<compile_context>
chip_gen: v5e
topology: v5e:2x2
jax: 0.10.0
libtpu: 0.0.40
codegen_flags: <defaults>
</compile_context>

<pallas_src>
import math
from functools import partial

import jax
import jax.numpy as jnp
from jax.experimental import pallas as pl
from jax.experimental.pallas import tpu as pltpu

LN_EPS = 1e-5
NEG_INF = -1e9            # finite stand-in for -inf so masked rows never NaN
MXU_DTYPE = jnp.bfloat16  # matmul operand dtype (accumulation stays f32)


# ----------------------------- in-kernel helpers ---------------------------- #

def _mm(a, b):
    """MXU matmul: bf16 operands (no-op cast if already bf16), f32 accumulation."""
    return jnp.dot(a.astype(MXU_DTYPE), b.astype(MXU_DTYPE),
                   preferred_element_type=jnp.float32)


def _mm_t(a, b):
    """a @ b.T without materializing the transpose (contract last dims of both)."""
    return jax.lax.dot_general(
        a.astype(MXU_DTYPE), b.astype(MXU_DTYPE),
        dimension_numbers=(((1,), (1,)), ((), ())),
        preferred_element_type=jnp.float32)


def _layernorm(x, g, b):
    mean = jnp.mean(x, axis=-1, keepdims=True)
    var = jnp.mean(jnp.square(x - mean), axis=-1, keepdims=True)
    return (x - mean) * jax.lax.rsqrt(var + LN_EPS) * g + b


def _ffn(x, w1, b1, w2, b2):
    h = jnp.maximum(_mm(x, w1) + b1, 0.0)        # bias + ReLU fused
    return _mm(h, w2) + b2


def _mha(q, k, v, add_mask, wo, bo, n_head):
    """Multi-head attention over batch-folded rows.

    q: [Rq, E]; k, v: [Rk, E] (already projected, batch folded into rows).
    add_mask: [Rq, Rk] additive mask (batch-block + key padding [+ causal]).
    Returns concat_h(softmax(q_h k_h^T / sqrt(Dh) + mask) v_h) @ Wo + bo : [Rq, E].
    """
    rows, e = q.shape
    dh = e // n_head
    qb = (q * (1.0 / math.sqrt(dh))).astype(MXU_DTYPE)   # fold scale into q once
    kb = k.astype(MXU_DTYPE)
    vb = v.astype(MXU_DTYPE)
    heads = []
    for h in range(n_head):                               # static unrolled (n_head small)
        lo = h * dh
        s = _mm_t(qb[:, lo:lo + dh], kb[:, lo:lo + dh]) + add_mask   # [Rq, Rk] f32
        m = jnp.max(s, axis=-1, keepdims=True)
        p = jnp.exp(s - m)
        p = p * pl.reciprocal(jnp.sum(p, axis=-1, keepdims=True), approx=True)
        heads.append(_mm(p, vb[:, lo:lo + dh]))           # [Rq, Dh]
    o = jnp.concatenate(heads, axis=-1)                   # [Rq, E]
    return _mm(o, wo) + bo                                 # single output projection


# ------------------------------ fused whole-model kernel --------------------- #

def _transformer_kernel(
        # activations & masks
        src_ref, tgt_ref, enc_mask_ref, dec_mask_ref, cross_mask_ref,
        # encoder layer stacks (leading layer axis)
        e_wqkv_ref, e_bqkv_ref, e_wo_ref, e_bo_ref, e_ln1g_ref, e_ln1b_ref,
        e_w1_ref, e_b1_ref, e_w2_ref, e_b2_ref, e_ln2g_ref, e_ln2b_ref,
        enc_ng_ref, enc_nb_ref,
        # decoder layer stacks (leading layer axis)
        d_wqkv_ref, d_bqkv_ref, d_wo_ref, d_bo_ref, d_ln1g_ref, d_ln1b_ref,
        d_cwq_ref, d_cbq_ref, d_cwkv_ref, d_cbkv_ref, d_cwo_ref, d_cbo_ref,
        d_ln2g_ref, d_ln2b_ref, d_w1_ref, d_b1_ref, d_w2_ref, d_b2_ref,
        d_ln3g_ref, d_ln3b_ref,
        dec_ng_ref, dec_nb_ref,
        # generator (final decoder LayerNorm + vocab projection, vocab padded to 128)
        gen_w_ref, gen_b_ref,
        # output
        out_ref,
        *, n_head, n_enc, n_dec):
    e = src_ref.shape[-1]
    enc_mask = enc_mask_ref[...]
    dec_mask = dec_mask_ref[...]
    cross_mask = cross_mask_ref[...]

    # ------------------------------- encoder -------------------------------- #
    x = src_ref[...]                                        # [B*Ssrc, E]
    for l in range(n_enc):
        qkv = _mm(x, e_wqkv_ref[l]) + e_bqkv_ref[l]         # fused QKV -> [rows, 3E]
        attn = _mha(qkv[:, :e], qkv[:, e:2 * e], qkv[:, 2 * e:],
                    enc_mask, e_wo_ref[l], e_bo_ref[l], n_head)
        x = _layernorm(x + attn, e_ln1g_ref[l], e_ln1b_ref[l])
        x = _layernorm(x + _ffn(x, e_w1_ref[l], e_b1_ref[l], e_w2_ref[l], e_b2_ref[l]),
                       e_ln2g_ref[l], e_ln2b_ref[l])
    mem = _layernorm(x, enc_ng_ref[...], enc_nb_ref[...])   # final encoder LayerNorm

    # ------------------------------- decoder -------------------------------- #
    y = tgt_ref[...]                                        # [B*Stgt, E]
    for l in range(n_dec):
        # masked self-attention (fused QKV projection)
        qkv = _mm(y, d_wqkv_ref[l]) + d_bqkv_ref[l]
        sa = _mha(qkv[:, :e], qkv[:, e:2 * e], qkv[:, 2 * e:],
                  dec_mask, d_wo_ref[l], d_bo_ref[l], n_head)
        y = _layernorm(y + sa, d_ln1g_ref[l], d_ln1b_ref[l])
        # cross-attention over encoder memory (fused KV projection)
        q = _mm(y, d_cwq_ref[l]) + d_cbq_ref[l]
        kv = _mm(mem, d_cwkv_ref[l]) + d_cbkv_ref[l]
        ca = _mha(q, kv[:, :e], kv[:, e:], cross_mask,
                  d_cwo_ref[l], d_cbo_ref[l], n_head)
        y = _layernorm(y + ca, d_ln2g_ref[l], d_ln2b_ref[l])
        # feed-forward
        y = _layernorm(y + _ffn(y, d_w1_ref[l], d_b1_ref[l], d_w2_ref[l], d_b2_ref[l]),
                       d_ln3g_ref[l], d_ln3b_ref[l])

    # final decoder LayerNorm + generator (lane-dense 128-wide padded vocab)
    y = _layernorm(y, dec_ng_ref[...], dec_nb_ref[...])
    out_ref[...] = (_mm(y, gen_w_ref[...]) + gen_b_ref[...]).astype(out_ref.dtype)


# ------------------------------ parameter init ------------------------------- #

def sinusoidal_pe(max_len, emb_size):
    pos = jnp.arange(max_len, dtype=jnp.float32)[:, None]
    den = jnp.exp(-jnp.arange(0, emb_size, 2, dtype=jnp.float32)
                  * math.log(10000.0) / emb_size)
    pe = jnp.zeros((max_len, emb_size), jnp.float32)
    pe = pe.at[:, 0::2].set(jnp.sin(pos * den))
    pe = pe.at[:, 1::2].set(jnp.cos(pos * den))
    return pe


class _KeyGen:
    def __init__(self, key):
        self.key = key

    def __call__(self):
        self.key, sub = jax.random.split(self.key)
        return sub


def init_params(key, num_enc, num_dec, E, FF, src_vocab, tgt_vocab, max_len=128):
    kg = _KeyGen(key)

    def w(*shape):  # bf16 matmul weight stored in HBM
        return (0.02 * jax.random.normal(kg(), shape, jnp.float32)).astype(MXU_DTYPE)

    gamma = lambda *s: jnp.ones(s, jnp.float32)
    beta = lambda *s: jnp.zeros(s, jnp.float32)

    v_pad = ((tgt_vocab + 127) // 128) * 128               # lane-dense generator output
    gen_w = 0.02 * jax.random.normal(kg(), (E, tgt_vocab), jnp.float32)
    gen_w = jnp.pad(gen_w, ((0, 0), (0, v_pad - tgt_vocab))).astype(MXU_DTYPE)

    Le, Ld = num_enc, num_dec
    params = {
        "src_emb": 0.02 * jax.random.normal(kg(), (src_vocab, E), jnp.float32),
        "tgt_emb": 0.02 * jax.random.normal(kg(), (tgt_vocab, E), jnp.float32),
        "pe": sinusoidal_pe(max_len, E),
        "enc": {
            "wqkv": w(Le, E, 3 * E), "bqkv": beta(Le, 1, 3 * E),
            "wo": w(Le, E, E), "bo": beta(Le, 1, E),
            "ln1_g": gamma(Le, 1, E), "ln1_b": beta(Le, 1, E),
            "w1": w(Le, E, FF), "b1": beta(Le, 1, FF),
            "w2": w(Le, FF, E), "b2": beta(Le, 1, E),
            "ln2_g": gamma(Le, 1, E), "ln2_b": beta(Le, 1, E),
        },
        "enc_norm_g": gamma(1, E), "enc_norm_b": beta(1, E),
        "dec": {
            "sa_wqkv": w(Ld, E, 3 * E), "sa_bqkv": beta(Ld, 1, 3 * E),
            "sa_wo": w(Ld, E, E), "sa_bo": beta(Ld, 1, E),
            "ln1_g": gamma(Ld, 1, E), "ln1_b": beta(Ld, 1, E),
            "ca_wq": w(Ld, E, E), "ca_bq": beta(Ld, 1, E),
            "ca_wkv": w(Ld, E, 2 * E), "ca_bkv": beta(Ld, 1, 2 * E),
            "ca_wo": w(Ld, E, E), "ca_bo": beta(Ld, 1, E),
            "ln2_g": gamma(Ld, 1, E), "ln2_b": beta(Ld, 1, E),
            "w1": w(Ld, E, FF), "b1": beta(Ld, 1, FF),
            "w2": w(Ld, FF, E), "b2": beta(Ld, 1, E),
            "ln3_g": gamma(Ld, 1, E), "ln3_b": beta(Ld, 1, E),
        },
        "dec_norm_g": gamma(1, E), "dec_norm_b": beta(1, E),
        "gen_w": gen_w, "gen_b": jnp.zeros((1, v_pad), jnp.float32),
    }
    return params


# -------------------------------- forward pass -------------------------------- #

def _additive_key_mask(row_batch, col_batch, col_pad):
    """[R, C] additive mask: 0 where same batch and key not padded, NEG_INF otherwise."""
    keep = (row_batch[:, None] == col_batch[None, :]) & jnp.logical_not(col_pad)[None, :]
    return jnp.where(keep, 0.0, NEG_INF).astype(jnp.float32)


def translation_model_forward(params, src_tokens, tgt_tokens, tgt_mask,
                              src_padding_mask, tgt_padding_mask, n_head):
    E = params["src_emb"].shape[1]
    V = params["tgt_emb"].shape[0]                 # tgt vocab size
    B, S_src = src_tokens.shape
    S_tgt = tgt_tokens.shape[1]
    scale = math.sqrt(E)

    # TODO(synk): the token-embedding gather has no clean Pallas equivalent; the gather,
    # *sqrt(E) scale and PE add are XLA glue fused into one gather+elementwise op.
    src_x = (params["src_emb"][src_tokens] * scale
             + params["pe"][None, :S_src, :]).reshape(B * S_src, E)
    tgt_x = (params["tgt_emb"][tgt_tokens] * scale
             + params["pe"][None, :S_tgt, :]).reshape(B * S_tgt, E)

    # combined additive masks for the batch-folded attention (built once, tiny):
    #   batch-block structure + key padding (+ causal for decoder self-attention)
    row_src = jnp.repeat(jnp.arange(B), S_src)
    row_tgt = jnp.repeat(jnp.arange(B), S_tgt)
    enc_mask = _additive_key_mask(row_src, row_src, src_padding_mask.reshape(-1))
    cross_mask = _additive_key_mask(row_tgt, row_src, src_padding_mask.reshape(-1))
    tgt_add = jnp.maximum(tgt_mask.astype(jnp.float32), NEG_INF)   # finite, no +/-inf
    dec_mask = (_additive_key_mask(row_tgt, row_tgt, tgt_padding_mask.reshape(-1))
                + jnp.tile(tgt_add, (B, B)))

    enc, dec = params["enc"], params["dec"]
    n_enc = enc["wqkv"].shape[0]
    n_dec = dec["sa_wqkv"].shape[0]
    v_pad = params["gen_w"].shape[1]

    args = (
        src_x, tgt_x, enc_mask, dec_mask, cross_mask,
        enc["wqkv"], enc["bqkv"], enc["wo"], enc["bo"],
        enc["ln1_g"], enc["ln1_b"],
        enc["w1"], enc["b1"], enc["w2"], enc["b2"],
        enc["ln2_g"], enc["ln2_b"],
        params["enc_norm_g"], params["enc_norm_b"],
        dec["sa_wqkv"], dec["sa_bqkv"], dec["sa_wo"], dec["sa_bo"],
        dec["ln1_g"], dec["ln1_b"],
        dec["ca_wq"], dec["ca_bq"], dec["ca_wkv"], dec["ca_bkv"],
        dec["ca_wo"], dec["ca_bo"],
        dec["ln2_g"], dec["ln2_b"],
        dec["w1"], dec["b1"], dec["w2"], dec["b2"],
        dec["ln3_g"], dec["ln3_b"],
        params["dec_norm_g"], params["dec_norm_b"],
        params["gen_w"], params["gen_b"],
    )

    vmem_spec = pl.BlockSpec(memory_space=pltpu.MemorySpace.VMEM)
    logits_flat = pl.pallas_call(
        partial(_transformer_kernel, n_head=n_head, n_enc=n_enc, n_dec=n_dec),
        in_specs=[vmem_spec] * len(args),
        out_specs=vmem_spec,
        out_shape=jax.ShapeDtypeStruct((B * S_tgt, v_pad), jnp.float32),
    )(*args)

    return logits_flat[:, :V].reshape(B, S_tgt, V)


# ------------------------------------ main ------------------------------------ #

if __name__ == "__main__":
    # model hyper-parameters (small)
    num_encoder_layers = 2
    num_decoder_layers = 2
    emb_size = 32
    dim_feedforward = 64
    n_head = 4
    src_vocab_size = 50
    tgt_vocab_size = 60
    dropout_prob = 0.1  # eval mode -> identity

    B, S_src, S_tgt = 2, 16, 8

    root = jax.random.PRNGKey(0)
    k_params, k_src, k_tgt = jax.random.split(root, 3)

    params = init_params(k_params, num_encoder_layers, num_decoder_layers,
                         emb_size, dim_feedforward, src_vocab_size, tgt_vocab_size)

    src_tokens = jax.random.randint(k_src, (B, S_src), 0, src_vocab_size, dtype=jnp.int32)
    tgt_tokens = jax.random.randint(k_tgt, (B, S_tgt), 0, tgt_vocab_size, dtype=jnp.int32)

    # PyTorch-style causal float mask: 0 on/below diagonal, -inf above
    causal = jnp.triu(jnp.ones((S_tgt, S_tgt), jnp.bool_), k=1)
    tgt_mask = jnp.where(causal, -jnp.inf, 0.0).astype(jnp.float32)

    # key-padding masks (True = pad/ignore), pad the tail of the second sentence
    src_padding_mask = jnp.zeros((B, S_src), jnp.bool_).at[1, -4:].set(True)
    tgt_padding_mask = jnp.zeros((B, S_tgt), jnp.bool_).at[1, -2:].set(True)

    fwd = jax.jit(translation_model_forward, static_argnames=("n_head",))
    logits = fwd(params, src_tokens, tgt_tokens, tgt_mask,
                 src_padding_mask, tgt_padding_mask, n_head=n_head)
    jax.block_until_ready(logits)

    assert logits.shape == (B, S_tgt, tgt_vocab_size), logits.shape
    assert bool(jnp.all(jnp.isfinite(logits)))
    print("KERNEL_OK")
</pallas_src>

<mosaic_0001>
module attributes {stable_mosaic.version = 11 : i64} {
  func.func @_transformer_kernel(%arg0: memref<32x32xf32, #tpu.memory_space<vmem>>, %arg1: memref<16x32xf32, #tpu.memory_space<vmem>>, %arg2: memref<32x32xf32, #tpu.memory_space<vmem>>, %arg3: memref<16x16xf32, #tpu.memory_space<vmem>>, %arg4: memref<16x32xf32, #tpu.memory_space<vmem>>, %arg5: memref<2x32x96xbf16, #tpu.memory_space<vmem>>, %arg6: memref<2x1x96xf32, #tpu.memory_space<vmem>>, %arg7: memref<2x32x32xbf16, #tpu.memory_space<vmem>>, %arg8: memref<2x1x32xf32, #tpu.memory_space<vmem>>, %arg9: memref<2x1x32xf32, #tpu.memory_space<vmem>>, %arg10: memref<2x1x32xf32, #tpu.memory_space<vmem>>, %arg11: memref<2x32x64xbf16, #tpu.memory_space<vmem>>, %arg12: memref<2x1x64xf32, #tpu.memory_space<vmem>>, %arg13: memref<2x64x32xbf16, #tpu.memory_space<vmem>>, %arg14: memref<2x1x32xf32, #tpu.memory_space<vmem>>, %arg15: memref<2x1x32xf32, #tpu.memory_space<vmem>>, %arg16: memref<2x1x32xf32, #tpu.memory_space<vmem>>, %arg17: memref<1x32xf32, #tpu.memory_space<vmem>>, %arg18: memref<1x32xf32, #tpu.memory_space<vmem>>, %arg19: memref<2x32x96xbf16, #tpu.memory_space<vmem>>, %arg20: memref<2x1x96xf32, #tpu.memory_space<vmem>>, %arg21: memref<2x32x32xbf16, #tpu.memory_space<vmem>>, %arg22: memref<2x1x32xf32, #tpu.memory_space<vmem>>, %arg23: memref<2x1x32xf32, #tpu.memory_space<vmem>>, %arg24: memref<2x1x32xf32, #tpu.memory_space<vmem>>, %arg25: memref<2x32x32xbf16, #tpu.memory_space<vmem>>, %arg26: memref<2x1x32xf32, #tpu.memory_space<vmem>>, %arg27: memref<2x32x64xbf16, #tpu.memory_space<vmem>>, %arg28: memref<2x1x64xf32, #tpu.memory_space<vmem>>, %arg29: memref<2x32x32xbf16, #tpu.memory_space<vmem>>, %arg30: memref<2x1x32xf32, #tpu.memory_space<vmem>>, %arg31: memref<2x1x32xf32, #tpu.memory_space<vmem>>, %arg32: memref<2x1x32xf32, #tpu.memory_space<vmem>>, %arg33: memref<2x32x64xbf16, #tpu.memory_space<vmem>>, %arg34: memref<2x1x64xf32, #tpu.memory_space<vmem>>, %arg35: memref<2x64x32xbf16, #tpu.memory_space<vmem>>, %arg36: memref<2x1x32xf32, #tpu.memory_space<vmem>>, %arg37: memref<2x1x32xf32, #tpu.memory_space<vmem>>, %arg38: memref<2x1x32xf32, #tpu.memory_space<vmem>>, %arg39: memref<1x32xf32, #tpu.memory_space<vmem>>, %arg40: memref<1x32xf32, #tpu.memory_space<vmem>>, %arg41: memref<32x128xbf16, #tpu.memory_space<vmem>>, %arg42: memref<1x128xf32, #tpu.memory_space<vmem>>, %arg43: memref<16x128xf32, #tpu.memory_space<vmem>>) attributes {dimension_semantics = [], scalar_prefetch = 0 : i64, scratch_operands = 0 : i64, tpu.core_type = #tpu.core_type<tc>} {
    %c0 = arith.constant 0 : index
    %c0_0 = arith.constant 0 : index
    %0 = vector.load %arg2[%c0, %c0_0] : memref<32x32xf32, #tpu.memory_space<vmem>>, vector<32x32xf32>
    %c0_1 = arith.constant 0 : index
    %c0_2 = arith.constant 0 : index
    %1 = vector.load %arg3[%c0_1, %c0_2] : memref<16x16xf32, #tpu.memory_space<vmem>>, vector<16x16xf32>
    %c0_3 = arith.constant 0 : index
    %c0_4 = arith.constant 0 : index
    %2 = vector.load %arg4[%c0_3, %c0_4] : memref<16x32xf32, #tpu.memory_space<vmem>>, vector<16x32xf32>
    %c0_5 = arith.constant 0 : index
    %c0_6 = arith.constant 0 : index
    %3 = vector.load %arg0[%c0_5, %c0_6] : memref<32x32xf32, #tpu.memory_space<vmem>>, vector<32x32xf32>
    %c0_7 = arith.constant 0 : index
    %c0_8 = arith.constant 0 : index
    %c0_9 = arith.constant 0 : index
    %4 = vector.load %arg5[%c0_7, %c0_8, %c0_9] : memref<2x32x96xbf16, #tpu.memory_space<vmem>>, vector<1x32x96xbf16>
    %5 = vector.shape_cast %4 : vector<1x32x96xbf16> to vector<32x96xbf16>
    %6 = arith.truncf %3 : vector<32x32xf32> to vector<32x32xbf16>
    %cst = arith.constant dense<0.000000e+00> : vector<32x96xf32>
    %7 = tpu.matmul %6, %5, %cst {dimension_numbers = #tpu.dot_dimension_numbers<[1], [0], [0], [1], [0, 0, 1, 1], [], []>} : vector<32x32xbf16>, vector<32x96xbf16>, vector<32x96xf32> -> vector<32x96xf32>
    %c0_10 = arith.constant 0 : index
    %c0_11 = arith.constant 0 : index
    %c0_12 = arith.constant 0 : index
    %8 = vector.load %arg6[%c0_10, %c0_11, %c0_12] : memref<2x1x96xf32, #tpu.memory_space<vmem>>, vector<1x1x96xf32>
    %9 = vector.shape_cast %8 : vector<1x1x96xf32> to vector<1x96xf32>
    %10 = vector.broadcast %9 : vector<1x96xf32> to vector<32x96xf32>
    %11 = arith.addf %7, %10 : vector<32x96xf32>
    %12 = vector.extract_strided_slice %11 {offsets = [0, 0], sizes = [32, 32], strides = [1, 1]} : vector<32x96xf32> to vector<32x32xf32>
    %13 = vector.extract_strided_slice %11 {offsets = [0, 32], sizes = [32, 32], strides = [1, 1]} : vector<32x96xf32> to vector<32x32xf32>
    %14 = vector.extract_strided_slice %11 {offsets = [0, 64], sizes = [32, 32], strides = [1, 1]} : vector<32x96xf32> to vector<32x32xf32>
    %c0_13 = arith.constant 0 : index
    %c0_14 = arith.constant 0 : index
    %c0_15 = arith.constant 0 : index
    %15 = vector.load %arg7[%c0_13, %c0_14, %c0_15] : memref<2x32x32xbf16, #tpu.memory_space<vmem>>, vector<1x32x32xbf16>
    %16 = vector.shape_cast %15 : vector<1x32x32xbf16> to vector<32x32xbf16>
    %c0_16 = arith.constant 0 : index
    %c0_17 = arith.constant 0 : index
    %c0_18 = arith.constant 0 : index
    %17 = vector.load %arg8[%c0_16, %c0_17, %c0_18] : memref<2x1x32xf32, #tpu.memory_space<vmem>>, vector<1x1x32xf32>
    %18 = vector.shape_cast %17 : vector<1x1x32xf32> to vector<1x32xf32>
    %cst_19 = arith.constant 0.353553385 : f32
    %19 = vector.broadcast %cst_19 : f32 to vector<32x32xf32>
    %20 = arith.mulf %12, %19 : vector<32x32xf32>
    %21 = arith.truncf %20 : vector<32x32xf32> to vector<32x32xbf16>
    %22 = arith.truncf %13 : vector<32x32xf32> to vector<32x32xbf16>
    %23 = arith.truncf %14 : vector<32x32xf32> to vector<32x32xbf16>
    %24 = vector.extract_strided_slice %21 {offsets = [0, 0], sizes = [32, 8], strides = [1, 1]} : vector<32x32xbf16> to vector<32x8xbf16>
    %25 = vector.extract_strided_slice %22 {offsets = [0, 0], sizes = [32, 8], strides = [1, 1]} : vector<32x32xbf16> to vector<32x8xbf16>
    %cst_20 = arith.constant dense<0.000000e+00> : vector<32x32xf32>
    %26 = tpu.matmul %24, %25, %cst_20 {dimension_numbers = #tpu.dot_dimension_numbers<[1], [1], [0], [0], [0, 0, 1, 0], [], []>} : vector<32x8xbf16>, vector<32x8xbf16>, vector<32x32xf32> -> vector<32x32xf32>
    %27 = arith.addf %26, %0 : vector<32x32xf32>
    %cst_21 = arith.constant dense<0xFF800000> : vector<32xf32>
    %28 = vector.multi_reduction <maximumf>, %27, %cst_21 [1] : vector<32x32xf32> to vector<32xf32>
    %29 = vector.shape_cast %28 : vector<32xf32> to vector<32x1xf32>
    %30 = vector.broadcast %29 : vector<32x1xf32> to vector<32x32xf32>
    %31 = arith.subf %27, %30 : vector<32x32xf32>
    %32 = math.exp %31 : vector<32x32xf32>
    %cst_22 = arith.constant dense<0.000000e+00> : vector<32xf32>
    %33 = vector.multi_reduction <add>, %32, %cst_22 [1] : vector<32x32xf32> to vector<32xf32>
    %34 = vector.shape_cast %33 : vector<32xf32> to vector<32x1xf32>
    %35 = tpu.reciprocal %34 {approx = true} : vector<32x1xf32> -> vector<32x1xf32>
    %36 = vector.broadcast %35 : vector<32x1xf32> to vector<32x32xf32>
    %37 = arith.mulf %32, %36 : vector<32x32xf32>
    %38 = vector.extract_strided_slice %23 {offsets = [0, 0], sizes = [32, 8], strides = [1, 1]} : vector<32x32xbf16> to vector<32x8xbf16>
    %39 = arith.truncf %37 : vector<32x32xf32> to vector<32x32xbf16>
    %cst_23 = arith.constant dense<0.000000e+00> : vector<32x8xf32>
    %40 = tpu.matmul %39, %38, %cst_23 {dimension_numbers = #tpu.dot_dimension_numbers<[1], [0], [0], [1], [0, 0, 1, 1], [], []>} : vector<32x32xbf16>, vector<32x8xbf16>, vector<32x8xf32> -> vector<32x8xf32>
    %41 = vector.extract_strided_slice %21 {offsets = [0, 8], sizes = [32, 8], strides = [1, 1]} : vector<32x32xbf16> to vector<32x8xbf16>
    %42 = vector.extract_strided_slice %22 {offsets = [0, 8], sizes = [32, 8], strides = [1, 1]} : vector<32x32xbf16> to vector<32x8xbf16>
    %cst_24 = arith.constant dense<0.000000e+00> : vector<32x32xf32>
    %43 = tpu.matmul %41, %42, %cst_24 {dimension_numbers = #tpu.dot_dimension_numbers<[1], [1], [0], [0], [0, 0, 1, 0], [], []>} : vector<32x8xbf16>, vector<32x8xbf16>, vector<32x32xf32> -> vector<32x32xf32>
    %44 = arith.addf %43, %0 : vector<32x32xf32>
    %cst_25 = arith.constant dense<0xFF800000> : vector<32xf32>
    %45 = vector.multi_reduction <maximumf>, %44, %cst_25 [1] : vector<32x32xf32> to vector<32xf32>
    %46 = vector.shape_cast %45 : vector<32xf32> to vector<32x1xf32>
    %47 = vector.broadcast %46 : vector<32x1xf32> to vector<32x32xf32>
    %48 = arith.subf %44, %47 : vector<32x32xf32>
    %49 = math.exp %48 : vector<32x32xf32>
    %cst_26 = arith.constant dense<0.000000e+00> : vector<32xf32>
    %50 = vector.multi_reduction <add>, %49, %cst_26 [1] : vector<32x32xf32> to vector<32xf32>
    %51 = vector.shape_cast %50 : vector<32xf32> to vector<32x1xf32>
    %52 = tpu.reciprocal %51 {approx = true} : vector<32x1xf32> -> vector<32x1xf32>
    %53 = vector.broadcast %52 : vector<32x1xf32> to vector<32x32xf32>
    %54 = arith.mulf %49, %53 : vector<32x32xf32>
    %55 = vector.extract_strided_slice %23 {offsets = [0, 8], sizes = [32, 8], strides = [1, 1]} : vector<32x32xbf16> to vector<32x8xbf16>
    %56 = arith.truncf %54 : vector<32x32xf32> to vector<32x32xbf16>
    %cst_27 = arith.constant dense<0.000000e+00> : vector<32x8xf32>
    %57 = tpu.matmul %56, %55, %cst_27 {dimension_numbers = #tpu.dot_dimension_numbers<[1], [0], [0], [1], [0, 0, 1, 1], [], []>} : vector<32x32xbf16>, vector<32x8xbf16>, vector<32x8xf32> -> vector<32x8xf32>
    %58 = vector.extract_strided_slice %21 {offsets = [0, 16], sizes = [32, 8], strides = [1, 1]} : vector<32x32xbf16> to vector<32x8xbf16>
    %59 = vector.extract_strided_slice %22 {offsets = [0, 16], sizes = [32, 8], strides = [1, 1]} : vector<32x32xbf16> to vector<32x8xbf16>
    %cst_28 = arith.constant dense<0.000000e+00> : vector<32x32xf32>
    %60 = tpu.matmul %58, %59, %cst_28 {dimension_numbers = #tpu.dot_dimension_numbers<[1], [1], [0], [0], [0, 0, 1, 0], [], []>} : vector<32x8xbf16>, vector<32x8xbf16>, vector<32x32xf32> -> vector<32x32xf32>
    %61 = arith.addf %60, %0 : vector<32x32xf32>
    %cst_29 = arith.constant dense<0xFF800000> : vector<32xf32>
    %62 = vector.multi_reduction <maximumf>, %61, %cst_29 [1] : vector<32x32xf32> to vector<32xf32>
    %63 = vector.shape_cast %62 : vector<32xf32> to vector<32x1xf32>
    %64 = vector.broadcast %63 : vector<32x1xf32> to vector<32x32xf32>
    %65 = arith.subf %61, %64 : vector<32x32xf32>
    %66 = math.exp %65 : vector<32x32xf32>
    %cst_30 = arith.constant dense<0.000000e+00> : vector<32xf32>
    %67 = vector.multi_reduction <add>, %66, %cst_30 [1] : vector<32x32xf32> to vector<32xf32>
    %68 = vector.shape_cast %67 : vector<32xf32> to vector<32x1xf32>
    %69 = tpu.reciprocal %68 {approx = true} : vector<32x1xf32> -> vector<32x1xf32>
    %70 = vector.broadcast %69 : vector<32x1xf32> to vector<32x32xf32>
    %71 = arith.mulf %66, %70 : vector<32x32xf32>
    %72 = vector.extract_strided_slice %23 {offsets = [0, 16], sizes = [32, 8], strides = [1, 1]} : vector<32x32xbf16> to vector<32x8xbf16>
    %73 = arith.truncf %71 : vector<32x32xf32> to vector<32x32xbf16>
    %cst_31 = arith.constant dense<0.000000e+00> : vector<32x8xf32>
    %74 = tpu.matmul %73, %72, %cst_31 {dimension_numbers = #tpu.dot_dimension_numbers<[1], [0], [0], [1], [0, 0, 1, 1], [], []>} : vector<32x32xbf16>, vector<32x8xbf16>, vector<32x8xf32> -> vector<32x8xf32>
    %75 = vector.extract_strided_slice %21 {offsets = [0, 24], sizes = [32, 8], strides = [1, 1]} : vector<32x32xbf16> to vector<32x8xbf16>
    %76 = vector.extract_strided_slice %22 {offsets = [0, 24], sizes = [32, 8], strides = [1, 1]} : vector<32x32xbf16> to vector<32x8xbf16>
    %cst_32 = arith.constant dense<0.000000e+00> : vector<32x32xf32>
    %77 = tpu.matmul %75, %76, %cst_32 {dimension_numbers = #tpu.dot_dimension_numbers<[1], [1], [0], [0], [0, 0, 1, 0], [], []>} : vector<32x8xbf16>, vector<32x8xbf16>, vector<32x32xf32> -> vector<32x32xf32>
    %78 = arith.addf %77, %0 : vector<32x32xf32>
    %cst_33 = arith.constant dense<0xFF800000> : vector<32xf32>
    %79 = vector.multi_reduction <maximumf>, %78, %cst_33 [1] : vector<32x32xf32> to vector<32xf32>
    %80 = vector.shape_cast %79 : vector<32xf32> to vector<32x1xf32>
    %81 = vector.broadcast %80 : vector<32x1xf32> to vector<32x32xf32>
    %82 = arith.subf %78, %81 : vector<32x32xf32>
    %83 = math.exp %82 : vector<32x32xf32>
    %cst_34 = arith.constant dense<0.000000e+00> : vector<32xf32>
    %84 = vector.multi_reduction <add>, %83, %cst_34 [1] : vector<32x32xf32> to vector<32xf32>
    %85 = vector.shape_cast %84 : vector<32xf32> to vector<32x1xf32>
    %86 = tpu.reciprocal %85 {approx = true} : vector<32x1xf32> -> vector<32x1xf32>
    %87 = vector.broadcast %86 : vector<32x1xf32> to vector<32x32xf32>
    %88 = arith.mulf %83, %87 : vector<32x32xf32>
    %89 = vector.extract_strided_slice %23 {offsets = [0, 24], sizes = [32, 8], strides = [1, 1]} : vector<32x32xbf16> to vector<32x8xbf16>
    %90 = arith.truncf %88 : vector<32x32xf32> to vector<32x32xbf16>
    %cst_35 = arith.constant dense<0.000000e+00> : vector<32x8xf32>
    %91 = tpu.matmul %90, %89, %cst_35 {dimension_numbers = #tpu.dot_dimension_numbers<[1], [0], [0], [1], [0, 0, 1, 1], [], []>} : vector<32x32xbf16>, vector<32x8xbf16>, vector<32x8xf32> -> vector<32x8xf32>
    %92 = tpu.concatenate %40, %57, %74, %91 in 1 : vector<32x8xf32>, vector<32x8xf32>, vector<32x8xf32>, vector<32x8xf32> -> vector<32x32xf32>
    %93 = arith.truncf %92 : vector<32x32xf32> to vector<32x32xbf16>
    %cst_36 = arith.constant dense<0.000000e+00> : vector<32x32xf32>
    %94 = tpu.matmul %93, %16, %cst_36 {dimension_numbers = #tpu.dot_dimension_numbers<[1], [0], [0], [1], [0, 0, 1, 1], [], []>} : vector<32x32xbf16>, vector<32x32xbf16>, vector<32x32xf32> -> vector<32x32xf32>
    %95 = vector.broadcast %18 : vector<1x32xf32> to vector<32x32xf32>
    %96 = arith.addf %94, %95 : vector<32x32xf32>
    %97 = arith.addf %3, %96 : vector<32x32xf32>
    %c0_37 = arith.constant 0 : index
    %c0_38 = arith.constant 0 : index
    %c0_39 = arith.constant 0 : index
    %98 = vector.load %arg9[%c0_37, %c0_38, %c0_39] : memref<2x1x32xf32, #tpu.memory_space<vmem>>, vector<1x1x32xf32>
    %99 = vector.shape_cast %98 : vector<1x1x32xf32> to vector<1x32xf32>
    %c0_40 = arith.constant 0 : index
    %c0_41 = arith.constant 0 : index
    %c0_42 = arith.constant 0 : index
    %100 = vector.load %arg10[%c0_40, %c0_41, %c0_42] : memref<2x1x32xf32, #tpu.memory_space<vmem>>, vector<1x1x32xf32>
    %101 = vector.shape_cast %100 : vector<1x1x32xf32> to vector<1x32xf32>
    %cst_43 = arith.constant dense<0.000000e+00> : vector<32xf32>
    %102 = vector.multi_reduction <add>, %97, %cst_43 [1] : vector<32x32xf32> to vector<32xf32>
    %103 = vector.shape_cast %102 : vector<32xf32> to vector<32x1xf32>
    %cst_44 = arith.constant 3.200000e+01 : f32
    %104 = vector.broadcast %cst_44 : f32 to vector<32x1xf32>
    %105 = arith.divf %103, %104 : vector<32x1xf32>
    %106 = vector.broadcast %105 : vector<32x1xf32> to vector<32x32xf32>
    %107 = arith.subf %97, %106 : vector<32x32xf32>
    %108 = arith.mulf %107, %107 : vector<32x32xf32>
    %cst_45 = arith.constant dense<0.000000e+00> : vector<32xf32>
    %109 = vector.multi_reduction <add>, %108, %cst_45 [1] : vector<32x32xf32> to vector<32xf32>
    %110 = vector.shape_cast %109 : vector<32xf32> to vector<32x1xf32>
    %cst_46 = arith.constant 3.200000e+01 : f32
    %111 = vector.broadcast %cst_46 : f32 to vector<32x1xf32>
    %112 = arith.divf %110, %111 : vector<32x1xf32>
    %113 = vector.broadcast %105 : vector<32x1xf32> to vector<32x32xf32>
    %114 = arith.subf %97, %113 : vector<32x32xf32>
    %cst_47 = arith.constant 9.99999974E-6 : f32
    %115 = vector.broadcast %cst_47 : f32 to vector<32x1xf32>
    %116 = arith.addf %112, %115 : vector<32x1xf32>
    %117 = math.rsqrt %116 : vector<32x1xf32>
    %118 = vector.broadcast %117 : vector<32x1xf32> to vector<32x32xf32>
    %119 = arith.mulf %114, %118 : vector<32x32xf32>
    %120 = vector.broadcast %99 : vector<1x32xf32> to vector<32x32xf32>
    %121 = arith.mulf %119, %120 : vector<32x32xf32>
    %122 = vector.broadcast %101 : vector<1x32xf32> to vector<32x32xf32>
    %123 = arith.addf %121, %122 : vector<32x32xf32>
    %c0_48 = arith.constant 0 : index
    %c0_49 = arith.constant 0 : index
    %c0_50 = arith.constant 0 : index
    %124 = vector.load %arg11[%c0_48, %c0_49, %c0_50] : memref<2x32x64xbf16, #tpu.memory_space<vmem>>, vector<1x32x64xbf16>
    %125 = vector.shape_cast %124 : vector<1x32x64xbf16> to vector<32x64xbf16>
    %c0_51 = arith.constant 0 : index
    %c0_52 = arith.constant 0 : index
    %c0_53 = arith.constant 0 : index
    %126 = vector.load %arg12[%c0_51, %c0_52, %c0_53] : memref<2x1x64xf32, #tpu.memory_space<vmem>>, vector<1x1x64xf32>
    %127 = vector.shape_cast %126 : vector<1x1x64xf32> to vector<1x64xf32>
    %c0_54 = arith.constant 0 : index
    %c0_55 = arith.constant 0 : index
    %c0_56 = arith.constant 0 : index
    %128 = vector.load %arg13[%c0_54, %c0_55, %c0_56] : memref<2x64x32xbf16, #tpu.memory_space<vmem>>, vector<1x64x32xbf16>
    %129 = vector.shape_cast %128 : vector<1x64x32xbf16> to vector<64x32xbf16>
    %c0_57 = arith.constant 0 : index
    %c0_58 = arith.constant 0 : index
    %c0_59 = arith.constant 0 : index
    %130 = vector.load %arg14[%c0_57, %c0_58, %c0_59] : memref<2x1x32xf32, #tpu.memory_space<vmem>>, vector<1x1x32xf32>
    %131 = vector.shape_cast %130 : vector<1x1x32xf32> to vector<1x32xf32>
    %132 = arith.truncf %123 : vector<32x32xf32> to vector<32x32xbf16>
    %cst_60 = arith.constant dense<0.000000e+00> : vector<32x64xf32>
    %133 = tpu.matmul %132, %125, %cst_60 {dimension_numbers = #tpu.dot_dimension_numbers<[1], [0], [0], [1], [0, 0, 1, 1], [], []>} : vector<32x32xbf16>, vector<32x64xbf16>, vector<32x64xf32> -> vector<32x64xf32>
    %134 = vector.broadcast %127 : vector<1x64xf32> to vector<32x64xf32>
    %135 = arith.addf %133, %134 : vector<32x64xf32>
    %cst_61 = arith.constant 0.000000e+00 : f32
    %136 = vector.broadcast %cst_61 : f32 to vector<32x64xf32>
    %137 = arith.maximumf %135, %136 : vector<32x64xf32>
    %138 = arith.truncf %137 : vector<32x64xf32> to vector<32x64xbf16>
    %cst_62 = arith.constant dense<0.000000e+00> : vector<32x32xf32>
    %139 = tpu.matmul %138, %129, %cst_62 {dimension_numbers = #tpu.dot_dimension_numbers<[1], [0], [0], [1], [0, 0, 1, 1], [], []>} : vector<32x64xbf16>, vector<64x32xbf16>, vector<32x32xf32> -> vector<32x32xf32>
    %140 = vector.broadcast %131 : vector<1x32xf32> to vector<32x32xf32>
    %141 = arith.addf %139, %140 : vector<32x32xf32>
    %142 = arith.addf %123, %141 : vector<32x32xf32>
    %c0_63 = arith.constant 0 : index
    %c0_64 = arith.constant 0 : index
    %c0_65 = arith.constant 0 : index
    %143 = vector.load %arg15[%c0_63, %c0_64, %c0_65] : memref<2x1x32xf32, #tpu.memory_space<vmem>>, vector<1x1x32xf32>
    %144 = vector.shape_cast %143 : vector<1x1x32xf32> to vector<1x32xf32>
    %c0_66 = arith.constant 0 : index
    %c0_67 = arith.constant 0 : index
    %c0_68 = arith.constant 0 : index
    %145 = vector.load %arg16[%c0_66, %c0_67, %c0_68] : memref<2x1x32xf32, #tpu.memory_space<vmem>>, vector<1x1x32xf32>
    %146 = vector.shape_cast %145 : vector<1x1x32xf32> to vector<1x32xf32>
    %cst_69 = arith.constant dense<0.000000e+00> : vector<32xf32>
    %147 = vector.multi_reduction <add>, %142, %cst_69 [1] : vector<32x32xf32> to vector<32xf32>
    %148 = vector.shape_cast %147 : vector<32xf32> to vector<32x1xf32>
    %cst_70 = arith.constant 3.200000e+01 : f32
    %149 = vector.broadcast %cst_70 : f32 to vector<32x1xf32>
    %150 = arith.divf %148, %149 : vector<32x1xf32>
    %151 = vector.broadcast %150 : vector<32x1xf32> to vector<32x32xf32>
    %152 = arith.subf %142, %151 : vector<32x32xf32>
    %153 = arith.mulf %152, %152 : vector<32x32xf32>
    %cst_71 = arith.constant dense<0.000000e+00> : vector<32xf32>
    %154 = vector.multi_reduction <add>, %153, %cst_71 [1] : vector<32x32xf32> to vector<32xf32>
    %155 = vector.shape_cast %154 : vector<32xf32> to vector<32x1xf32>
    %cst_72 = arith.constant 3.200000e+01 : f32
    %156 = vector.broadcast %cst_72 : f32 to vector<32x1xf32>
    %157 = arith.divf %155, %156 : vector<32x1xf32>
    %158 = vector.broadcast %150 : vector<32x1xf32> to vector<32x32xf32>
    %159 = arith.subf %142, %158 : vector<32x32xf32>
    %cst_73 = arith.constant 9.99999974E-6 : f32
    %160 = vector.broadcast %cst_73 : f32 to vector<32x1xf32>
    %161 = arith.addf %157, %160 : vector<32x1xf32>
    %162 = math.rsqrt %161 : vector<32x1xf32>
    %163 = vector.broadcast %162 : vector<32x1xf32> to vector<32x32xf32>
    %164 = arith.mulf %159, %163 : vector<32x32xf32>
    %165 = vector.broadcast %144 : vector<1x32xf32> to vector<32x32xf32>
    %166 = arith.mulf %164, %165 : vector<32x32xf32>
    %167 = vector.broadcast %146 : vector<1x32xf32> to vector<32x32xf32>
    %168 = arith.addf %166, %167 : vector<32x32xf32>
    %c1 = arith.constant 1 : index
    %c0_74 = arith.constant 0 : index
    %c0_75 = arith.constant 0 : index
    %169 = vector.load %arg5[%c1, %c0_74, %c0_75] : memref<2x32x96xbf16, #tpu.memory_space<vmem>>, vector<1x32x96xbf16>
    %170 = vector.shape_cast %169 : vector<1x32x96xbf16> to vector<32x96xbf16>
    %171 = arith.truncf %168 : vector<32x32xf32> to vector<32x32xbf16>
    %cst_76 = arith.constant dense<0.000000e+00> : vector<32x96xf32>
    %172 = tpu.matmul %171, %170, %cst_76 {dimension_numbers = #tpu.dot_dimension_numbers<[1], [0], [0], [1], [0, 0, 1, 1], [], []>} : vector<32x32xbf16>, vector<32x96xbf16>, vector<32x96xf32> -> vector<32x96xf32>
    %c1_77 = arith.constant 1 : index
    %c0_78 = arith.constant 0 : index
    %c0_79 = arith.constant 0 : index
    %173 = vector.load %arg6[%c1_77, %c0_78, %c0_79] : memref<2x1x96xf32, #tpu.memory_space<vmem>>, vector<1x1x96xf32>
    %174 = vector.shape_cast %173 : vector<1x1x96xf32> to vector<1x96xf32>
    %175 = vector.broadcast %174 : vector<1x96xf32> to vector<32x96xf32>
    %176 = arith.addf %172, %175 : vector<32x96xf32>
    %177 = vector.extract_strided_slice %176 {offsets = [0, 0], sizes = [32, 32], strides = [1, 1]} : vector<32x96xf32> to vector<32x32xf32>
    %178 = vector.extract_strided_slice %176 {offsets = [0, 32], sizes = [32, 32], strides = [1, 1]} : vector<32x96xf32> to vector<32x32xf32>
    %179 = vector.extract_strided_slice %176 {offsets = [0, 64], sizes = [32, 32], strides = [1, 1]} : vector<32x96xf32> to vector<32x32xf32>
    %c1_80 = arith.constant 1 : index
    %c0_81 = arith.constant 0 : index
    %c0_82 = arith.constant 0 : index
    %180 = vector.load %arg7[%c1_80, %c0_81, %c0_82] : memref<2x32x32xbf16, #tpu.memory_space<vmem>>, vector<1x32x32xbf16>
    %181 = vector.shape_cast %180 : vector<1x32x32xbf16> to vector<32x32xbf16>
    %c1_83 = arith.constant 1 : index
    %c0_84 = arith.constant 0 : index
    %c0_85 = arith.constant 0 : index
    %182 = vector.load %arg8[%c1_83, %c0_84, %c0_85] : memref<2x1x32xf32, #tpu.memory_space<vmem>>, vector<1x1x32xf32>
    %183 = vector.shape_cast %182 : vector<1x1x32xf32> to vector<1x32xf32>
    %cst_86 = arith.constant 0.353553385 : f32
    %184 = vector.broadcast %cst_86 : f32 to vector<32x32xf32>
    %185 = arith.mulf %177, %184 : vector<32x32xf32>
    %186 = arith.truncf %185 : vector<32x32xf32> to vector<32x32xbf16>
    %187 = arith.truncf %178 : vector<32x32xf32> to vector<32x32xbf16>
    %188 = arith.truncf %179 : vector<32x32xf32> to vector<32x32xbf16>
    %189 = vector.extract_strided_slice %186 {offsets = [0, 0], sizes = [32, 8], strides = [1, 1]} : vector<32x32xbf16> to vector<32x8xbf16>
    %190 = vector.extract_strided_slice %187 {offsets = [0, 0], sizes = [32, 8], strides = [1, 1]} : vector<32x32xbf16> to vector<32x8xbf16>
    %cst_87 = arith.constant dense<0.000000e+00> : vector<32x32xf32>
    %191 = tpu.matmul %189, %190, %cst_87 {dimension_numbers = #tpu.dot_dimension_numbers<[1], [1], [0], [0], [0, 0, 1, 0], [], []>} : vector<32x8xbf16>, vector<32x8xbf16>, vector<32x32xf32> -> vector<32x32xf32>
    %192 = arith.addf %191, %0 : vector<32x32xf32>
    %cst_88 = arith.constant dense<0xFF800000> : vector<32xf32>
    %193 = vector.multi_reduction <maximumf>, %192, %cst_88 [1] : vector<32x32xf32> to vector<32xf32>
    %194 = vector.shape_cast %193 : vector<32xf32> to vector<32x1xf32>
    %195 = vector.broadcast %194 : vector<32x1xf32> to vector<32x32xf32>
    %196 = arith.subf %192, %195 : vector<32x32xf32>
    %197 = math.exp %196 : vector<32x32xf32>
    %cst_89 = arith.constant dense<0.000000e+00> : vector<32xf32>
    %198 = vector.multi_reduction <add>, %197, %cst_89 [1] : vector<32x32xf32> to vector<32xf32>
    %199 = vector.shape_cast %198 : vector<32xf32> to vector<32x1xf32>
    %200 = tpu.reciprocal %199 {approx = true} : vector<32x1xf32> -> vector<32x1xf32>
    %201 = vector.broadcast %200 : vector<32x1xf32> to vector<32x32xf32>
    %202 = arith.mulf %197, %201 : vector<32x32xf32>
    %203 = vector.extract_strided_slice %188 {offsets = [0, 0], sizes = [32, 8], strides = [1, 1]} : vector<32x32xbf16> to vector<32x8xbf16>
    %204 = arith.truncf %202 : vector<32x32xf32> to vector<32x32xbf16>
    %cst_90 = arith.constant dense<0.000000e+00> : vector<32x8xf32>
    %205 = tpu.matmul %204, %203, %cst_90 {dimension_numbers = #tpu.dot_dimension_numbers<[1], [0], [0], [1], [0, 0, 1, 1], [], []>} : vector<32x32xbf16>, vector<32x8xbf16>, vector<32x8xf32> -> vector<32x8xf32>
    %206 = vector.extract_strided_slice %186 {offsets = [0, 8], sizes = [32, 8], strides = [1, 1]} : vector<32x32xbf16> to vector<32x8xbf16>
    %207 = vector.extract_strided_slice %187 {offsets = [0, 8], sizes = [32, 8], strides = [1, 1]} : vector<32x32xbf16> to vector<32x8xbf16>
    %cst_91 = arith.constant dense<0.000000e+00> : vector<32x32xf32>
    %208 = tpu.matmul %206, %207, %cst_91 {dimension_numbers = #tpu.dot_dimension_numbers<[1], [1], [0], [0], [0, 0, 1, 0], [], []>} : vector<32x8xbf16>, vector<32x8xbf16>, vector<32x32xf32> -> vector<32x32xf32>
    %209 = arith.addf %208, %0 : vector<32x32xf32>
    %cst_92 = arith.constant dense<0xFF800000> : vector<32xf32>
    %210 = vector.multi_reduction <maximumf>, %209, %cst_92 [1] : vector<32x32xf32> to vector<32xf32>
    %211 = vector.shape_cast %210 : vector<32xf32> to vector<32x1xf32>
    %212 = vector.broadcast %211 : vector<32x1xf32> to vector<32x32xf32>
    %213 = arith.subf %209, %212 : vector<32x32xf32>
    %214 = math.exp %213 : vector<32x32xf32>
    %cst_93 = arith.constant dense<0.000000e+00> : vector<32xf32>
    %215 = vector.multi_reduction <add>, %214, %cst_93 [1] : vector<32x32xf32> to vector<32xf32>
    %216 = vector.shape_cast %215 : vector<32xf32> to vector<32x1xf32>
    %217 = tpu.reciprocal %216 {approx = true} : vector<32x1xf32> -> vector<32x1xf32>
    %218 = vector.broadcast %217 : vector<32x1xf32> to vector<32x32xf32>
    %219 = arith.mulf %214, %218 : vector<32x32xf32>
    %220 = vector.extract_strided_slice %188 {offsets = [0, 8], sizes = [32, 8], strides = [1, 1]} : vector<32x32xbf16> to vector<32x8xbf16>
    %221 = arith.truncf %219 : vector<32x32xf32> to vector<32x32xbf16>
    %cst_94 = arith.constant dense<0.000000e+00> : vector<32x8xf32>
    %222 = tpu.matmul %221, %220, %cst_94 {dimension_numbers = #tpu.dot_dimension_numbers<[1], [0], [0], [1], [0, 0, 1, 1], [], []>} : vector<32x32xbf16>, vector<32x8xbf16>, vector<32x8xf32> -> vector<32x8xf32>
    %223 = vector.extract_strided_slice %186 {offsets = [0, 16], sizes = [32, 8], strides = [1, 1]} : vector<32x32xbf16> to vector<32x8xbf16>
    %224 = vector.extract_strided_slice %187 {offsets = [0, 16], sizes = [32, 8], strides = [1, 1]} : vector<32x32xbf16> to vector<32x8xbf16>
    %cst_95 = arith.constant dense<0.000000e+00> : vector<32x32xf32>
    %225 = tpu.matmul %223, %224, %cst_95 {dimension_numbers = #tpu.dot_dimension_numbers<[1], [1], [0], [0], [0, 0, 1, 0], [], []>} : vector<32x8xbf16>, vector<32x8xbf16>, vector<32x32xf32> -> vector<32x32xf32>
    %226 = arith.addf %225, %0 : vector<32x32xf32>
    %cst_96 = arith.constant dense<0xFF800000> : vector<32xf32>
    %227 = vector.multi_reduction <maximumf>, %226, %cst_96 [1] : vector<32x32xf32> to vector<32xf32>
    %228 = vector.shape_cast %227 : vector<32xf32> to vector<32x1xf32>
    %229 = vector.broadcast %228 : vector<32x1xf32> to vector<32x32xf32>
    %230 = arith.subf %226, %229 : vector<32x32xf32>
    %231 = math.exp %230 : vector<32x32xf32>
    %cst_97 = arith.constant dense<0.000000e+00> : vector<32xf32>
    %232 = vector.multi_reduction <add>, %231, %cst_97 [1] : vector<32x32xf32> to vector<32xf32>
    %233 = vector.shape_cast %232 : vector<32xf32> to vector<32x1xf32>
    %234 = tpu.reciprocal %233 {approx = true} : vector<32x1xf32> -> vector<32x1xf32>
    %235 = vector.broadcast %234 : vector<32x1xf32> to vector<32x32xf32>
    %236 = arith.mulf %231, %235 : vector<32x32xf32>
    %237 = vector.extract_strided_slice %188 {offsets = [0, 16], sizes = [32, 8], strides = [1, 1]} : vector<32x32xbf16> to vector<32x8xbf16>
    %238 = arith.truncf %236 : vector<32x32xf32> to vector<32x32xbf16>
    %cst_98 = arith.constant dense<0.000000e+00> : vector<32x8xf32>
    %239 = tpu.matmul %238, %237, %cst_98 {dimension_numbers = #tpu.dot_dimension_numbers<[1], [0], [0], [1], [0, 0, 1, 1], [], []>} : vector<32x32xbf16>, vector<32x8xbf16>, vector<32x8xf32> -> vector<32x8xf32>
    %240 = vector.extract_strided_slice %186 {offsets = [0, 24], sizes = [32, 8], strides = [1, 1]} : vector<32x32xbf16> to vector<32x8xbf16>
    %241 = vector.extract_strided_slice %187 {offsets = [0, 24], sizes = [32, 8], strides = [1, 1]} : vector<32x32xbf16> to vector<32x8xbf16>
    %cst_99 = arith.constant dense<0.000000e+00> : vector<32x32xf32>
    %242 = tpu.matmul %240, %241, %cst_99 {dimension_numbers = #tpu.dot_dimension_numbers<[1], [1], [0], [0], [0, 0, 1, 0], [], []>} : vector<32x8xbf16>, vector<32x8xbf16>, vector<32x32xf32> -> vector<32x32xf32>
    %243 = arith.addf %242, %0 : vector<32x32xf32>
    %cst_100 = arith.constant dense<0xFF800000> : vector<32xf32>
    %244 = vector.multi_reduction <maximumf>, %243, %cst_100 [1] : vector<32x32xf32> to vector<32xf32>
    %245 = vector.shape_cast %244 : vector<32xf32> to vector<32x1xf32>
    %246 = vector.broadcast %245 : vector<32x1xf32> to vector<32x32xf32>
    %247 = arith.subf %243, %246 : vector<32x32xf32>
    %248 = math.exp %247 : vector<32x32xf32>
    %cst_101 = arith.constant dense<0.000000e+00> : vector<32xf32>
    %249 = vector.multi_reduction <add>, %248, %cst_101 [1] : vector<32x32xf32> to vector<32xf32>
    %250 = vector.shape_cast %249 : vector<32xf32> to vector<32x1xf32>
    %251 = tpu.reciprocal %250 {approx = true} : vector<32x1xf32> -> vector<32x1xf32>
    %252 = vector.broadcast %251 : vector<32x1xf32> to vector<32x32xf32>
    %253 = arith.mulf %248, %252 : vector<32x32xf32>
    %254 = vector.extract_strided_slice %188 {offsets = [0, 24], sizes = [32, 8], strides = [1, 1]} : vector<32x32xbf16> to vector<32x8xbf16>
    %255 = arith.truncf %253 : vector<32x32xf32> to vector<32x32xbf16>
    %cst_102 = arith.constant dense<0.000000e+00> : vector<32x8xf32>
    %256 = tpu.matmul %255, %254, %cst_102 {dimension_numbers = #tpu.dot_dimension_numbers<[1], [0], [0], [1], [0, 0, 1, 1], [], []>} : vector<32x32xbf16>, vector<32x8xbf16>, vector<32x8xf32> -> vector<32x8xf32>
    %257 = tpu.concatenate %205, %222, %239, %256 in 1 : vector<32x8xf32>, vector<32x8xf32>, vector<32x8xf32>, vector<32x8xf32> -> vector<32x32xf32>
    %258 = arith.truncf %257 : vector<32x32xf32> to vector<32x32xbf16>
    %cst_103 = arith.constant dense<0.000000e+00> : vector<32x32xf32>
    %259 = tpu.matmul %258, %181, %cst_103 {dimension_numbers = #tpu.dot_dimension_numbers<[1], [0], [0], [1], [0, 0, 1, 1], [], []>} : vector<32x32xbf16>, vector<32x32xbf16>, vector<32x32xf32> -> vector<32x32xf32>
    %260 = vector.broadcast %183 : vector<1x32xf32> to vector<32x32xf32>
    %261 = arith.addf %259, %260 : vector<32x32xf32>
    %262 = arith.addf %168, %261 : vector<32x32xf32>
    %c1_104 = arith.constant 1 : index
    %c0_105 = arith.constant 0 : index
    %c0_106 = arith.constant 0 : index
    %263 = vector.load %arg9[%c1_104, %c0_105, %c0_106] : memref<2x1x32xf32, #tpu.memory_space<vmem>>, vector<1x1x32xf32>
    %264 = vector.shape_cast %263 : vector<1x1x32xf32> to vector<1x32xf32>
    %c1_107 = arith.constant 1 : index
    %c0_108 = arith.constant 0 : index
    %c0_109 = arith.constant 0 : index
    %265 = vector.load %arg10[%c1_107, %c0_108, %c0_109] : memref<2x1x32xf32, #tpu.memory_space<vmem>>, vector<1x1x32xf32>
    %266 = vector.shape_cast %265 : vector<1x1x32xf32> to vector<1x32xf32>
    %cst_110 = arith.constant dense<0.000000e+00> : vector<32xf32>
    %267 = vector.multi_reduction <add>, %262, %cst_110 [1] : vector<32x32xf32> to vector<32xf32>
    %268 = vector.shape_cast %267 : vector<32xf32> to vector<32x1xf32>
    %cst_111 = arith.constant 3.200000e+01 : f32
    %269 = vector.broadcast %cst_111 : f32 to vector<32x1xf32>
    %270 = arith.divf %268, %269 : vector<32x1xf32>
    %271 = vector.broadcast %270 : vector<32x1xf32> to vector<32x32xf32>
    %272 = arith.subf %262, %271 : vector<32x32xf32>
    %273 = arith.mulf %272, %272 : vector<32x32xf32>
    %cst_112 = arith.constant dense<0.000000e+00> : vector<32xf32>
    %274 = vector.multi_reduction <add>, %273, %cst_112 [1] : vector<32x32xf32> to vector<32xf32>
    %275 = vector.shape_cast %274 : vector<32xf32> to vector<32x1xf32>
    %cst_113 = arith.constant 3.200000e+01 : f32
    %276 = vector.broadcast %cst_113 : f32 to vector<32x1xf32>
    %277 = arith.divf %275, %276 : vector<32x1xf32>
    %278 = vector.broadcast %270 : vector<32x1xf32> to vector<32x32xf32>
    %279 = arith.subf %262, %278 : vector<32x32xf32>
    %cst_114 = arith.constant 9.99999974E-6 : f32
    %280 = vector.broadcast %cst_114 : f32 to vector<32x1xf32>
    %281 = arith.addf %277, %280 : vector<32x1xf32>
    %282 = math.rsqrt %281 : vector<32x1xf32>
    %283 = vector.broadcast %282 : vector<32x1xf32> to vector<32x32xf32>
    %284 = arith.mulf %279, %283 : vector<32x32xf32>
    %285 = vector.broadcast %264 : vector<1x32xf32> to vector<32x32xf32>
    %286 = arith.mulf %284, %285 : vector<32x32xf32>
    %287 = vector.broadcast %266 : vector<1x32xf32> to vector<32x32xf32>
    %288 = arith.addf %286, %287 : vector<32x32xf32>
    %c1_115 = arith.constant 1 : index
    %c0_116 = arith.constant 0 : index
    %c0_117 = arith.constant 0 : index
    %289 = vector.load %arg11[%c1_115, %c0_116, %c0_117] : memref<2x32x64xbf16, #tpu.memory_space<vmem>>, vector<1x32x64xbf16>
    %290 = vector.shape_cast %289 : vector<1x32x64xbf16> to vector<32x64xbf16>
    %c1_118 = arith.constant 1 : index
    %c0_119 = arith.constant 0 : index
    %c0_120 = arith.constant 0 : index
    %291 = vector.load %arg12[%c1_118, %c0_119, %c0_120] : memref<2x1x64xf32, #tpu.memory_space<vmem>>, vector<1x1x64xf32>
    %292 = vector.shape_cast %291 : vector<1x1x64xf32> to vector<1x64xf32>
    %c1_121 = arith.constant 1 : index
    %c0_122 = arith.constant 0 : index
    %c0_123 = arith.constant 0 : index
    %293 = vector.load %arg13[%c1_121, %c0_122, %c0_123] : memref<2x64x32xbf16, #tpu.memory_space<vmem>>, vector<1x64x32xbf16>
    %294 = vector.shape_cast %293 : vector<1x64x32xbf16> to vector<64x32xbf16>
    %c1_124 = arith.constant 1 : index
    %c0_125 = arith.constant 0 : index
    %c0_126 = arith.constant 0 : index
    %295 = vector.load %arg14[%c1_124, %c0_125, %c0_126] : memref<2x1x32xf32, #tpu.memory_space<vmem>>, vector<1x1x32xf32>
    %296 = vector.shape_cast %295 : vector<1x1x32xf32> to vector<1x32xf32>
    %297 = arith.truncf %288 : vector<32x32xf32> to vector<32x32xbf16>
    %cst_127 = arith.constant dense<0.000000e+00> : vector<32x64xf32>
    %298 = tpu.matmul %297, %290, %cst_127 {dimension_numbers = #tpu.dot_dimension_numbers<[1], [0], [0], [1], [0, 0, 1, 1], [], []>} : vector<32x32xbf16>, vector<32x64xbf16>, vector<32x64xf32> -> vector<32x64xf32>
    %299 = vector.broadcast %292 : vector<1x64xf32> to vector<32x64xf32>
    %300 = arith.addf %298, %299 : vector<32x64xf32>
    %cst_128 = arith.constant 0.000000e+00 : f32
    %301 = vector.broadcast %cst_128 : f32 to vector<32x64xf32>
    %302 = arith.maximumf %300, %301 : vector<32x64xf32>
    %303 = arith.truncf %302 : vector<32x64xf32> to vector<32x64xbf16>
    %cst_129 = arith.constant dense<0.000000e+00> : vector<32x32xf32>
    %304 = tpu.matmul %303, %294, %cst_129 {dimension_numbers = #tpu.dot_dimension_numbers<[1], [0], [0], [1], [0, 0, 1, 1], [], []>} : vector<32x64xbf16>, vector<64x32xbf16>, vector<32x32xf32> -> vector<32x32xf32>
    %305 = vector.broadcast %296 : vector<1x32xf32> to vector<32x32xf32>
    %306 = arith.addf %304, %305 : vector<32x32xf32>
    %307 = arith.addf %288, %306 : vector<32x32xf32>
    %c1_130 = arith.constant 1 : index
    %c0_131 = arith.constant 0 : index
    %c0_132 = arith.constant 0 : index
    %308 = vector.load %arg15[%c1_130, %c0_131, %c0_132] : memref<2x1x32xf32, #tpu.memory_space<vmem>>, vector<1x1x32xf32>
    %309 = vector.shape_cast %308 : vector<1x1x32xf32> to vector<1x32xf32>
    %c1_133 = arith.constant 1 : index
    %c0_134 = arith.constant 0 : index
    %c0_135 = arith.constant 0 : index
    %310 = vector.load %arg16[%c1_133, %c0_134, %c0_135] : memref<2x1x32xf32, #tpu.memory_space<vmem>>, vector<1x1x32xf32>
    %311 = vector.shape_cast %310 : vector<1x1x32xf32> to vector<1x32xf32>
    %cst_136 = arith.constant dense<0.000000e+00> : vector<32xf32>
    %312 = vector.multi_reduction <add>, %307, %cst_136 [1] : vector<32x32xf32> to vector<32xf32>
    %313 = vector.shape_cast %312 : vector<32xf32> to vector<32x1xf32>
    %cst_137 = arith.constant 3.200000e+01 : f32
    %314 = vector.broadcast %cst_137 : f32 to vector<32x1xf32>
    %315 = arith.divf %313, %314 : vector<32x1xf32>
    %316 = vector.broadcast %315 : vector<32x1xf32> to vector<32x32xf32>
    %317 = arith.subf %307, %316 : vector<32x32xf32>
    %318 = arith.mulf %317, %317 : vector<32x32xf32>
    %cst_138 = arith.constant dense<0.000000e+00> : vector<32xf32>
    %319 = vector.multi_reduction <add>, %318, %cst_138 [1] : vector<32x32xf32> to vector<32xf32>
    %320 = vector.shape_cast %319 : vector<32xf32> to vector<32x1xf32>
    %cst_139 = arith.constant 3.200000e+01 : f32
    %321 = vector.broadcast %cst_139 : f32 to vector<32x1xf32>
    %322 = arith.divf %320, %321 : vector<32x1xf32>
    %323 = vector.broadcast %315 : vector<32x1xf32> to vector<32x32xf32>
    %324 = arith.subf %307, %323 : vector<32x32xf32>
    %cst_140 = arith.constant 9.99999974E-6 : f32
    %325 = vector.broadcast %cst_140 : f32 to vector<32x1xf32>
    %326 = arith.addf %322, %325 : vector<32x1xf32>
    %327 = math.rsqrt %326 : vector<32x1xf32>
    %328 = vector.broadcast %327 : vector<32x1xf32> to vector<32x32xf32>
    %329 = arith.mulf %324, %328 : vector<32x32xf32>
    %330 = vector.broadcast %309 : vector<1x32xf32> to vector<32x32xf32>
    %331 = arith.mulf %329, %330 : vector<32x32xf32>
    %332 = vector.broadcast %311 : vector<1x32xf32> to vector<32x32xf32>
    %333 = arith.addf %331, %332 : vector<32x32xf32>
    %c0_141 = arith.constant 0 : index
    %c0_142 = arith.constant 0 : index
    %334 = vector.load %arg17[%c0_141, %c0_142] : memref<1x32xf32, #tpu.memory_space<vmem>>, vector<1x32xf32>
    %c0_143 = arith.constant 0 : index
    %c0_144 = arith.constant 0 : index
    %335 = vector.load %arg18[%c0_143, %c0_144] : memref<1x32xf32, #tpu.memory_space<vmem>>, vector<1x32xf32>
    %cst_145 = arith.constant dense<0.000000e+00> : vector<32xf32>
    %336 = vector.multi_reduction <add>, %333, %cst_145 [1] : vector<32x32xf32> to vector<32xf32>
    %337 = vector.shape_cast %336 : vector<32xf32> to vector<32x1xf32>
    %cst_146 = arith.constant 3.200000e+01 : f32
    %338 = vector.broadcast %cst_146 : f32 to vector<32x1xf32>
    %339 = arith.divf %337, %338 : vector<32x1xf32>
    %340 = vector.broadcast %339 : vector<32x1xf32> to vector<32x32xf32>
    %341 = arith.subf %333, %340 : vector<32x32xf32>
    %342 = arith.mulf %341, %341 : vector<32x32xf32>
    %cst_147 = arith.constant dense<0.000000e+00> : vector<32xf32>
    %343 = vector.multi_reduction <add>, %342, %cst_147 [1] : vector<32x32xf32> to vector<32xf32>
    %344 = vector.shape_cast %343 : vector<32xf32> to vector<32x1xf32>
    %cst_148 = arith.constant 3.200000e+01 : f32
    %345 = vector.broadcast %cst_148 : f32 to vector<32x1xf32>
    %346 = arith.divf %344, %345 : vector<32x1xf32>
    %347 = vector.broadcast %339 : vector<32x1xf32> to vector<32x32xf32>
    %348 = arith.subf %333, %347 : vector<32x32xf32>
    %cst_149 = arith.constant 9.99999974E-6 : f32
    %349 = vector.broadcast %cst_149 : f32 to vector<32x1xf32>
    %350 = arith.addf %346, %349 : vector<32x1xf32>
    %351 = math.rsqrt %350 : vector<32x1xf32>
    %352 = vector.broadcast %351 : vector<32x1xf32> to vector<32x32xf32>
    %353 = arith.mulf %348, %352 : vector<32x32xf32>
    %354 = vector.broadcast %334 : vector<1x32xf32> to vector<32x32xf32>
    %355 = arith.mulf %353, %354 : vector<32x32xf32>
    %356 = vector.broadcast %335 : vector<1x32xf32> to vector<32x32xf32>
    %357 = arith.addf %355, %356 : vector<32x32xf32>
    %c0_150 = arith.constant 0 : index
    %c0_151 = arith.constant 0 : index
    %358 = vector.load %arg1[%c0_150, %c0_151] : memref<16x32xf32, #tpu.memory_space<vmem>>, vector<16x32xf32>
    %c0_152 = arith.constant 0 : index
    %c0_153 = arith.constant 0 : index
    %c0_154 = arith.constant 0 : index
    %359 = vector.load %arg19[%c0_152, %c0_153, %c0_154] : memref<2x32x96xbf16, #tpu.memory_space<vmem>>, vector<1x32x96xbf16>
    %360 = vector.shape_cast %359 : vector<1x32x96xbf16> to vector<32x96xbf16>
    %361 = arith.truncf %358 : vector<16x32xf32> to vector<16x32xbf16>
    %cst_155 = arith.constant dense<0.000000e+00> : vector<16x96xf32>
    %362 = tpu.matmul %361, %360, %cst_155 {dimension_numbers = #tpu.dot_dimension_numbers<[1], [0], [0], [1], [0, 0, 1, 1], [], []>} : vector<16x32xbf16>, vector<32x96xbf16>, vector<16x96xf32> -> vector<16x96xf32>
    %c0_156 = arith.constant 0 : index
    %c0_157 = arith.constant 0 : index
    %c0_158 = arith.constant 0 : index
    %363 = vector.load %arg20[%c0_156, %c0_157, %c0_158] : memref<2x1x96xf32, #tpu.memory_space<vmem>>, vector<1x1x96xf32>
    %364 = vector.shape_cast %363 : vector<1x1x96xf32> to vector<1x96xf32>
    %365 = vector.broadcast %364 : vector<1x96xf32> to vector<16x96xf32>
    %366 = arith.addf %362, %365 : vector<16x96xf32>
    %367 = vector.extract_strided_slice %366 {offsets = [0, 0], sizes = [16, 32], strides = [1, 1]} : vector<16x96xf32> to vector<16x32xf32>
    %368 = vector.extract_strided_slice %366 {offsets = [0, 32], sizes = [16, 32], strides = [1, 1]} : vector<16x96xf32> to vector<16x32xf32>
    %369 = vector.extract_strided_slice %366 {offsets = [0, 64], sizes = [16, 32], strides = [1, 1]} : vector<16x96xf32> to vector<16x32xf32>
    %c0_159 = arith.constant 0 : index
    %c0_160 = arith.constant 0 : index
    %c0_161 = arith.constant 0 : index
    %370 = vector.load %arg21[%c0_159, %c0_160, %c0_161] : memref<2x32x32xbf16, #tpu.memory_space<vmem>>, vector<1x32x32xbf16>
    %371 = vector.shape_cast %370 : vector<1x32x32xbf16> to vector<32x32xbf16>
    %c0_162 = arith.constant 0 : index
    %c0_163 = arith.constant 0 : index
    %c0_164 = arith.constant 0 : index
    %372 = vector.load %arg22[%c0_162, %c0_163, %c0_164] : memref<2x1x32xf32, #tpu.memory_space<vmem>>, vector<1x1x32xf32>
    %373 = vector.shape_cast %372 : vector<1x1x32xf32> to vector<1x32xf32>
    %cst_165 = arith.constant 0.353553385 : f32
    %374 = vector.broadcast %cst_165 : f32 to vector<16x32xf32>
    %375 = arith.mulf %367, %374 : vector<16x32xf32>
    %376 = arith.truncf %375 : vector<16x32xf32> to vector<16x32xbf16>
    %377 = arith.truncf %368 : vector<16x32xf32> to vector<16x32xbf16>
    %378 = arith.truncf %369 : vector<16x32xf32> to vector<16x32xbf16>
    %379 = vector.extract_strided_slice %376 {offsets = [0, 0], sizes = [16, 8], strides = [1, 1]} : vector<16x32xbf16> to vector<16x8xbf16>
    %380 = vector.extract_strided_slice %377 {offsets = [0, 0], sizes = [16, 8], strides = [1, 1]} : vector<16x32xbf16> to vector<16x8xbf16>
    %cst_166 = arith.constant dense<0.000000e+00> : vector<16x16xf32>
    %381 = tpu.matmul %379, %380, %cst_166 {dimension_numbers = #tpu.dot_dimension_numbers<[1], [1], [0], [0], [0, 0, 1, 0], [], []>} : vector<16x8xbf16>, vector<16x8xbf16>, vector<16x16xf32> -> vector<16x16xf32>
    %382 = arith.addf %381, %1 : vector<16x16xf32>
    %cst_167 = arith.constant dense<0xFF800000> : vector<16xf32>
    %383 = vector.multi_reduction <maximumf>, %382, %cst_167 [1] : vector<16x16xf32> to vector<16xf32>
    %384 = vector.shape_cast %383 : vector<16xf32> to vector<16x1xf32>
    %385 = vector.broadcast %384 : vector<16x1xf32> to vector<16x16xf32>
    %386 = arith.subf %382, %385 : vector<16x16xf32>
    %387 = math.exp %386 : vector<16x16xf32>
    %cst_168 = arith.constant dense<0.000000e+00> : vector<16xf32>
    %388 = vector.multi_reduction <add>, %387, %cst_168 [1] : vector<16x16xf32> to vector<16xf32>
    %389 = vector.shape_cast %388 : vector<16xf32> to vector<16x1xf32>
    %390 = tpu.reciprocal %389 {approx = true} : vector<16x1xf32> -> vector<16x1xf32>
    %391 = vector.broadcast %390 : vector<16x1xf32> to vector<16x16xf32>
    %392 = arith.mulf %387, %391 : vector<16x16xf32>
    %393 = vector.extract_strided_slice %378 {offsets = [0, 0], sizes = [16, 8], strides = [1, 1]} : vector<16x32xbf16> to vector<16x8xbf16>
    %394 = arith.truncf %392 : vector<16x16xf32> to vector<16x16xbf16>
    %cst_169 = arith.constant dense<0.000000e+00> : vector<16x8xf32>
    %395 = tpu.matmul %394, %393, %cst_169 {dimension_numbers = #tpu.dot_dimension_numbers<[1], [0], [0], [1], [0, 0, 1, 1], [], []>} : vector<16x16xbf16>, vector<16x8xbf16>, vector<16x8xf32> -> vector<16x8xf32>
    %396 = vector.extract_strided_slice %376 {offsets = [0, 8], sizes = [16, 8], strides = [1, 1]} : vector<16x32xbf16> to vector<16x8xbf16>
    %397 = vector.extract_strided_slice %377 {offsets = [0, 8], sizes = [16, 8], strides = [1, 1]} : vector<16x32xbf16> to vector<16x8xbf16>
    %cst_170 = arith.constant dense<0.000000e+00> : vector<16x16xf32>
    %398 = tpu.matmul %396, %397, %cst_170 {dimension_numbers = #tpu.dot_dimension_numbers<[1], [1], [0], [0], [0, 0, 1, 0], [], []>} : vector<16x8xbf16>, vector<16x8xbf16>, vector<16x16xf32> -> vector<16x16xf32>
    %399 = arith.addf %398, %1 : vector<16x16xf32>
    %cst_171 = arith.constant dense<0xFF800000> : vector<16xf32>
    %400 = vector.multi_reduction <maximumf>, %399, %cst_171 [1] : vector<16x16xf32> to vector<16xf32>
    %401 = vector.shape_cast %400 : vector<16xf32> to vector<16x1xf32>
    %402 = vector.broadcast %401 : vector<16x1xf32> to vector<16x16xf32>
    %403 = arith.subf %399, %402 : vector<16x16xf32>
    %404 = math.exp %403 : vector<16x16xf32>
    %cst_172 = arith.constant dense<0.000000e+00> : vector<16xf32>
    %405 = vector.multi_reduction <add>, %404, %cst_172 [1] : vector<16x16xf32> to vector<16xf32>
    %406 = vector.shape_cast %405 : vector<16xf32> to vector<16x1xf32>
    %407 = tpu.reciprocal %406 {approx = true} : vector<16x1xf32> -> vector<16x1xf32>
    %408 = vector.broadcast %407 : vector<16x1xf32> to vector<16x16xf32>
    %409 = arith.mulf %404, %408 : vector<16x16xf32>
    %410 = vector.extract_strided_slice %378 {offsets = [0, 8], sizes = [16, 8], strides = [1, 1]} : vector<16x32xbf16> to vector<16x8xbf16>
    %411 = arith.truncf %409 : vector<16x16xf32> to vector<16x16xbf16>
    %cst_173 = arith.constant dense<0.000000e+00> : vector<16x8xf32>
    %412 = tpu.matmul %411, %410, %cst_173 {dimension_numbers = #tpu.dot_dimension_numbers<[1], [0], [0], [1], [0, 0, 1, 1], [], []>} : vector<16x16xbf16>, vector<16x8xbf16>, vector<16x8xf32> -> vector<16x8xf32>
    %413 = vector.extract_strided_slice %376 {offsets = [0, 16], sizes = [16, 8], strides = [1, 1]} : vector<16x32xbf16> to vector<16x8xbf16>
    %414 = vector.extract_strided_slice %377 {offsets = [0, 16], sizes = [16, 8], strides = [1, 1]} : vector<16x32xbf16> to vector<16x8xbf16>
    %cst_174 = arith.constant dense<0.000000e+00> : vector<16x16xf32>
    %415 = tpu.matmul %413, %414, %cst_174 {dimension_numbers = #tpu.dot_dimension_numbers<[1], [1], [0], [0], [0, 0, 1, 0], [], []>} : vector<16x8xbf16>, vector<16x8xbf16>, vector<16x16xf32> -> vector<16x16xf32>
    %416 = arith.addf %415, %1 : vector<16x16xf32>
    %cst_175 = arith.constant dense<0xFF800000> : vector<16xf32>
    %417 = vector.multi_reduction <maximumf>, %416, %cst_175 [1] : vector<16x16xf32> to vector<16xf32>
    %418 = vector.shape_cast %417 : vector<16xf32> to vector<16x1xf32>
    %419 = vector.broadcast %418 : vector<16x1xf32> to vector<16x16xf32>
    %420 = arith.subf %416, %419 : vector<16x16xf32>
    %421 = math.exp %420 : vector<16x16xf32>
    %cst_176 = arith.constant dense<0.000000e+00> : vector<16xf32>
    %422 = vector.multi_reduction <add>, %421, %cst_176 [1] : vector<16x16xf32> to vector<16xf32>
    %423 = vector.shape_cast %422 : vector<16xf32> to vector<16x1xf32>
    %424 = tpu.reciprocal %423 {approx = true} : vector<16x1xf32> -> vector<16x1xf32>
    %425 = vector.broadcast %424 : vector<16x1xf32> to vector<16x16xf32>
    %426 = arith.mulf %421, %425 : vector<16x16xf32>
    %427 = vector.extract_strided_slice %378 {offsets = [0, 16], sizes = [16, 8], strides = [1, 1]} : vector<16x32xbf16> to vector<16x8xbf16>
    %428 = arith.truncf %426 : vector<16x16xf32> to vector<16x16xbf16>
    %cst_177 = arith.constant dense<0.000000e+00> : vector<16x8xf32>
    %429 = tpu.matmul %428, %427, %cst_177 {dimension_numbers = #tpu.dot_dimension_numbers<[1], [0], [0], [1], [0, 0, 1, 1], [], []>} : vector<16x16xbf16>, vector<16x8xbf16>, vector<16x8xf32> -> vector<16x8xf32>
    %430 = vector.extract_strided_slice %376 {offsets = [0, 24], sizes = [16, 8], strides = [1, 1]} : vector<16x32xbf16> to vector<16x8xbf16>
    %431 = vector.extract_strided_slice %377 {offsets = [0, 24], sizes = [16, 8], strides = [1, 1]} : vector<16x32xbf16> to vector<16x8xbf16>
    %cst_178 = arith.constant dense<0.000000e+00> : vector<16x16xf32>
    %432 = tpu.matmul %430, %431, %cst_178 {dimension_numbers = #tpu.dot_dimension_numbers<[1], [1], [0], [0], [0, 0, 1, 0], [], []>} : vector<16x8xbf16>, vector<16x8xbf16>, vector<16x16xf32> -> vector<16x16xf32>
    %433 = arith.addf %432, %1 : vector<16x16xf32>
    %cst_179 = arith.constant dense<0xFF800000> : vector<16xf32>
    %434 = vector.multi_reduction <maximumf>, %433, %cst_179 [1] : vector<16x16xf32> to vector<16xf32>
    %435 = vector.shape_cast %434 : vector<16xf32> to vector<16x1xf32>
    %436 = vector.broadcast %435 : vector<16x1xf32> to vector<16x16xf32>
    %437 = arith.subf %433, %436 : vector<16x16xf32>
    %438 = math.exp %437 : vector<16x16xf32>
    %cst_180 = arith.constant dense<0.000000e+00> : vector<16xf32>
    %439 = vector.multi_reduction <add>, %438, %cst_180 [1] : vector<16x16xf32> to vector<16xf32>
    %440 = vector.shape_cast %439 : vector<16xf32> to vector<16x1xf32>
    %441 = tpu.reciprocal %440 {approx = true} : vector<16x1xf32> -> vector<16x1xf32>
    %442 = vector.broadcast %441 : vector<16x1xf32> to vector<16x16xf32>
    %443 = arith.mulf %438, %442 : vector<16x16xf32>
    %444 = vector.extract_strided_slice %378 {offsets = [0, 24], sizes = [16, 8], strides = [1, 1]} : vector<16x32xbf16> to vector<16x8xbf16>
    %445 = arith.truncf %443 : vector<16x16xf32> to vector<16x16xbf16>
    %cst_181 = arith.constant dense<0.000000e+00> : vector<16x8xf32>
    %446 = tpu.matmul %445, %444, %cst_181 {dimension_numbers = #tpu.dot_dimension_numbers<[1], [0], [0], [1], [0, 0, 1, 1], [], []>} : vector<16x16xbf16>, vector<16x8xbf16>, vector<16x8xf32> -> vector<16x8xf32>
    %447 = tpu.concatenate %395, %412, %429, %446 in 1 : vector<16x8xf32>, vector<16x8xf32>, vector<16x8xf32>, vector<16x8xf32> -> vector<16x32xf32>
    %448 = arith.truncf %447 : vector<16x32xf32> to vector<16x32xbf16>
    %cst_182 = arith.constant dense<0.000000e+00> : vector<16x32xf32>
    %449 = tpu.matmul %448, %371, %cst_182 {dimension_numbers = #tpu.dot_dimension_numbers<[1], [0], [0], [1], [0, 0, 1, 1], [], []>} : vector<16x32xbf16>, vector<32x32xbf16>, vector<16x32xf32> -> vector<16x32xf32>
    %450 = vector.broadcast %373 : vector<1x32xf32> to vector<16x32xf32>
    %451 = arith.addf %449, %450 : vector<16x32xf32>
    %452 = arith.addf %358, %451 : vector<16x32xf32>
    %c0_183 = arith.constant 0 : index
    %c0_184 = arith.constant 0 : index
    %c0_185 = arith.constant 0 : index
    %453 = vector.load %arg23[%c0_183, %c0_184, %c0_185] : memref<2x1x32xf32, #tpu.memory_space<vmem>>, vector<1x1x32xf32>
    %454 = vector.shape_cast %453 : vector<1x1x32xf32> to vector<1x32xf32>
    %c0_186 = arith.constant 0 : index
    %c0_187 = arith.constant 0 : index
    %c0_188 = arith.constant 0 : index
    %455 = vector.load %arg24[%c0_186, %c0_187, %c0_188] : memref<2x1x32xf32, #tpu.memory_space<vmem>>, vector<1x1x32xf32>
    %456 = vector.shape_cast %455 : vector<1x1x32xf32> to vector<1x32xf32>
    %cst_189 = arith.constant dense<0.000000e+00> : vector<16xf32>
    %457 = vector.multi_reduction <add>, %452, %cst_189 [1] : vector<16x32xf32> to vector<16xf32>
    %458 = vector.shape_cast %457 : vector<16xf32> to vector<16x1xf32>
    %cst_190 = arith.constant 3.200000e+01 : f32
    %459 = vector.broadcast %cst_190 : f32 to vector<16x1xf32>
    %460 = arith.divf %458, %459 : vector<16x1xf32>
    %461 = vector.broadcast %460 : vector<16x1xf32> to vector<16x32xf32>
    %462 = arith.subf %452, %461 : vector<16x32xf32>
    %463 = arith.mulf %462, %462 : vector<16x32xf32>
    %cst_191 = arith.constant dense<0.000000e+00> : vector<16xf32>
    %464 = vector.multi_reduction <add>, %463, %cst_191 [1] : vector<16x32xf32> to vector<16xf32>
    %465 = vector.shape_cast %464 : vector<16xf32> to vector<16x1xf32>
    %cst_192 = arith.constant 3.200000e+01 : f32
    %466 = vector.broadcast %cst_192 : f32 to vector<16x1xf32>
    %467 = arith.divf %465, %466 : vector<16x1xf32>
    %468 = vector.broadcast %460 : vector<16x1xf32> to vector<16x32xf32>
    %469 = arith.subf %452, %468 : vector<16x32xf32>
    %cst_193 = arith.constant 9.99999974E-6 : f32
    %470 = vector.broadcast %cst_193 : f32 to vector<16x1xf32>
    %471 = arith.addf %467, %470 : vector<16x1xf32>
    %472 = math.rsqrt %471 : vector<16x1xf32>
    %473 = vector.broadcast %472 : vector<16x1xf32> to vector<16x32xf32>
    %474 = arith.mulf %469, %473 : vector<16x32xf32>
    %475 = vector.broadcast %454 : vector<1x32xf32> to vector<16x32xf32>
    %476 = arith.mulf %474, %475 : vector<16x32xf32>
    %477 = vector.broadcast %456 : vector<1x32xf32> to vector<16x32xf32>
    %478 = arith.addf %476, %477 : vector<16x32xf32>
    %c0_194 = arith.constant 0 : index
    %c0_195 = arith.constant 0 : index
    %c0_196 = arith.constant 0 : index
    %479 = vector.load %arg25[%c0_194, %c0_195, %c0_196] : memref<2x32x32xbf16, #tpu.memory_space<vmem>>, vector<1x32x32xbf16>
    %480 = vector.shape_cast %479 : vector<1x32x32xbf16> to vector<32x32xbf16>
    %481 = arith.truncf %478 : vector<16x32xf32> to vector<16x32xbf16>
    %cst_197 = arith.constant dense<0.000000e+00> : vector<16x32xf32>
    %482 = tpu.matmul %481, %480, %cst_197 {dimension_numbers = #tpu.dot_dimension_numbers<[1], [0], [0], [1], [0, 0, 1, 1], [], []>} : vector<16x32xbf16>, vector<32x32xbf16>, vector<16x32xf32> -> vector<16x32xf32>
    %c0_198 = arith.constant 0 : index
    %c0_199 = arith.constant 0 : index
    %c0_200 = arith.constant 0 : index
    %483 = vector.load %arg26[%c0_198, %c0_199, %c0_200] : memref<2x1x32xf32, #tpu.memory_space<vmem>>, vector<1x1x32xf32>
    %484 = vector.shape_cast %483 : vector<1x1x32xf32> to vector<1x32xf32>
    %485 = vector.broadcast %484 : vector<1x32xf32> to vector<16x32xf32>
    %486 = arith.addf %482, %485 : vector<16x32xf32>
    %c0_201 = arith.constant 0 : index
    %c0_202 = arith.constant 0 : index
    %c0_203 = arith.constant 0 : index
    %487 = vector.load %arg27[%c0_201, %c0_202, %c0_203] : memref<2x32x64xbf16, #tpu.memory_space<vmem>>, vector<1x32x64xbf16>
    %488 = vector.shape_cast %487 : vector<1x32x64xbf16> to vector<32x64xbf16>
    %489 = arith.truncf %357 : vector<32x32xf32> to vector<32x32xbf16>
    %cst_204 = arith.constant dense<0.000000e+00> : vector<32x64xf32>
    %490 = tpu.matmul %489, %488, %cst_204 {dimension_numbers = #tpu.dot_dimension_numbers<[1], [0], [0], [1], [0, 0, 1, 1], [], []>} : vector<32x32xbf16>, vector<32x64xbf16>, vector<32x64xf32> -> vector<32x64xf32>
    %c0_205 = arith.constant 0 : index
    %c0_206 = arith.constant 0 : index
    %c0_207 = arith.constant 0 : index
    %491 = vector.load %arg28[%c0_205, %c0_206, %c0_207] : memref<2x1x64xf32, #tpu.memory_space<vmem>>, vector<1x1x64xf32>
    %492 = vector.shape_cast %491 : vector<1x1x64xf32> to vector<1x64xf32>
    %493 = vector.broadcast %492 : vector<1x64xf32> to vector<32x64xf32>
    %494 = arith.addf %490, %493 : vector<32x64xf32>
    %495 = vector.extract_strided_slice %494 {offsets = [0, 0], sizes = [32, 32], strides = [1, 1]} : vector<32x64xf32> to vector<32x32xf32>
    %496 = vector.extract_strided_slice %494 {offsets = [0, 32], sizes = [32, 32], strides = [1, 1]} : vector<32x64xf32> to vector<32x32xf32>
    %c0_208 = arith.constant 0 : index
    %c0_209 = arith.constant 0 : index
    %c0_210 = arith.constant 0 : index
    %497 = vector.load %arg29[%c0_208, %c0_209, %c0_210] : memref<2x32x32xbf16, #tpu.memory_space<vmem>>, vector<1x32x32xbf16>
    %498 = vector.shape_cast %497 : vector<1x32x32xbf16> to vector<32x32xbf16>
    %c0_211 = arith.constant 0 : index
    %c0_212 = arith.constant 0 : index
    %c0_213 = arith.constant 0 : index
    %499 = vector.load %arg30[%c0_211, %c0_212, %c0_213] : memref<2x1x32xf32, #tpu.memory_space<vmem>>, vector<1x1x32xf32>
    %500 = vector.shape_cast %499 : vector<1x1x32xf32> to vector<1x32xf32>
    %cst_214 = arith.constant 0.353553385 : f32
    %501 = vector.broadcast %cst_214 : f32 to vector<16x32xf32>
    %502 = arith.mulf %486, %501 : vector<16x32xf32>
    %503 = arith.truncf %502 : vector<16x32xf32> to vector<16x32xbf16>
    %504 = arith.truncf %495 : vector<32x32xf32> to vector<32x32xbf16>
    %505 = arith.truncf %496 : vector<32x32xf32> to vector<32x32xbf16>
    %506 = vector.extract_strided_slice %503 {offsets = [0, 0], sizes = [16, 8], strides = [1, 1]} : vector<16x32xbf16> to vector<16x8xbf16>
    %507 = vector.extract_strided_slice %504 {offsets = [0, 0], sizes = [32, 8], strides = [1, 1]} : vector<32x32xbf16> to vector<32x8xbf16>
    %cst_215 = arith.constant dense<0.000000e+00> : vector<16x32xf32>
    %508 = tpu.matmul %506, %507, %cst_215 {dimension_numbers = #tpu.dot_dimension_numbers<[1], [1], [0], [0], [0, 0, 1, 0], [], []>} : vector<16x8xbf16>, vector<32x8xbf16>, vector<16x32xf32> -> vector<16x32xf32>
    %509 = arith.addf %508, %2 : vector<16x32xf32>
    %cst_216 = arith.constant dense<0xFF800000> : vector<16xf32>
    %510 = vector.multi_reduction <maximumf>, %509, %cst_216 [1] : vector<16x32xf32> to vector<16xf32>
    %511 = vector.shape_cast %510 : vector<16xf32> to vector<16x1xf32>
    %512 = vector.broadcast %511 : vector<16x1xf32> to vector<16x32xf32>
    %513 = arith.subf %509, %512 : vector<16x32xf32>
    %514 = math.exp %513 : vector<16x32xf32>
    %cst_217 = arith.constant dense<0.000000e+00> : vector<16xf32>
    %515 = vector.multi_reduction <add>, %514, %cst_217 [1] : vector<16x32xf32> to vector<16xf32>
    %516 = vector.shape_cast %515 : vector<16xf32> to vector<16x1xf32>
    %517 = tpu.reciprocal %516 {approx = true} : vector<16x1xf32> -> vector<16x1xf32>
    %518 = vector.broadcast %517 : vector<16x1xf32> to vector<16x32xf32>
    %519 = arith.mulf %514, %518 : vector<16x32xf32>
    %520 = vector.extract_strided_slice %505 {offsets = [0, 0], sizes = [32, 8], strides = [1, 1]} : vector<32x32xbf16> to vector<32x8xbf16>
    %521 = arith.truncf %519 : vector<16x32xf32> to vector<16x32xbf16>
    %cst_218 = arith.constant dense<0.000000e+00> : vector<16x8xf32>
    %522 = tpu.matmul %521, %520, %cst_218 {dimension_numbers = #tpu.dot_dimension_numbers<[1], [0], [0], [1], [0, 0, 1, 1], [], []>} : vector<16x32xbf16>, vector<32x8xbf16>, vector<16x8xf32> -> vector<16x8xf32>
    %523 = vector.extract_strided_slice %503 {offsets = [0, 8], sizes = [16, 8], strides = [1, 1]} : vector<16x32xbf16> to vector<16x8xbf16>
    %524 = vector.extract_strided_slice %504 {offsets = [0, 8], sizes = [32, 8], strides = [1, 1]} : vector<32x32xbf16> to vector<32x8xbf16>
    %cst_219 = arith.constant dense<0.000000e+00> : vector<16x32xf32>
    %525 = tpu.matmul %523, %524, %cst_219 {dimension_numbers = #tpu.dot_dimension_numbers<[1], [1], [0], [0], [0, 0, 1, 0], [], []>} : vector<16x8xbf16>, vector<32x8xbf16>, vector<16x32xf32> -> vector<16x32xf32>
    %526 = arith.addf %525, %2 : vector<16x32xf32>
    %cst_220 = arith.constant dense<0xFF800000> : vector<16xf32>
    %527 = vector.multi_reduction <maximumf>, %526, %cst_220 [1] : vector<16x32xf32> to vector<16xf32>
    %528 = vector.shape_cast %527 : vector<16xf32> to vector<16x1xf32>
    %529 = vector.broadcast %528 : vector<16x1xf32> to vector<16x32xf32>
    %530 = arith.subf %526, %529 : vector<16x32xf32>
    %531 = math.exp %530 : vector<16x32xf32>
    %cst_221 = arith.constant dense<0.000000e+00> : vector<16xf32>
    %532 = vector.multi_reduction <add>, %531, %cst_221 [1] : vector<16x32xf32> to vector<16xf32>
    %533 = vector.shape_cast %532 : vector<16xf32> to vector<16x1xf32>
    %534 = tpu.reciprocal %533 {approx = true} : vector<16x1xf32> -> vector<16x1xf32>
    %535 = vector.broadcast %534 : vector<16x1xf32> to vector<16x32xf32>
    %536 = arith.mulf %531, %535 : vector<16x32xf32>
    %537 = vector.extract_strided_slice %505 {offsets = [0, 8], sizes = [32, 8], strides = [1, 1]} : vector<32x32xbf16> to vector<32x8xbf16>
    %538 = arith.truncf %536 : vector<16x32xf32> to vector<16x32xbf16>
    %cst_222 = arith.constant dense<0.000000e+00> : vector<16x8xf32>
    %539 = tpu.matmul %538, %537, %cst_222 {dimension_numbers = #tpu.dot_dimension_numbers<[1], [0], [0], [1], [0, 0, 1, 1], [], []>} : vector<16x32xbf16>, vector<32x8xbf16>, vector<16x8xf32> -> vector<16x8xf32>
    %540 = vector.extract_strided_slice %503 {offsets = [0, 16], sizes = [16, 8], strides = [1, 1]} : vector<16x32xbf16> to vector<16x8xbf16>
    %541 = vector.extract_strided_slice %504 {offsets = [0, 16], sizes = [32, 8], strides = [1, 1]} : vector<32x32xbf16> to vector<32x8xbf16>
    %cst_223 = arith.constant dense<0.000000e+00> : vector<16x32xf32>
    %542 = tpu.matmul %540, %541, %cst_223 {dimension_numbers = #tpu.dot_dimension_numbers<[1], [1], [0], [0], [0, 0, 1, 0], [], []>} : vector<16x8xbf16>, vector<32x8xbf16>, vector<16x32xf32> -> vector<16x32xf32>
    %543 = arith.addf %542, %2 : vector<16x32xf32>
    %cst_224 = arith.constant dense<0xFF800000> : vector<16xf32>
    %544 = vector.multi_reduction <maximumf>, %543, %cst_224 [1] : vector<16x32xf32> to vector<16xf32>
    %545 = vector.shape_cast %544 : vector<16xf32> to vector<16x1xf32>
    %546 = vector.broadcast %545 : vector<16x1xf32> to vector<16x32xf32>
    %547 = arith.subf %543, %546 : vector<16x32xf32>
    %548 = math.exp %547 : vector<16x32xf32>
    %cst_225 = arith.constant dense<0.000000e+00> : vector<16xf32>
    %549 = vector.multi_reduction <add>, %548, %cst_225 [1] : vector<16x32xf32> to vector<16xf32>
    %550 = vector.shape_cast %549 : vector<16xf32> to vector<16x1xf32>
    %551 = tpu.reciprocal %550 {approx = true} : vector<16x1xf32> -> vector<16x1xf32>
    %552 = vector.broadcast %551 : vector<16x1xf32> to vector<16x32xf32>
    %553 = arith.mulf %548, %552 : vector<16x32xf32>
    %554 = vector.extract_strided_slice %505 {offsets = [0, 16], sizes = [32, 8], strides = [1, 1]} : vector<32x32xbf16> to vector<32x8xbf16>
    %555 = arith.truncf %553 : vector<16x32xf32> to vector<16x32xbf16>
    %cst_226 = arith.constant dense<0.000000e+00> : vector<16x8xf32>
    %556 = tpu.matmul %555, %554, %cst_226 {dimension_numbers = #tpu.dot_dimension_numbers<[1], [0], [0], [1], [0, 0, 1, 1], [], []>} : vector<16x32xbf16>, vector<32x8xbf16>, vector<16x8xf32> -> vector<16x8xf32>
    %557 = vector.extract_strided_slice %503 {offsets = [0, 24], sizes = [16, 8], strides = [1, 1]} : vector<16x32xbf16> to vector<16x8xbf16>
    %558 = vector.extract_strided_slice %504 {offsets = [0, 24], sizes = [32, 8], strides = [1, 1]} : vector<32x32xbf16> to vector<32x8xbf16>
    %cst_227 = arith.constant dense<0.000000e+00> : vector<16x32xf32>
    %559 = tpu.matmul %557, %558, %cst_227 {dimension_numbers = #tpu.dot_dimension_numbers<[1], [1], [0], [0], [0, 0, 1, 0], [], []>} : vector<16x8xbf16>, vector<32x8xbf16>, vector<16x32xf32> -> vector<16x32xf32>
    %560 = arith.addf %559, %2 : vector<16x32xf32>
    %cst_228 = arith.constant dense<0xFF800000> : vector<16xf32>
    %561 = vector.multi_reduction <maximumf>, %560, %cst_228 [1] : vector<16x32xf32> to vector<16xf32>
    %562 = vector.shape_cast %561 : vector<16xf32> to vector<16x1xf32>
    %563 = vector.broadcast %562 : vector<16x1xf32> to vector<16x32xf32>
    %564 = arith.subf %560, %563 : vector<16x32xf32>
    %565 = math.exp %564 : vector<16x32xf32>
    %cst_229 = arith.constant dense<0.000000e+00> : vector<16xf32>
    %566 = vector.multi_reduction <add>, %565, %cst_229 [1] : vector<16x32xf32> to vector<16xf32>
    %567 = vector.shape_cast %566 : vector<16xf32> to vector<16x1xf32>
    %568 = tpu.reciprocal %567 {approx = true} : vector<16x1xf32> -> vector<16x1xf32>
    %569 = vector.broadcast %568 : vector<16x1xf32> to vector<16x32xf32>
    %570 = arith.mulf %565, %569 : vector<16x32xf32>
    %571 = vector.extract_strided_slice %505 {offsets = [0, 24], sizes = [32, 8], strides = [1, 1]} : vector<32x32xbf16> to vector<32x8xbf16>
    %572 = arith.truncf %570 : vector<16x32xf32> to vector<16x32xbf16>
    %cst_230 = arith.constant dense<0.000000e+00> : vector<16x8xf32>
    %573 = tpu.matmul %572, %571, %cst_230 {dimension_numbers = #tpu.dot_dimension_numbers<[1], [0], [0], [1], [0, 0, 1, 1], [], []>} : vector<16x32xbf16>, vector<32x8xbf16>, vector<16x8xf32> -> vector<16x8xf32>
    %574 = tpu.concatenate %522, %539, %556, %573 in 1 : vector<16x8xf32>, vector<16x8xf32>, vector<16x8xf32>, vector<16x8xf32> -> vector<16x32xf32>
    %575 = arith.truncf %574 : vector<16x32xf32> to vector<16x32xbf16>
    %cst_231 = arith.constant dense<0.000000e+00> : vector<16x32xf32>
    %576 = tpu.matmul %575, %498, %cst_231 {dimension_numbers = #tpu.dot_dimension_numbers<[1], [0], [0], [1], [0, 0, 1, 1], [], []>} : vector<16x32xbf16>, vector<32x32xbf16>, vector<16x32xf32> -> vector<16x32xf32>
    %577 = vector.broadcast %500 : vector<1x32xf32> to vector<16x32xf32>
    %578 = arith.addf %576, %577 : vector<16x32xf32>
    %579 = arith.addf %478, %578 : vector<16x32xf32>
    %c0_232 = arith.constant 0 : index
    %c0_233 = arith.constant 0 : index
    %c0_234 = arith.constant 0 : index
    %580 = vector.load %arg31[%c0_232, %c0_233, %c0_234] : memref<2x1x32xf32, #tpu.memory_space<vmem>>, vector<1x1x32xf32>
    %581 = vector.shape_cast %580 : vector<1x1x32xf32> to vector<1x32xf32>
    %c0_235 = arith.constant 0 : index
    %c0_236 = arith.constant 0 : index
    %c0_237 = arith.constant 0 : index
    %582 = vector.load %arg32[%c0_235, %c0_236, %c0_237] : memref<2x1x32xf32, #tpu.memory_space<vmem>>, vector<1x1x32xf32>
    %583 = vector.shape_cast %582 : vector<1x1x32xf32> to vector<1x32xf32>
    %cst_238 = arith.constant dense<0.000000e+00> : vector<16xf32>
    %584 = vector.multi_reduction <add>, %579, %cst_238 [1] : vector<16x32xf32> to vector<16xf32>
    %585 = vector.shape_cast %584 : vector<16xf32> to vector<16x1xf32>
    %cst_239 = arith.constant 3.200000e+01 : f32
    %586 = vector.broadcast %cst_239 : f32 to vector<16x1xf32>
    %587 = arith.divf %585, %586 : vector<16x1xf32>
    %588 = vector.broadcast %587 : vector<16x1xf32> to vector<16x32xf32>
    %589 = arith.subf %579, %588 : vector<16x32xf32>
    %590 = arith.mulf %589, %589 : vector<16x32xf32>
    %cst_240 = arith.constant dense<0.000000e+00> : vector<16xf32>
    %591 = vector.multi_reduction <add>, %590, %cst_240 [1] : vector<16x32xf32> to vector<16xf32>
    %592 = vector.shape_cast %591 : vector<16xf32> to vector<16x1xf32>
    %cst_241 = arith.constant 3.200000e+01 : f32
    %593 = vector.broadcast %cst_241 : f32 to vector<16x1xf32>
    %594 = arith.divf %592, %593 : vector<16x1xf32>
    %595 = vector.broadcast %587 : vector<16x1xf32> to vector<16x32xf32>
    %596 = arith.subf %579, %595 : vector<16x32xf32>
    %cst_242 = arith.constant 9.99999974E-6 : f32
    %597 = vector.broadcast %cst_242 : f32 to vector<16x1xf32>
    %598 = arith.addf %594, %597 : vector<16x1xf32>
    %599 = math.rsqrt %598 : vector<16x1xf32>
    %600 = vector.broadcast %599 : vector<16x1xf32> to vector<16x32xf32>
    %601 = arith.mulf %596, %600 : vector<16x32xf32>
    %602 = vector.broadcast %581 : vector<1x32xf32> to vector<16x32xf32>
    %603 = arith.mulf %601, %602 : vector<16x32xf32>
    %604 = vector.broadcast %583 : vector<1x32xf32> to vector<16x32xf32>
    %605 = arith.addf %603, %604 : vector<16x32xf32>
    %c0_243 = arith.constant 0 : index
    %c0_244 = arith.constant 0 : index
    %c0_245 = arith.constant 0 : index
    %606 = vector.load %arg33[%c0_243, %c0_244, %c0_245] : memref<2x32x64xbf16, #tpu.memory_space<vmem>>, vector<1x32x64xbf16>
    %607 = vector.shape_cast %606 : vector<1x32x64xbf16> to vector<32x64xbf16>
    %c0_246 = arith.constant 0 : index
    %c0_247 = arith.constant 0 : index
    %c0_248 = arith.constant 0 : index
    %608 = vector.load %arg34[%c0_246, %c0_247, %c0_248] : memref<2x1x64xf32, #tpu.memory_space<vmem>>, vector<1x1x64xf32>
    %609 = vector.shape_cast %608 : vector<1x1x64xf32> to vector<1x64xf32>
    %c0_249 = arith.constant 0 : index
    %c0_250 = arith.constant 0 : index
    %c0_251 = arith.constant 0 : index
    %610 = vector.load %arg35[%c0_249, %c0_250, %c0_251] : memref<2x64x32xbf16, #tpu.memory_space<vmem>>, vector<1x64x32xbf16>
    %611 = vector.shape_cast %610 : vector<1x64x32xbf16> to vector<64x32xbf16>
    %c0_252 = arith.constant 0 : index
    %c0_253 = arith.constant 0 : index
    %c0_254 = arith.constant 0 : index
    %612 = vector.load %arg36[%c0_252, %c0_253, %c0_254] : memref<2x1x32xf32, #tpu.memory_space<vmem>>, vector<1x1x32xf32>
    %613 = vector.shape_cast %612 : vector<1x1x32xf32> to vector<1x32xf32>
    %614 = arith.truncf %605 : vector<16x32xf32> to vector<16x32xbf16>
    %cst_255 = arith.constant dense<0.000000e+00> : vector<16x64xf32>
    %615 = tpu.matmul %614, %607, %cst_255 {dimension_numbers = #tpu.dot_dimension_numbers<[1], [0], [0], [1], [0, 0, 1, 1], [], []>} : vector<16x32xbf16>, vector<32x64xbf16>, vector<16x64xf32> -> vector<16x64xf32>
    %616 = vector.broadcast %609 : vector<1x64xf32> to vector<16x64xf32>
    %617 = arith.addf %615, %616 : vector<16x64xf32>
    %cst_256 = arith.constant 0.000000e+00 : f32
    %618 = vector.broadcast %cst_256 : f32 to vector<16x64xf32>
    %619 = arith.maximumf %617, %618 : vector<16x64xf32>
    %620 = arith.truncf %619 : vector<16x64xf32> to vector<16x64xbf16>
    %cst_257 = arith.constant dense<0.000000e+00> : vector<16x32xf32>
    %621 = tpu.matmul %620, %611, %cst_257 {dimension_numbers = #tpu.dot_dimension_numbers<[1], [0], [0], [1], [0, 0, 1, 1], [], []>} : vector<16x64xbf16>, vector<64x32xbf16>, vector<16x32xf32> -> vector<16x32xf32>
    %622 = vector.broadcast %613 : vector<1x32xf32> to vector<16x32xf32>
    %623 = arith.addf %621, %622 : vector<16x32xf32>
    %624 = arith.addf %605, %623 : vector<16x32xf32>
    %c0_258 = arith.constant 0 : index
    %c0_259 = arith.constant 0 : index
    %c0_260 = arith.constant 0 : index
    %625 = vector.load %arg37[%c0_258, %c0_259, %c0_260] : memref<2x1x32xf32, #tpu.memory_space<vmem>>, vector<1x1x32xf32>
    %626 = vector.shape_cast %625 : vector<1x1x32xf32> to vector<1x32xf32>
    %c0_261 = arith.constant 0 : index
    %c0_262 = arith.constant 0 : index
    %c0_263 = arith.constant 0 : index
    %627 = vector.load %arg38[%c0_261, %c0_262, %c0_263] : memref<2x1x32xf32, #tpu.memory_space<vmem>>, vector<1x1x32xf32>
    %628 = vector.shape_cast %627 : vector<1x1x32xf32> to vector<1x32xf32>
    %cst_264 = arith.constant dense<0.000000e+00> : vector<16xf32>
    %629 = vector.multi_reduction <add>, %624, %cst_264 [1] : vector<16x32xf32> to vector<16xf32>
    %630 = vector.shape_cast %629 : vector<16xf32> to vector<16x1xf32>
    %cst_265 = arith.constant 3.200000e+01 : f32
    %631 = vector.broadcast %cst_265 : f32 to vector<16x1xf32>
    %632 = arith.divf %630, %631 : vector<16x1xf32>
    %633 = vector.broadcast %632 : vector<16x1xf32> to vector<16x32xf32>
    %634 = arith.subf %624, %633 : vector<16x32xf32>
    %635 = arith.mulf %634, %634 : vector<16x32xf32>
    %cst_266 = arith.constant dense<0.000000e+00> : vector<16xf32>
    %636 = vector.multi_reduction <add>, %635, %cst_266 [1] : vector<16x32xf32> to vector<16xf32>
    %637 = vector.shape_cast %636 : vector<16xf32> to vector<16x1xf32>
    %cst_267 = arith.constant 3.200000e+01 : f32
    %638 = vector.broadcast %cst_267 : f32 to vector<16x1xf32>
    %639 = arith.divf %637, %638 : vector<16x1xf32>
    %640 = vector.broadcast %632 : vector<16x1xf32> to vector<16x32xf32>
    %641 = arith.subf %624, %640 : vector<16x32xf32>
    %cst_268 = arith.constant 9.99999974E-6 : f32
    %642 = vector.broadcast %cst_268 : f32 to vector<16x1xf32>
    %643 = arith.addf %639, %642 : vector<16x1xf32>
    %644 = math.rsqrt %643 : vector<16x1xf32>
    %645 = vector.broadcast %644 : vector<16x1xf32> to vector<16x32xf32>
    %646 = arith.mulf %641, %645 : vector<16x32xf32>
    %647 = vector.broadcast %626 : vector<1x32xf32> to vector<16x32xf32>
    %648 = arith.mulf %646, %647 : vector<16x32xf32>
    %649 = vector.broadcast %628 : vector<1x32xf32> to vector<16x32xf32>
    %650 = arith.addf %648, %649 : vector<16x32xf32>
    %c1_269 = arith.constant 1 : index
    %c0_270 = arith.constant 0 : index
    %c0_271 = arith.constant 0 : index
    %651 = vector.load %arg19[%c1_269, %c0_270, %c0_271] : memref<2x32x96xbf16, #tpu.memory_space<vmem>>, vector<1x32x96xbf16>
    %652 = vector.shape_cast %651 : vector<1x32x96xbf16> to vector<32x96xbf16>
    %653 = arith.truncf %650 : vector<16x32xf32> to vector<16x32xbf16>
    %cst_272 = arith.constant dense<0.000000e+00> : vector<16x96xf32>
    %654 = tpu.matmul %653, %652, %cst_272 {dimension_numbers = #tpu.dot_dimension_numbers<[1], [0], [0], [1], [0, 0, 1, 1], [], []>} : vector<16x32xbf16>, vector<32x96xbf16>, vector<16x96xf32> -> vector<16x96xf32>
    %c1_273 = arith.constant 1 : index
    %c0_274 = arith.constant 0 : index
    %c0_275 = arith.constant 0 : index
    %655 = vector.load %arg20[%c1_273, %c0_274, %c0_275] : memref<2x1x96xf32, #tpu.memory_space<vmem>>, vector<1x1x96xf32>
    %656 = vector.shape_cast %655 : vector<1x1x96xf32> to vector<1x96xf32>
    %657 = vector.broadcast %656 : vector<1x96xf32> to vector<16x96xf32>
    %658 = arith.addf %654, %657 : vector<16x96xf32>
    %659 = vector.extract_strided_slice %658 {offsets = [0, 0], sizes = [16, 32], strides = [1, 1]} : vector<16x96xf32> to vector<16x32xf32>
    %660 = vector.extract_strided_slice %658 {offsets = [0, 32], sizes = [16, 32], strides = [1, 1]} : vector<16x96xf32> to vector<16x32xf32>
    %661 = vector.extract_strided_slice %658 {offsets = [0, 64], sizes = [16, 32], strides = [1, 1]} : vector<16x96xf32> to vector<16x32xf32>
    %c1_276 = arith.constant 1 : index
    %c0_277 = arith.constant 0 : index
    %c0_278 = arith.constant 0 : index
    %662 = vector.load %arg21[%c1_276, %c0_277, %c0_278] : memref<2x32x32xbf16, #tpu.memory_space<vmem>>, vector<1x32x32xbf16>
    %663 = vector.shape_cast %662 : vector<1x32x32xbf16> to vector<32x32xbf16>
    %c1_279 = arith.constant 1 : index
    %c0_280 = arith.constant 0 : index
    %c0_281 = arith.constant 0 : index
    %664 = vector.load %arg22[%c1_279, %c0_280, %c0_281] : memref<2x1x32xf32, #tpu.memory_space<vmem>>, vector<1x1x32xf32>
    %665 = vector.shape_cast %664 : vector<1x1x32xf32> to vector<1x32xf32>
    %cst_282 = arith.constant 0.353553385 : f32
    %666 = vector.broadcast %cst_282 : f32 to vector<16x32xf32>
    %667 = arith.mulf %659, %666 : vector<16x32xf32>
    %668 = arith.truncf %667 : vector<16x32xf32> to vector<16x32xbf16>
    %669 = arith.truncf %660 : vector<16x32xf32> to vector<16x32xbf16>
    %670 = arith.truncf %661 : vector<16x32xf32> to vector<16x32xbf16>
    %671 = vector.extract_strided_slice %668 {offsets = [0, 0], sizes = [16, 8], strides = [1, 1]} : vector<16x32xbf16> to vector<16x8xbf16>
    %672 = vector.extract_strided_slice %669 {offsets = [0, 0], sizes = [16, 8], strides = [1, 1]} : vector<16x32xbf16> to vector<16x8xbf16>
    %cst_283 = arith.constant dense<0.000000e+00> : vector<16x16xf32>
    %673 = tpu.matmul %671, %672, %cst_283 {dimension_numbers = #tpu.dot_dimension_numbers<[1], [1], [0], [0], [0, 0, 1, 0], [], []>} : vector<16x8xbf16>, vector<16x8xbf16>, vector<16x16xf32> -> vector<16x16xf32>
    %674 = arith.addf %673, %1 : vector<16x16xf32>
    %cst_284 = arith.constant dense<0xFF800000> : vector<16xf32>
    %675 = vector.multi_reduction <maximumf>, %674, %cst_284 [1] : vector<16x16xf32> to vector<16xf32>
    %676 = vector.shape_cast %675 : vector<16xf32> to vector<16x1xf32>
    %677 = vector.broadcast %676 : vector<16x1xf32> to vector<16x16xf32>
    %678 = arith.subf %674, %677 : vector<16x16xf32>
    %679 = math.exp %678 : vector<16x16xf32>
    %cst_285 = arith.constant dense<0.000000e+00> : vector<16xf32>
    %680 = vector.multi_reduction <add>, %679, %cst_285 [1] : vector<16x16xf32> to vector<16xf32>
    %681 = vector.shape_cast %680 : vector<16xf32> to vector<16x1xf32>
    %682 = tpu.reciprocal %681 {approx = true} : vector<16x1xf32> -> vector<16x1xf32>
    %683 = vector.broadcast %682 : vector<16x1xf32> to vector<16x16xf32>
    %684 = arith.mulf %679, %683 : vector<16x16xf32>
    %685 = vector.extract_strided_slice %670 {offsets = [0, 0], sizes = [16, 8], strides = [1, 1]} : vector<16x32xbf16> to vector<16x8xbf16>
    %686 = arith.truncf %684 : vector<16x16xf32> to vector<16x16xbf16>
    %cst_286 = arith.constant dense<0.000000e+00> : vector<16x8xf32>
    %687 = tpu.matmul %686, %685, %cst_286 {dimension_numbers = #tpu.dot_dimension_numbers<[1], [0], [0], [1], [0, 0, 1, 1], [], []>} : vector<16x16xbf16>, vector<16x8xbf16>, vector<16x8xf32> -> vector<16x8xf32>
    %688 = vector.extract_strided_slice %668 {offsets = [0, 8], sizes = [16, 8], strides = [1, 1]} : vector<16x32xbf16> to vector<16x8xbf16>
    %689 = vector.extract_strided_slice %669 {offsets = [0, 8], sizes = [16, 8], strides = [1, 1]} : vector<16x32xbf16> to vector<16x8xbf16>
    %cst_287 = arith.constant dense<0.000000e+00> : vector<16x16xf32>
    %690 = tpu.matmul %688, %689, %cst_287 {dimension_numbers = #tpu.dot_dimension_numbers<[1], [1], [0], [0], [0, 0, 1, 0], [], []>} : vector<16x8xbf16>, vector<16x8xbf16>, vector<16x16xf32> -> vector<16x16xf32>
    %691 = arith.addf %690, %1 : vector<16x16xf32>
    %cst_288 = arith.constant dense<0xFF800000> : vector<16xf32>
    %692 = vector.multi_reduction <maximumf>, %691, %cst_288 [1] : vector<16x16xf32> to vector<16xf32>
    %693 = vector.shape_cast %692 : vector<16xf32> to vector<16x1xf32>
    %694 = vector.broadcast %693 : vector<16x1xf32> to vector<16x16xf32>
    %695 = arith.subf %691, %694 : vector<16x16xf32>
    %696 = math.exp %695 : vector<16x16xf32>
    %cst_289 = arith.constant dense<0.000000e+00> : vector<16xf32>
    %697 = vector.multi_reduction <add>, %696, %cst_289 [1] : vector<16x16xf32> to vector<16xf32>
    %698 = vector.shape_cast %697 : vector<16xf32> to vector<16x1xf32>
    %699 = tpu.reciprocal %698 {approx = true} : vector<16x1xf32> -> vector<16x1xf32>
    %700 = vector.broadcast %699 : vector<16x1xf32> to vector<16x16xf32>
    %701 = arith.mulf %696, %700 : vector<16x16xf32>
    %702 = vector.extract_strided_slice %670 {offsets = [0, 8], sizes = [16, 8], strides = [1, 1]} : vector<16x32xbf16> to vector<16x8xbf16>
    %703 = arith.truncf %701 : vector<16x16xf32> to vector<16x16xbf16>
    %cst_290 = arith.constant dense<0.000000e+00> : vector<16x8xf32>
    %704 = tpu.matmul %703, %702, %cst_290 {dimension_numbers = #tpu.dot_dimension_numbers<[1], [0], [0], [1], [0, 0, 1, 1], [], []>} : vector<16x16xbf16>, vector<16x8xbf16>, vector<16x8xf32> -> vector<16x8xf32>
    %705 = vector.extract_strided_slice %668 {offsets = [0, 16], sizes = [16, 8], strides = [1, 1]} : vector<16x32xbf16> to vector<16x8xbf16>
    %706 = vector.extract_strided_slice %669 {offsets = [0, 16], sizes = [16, 8], strides = [1, 1]} : vector<16x32xbf16> to vector<16x8xbf16>
    %cst_291 = arith.constant dense<0.000000e+00> : vector<16x16xf32>
    %707 = tpu.matmul %705, %706, %cst_291 {dimension_numbers = #tpu.dot_dimension_numbers<[1], [1], [0], [0], [0, 0, 1, 0], [], []>} : vector<16x8xbf16>, vector<16x8xbf16>, vector<16x16xf32> -> vector<16x16xf32>
    %708 = arith.addf %707, %1 : vector<16x16xf32>
    %cst_292 = arith.constant dense<0xFF800000> : vector<16xf32>
    %709 = vector.multi_reduction <maximumf>, %708, %cst_292 [1] : vector<16x16xf32> to vector<16xf32>
    %710 = vector.shape_cast %709 : vector<16xf32> to vector<16x1xf32>
    %711 = vector.broadcast %710 : vector<16x1xf32> to vector<16x16xf32>
    %712 = arith.subf %708, %711 : vector<16x16xf32>
    %713 = math.exp %712 : vector<16x16xf32>
    %cst_293 = arith.constant dense<0.000000e+00> : vector<16xf32>
    %714 = vector.multi_reduction <add>, %713, %cst_293 [1] : vector<16x16xf32> to vector<16xf32>
    %715 = vector.shape_cast %714 : vector<16xf32> to vector<16x1xf32>
    %716 = tpu.reciprocal %715 {approx = true} : vector<16x1xf32> -> vector<16x1xf32>
    %717 = vector.broadcast %716 : vector<16x1xf32> to vector<16x16xf32>
    %718 = arith.mulf %713, %717 : vector<16x16xf32>
    %719 = vector.extract_strided_slice %670 {offsets = [0, 16], sizes = [16, 8], strides = [1, 1]} : vector<16x32xbf16> to vector<16x8xbf16>
    %720 = arith.truncf %718 : vector<16x16xf32> to vector<16x16xbf16>
    %cst_294 = arith.constant dense<0.000000e+00> : vector<16x8xf32>
    %721 = tpu.matmul %720, %719, %cst_294 {dimension_numbers = #tpu.dot_dimension_numbers<[1], [0], [0], [1], [0, 0, 1, 1], [], []>} : vector<16x16xbf16>, vector<16x8xbf16>, vector<16x8xf32> -> vector<16x8xf32>
    %722 = vector.extract_strided_slice %668 {offsets = [0, 24], sizes = [16, 8], strides = [1, 1]} : vector<16x32xbf16> to vector<16x8xbf16>
    %723 = vector.extract_strided_slice %669 {offsets = [0, 24], sizes = [16, 8], strides = [1, 1]} : vector<16x32xbf16> to vector<16x8xbf16>
    %cst_295 = arith.constant dense<0.000000e+00> : vector<16x16xf32>
    %724 = tpu.matmul %722, %723, %cst_295 {dimension_numbers = #tpu.dot_dimension_numbers<[1], [1], [0], [0], [0, 0, 1, 0], [], []>} : vector<16x8xbf16>, vector<16x8xbf16>, vector<16x16xf32> -> vector<16x16xf32>
    %725 = arith.addf %724, %1 : vector<16x16xf32>
    %cst_296 = arith.constant dense<0xFF800000> : vector<16xf32>
    %726 = vector.multi_reduction <maximumf>, %725, %cst_296 [1] : vector<16x16xf32> to vector<16xf32>
    %727 = vector.shape_cast %726 : vector<16xf32> to vector<16x1xf32>
    %728 = vector.broadcast %727 : vector<16x1xf32> to vector<16x16xf32>
    %729 = arith.subf %725, %728 : vector<16x16xf32>
    %730 = math.exp %729 : vector<16x16xf32>
    %cst_297 = arith.constant dense<0.000000e+00> : vector<16xf32>
    %731 = vector.multi_reduction <add>, %730, %cst_297 [1] : vector<16x16xf32> to vector<16xf32>
    %732 = vector.shape_cast %731 : vector<16xf32> to vector<16x1xf32>
    %733 = tpu.reciprocal %732 {approx = true} : vector<16x1xf32> -> vector<16x1xf32>
    %734 = vector.broadcast %733 : vector<16x1xf32> to vector<16x16xf32>
    %735 = arith.mulf %730, %734 : vector<16x16xf32>
    %736 = vector.extract_strided_slice %670 {offsets = [0, 24], sizes = [16, 8], strides = [1, 1]} : vector<16x32xbf16> to vector<16x8xbf16>
    %737 = arith.truncf %735 : vector<16x16xf32> to vector<16x16xbf16>
    %cst_298 = arith.constant dense<0.000000e+00> : vector<16x8xf32>
    %738 = tpu.matmul %737, %736, %cst_298 {dimension_numbers = #tpu.dot_dimension_numbers<[1], [0], [0], [1], [0, 0, 1, 1], [], []>} : vector<16x16xbf16>, vector<16x8xbf16>, vector<16x8xf32> -> vector<16x8xf32>
    %739 = tpu.concatenate %687, %704, %721, %738 in 1 : vector<16x8xf32>, vector<16x8xf32>, vector<16x8xf32>, vector<16x8xf32> -> vector<16x32xf32>
    %740 = arith.truncf %739 : vector<16x32xf32> to vector<16x32xbf16>
    %cst_299 = arith.constant dense<0.000000e+00> : vector<16x32xf32>
    %741 = tpu.matmul %740, %663, %cst_299 {dimension_numbers = #tpu.dot_dimension_numbers<[1], [0], [0], [1], [0, 0, 1, 1], [], []>} : vector<16x32xbf16>, vector<32x32xbf16>, vector<16x32xf32> -> vector<16x32xf32>
    %742 = vector.broadcast %665 : vector<1x32xf32> to vector<16x32xf32>
    %743 = arith.addf %741, %742 : vector<16x32xf32>
    %744 = arith.addf %650, %743 : vector<16x32xf32>
    %c1_300 = arith.constant 1 : index
    %c0_301 = arith.constant 0 : index
    %c0_302 = arith.constant 0 : index
    %745 = vector.load %arg23[%c1_300, %c0_301, %c0_302] : memref<2x1x32xf32, #tpu.memory_space<vmem>>, vector<1x1x32xf32>
    %746 = vector.shape_cast %745 : vector<1x1x32xf32> to vector<1x32xf32>
    %c1_303 = arith.constant 1 : index
    %c0_304 = arith.constant 0 : index
    %c0_305 = arith.constant 0 : index
    %747 = vector.load %arg24[%c1_303, %c0_304, %c0_305] : memref<2x1x32xf32, #tpu.memory_space<vmem>>, vector<1x1x32xf32>
    %748 = vector.shape_cast %747 : vector<1x1x32xf32> to vector<1x32xf32>
    %cst_306 = arith.constant dense<0.000000e+00> : vector<16xf32>
    %749 = vector.multi_reduction <add>, %744, %cst_306 [1] : vector<16x32xf32> to vector<16xf32>
    %750 = vector.shape_cast %749 : vector<16xf32> to vector<16x1xf32>
    %cst_307 = arith.constant 3.200000e+01 : f32
    %751 = vector.broadcast %cst_307 : f32 to vector<16x1xf32>
    %752 = arith.divf %750, %751 : vector<16x1xf32>
    %753 = vector.broadcast %752 : vector<16x1xf32> to vector<16x32xf32>
    %754 = arith.subf %744, %753 : vector<16x32xf32>
    %755 = arith.mulf %754, %754 : vector<16x32xf32>
    %cst_308 = arith.constant dense<0.000000e+00> : vector<16xf32>
    %756 = vector.multi_reduction <add>, %755, %cst_308 [1] : vector<16x32xf32> to vector<16xf32>
    %757 = vector.shape_cast %756 : vector<16xf32> to vector<16x1xf32>
    %cst_309 = arith.constant 3.200000e+01 : f32
    %758 = vector.broadcast %cst_309 : f32 to vector<16x1xf32>
    %759 = arith.divf %757, %758 : vector<16x1xf32>
    %760 = vector.broadcast %752 : vector<16x1xf32> to vector<16x32xf32>
    %761 = arith.subf %744, %760 : vector<16x32xf32>
    %cst_310 = arith.constant 9.99999974E-6 : f32
    %762 = vector.broadcast %cst_310 : f32 to vector<16x1xf32>
    %763 = arith.addf %759, %762 : vector<16x1xf32>
    %764 = math.rsqrt %763 : vector<16x1xf32>
    %765 = vector.broadcast %764 : vector<16x1xf32> to vector<16x32xf32>
    %766 = arith.mulf %761, %765 : vector<16x32xf32>
    %767 = vector.broadcast %746 : vector<1x32xf32> to vector<16x32xf32>
    %768 = arith.mulf %766, %767 : vector<16x32xf32>
    %769 = vector.broadcast %748 : vector<1x32xf32> to vector<16x32xf32>
    %770 = arith.addf %768, %769 : vector<16x32xf32>
    %c1_311 = arith.constant 1 : index
    %c0_312 = arith.constant 0 : index
    %c0_313 = arith.constant 0 : index
    %771 = vector.load %arg25[%c1_311, %c0_312, %c0_313] : memref<2x32x32xbf16, #tpu.memory_space<vmem>>, vector<1x32x32xbf16>
    %772 = vector.shape_cast %771 : vector<1x32x32xbf16> to vector<32x32xbf16>
    %773 = arith.truncf %770 : vector<16x32xf32> to vector<16x32xbf16>
    %cst_314 = arith.constant dense<0.000000e+00> : vector<16x32xf32>
    %774 = tpu.matmul %773, %772, %cst_314 {dimension_numbers = #tpu.dot_dimension_numbers<[1], [0], [0], [1], [0, 0, 1, 1], [], []>} : vector<16x32xbf16>, vector<32x32xbf16>, vector<16x32xf32> -> vector<16x32xf32>
    %c1_315 = arith.constant 1 : index
    %c0_316 = arith.constant 0 : index
    %c0_317 = arith.constant 0 : index
    %775 = vector.load %arg26[%c1_315, %c0_316, %c0_317] : memref<2x1x32xf32, #tpu.memory_space<vmem>>, vector<1x1x32xf32>
    %776 = vector.shape_cast %775 : vector<1x1x32xf32> to vector<1x32xf32>
    %777 = vector.broadcast %776 : vector<1x32xf32> to vector<16x32xf32>
    %778 = arith.addf %774, %777 : vector<16x32xf32>
    %c1_318 = arith.constant 1 : index
    %c0_319 = arith.constant 0 : index
    %c0_320 = arith.constant 0 : index
    %779 = vector.load %arg27[%c1_318, %c0_319, %c0_320] : memref<2x32x64xbf16, #tpu.memory_space<vmem>>, vector<1x32x64xbf16>
    %780 = vector.shape_cast %779 : vector<1x32x64xbf16> to vector<32x64xbf16>
    %781 = arith.truncf %357 : vector<32x32xf32> to vector<32x32xbf16>
    %cst_321 = arith.constant dense<0.000000e+00> : vector<32x64xf32>
    %782 = tpu.matmul %781, %780, %cst_321 {dimension_numbers = #tpu.dot_dimension_numbers<[1], [0], [0], [1], [0, 0, 1, 1], [], []>} : vector<32x32xbf16>, vector<32x64xbf16>, vector<32x64xf32> -> vector<32x64xf32>
    %c1_322 = arith.constant 1 : index
    %c0_323 = arith.constant 0 : index
    %c0_324 = arith.constant 0 : index
    %783 = vector.load %arg28[%c1_322, %c0_323, %c0_324] : memref<2x1x64xf32, #tpu.memory_space<vmem>>, vector<1x1x64xf32>
    %784 = vector.shape_cast %783 : vector<1x1x64xf32> to vector<1x64xf32>
    %785 = vector.broadcast %784 : vector<1x64xf32> to vector<32x64xf32>
    %786 = arith.addf %782, %785 : vector<32x64xf32>
    %787 = vector.extract_strided_slice %786 {offsets = [0, 0], sizes = [32, 32], strides = [1, 1]} : vector<32x64xf32> to vector<32x32xf32>
    %788 = vector.extract_strided_slice %786 {offsets = [0, 32], sizes = [32, 32], strides = [1, 1]} : vector<32x64xf32> to vector<32x32xf32>
    %c1_325 = arith.constant 1 : index
    %c0_326 = arith.constant 0 : index
    %c0_327 = arith.constant 0 : index
    %789 = vector.load %arg29[%c1_325, %c0_326, %c0_327] : memref<2x32x32xbf16, #tpu.memory_space<vmem>>, vector<1x32x32xbf16>
    %790 = vector.shape_cast %789 : vector<1x32x32xbf16> to vector<32x32xbf16>
    %c1_328 = arith.constant 1 : index
    %c0_329 = arith.constant 0 : index
    %c0_330 = arith.constant 0 : index
    %791 = vector.load %arg30[%c1_328, %c0_329, %c0_330] : memref<2x1x32xf32, #tpu.memory_space<vmem>>, vector<1x1x32xf32>
    %792 = vector.shape_cast %791 : vector<1x1x32xf32> to vector<1x32xf32>
    %cst_331 = arith.constant 0.353553385 : f32
    %793 = vector.broadcast %cst_331 : f32 to vector<16x32xf32>
    %794 = arith.mulf %778, %793 : vector<16x32xf32>
    %795 = arith.truncf %794 : vector<16x32xf32> to vector<16x32xbf16>
    %796 = arith.truncf %787 : vector<32x32xf32> to vector<32x32xbf16>
    %797 = arith.truncf %788 : vector<32x32xf32> to vector<32x32xbf16>
    %798 = vector.extract_strided_slice %795 {offsets = [0, 0], sizes = [16, 8], strides = [1, 1]} : vector<16x32xbf16> to vector<16x8xbf16>
    %799 = vector.extract_strided_slice %796 {offsets = [0, 0], sizes = [32, 8], strides = [1, 1]} : vector<32x32xbf16> to vector<32x8xbf16>
    %cst_332 = arith.constant dense<0.000000e+00> : vector<16x32xf32>
    %800 = tpu.matmul %798, %799, %cst_332 {dimension_numbers = #tpu.dot_dimension_numbers<[1], [1], [0], [0], [0, 0, 1, 0], [], []>} : vector<16x8xbf16>, vector<32x8xbf16>, vector<16x32xf32> -> vector<16x32xf32>
    %801 = arith.addf %800, %2 : vector<16x32xf32>
    %cst_333 = arith.constant dense<0xFF800000> : vector<16xf32>
    %802 = vector.multi_reduction <maximumf>, %801, %cst_333 [1] : vector<16x32xf32> to vector<16xf32>
    %803 = vector.shape_cast %802 : vector<16xf32> to vector<16x1xf32>
    %804 = vector.broadcast %803 : vector<16x1xf32> to vector<16x32xf32>
    %805 = arith.subf %801, %804 : vector<16x32xf32>
    %806 = math.exp %805 : vector<16x32xf32>
    %cst_334 = arith.constant dense<0.000000e+00> : vector<16xf32>
    %807 = vector.multi_reduction <add>, %806, %cst_334 [1] : vector<16x32xf32> to vector<16xf32>
    %808 = vector.shape_cast %807 : vector<16xf32> to vector<16x1xf32>
    %809 = tpu.reciprocal %808 {approx = true} : vector<16x1xf32> -> vector<16x1xf32>
    %810 = vector.broadcast %809 : vector<16x1xf32> to vector<16x32xf32>
    %811 = arith.mulf %806, %810 : vector<16x32xf32>
    %812 = vector.extract_strided_slice %797 {offsets = [0, 0], sizes = [32, 8], strides = [1, 1]} : vector<32x32xbf16> to vector<32x8xbf16>
    %813 = arith.truncf %811 : vector<16x32xf32> to vector<16x32xbf16>
    %cst_335 = arith.constant dense<0.000000e+00> : vector<16x8xf32>
    %814 = tpu.matmul %813, %812, %cst_335 {dimension_numbers = #tpu.dot_dimension_numbers<[1], [0], [0], [1], [0, 0, 1, 1], [], []>} : vector<16x32xbf16>, vector<32x8xbf16>, vector<16x8xf32> -> vector<16x8xf32>
    %815 = vector.extract_strided_slice %795 {offsets = [0, 8], sizes = [16, 8], strides = [1, 1]} : vector<16x32xbf16> to vector<16x8xbf16>
    %816 = vector.extract_strided_slice %796 {offsets = [0, 8], sizes = [32, 8], strides = [1, 1]} : vector<32x32xbf16> to vector<32x8xbf16>
    %cst_336 = arith.constant dense<0.000000e+00> : vector<16x32xf32>
    %817 = tpu.matmul %815, %816, %cst_336 {dimension_numbers = #tpu.dot_dimension_numbers<[1], [1], [0], [0], [0, 0, 1, 0], [], []>} : vector<16x8xbf16>, vector<32x8xbf16>, vector<16x32xf32> -> vector<16x32xf32>
    %818 = arith.addf %817, %2 : vector<16x32xf32>
    %cst_337 = arith.constant dense<0xFF800000> : vector<16xf32>
    %819 = vector.multi_reduction <maximumf>, %818, %cst_337 [1] : vector<16x32xf32> to vector<16xf32>
    %820 = vector.shape_cast %819 : vector<16xf32> to vector<16x1xf32>
    %821 = vector.broadcast %820 : vector<16x1xf32> to vector<16x32xf32>
    %822 = arith.subf %818, %821 : vector<16x32xf32>
    %823 = math.exp %822 : vector<16x32xf32>
    %cst_338 = arith.constant dense<0.000000e+00> : vector<16xf32>
    %824 = vector.multi_reduction <add>, %823, %cst_338 [1] : vector<16x32xf32> to vector<16xf32>
    %825 = vector.shape_cast %824 : vector<16xf32> to vector<16x1xf32>
    %826 = tpu.reciprocal %825 {approx = true} : vector<16x1xf32> -> vector<16x1xf32>
    %827 = vector.broadcast %826 : vector<16x1xf32> to vector<16x32xf32>
    %828 = arith.mulf %823, %827 : vector<16x32xf32>
    %829 = vector.extract_strided_slice %797 {offsets = [0, 8], sizes = [32, 8], strides = [1, 1]} : vector<32x32xbf16> to vector<32x8xbf16>
    %830 = arith.truncf %828 : vector<16x32xf32> to vector<16x32xbf16>
    %cst_339 = arith.constant dense<0.000000e+00> : vector<16x8xf32>
    %831 = tpu.matmul %830, %829, %cst_339 {dimension_numbers = #tpu.dot_dimension_numbers<[1], [0], [0], [1], [0, 0, 1, 1], [], []>} : vector<16x32xbf16>, vector<32x8xbf16>, vector<16x8xf32> -> vector<16x8xf32>
    %832 = vector.extract_strided_slice %795 {offsets = [0, 16], sizes = [16, 8], strides = [1, 1]} : vector<16x32xbf16> to vector<16x8xbf16>
    %833 = vector.extract_strided_slice %796 {offsets = [0, 16], sizes = [32, 8], strides = [1, 1]} : vector<32x32xbf16> to vector<32x8xbf16>
    %cst_340 = arith.constant dense<0.000000e+00> : vector<16x32xf32>
    %834 = tpu.matmul %832, %833, %cst_340 {dimension_numbers = #tpu.dot_dimension_numbers<[1], [1], [0], [0], [0, 0, 1, 0], [], []>} : vector<16x8xbf16>, vector<32x8xbf16>, vector<16x32xf32> -> vector<16x32xf32>
    %835 = arith.addf %834, %2 : vector<16x32xf32>
    %cst_341 = arith.constant dense<0xFF800000> : vector<16xf32>
    %836 = vector.multi_reduction <maximumf>, %835, %cst_341 [1] : vector<16x32xf32> to vector<16xf32>
    %837 = vector.shape_cast %836 : vector<16xf32> to vector<16x1xf32>
    %838 = vector.broadcast %837 : vector<16x1xf32> to vector<16x32xf32>
    %839 = arith.subf %835, %838 : vector<16x32xf32>
    %840 = math.exp %839 : vector<16x32xf32>
    %cst_342 = arith.constant dense<0.000000e+00> : vector<16xf32>
    %841 = vector.multi_reduction <add>, %840, %cst_342 [1] : vector<16x32xf32> to vector<16xf32>
    %842 = vector.shape_cast %841 : vector<16xf32> to vector<16x1xf32>
    %843 = tpu.reciprocal %842 {approx = true} : vector<16x1xf32> -> vector<16x1xf32>
    %844 = vector.broadcast %843 : vector<16x1xf32> to vector<16x32xf32>
    %845 = arith.mulf %840, %844 : vector<16x32xf32>
    %846 = vector.extract_strided_slice %797 {offsets = [0, 16], sizes = [32, 8], strides = [1, 1]} : vector<32x32xbf16> to vector<32x8xbf16>
    %847 = arith.truncf %845 : vector<16x32xf32> to vector<16x32xbf16>
    %cst_343 = arith.constant dense<0.000000e+00> : vector<16x8xf32>
    %848 = tpu.matmul %847, %846, %cst_343 {dimension_numbers = #tpu.dot_dimension_numbers<[1], [0], [0], [1], [0, 0, 1, 1], [], []>} : vector<16x32xbf16>, vector<32x8xbf16>, vector<16x8xf32> -> vector<16x8xf32>
    %849 = vector.extract_strided_slice %795 {offsets = [0, 24], sizes = [16, 8], strides = [1, 1]} : vector<16x32xbf16> to vector<16x8xbf16>
    %850 = vector.extract_strided_slice %796 {offsets = [0, 24], sizes = [32, 8], strides = [1, 1]} : vector<32x32xbf16> to vector<32x8xbf16>
    %cst_344 = arith.constant dense<0.000000e+00> : vector<16x32xf32>
    %851 = tpu.matmul %849, %850, %cst_344 {dimension_numbers = #tpu.dot_dimension_numbers<[1], [1], [0], [0], [0, 0, 1, 0], [], []>} : vector<16x8xbf16>, vector<32x8xbf16>, vector<16x32xf32> -> vector<16x32xf32>
    %852 = arith.addf %851, %2 : vector<16x32xf32>
    %cst_345 = arith.constant dense<0xFF800000> : vector<16xf32>
    %853 = vector.multi_reduction <maximumf>, %852, %cst_345 [1] : vector<16x32xf32> to vector<16xf32>
    %854 = vector.shape_cast %853 : vector<16xf32> to vector<16x1xf32>
    %855 = vector.broadcast %854 : vector<16x1xf32> to vector<16x32xf32>
    %856 = arith.subf %852, %855 : vector<16x32xf32>
    %857 = math.exp %856 : vector<16x32xf32>
    %cst_346 = arith.constant dense<0.000000e+00> : vector<16xf32>
    %858 = vector.multi_reduction <add>, %857, %cst_346 [1] : vector<16x32xf32> to vector<16xf32>
    %859 = vector.shape_cast %858 : vector<16xf32> to vector<16x1xf32>
    %860 = tpu.reciprocal %859 {approx = true} : vector<16x1xf32> -> vector<16x1xf32>
    %861 = vector.broadcast %860 : vector<16x1xf32> to vector<16x32xf32>
    %862 = arith.mulf %857, %861 : vector<16x32xf32>
    %863 = vector.extract_strided_slice %797 {offsets = [0, 24], sizes = [32, 8], strides = [1, 1]} : vector<32x32xbf16> to vector<32x8xbf16>
    %864 = arith.truncf %862 : vector<16x32xf32> to vector<16x32xbf16>
    %cst_347 = arith.constant dense<0.000000e+00> : vector<16x8xf32>
    %865 = tpu.matmul %864, %863, %cst_347 {dimension_numbers = #tpu.dot_dimension_numbers<[1], [0], [0], [1], [0, 0, 1, 1], [], []>} : vector<16x32xbf16>, vector<32x8xbf16>, vector<16x8xf32> -> vector<16x8xf32>
    %866 = tpu.concatenate %814, %831, %848, %865 in 1 : vector<16x8xf32>, vector<16x8xf32>, vector<16x8xf32>, vector<16x8xf32> -> vector<16x32xf32>
    %867 = arith.truncf %866 : vector<16x32xf32> to vector<16x32xbf16>
    %cst_348 = arith.constant dense<0.000000e+00> : vector<16x32xf32>
    %868 = tpu.matmul %867, %790, %cst_348 {dimension_numbers = #tpu.dot_dimension_numbers<[1], [0], [0], [1], [0, 0, 1, 1], [], []>} : vector<16x32xbf16>, vector<32x32xbf16>, vector<16x32xf32> -> vector<16x32xf32>
    %869 = vector.broadcast %792 : vector<1x32xf32> to vector<16x32xf32>
    %870 = arith.addf %868, %869 : vector<16x32xf32>
    %871 = arith.addf %770, %870 : vector<16x32xf32>
    %c1_349 = arith.constant 1 : index
    %c0_350 = arith.constant 0 : index
    %c0_351 = arith.constant 0 : index
    %872 = vector.load %arg31[%c1_349, %c0_350, %c0_351] : memref<2x1x32xf32, #tpu.memory_space<vmem>>, vector<1x1x32xf32>
    %873 = vector.shape_cast %872 : vector<1x1x32xf32> to vector<1x32xf32>
    %c1_352 = arith.constant 1 : index
    %c0_353 = arith.constant 0 : index
    %c0_354 = arith.constant 0 : index
    %874 = vector.load %arg32[%c1_352, %c0_353, %c0_354] : memref<2x1x32xf32, #tpu.memory_space<vmem>>, vector<1x1x32xf32>
    %875 = vector.shape_cast %874 : vector<1x1x32xf32> to vector<1x32xf32>
    %cst_355 = arith.constant dense<0.000000e+00> : vector<16xf32>
    %876 = vector.multi_reduction <add>, %871, %cst_355 [1] : vector<16x32xf32> to vector<16xf32>
    %877 = vector.shape_cast %876 : vector<16xf32> to vector<16x1xf32>
    %cst_356 = arith.constant 3.200000e+01 : f32
    %878 = vector.broadcast %cst_356 : f32 to vector<16x1xf32>
    %879 = arith.divf %877, %878 : vector<16x1xf32>
    %880 = vector.broadcast %879 : vector<16x1xf32> to vector<16x32xf32>
    %881 = arith.subf %871, %880 : vector<16x32xf32>
    %882 = arith.mulf %881, %881 : vector<16x32xf32>
    %cst_357 = arith.constant dense<0.000000e+00> : vector<16xf32>
    %883 = vector.multi_reduction <add>, %882, %cst_357 [1] : vector<16x32xf32> to vector<16xf32>
    %884 = vector.shape_cast %883 : vector<16xf32> to vector<16x1xf32>
    %cst_358 = arith.constant 3.200000e+01 : f32
    %885 = vector.broadcast %cst_358 : f32 to vector<16x1xf32>
    %886 = arith.divf %884, %885 : vector<16x1xf32>
    %887 = vector.broadcast %879 : vector<16x1xf32> to vector<16x32xf32>
    %888 = arith.subf %871, %887 : vector<16x32xf32>
    %cst_359 = arith.constant 9.99999974E-6 : f32
    %889 = vector.broadcast %cst_359 : f32 to vector<16x1xf32>
    %890 = arith.addf %886, %889 : vector<16x1xf32>
    %891 = math.rsqrt %890 : vector<16x1xf32>
    %892 = vector.broadcast %891 : vector<16x1xf32> to vector<16x32xf32>
    %893 = arith.mulf %888, %892 : vector<16x32xf32>
    %894 = vector.broadcast %873 : vector<1x32xf32> to vector<16x32xf32>
    %895 = arith.mulf %893, %894 : vector<16x32xf32>
    %896 = vector.broadcast %875 : vector<1x32xf32> to vector<16x32xf32>
    %897 = arith.addf %895, %896 : vector<16x32xf32>
    %c1_360 = arith.constant 1 : index
    %c0_361 = arith.constant 0 : index
    %c0_362 = arith.constant 0 : index
    %898 = vector.load %arg33[%c1_360, %c0_361, %c0_362] : memref<2x32x64xbf16, #tpu.memory_space<vmem>>, vector<1x32x64xbf16>
    %899 = vector.shape_cast %898 : vector<1x32x64xbf16> to vector<32x64xbf16>
    %c1_363 = arith.constant 1 : index
    %c0_364 = arith.constant 0 : index
    %c0_365 = arith.constant 0 : index
    %900 = vector.load %arg34[%c1_363, %c0_364, %c0_365] : memref<2x1x64xf32, #tpu.memory_space<vmem>>, vector<1x1x64xf32>
    %901 = vector.shape_cast %900 : vector<1x1x64xf32> to vector<1x64xf32>
    %c1_366 = arith.constant 1 : index
    %c0_367 = arith.constant 0 : index
    %c0_368 = arith.constant 0 : index
    %902 = vector.load %arg35[%c1_366, %c0_367, %c0_368] : memref<2x64x32xbf16, #tpu.memory_space<vmem>>, vector<1x64x32xbf16>
    %903 = vector.shape_cast %902 : vector<1x64x32xbf16> to vector<64x32xbf16>
    %c1_369 = arith.constant 1 : index
    %c0_370 = arith.constant 0 : index
    %c0_371 = arith.constant 0 : index
    %904 = vector.load %arg36[%c1_369, %c0_370, %c0_371] : memref<2x1x32xf32, #tpu.memory_space<vmem>>, vector<1x1x32xf32>
    %905 = vector.shape_cast %904 : vector<1x1x32xf32> to vector<1x32xf32>
    %906 = arith.truncf %897 : vector<16x32xf32> to vector<16x32xbf16>
    %cst_372 = arith.constant dense<0.000000e+00> : vector<16x64xf32>
    %907 = tpu.matmul %906, %899, %cst_372 {dimension_numbers = #tpu.dot_dimension_numbers<[1], [0], [0], [1], [0, 0, 1, 1], [], []>} : vector<16x32xbf16>, vector<32x64xbf16>, vector<16x64xf32> -> vector<16x64xf32>
    %908 = vector.broadcast %901 : vector<1x64xf32> to vector<16x64xf32>
    %909 = arith.addf %907, %908 : vector<16x64xf32>
    %cst_373 = arith.constant 0.000000e+00 : f32
    %910 = vector.broadcast %cst_373 : f32 to vector<16x64xf32>
    %911 = arith.maximumf %909, %910 : vector<16x64xf32>
    %912 = arith.truncf %911 : vector<16x64xf32> to vector<16x64xbf16>
    %cst_374 = arith.constant dense<0.000000e+00> : vector<16x32xf32>
    %913 = tpu.matmul %912, %903, %cst_374 {dimension_numbers = #tpu.dot_dimension_numbers<[1], [0], [0], [1], [0, 0, 1, 1], [], []>} : vector<16x64xbf16>, vector<64x32xbf16>, vector<16x32xf32> -> vector<16x32xf32>
    %914 = vector.broadcast %905 : vector<1x32xf32> to vector<16x32xf32>
    %915 = arith.addf %913, %914 : vector<16x32xf32>
    %916 = arith.addf %897, %915 : vector<16x32xf32>
    %c1_375 = arith.constant 1 : index
    %c0_376 = arith.constant 0 : index
    %c0_377 = arith.constant 0 : index
    %917 = vector.load %arg37[%c1_375, %c0_376, %c0_377] : memref<2x1x32xf32, #tpu.memory_space<vmem>>, vector<1x1x32xf32>
    %918 = vector.shape_cast %917 : vector<1x1x32xf32> to vector<1x32xf32>
    %c1_378 = arith.constant 1 : index
    %c0_379 = arith.constant 0 : index
    %c0_380 = arith.constant 0 : index
    %919 = vector.load %arg38[%c1_378, %c0_379, %c0_380] : memref<2x1x32xf32, #tpu.memory_space<vmem>>, vector<1x1x32xf32>
    %920 = vector.shape_cast %919 : vector<1x1x32xf32> to vector<1x32xf32>
    %cst_381 = arith.constant dense<0.000000e+00> : vector<16xf32>
    %921 = vector.multi_reduction <add>, %916, %cst_381 [1] : vector<16x32xf32> to vector<16xf32>
    %922 = vector.shape_cast %921 : vector<16xf32> to vector<16x1xf32>
    %cst_382 = arith.constant 3.200000e+01 : f32
    %923 = vector.broadcast %cst_382 : f32 to vector<16x1xf32>
    %924 = arith.divf %922, %923 : vector<16x1xf32>
    %925 = vector.broadcast %924 : vector<16x1xf32> to vector<16x32xf32>
    %926 = arith.subf %916, %925 : vector<16x32xf32>
    %927 = arith.mulf %926, %926 : vector<16x32xf32>
    %cst_383 = arith.constant dense<0.000000e+00> : vector<16xf32>
    %928 = vector.multi_reduction <add>, %927, %cst_383 [1] : vector<16x32xf32> to vector<16xf32>
    %929 = vector.shape_cast %928 : vector<16xf32> to vector<16x1xf32>
    %cst_384 = arith.constant 3.200000e+01 : f32
    %930 = vector.broadcast %cst_384 : f32 to vector<16x1xf32>
    %931 = arith.divf %929, %930 : vector<16x1xf32>
    %932 = vector.broadcast %924 : vector<16x1xf32> to vector<16x32xf32>
    %933 = arith.subf %916, %932 : vector<16x32xf32>
    %cst_385 = arith.constant 9.99999974E-6 : f32
    %934 = vector.broadcast %cst_385 : f32 to vector<16x1xf32>
    %935 = arith.addf %931, %934 : vector<16x1xf32>
    %936 = math.rsqrt %935 : vector<16x1xf32>
    %937 = vector.broadcast %936 : vector<16x1xf32> to vector<16x32xf32>
    %938 = arith.mulf %933, %937 : vector<16x32xf32>
    %939 = vector.broadcast %918 : vector<1x32xf32> to vector<16x32xf32>
    %940 = arith.mulf %938, %939 : vector<16x32xf32>
    %941 = vector.broadcast %920 : vector<1x32xf32> to vector<16x32xf32>
    %942 = arith.addf %940, %941 : vector<16x32xf32>
    %c0_386 = arith.constant 0 : index
    %c0_387 = arith.constant 0 : index
    %943 = vector.load %arg39[%c0_386, %c0_387] : memref<1x32xf32, #tpu.memory_space<vmem>>, vector<1x32xf32>
    %c0_388 = arith.constant 0 : index
    %c0_389 = arith.constant 0 : index
    %944 = vector.load %arg40[%c0_388, %c0_389] : memref<1x32xf32, #tpu.memory_space<vmem>>, vector<1x32xf32>
    %cst_390 = arith.constant dense<0.000000e+00> : vector<16xf32>
    %945 = vector.multi_reduction <add>, %942, %cst_390 [1] : vector<16x32xf32> to vector<16xf32>
    %946 = vector.shape_cast %945 : vector<16xf32> to vector<16x1xf32>
    %cst_391 = arith.constant 3.200000e+01 : f32
    %947 = vector.broadcast %cst_391 : f32 to vector<16x1xf32>
    %948 = arith.divf %946, %947 : vector<16x1xf32>
    %949 = vector.broadcast %948 : vector<16x1xf32> to vector<16x32xf32>
    %950 = arith.subf %942, %949 : vector<16x32xf32>
    %951 = arith.mulf %950, %950 : vector<16x32xf32>
    %cst_392 = arith.constant dense<0.000000e+00> : vector<16xf32>
    %952 = vector.multi_reduction <add>, %951, %cst_392 [1] : vector<16x32xf32> to vector<16xf32>
    %953 = vector.shape_cast %952 : vector<16xf32> to vector<16x1xf32>
    %cst_393 = arith.constant 3.200000e+01 : f32
    %954 = vector.broadcast %cst_393 : f32 to vector<16x1xf32>
    %955 = arith.divf %953, %954 : vector<16x1xf32>
    %956 = vector.broadcast %948 : vector<16x1xf32> to vector<16x32xf32>
    %957 = arith.subf %942, %956 : vector<16x32xf32>
    %cst_394 = arith.constant 9.99999974E-6 : f32
    %958 = vector.broadcast %cst_394 : f32 to vector<16x1xf32>
    %959 = arith.addf %955, %958 : vector<16x1xf32>
    %960 = math.rsqrt %959 : vector<16x1xf32>
    %961 = vector.broadcast %960 : vector<16x1xf32> to vector<16x32xf32>
    %962 = arith.mulf %957, %961 : vector<16x32xf32>
    %963 = vector.broadcast %943 : vector<1x32xf32> to vector<16x32xf32>
    %964 = arith.mulf %962, %963 : vector<16x32xf32>
    %965 = vector.broadcast %944 : vector<1x32xf32> to vector<16x32xf32>
    %966 = arith.addf %964, %965 : vector<16x32xf32>
    %c0_395 = arith.constant 0 : index
    %c0_396 = arith.constant 0 : index
    %967 = vector.load %arg41[%c0_395, %c0_396] : memref<32x128xbf16, #tpu.memory_space<vmem>>, vector<32x128xbf16>
    %968 = arith.truncf %966 : vector<16x32xf32> to vector<16x32xbf16>
    %cst_397 = arith.constant dense<0.000000e+00> : vector<16x128xf32>
    %969 = tpu.matmul %968, %967, %cst_397 {dimension_numbers = #tpu.dot_dimension_numbers<[1], [0], [0], [1], [0, 0, 1, 1], [], []>} : vector<16x32xbf16>, vector<32x128xbf16>, vector<16x128xf32> -> vector<16x128xf32>
    %c0_398 = arith.constant 0 : index
    %c0_399 = arith.constant 0 : index
    %970 = vector.load %arg42[%c0_398, %c0_399] : memref<1x128xf32, #tpu.memory_space<vmem>>, vector<1x128xf32>
    %971 = vector.broadcast %970 : vector<1x128xf32> to vector<16x128xf32>
    %972 = arith.addf %969, %971 : vector<16x128xf32>
    %c0_400 = arith.constant 0 : index
    %c0_401 = arith.constant 0 : index
    %973 = vector.load %arg43[%c0_400, %c0_401] : memref<16x128xf32, #tpu.memory_space<vmem>>, vector<16x128xf32>
    tpu.vector_store %arg43[%c0_400, %c0_401], %972 {strides = array<i32>} : memref<16x128xf32, #tpu.memory_space<vmem>>, vector<16x128xf32>,
    return
  }
}

</mosaic_0001>

<llo_original>
// kernel: eq.36
$region0: #{eq.36}
  %s0 = inlined_call_operand.vmem [shape: s32[2,8], index: 0, kind: input, shape index: {}]
  %s1 = inlined_call_operand.vmem [shape: s32[16], index: 1, kind: output, shape index: {}]
  $region1: #{eq.36} parent=0
    #allocation0 [shape = 'u8[4096]{0}', space=vmem, size = 0x1000, scoped, tag = 'scoped mem for output reshape']
    #allocation1 [shape = 'u8[4096]{0}', space=vmem, size = 0x1000, scoped, tag = 'scoped mem for input reshape']
    %s3 = ssub.s32 4, 1
    %v4 = vld [vmem:[%s0] sm:%s3]
    %5 = vst [vmem:[#allocation1] sm:%s3] %v4
    %v6 = vld [vmem:[#allocation1] sm:$0x1]
    %vm7 = vcmask 64512
    %8 = vst.msk [vmem:[#allocation0] sm:$0x1] %vm7, %v6
    %s9 = scalar_lea.vmem [#allocation1], 1
    %v10 = vld [vmem:[%s9] sm:$0x1]
    %11 = vrot.lane.b32.xlu0 %v10, 8
    %v12 = vpop.permute.xlu0 %11
    %vm13 = vcmask 130112
    %14 = vst.msk [vmem:[#allocation0] sm:$0x1] %vm13, %v12
    %s16 = ssub.s32 2, 1
    %v17 = vld [vmem:[#allocation0] sm:%s16]
    %s19 = ssub.s32 2, 1
    %20 = vst [vmem:[%s1] sm:%s19] %v17

// kernel: eq.22
$region0: #{eq.22}
  %s0 = inlined_call_operand.vmem [shape: s32[2,16], index: 0, kind: input, shape index: {}]
  %s1 = inlined_call_operand.vmem [shape: s32[32], index: 1, kind: output, shape index: {}]
  $region1: #{eq.22} parent=0
    #allocation0 [shape = 'u8[4096]{0}', space=vmem, size = 0x1000, scoped, tag = 'scoped mem for output reshape']
    #allocation1 [shape = 'u8[4096]{0}', space=vmem, size = 0x1000, scoped, tag = 'scoped mem for input reshape']
    %s3 = ssub.s32 4, 1
    %v4 = vld [vmem:[%s0] sm:%s3]
    %5 = vst [vmem:[#allocation1] sm:%s3] %v4
    %v6 = vld [vmem:[#allocation1] sm:$0x1]
    %vm7 = vcmask 130048
    %8 = vst.msk [vmem:[#allocation0] sm:$0x1] %vm7, %v6
    %s9 = scalar_lea.vmem [#allocation1], 1
    %v10 = vld [vmem:[%s9] sm:$0x1]
    %11 = vrot.lane.b32.xlu0 %v10, 16
    %v12 = vpop.permute.xlu0 %11
    %vm13 = vcmask 261248
    %14 = vst.msk [vmem:[#allocation0] sm:$0x1] %vm13, %v12
    %s16 = ssub.s32 2, 1
    %v17 = vld [vmem:[#allocation0] sm:%s16]
    %s19 = ssub.s32 2, 1
    %20 = vst [vmem:[%s1] sm:%s19] %v17

// kernel: tile.8
$region0: #{tile.8}
  #allocation0 [shape = 's32[1]{0}', space=sflag, size = 0x4, scoped, tag = 'scoped memory for tile.8']
  %s0 = inlined_call_operand.vmem [shape: f32[8,8], index: 0, kind: input, shape index: {}]
  %s1 = inlined_call_operand.vmem [shape: f32[2,8,2,8], index: 1, kind: output, shape index: {}]
  // Predicated region
  $region2: #{tile.8} parent=0 // pred_check
    _
  $region3: #{tile.8} parent=0 // pred_check_branch
    %3 = sbr.rel (0) target = $region5
  $region4: #{tile.8} parent=0 // pred_region
    _
  $region5: #{tile.8} parent=0 // pred_fallthru
    _
  %v4 = vld [vmem:[%s0] ss:$0 sm:$0xff]
  %5 = vst [vmem:[%s1] sm:$0x3] %v4
  %s6 = scalar_lea.vmem %s1, 16
  %7 = vst [vmem:[%s6] sm:$0x3] %v4
  %s8 = scalar_lea.vmem %s0, 1
  %v9 = vld [vmem:[%s8] ss:$0 sm:$0xff]
  %s10 = scalar_lea.vmem %s1, 2
  %11 = vst [vmem:[%s10] sm:$0x3] %v9
  %s12 = scalar_lea.vmem %s1, 18
  %13 = vst [vmem:[%s12] sm:$0x3] %v9
  %s14 = scalar_lea.vmem %s0, 2
  %v15 = vld [vmem:[%s14] ss:$0 sm:$0xff]
  %s16 = scalar_lea.vmem %s1, 4
  %17 = vst [vmem:[%s16] sm:$0x3] %v15
  %s18 = scalar_lea.vmem %s1, 20
  %19 = vst [vmem:[%s18] sm:$0x3] %v15
  %s20 = scalar_lea.vmem %s0, 3
  %v21 = vld [vmem:[%s20] ss:$0 sm:$0xff]
  %s22 = scalar_lea.vmem %s1, 6
  %23 = vst [vmem:[%s22] sm:$0x3] %v21
  %s24 = scalar_lea.vmem %s1, 22
  %25 = vst [vmem:[%s24] sm:$0x3] %v21
  %s26 = scalar_lea.vmem %s0, 4
  %v27 = vld [vmem:[%s26] ss:$0 sm:$0xff]
  %s28 = scalar_lea.vmem %s1, 8
  %29 = vst [vmem:[%s28] sm:$0x3] %v27
  %s30 = scalar_lea.vmem %s1, 24
  %31 = vst [vmem:[%s30] sm:$0x3] %v27
  %s32 = scalar_lea.vmem %s0, 5
  %v33 = vld [vmem:[%s32] ss:$0 sm:$0xff]
  %s34 = scalar_lea.vmem %s1, 10
  %35 = vst [vmem:[%s34] sm:$0x3] %v33
  %s36 = scalar_lea.vmem %s1, 26
  %37 = vst [vmem:[%s36] sm:$0x3] %v33
  %s38 = scalar_lea.vmem %s0, 6
  %v39 = vld [vmem:[%s38] ss:$0 sm:$0xff]
  %s40 = scalar_lea.vmem %s1, 12
  %41 = vst [vmem:[%s40] sm:$0x3] %v39
  %s42 = scalar_lea.vmem %s1, 28
  %43 = vst [vmem:[%s42] sm:$0x3] %v39
  %s44 = scalar_lea.vmem %s0, 7
  %v45 = vld [vmem:[%s44] ss:$0 sm:$0xff]
  %s46 = scalar_lea.vmem %s1, 14
  %47 = vst [vmem:[%s46] sm:$0x3] %v45
  %s48 = scalar_lea.vmem %s1, 30
  %49 = vst [vmem:[%s48] sm:$0x3] %v45

// kernel: tile.9
$region0: #{tile.9}
  %s0 = inlined_call_operand.vmem [shape: f32[2,8,2,8], index: 0, kind: input, shape index: {}]
  %s1 = inlined_call_operand.vmem [shape: f32[16,16], index: 1, kind: output, shape index: {}]
  $region1: #{tile.9} parent=0
    #allocation0 [shape = 'u8[65536]{0}', space=vmem, size = 0x10000, scoped, tag = 'scoped mem for input reshape']
    %s3 = ssub.s32 4, 1
    %s4 = scalar_lea.vmem %s0, 30
    %v5 = vld [vmem:[%s4] sm:%s3]
    %s6 = scalar_lea.vmem [#allocation0], 120
    %7 = vst [vmem:[%s6] sm:%s3] %v5
    %s8 = scalar_lea.vmem %s0, 28
    %v9 = vld [vmem:[%s8] sm:%s3]
    %s10 = scalar_lea.vmem [#allocation0], 112
    %11 = vst [vmem:[%s10] sm:%s3] %v9
    %s12 = scalar_lea.vmem %s0, 26
    %v13 = vld [vmem:[%s12] sm:%s3]
    %s14 = scalar_lea.vmem [#allocation0], 104
    %15 = vst [vmem:[%s14] sm:%s3] %v13
    %s16 = scalar_lea.vmem %s0, 24
    %v17 = vld [vmem:[%s16] sm:%s3]
    %s18 = scalar_lea.vmem [#allocation0], 96
    %19 = vst [vmem:[%s18] sm:%s3] %v17
    %s20 = scalar_lea.vmem %s0, 22
    %v21 = vld [vmem:[%s20] sm:%s3]
    %s22 = scalar_lea.vmem [#allocation0], 88
    %23 = vst [vmem:[%s22] sm:%s3] %v21
    %s24 = scalar_lea.vmem %s0, 20
    %v25 = vld [vmem:[%s24] sm:%s3]
    %s26 = scalar_lea.vmem [#allocation0], 80
    %27 = vst [vmem:[%s26] sm:%s3] %v25
    %s28 = scalar_lea.vmem %s0, 18
    %v29 = vld [vmem:[%s28] sm:%s3]
    %s30 = scalar_lea.vmem [#allocation0], 72
    %31 = vst [vmem:[%s30] sm:%s3] %v29
    %s32 = scalar_lea.vmem %s0, 16
    %v33 = vld [vmem:[%s32] sm:%s3]
    %s34 = scalar_lea.vmem [#allocation0], 64
    %35 = vst [vmem:[%s34] sm:%s3] %v33
    %s36 = scalar_lea.vmem %s0, 14
    %v37 = vld [vmem:[%s36] sm:%s3]
    %s38 = scalar_lea.vmem [#allocation0], 56
    %39 = vst [vmem:[%s38] sm:%s3] %v37
    %s40 = scalar_lea.vmem %s0, 12
    %v41 = vld [vmem:[%s40] sm:%s3]
    %s42 = scalar_lea.vmem [#allocation0], 48
    %43 = vst [vmem:[%s42] sm:%s3] %v41
    %s44 = scalar_lea.vmem %s0, 10
    %v45 = vld [vmem:[%s44] sm:%s3]
    %s46 = scalar_lea.vmem [#allocation0], 40
    %47 = vst [vmem:[%s46] sm:%s3] %v45
    %s48 = scalar_lea.vmem %s0, 8
    %v49 = vld [vmem:[%s48] sm:%s3]
    %s50 = scalar_lea.vmem [#allocation0], 32
    %51 = vst [vmem:[%s50] sm:%s3] %v49
    %s52 = scalar_lea.vmem %s0, 6
    %v53 = vld [vmem:[%s52] sm:%s3]
    %s54 = scalar_lea.vmem [#allocation0], 24
    %55 = vst [vmem:[%s54] sm:%s3] %v53
    %s56 = scalar_lea.vmem %s0, 4
    %v57 = vld [vmem:[%s56] sm:%s3]
    %s58 = scalar_lea.vmem [#allocation0], 16
    %59 = vst [vmem:[%s58] sm:%s3] %v57
    %s60 = scalar_lea.vmem %s0, 2
    %v61 = vld [vmem:[%s60] sm:%s3]
    %s62 = scalar_lea.vmem [#allocation0], 8
    %63 = vst [vmem:[%s62] sm:%s3] %v61
    %v64 = vld [vmem:[%s0] sm:%s3]
    %65 = vst [vmem:[#allocation0] sm:%s3] %v64
    %v66 = vld [vmem:[#allocation0] ss:$8 sm:$0xf]
    %v67 = vld [vmem:[#allocation0] ss:$8 sm:$0xf0]
    %vm68 = vcmask 1047556
    %v69 = vsel %vm68, %v67, %v66
    %vm70 = vcmask 64512
    %71 = vst.msk [vmem:[%s1] sm:$0xff] %vm70, %v69
    %s72 = scalar_lea.vmem [#allocation0], 64
    %v73 = vld [vmem:[%s72] ss:$8 sm:$0xf]
    %s74 = scalar_lea.vmem [#allocation0], 64
    %v75 = vld [vmem:[%s74] ss:$8 sm:$0xf0]
    %vm76 = vcmask 1047556
    %v77 = vsel %vm76, %v75, %v73
    %vm78 = vcmask 64512
    %s79 = scalar_lea.vmem %s1, 8
    %80 = vst.msk [vmem:[%s79] sm:$0xff] %vm78, %v77
    %s81 = scalar_lea.vmem [#allocation0], 1
    %v82 = vld [vmem:[%s81] ss:$8 sm:$0xf]
    %s83 = scalar_lea.vmem [#allocation0], 1
    %v84 = vld [vmem:[%s83] ss:$8 sm:$0xf0]
    %vm85 = vcmask 1047556
    %v86 = vsel %vm85, %v84, %v82
    %87 = vrot.lane.b32.xlu0 %v86, 8
    %v88 = vpop.permute.xlu0 %87
    %vm89 = vcmask 130112
    %90 = vst.msk [vmem:[%s1] sm:$0xff] %vm89, %v88
    %s91 = scalar_lea.vmem [#allocation0], 65
    %v92 = vld [vmem:[%s91] ss:$8 sm:$0xf]
    %s93 = scalar_lea.vmem [#allocation0], 65
    %v94 = vld [vmem:[%s93] ss:$8 sm:$0xf0]
    %vm95 = vcmask 1047556
    %v96 = vsel %vm95, %v94, %v92
    %97 = vrot.lane.b32.xlu0 %v96, 8
    %v98 = vpop.permute.xlu0 %97
    %vm99 = vcmask 130112
    %s100 = scalar_lea.vmem %s1, 8
    %101 = vst.msk [vmem:[%s100] sm:$0xff] %vm99, %v98

// kernel: translation_model_forward.1
$region0: #{translation_model_forward.1}
  #allocation0 [shape = 'u32[]', space=smem, size = 0x4, offset = 0x4, fixed_abs, tag = 'smem constant byte address 0x4 - core index']
  #allocation1 [shape = 'u32[72,128]{1,0:T(1,128)}', space=vmem, size = 0x9000, scoped, tag = 'internal scratch']
  %s0 = inlined_call_operand.smem [shape: u32[44], index: -1, kind: input, shape index: {}]
  %s1 = sld [smem:[%s0]]
  %s2 = scalar_lea.smem %s0, 1
  %s3 = sld [smem:[%s2]]
  %s4 = scalar_lea.smem %s0, 2
  %s5 = sld [smem:[%s4]]
  %s6 = scalar_lea.smem %s0, 3
  %s7 = sld [smem:[%s6]]
  %s8 = scalar_lea.smem %s0, 4
  %s9 = sld [smem:[%s8]]
  %s10 = scalar_lea.smem %s0, 5
  %s11 = sld [smem:[%s10]]
  %s12 = scalar_lea.smem %s0, 6
  %s13 = sld [smem:[%s12]]
  %s14 = scalar_lea.smem %s0, 7
  %s15 = sld [smem:[%s14]]
  %s16 = scalar_lea.smem %s0, 8
  %s17 = sld [smem:[%s16]]
  %s18 = scalar_lea.smem %s0, 9
  %s19 = sld [smem:[%s18]]
  %s20 = scalar_lea.smem %s0, 10
  %s21 = sld [smem:[%s20]]
  %s22 = scalar_lea.smem %s0, 11
  %s23 = sld [smem:[%s22]]
  %s24 = scalar_lea.smem %s0, 12
  %s25 = sld [smem:[%s24]]
  %s26 = scalar_lea.smem %s0, 13
  %s27 = sld [smem:[%s26]]
  %s28 = scalar_lea.smem %s0, 14
  %s29 = sld [smem:[%s28]]
  %s30 = scalar_lea.smem %s0, 15
  %s31 = sld [smem:[%s30]]
  %s32 = scalar_lea.smem %s0, 16
  %s33 = sld [smem:[%s32]]
  %s34 = scalar_lea.smem %s0, 17
  %s35 = sld [smem:[%s34]]
  %s36 = scalar_lea.smem %s0, 18
  %s37 = sld [smem:[%s36]]
  %s38 = scalar_lea.smem %s0, 19
  %s39 = sld [smem:[%s38]]
  %s40 = scalar_lea.smem %s0, 20
  %s41 = sld [smem:[%s40]]
  %s42 = scalar_lea.smem %s0, 21
  %s43 = sld [smem:[%s42]]
  %s44 = scalar_lea.smem %s0, 22
  %s45 = sld [smem:[%s44]]
  %s46 = scalar_lea.smem %s0, 23
  %s47 = sld [smem:[%s46]]
  %s48 = scalar_lea.smem %s0, 24
  %s49 = sld [smem:[%s48]]
  %s50 = scalar_lea.smem %s0, 25
  %s51 = sld [smem:[%s50]]
  %s52 = scalar_lea.smem %s0, 26
  %s53 = sld [smem:[%s52]]
  %s54 = scalar_lea.smem %s0, 27
  %s55 = sld [smem:[%s54]]
  %s56 = scalar_lea.smem %s0, 28
  %s57 = sld [smem:[%s56]]
  %s58 = scalar_lea.smem %s0, 29
  %s59 = sld [smem:[%s58]]
  %s60 = scalar_lea.smem %s0, 30
  %s61 = sld [smem:[%s60]]
  %s62 = scalar_lea.smem %s0, 31
  %s63 = sld [smem:[%s62]]
  %s64 = scalar_lea.smem %s0, 32
  %s65 = sld [smem:[%s64]]
  %s66 = scalar_lea.smem %s0, 33
  %s67 = sld [smem:[%s66]]
  %s68 = scalar_lea.smem %s0, 34
  %s69 = sld [smem:[%s68]]
  %s70 = scalar_lea.smem %s0, 35
  %s71 = sld [smem:[%s70]]
  %s72 = scalar_lea.smem %s0, 36
  %s73 = sld [smem:[%s72]]
  %s74 = scalar_lea.smem %s0, 37
  %s75 = sld [smem:[%s74]]
  %s76 = scalar_lea.smem %s0, 38
  %s77 = sld [smem:[%s76]]
  %s78 = scalar_lea.smem %s0, 39
  %s79 = sld [smem:[%s78]]
  %s80 = scalar_lea.smem %s0, 40
  %s81 = sld [smem:[%s80]]
  %s82 = scalar_lea.smem %s0, 41
  %s83 = sld [smem:[%s82]]
  %s84 = scalar_lea.smem %s0, 42
  %s85 = sld [smem:[%s84]]
  %s86 = scalar_lea.smem %s0, 43
  %s87 = sld [smem:[%s86]]
  %s88 = sld [smem:[#allocation0]]
  $region182: #{translation_model_forward.1} parent=0
    _
  %s90 = ssub.s32 1, %s88
  %s91 = scalar_select 0, %s90, %s88
  // Predicated region
  $region2: #{translation_model_forward.1} parent=0 // pred_check
    _
  $region3: #{translation_model_forward.1} parent=0 // pred_check_branch
    %93 = sbr.rel (0) target = $region5
  $region4: #{translation_model_forward.1} parent=0 // pred_region
    _
  $region5: #{translation_model_forward.1} parent=0 // pred_fallthru
    _
  // Predicated region
  $region6: #{translation_model_forward.1} parent=0 // pred_check
    _
  $region7: #{translation_model_forward.1} parent=0 // pred_check_branch
    %95 = sbr.rel (0) target = $region9
  $region8: #{translation_model_forward.1} parent=0 // pred_region
    _
  $region9: #{translation_model_forward.1} parent=0 // pred_fallthru
    _
  // Predicated region
  $region10: #{translation_model_forward.1} parent=0 // pred_check
    _
  $region11: #{translation_model_forward.1} parent=0 // pred_check_branch
    %97 = sbr.rel (0) target = $region13
  $region12: #{translation_model_forward.1} parent=0 // pred_region
    _
  $region13: #{translation_model_forward.1} parent=0 // pred_fallthru
    _
  // Predicated region
  $region14: #{translation_model_forward.1} parent=0 // pred_check
    _
  $region15: #{translation_model_forward.1} parent=0 // pred_check_branch
    %99 = sbr.rel (0) target = $region17
  $region16: #{translation_model_forward.1} parent=0 // pred_region
    _
  $region17: #{translation_model_forward.1} parent=0 // pred_fallthru
    _
  // Predicated region
  $region18: #{translation_model_forward.1} parent=0 // pred_check
    _
  $region19: #{translation_model_forward.1} parent=0 // pred_check_branch
    %101 = sbr.rel (0) target = $region21
  $region20: #{translation_model_forward.1} parent=0 // pred_region
    _
  $region21: #{translation_model_forward.1} parent=0 // pred_fallthru
    _
  // Predicated region
  $region22: #{translation_model_forward.1} parent=0 // pred_check
    _
  $region23: #{translation_model_forward.1} parent=0 // pred_check_branch
    %103 = sbr.rel (0) target = $region25
  $region24: #{translation_model_forward.1} parent=0 // pred_region
    _
  $region25: #{translation_model_forward.1} parent=0 // pred_fallthru
    _
  // Predicated region
  $region26: #{translation_model_forward.1} parent=0 // pred_check
    _
  $region27: #{translation_model_forward.1} parent=0 // pred_check_branch
    %105 = sbr.rel (0) target = $region29
  $region28: #{translation_model_forward.1} parent=0 // pred_region
    _
  $region29: #{translation_model_forward.1} parent=0 // pred_fallthru
    _
  // Predicated region
  $region30: #{translation_model_forward.1} parent=0 // pred_check
    _
  $region31: #{translation_model_forward.1} parent=0 // pred_check_branch
    %107 = sbr.rel (0) target = $region33
  $region32: #{translation_model_forward.1} parent=0 // pred_region
    _
  $region33: #{translation_model_forward.1} parent=0 // pred_fallthru
    _
  // Predicated region
  $region34: #{translation_model_forward.1} parent=0 // pred_check
    _
  $region35: #{translation_model_forward.1} parent=0 // pred_check_branch
    %109 = sbr.rel (0) target = $region37
  $region36: #{translation_model_forward.1} parent=0 // pred_region
    _
  $region37: #{translation_model_forward.1} parent=0 // pred_fallthru
    _
  // Predicated region
  $region38: #{translation_model_forward.1} parent=0 // pred_check
    _
  $region39: #{translation_model_forward.1} parent=0 // pred_check_branch
    %111 = sbr.rel (0) target = $region41
  $region40: #{translation_model_forward.1} parent=0 // pred_region
    _
  $region41: #{translation_model_forward.1} parent=0 // pred_fallthru
    _
  // Predicated region
  $region42: #{translation_model_forward.1} parent=0 // pred_check
    _
  $region43: #{translation_model_forward.1} parent=0 // pred_check_branch
    %113 = sbr.rel (0) target = $region45
  $region44: #{translation_model_forward.1} parent=0 // pred_region
    _
  $region45: #{translation_model_forward.1} parent=0 // pred_fallthru
    _
  // Predicated region
  $region46: #{translation_model_forward.1} parent=0 // pred_check
    _
  $region47: #{translation_model_forward.1} parent=0 // pred_check_branch
    %115 = sbr.rel (0) target = $region49
  $region48: #{translation_model_forward.1} parent=0 // pred_region
    _
  $region49: #{translation_model_forward.1} parent=0 // pred_fallthru
    _
  // Predicated region
  $region50: #{translation_model_forward.1} parent=0 // pred_check
    _
  $region51: #{translation_model_forward.1} parent=0 // pred_check_branch
    %117 = sbr.rel (0) target = $region53
  $region52: #{translation_model_forward.1} parent=0 // pred_region
    _
  $region53: #{translation_model_forward.1} parent=0 // pred_fallthru
    _
  // Predicated region
  $region54: #{translation_model_forward.1} parent=0 // pred_check
    _
  $region55: #{translation_model_forward.1} parent=0 // pred_check_branch
    %119 = sbr.rel (0) target = $region57
  $region56: #{translation_model_forward.1} parent=0 // pred_region
    _
  $region57: #{translation_model_forward.1} parent=0 // pred_fallthru
    _
  // Predicated region
  $region58: #{translation_model_forward.1} parent=0 // pred_check
    _
  $region59: #{translation_model_forward.1} parent=0 // pred_check_branch
    %121 = sbr.rel (0) target = $region61
  $region60: #{translation_model_forward.1} parent=0 // pred_region
    _
  $region61: #{translation_model_forward.1} parent=0 // pred_fallthru
    _
  // Predicated region
  $region62: #{translation_model_forward.1} parent=0 // pred_check
    _
  $region63: #{translation_model_forward.1} parent=0 // pred_check_branch
    %123 = sbr.rel (0) target = $region65
  $region64: #{translation_model_forward.1} parent=0 // pred_region
    _
  $region65: #{translation_model_forward.1} parent=0 // pred_fallthru
    _
  // Predicated region
  $region66: #{translation_model_forward.1} parent=0 // pred_check
    _
  $region67: #{translation_model_forward.1} parent=0 // pred_check_branch
    %125 = sbr.rel (0) target = $region69
  $region68: #{translation_model_forward.1} parent=0 // pred_region
    _
  $region69: #{translation_model_forward.1} parent=0 // pred_fallthru
    _
  // Predicated region
  $region70: #{translation_model_forward.1} parent=0 // pred_check
    _
  $region71: #{translation_model_forward.1} parent=0 // pred_check_branch
    %127 = sbr.rel (0) target = $region73
  $region72: #{translation_model_forward.1} parent=0 // pred_region
    _
  $region73: #{translation_model_forward.1} parent=0 // pred_fallthru
    _
  // Predicated region
  $region74: #{translation_model_forward.1} parent=0 // pred_check
    _
  $region75: #{translation_model_forward.1} parent=0 // pred_check_branch
    %129 = sbr.rel (0) target = $region77
  $region76: #{translation_model_forward.1} parent=0 // pred_region
    _
  $region77: #{translation_model_forward.1} parent=0 // pred_fallthru
    _
  // Predicated region
  $region78: #{translation_model_forward.1} parent=0 // pred_check
    _
  $region79: #{translation_model_forward.1} parent=0 // pred_check_branch
    %131 = sbr.rel (0) target = $region81
  $region80: #{translation_model_forward.1} parent=0 // pred_region
    _
  $region81: #{translation_model_forward.1} parent=0 // pred_fallthru
    _
  // Predicated region
  $region82: #{translation_model_forward.1} parent=0 // pred_check
    _
  $region83: #{translation_model_forward.1} parent=0 // pred_check_branch
    %133 = sbr.rel (0) target = $region85
  $region84: #{translation_model_forward.1} parent=0 // pred_region
    _
  $region85: #{translation_model_forward.1} parent=0 // pred_fallthru
    _
  // Predicated region
  $region86: #{translation_model_forward.1} parent=0 // pred_check
    _
  $region87: #{translation_model_forward.1} parent=0 // pred_check_branch
    %135 = sbr.rel (0) target = $region89
  $region88: #{translation_model_forward.1} parent=0 // pred_region
    _
  $region89: #{translation_model_forward.1} parent=0 // pred_fallthru
    _
  // Predicated region
  $region90: #{translation_model_forward.1} parent=0 // pred_check
    _
  $region91: #{translation_model_forward.1} parent=0 // pred_check_branch
    %137 = sbr.rel (0) target = $region93
  $region92: #{translation_model_forward.1} parent=0 // pred_region
    _
  $region93: #{translation_model_forward.1} parent=0 // pred_fallthru
    _
  // Predicated region
  $region94: #{translation_model_forward.1} parent=0 // pred_check
    _
  $region95: #{translation_model_forward.1} parent=0 // pred_check_branch
    %139 = sbr.rel (0) target = $region97
  $region96: #{translation_model_forward.1} parent=0 // pred_region
    _
  $region97: #{translation_model_forward.1} parent=0 // pred_fallthru
    _
  // Predicated region
  $region98: #{translation_model_forward.1} parent=0 // pred_check
    _
  $region99: #{translation_model_forward.1} parent=0 // pred_check_branch
    %141 = sbr.rel (0) target = $region101
  $region100: #{translation_model_forward.1} parent=0 // pred_region
    _
  $region101: #{translation_model_forward.1} parent=0 // pred_fallthru
    _
  // Predicated region
  $region102: #{translation_model_forward.1} parent=0 // pred_check
    _
  $region103: #{translation_model_forward.1} parent=0 // pred_check_branch
    %143 = sbr.rel (0) target = $region105
  $region104: #{translation_model_forward.1} parent=0 // pred_region
    _
  $region105: #{translation_model_forward.1} parent=0 // pred_fallthru
    _
  // Predicated region
  $region106: #{translation_model_forward.1} parent=0 // pred_check
    _
  $region107: #{translation_model_forward.1} parent=0 // pred_check_branch
    %145 = sbr.rel (0) target = $region109
  $region108: #{translation_model_forward.1} parent=0 // pred_region
    _
  $region109: #{translation_model_forward.1} parent=0 // pred_fallthru
    _
  // Predicated region
  $region110: #{translation_model_forward.1} parent=0 // pred_check
    _
  $region111: #{translation_model_forward.1} parent=0 // pred_check_branch
    %147 = sbr.rel (0) target = $region113
  $region112: #{translation_model_forward.1} parent=0 // pred_region
    _
  $region113: #{translation_model_forward.1} parent=0 // pred_fallthru
    _
  // Predicated region
  $region114: #{translation_model_forward.1} parent=0 // pred_check
    _
  $region115: #{translation_model_forward.1} parent=0 // pred_check_branch
    %149 = sbr.rel (0) target = $region117
  $region116: #{translation_model_forward.1} parent=0 // pred_region
    _
  $region117: #{translation_model_forward.1} parent=0 // pred_fallthru
    _
  // Predicated region
  $region118: #{translation_model_forward.1} parent=0 // pred_check
    _
  $region119: #{translation_model_forward.1} parent=0 // pred_check_branch
    %151 = sbr.rel (0) target = $region121
  $region120: #{translation_model_forward.1} parent=0 // pred_region
    _
  $region121: #{translation_model_forward.1} parent=0 // pred_fallthru
    _
  // Predicated region
  $region122: #{translation_model_forward.1} parent=0 // pred_check
    _
  $region123: #{translation_model_forward.1} parent=0 // pred_check_branch
    %153 = sbr.rel (0) target = $region125
  $region124: #{translation_model_forward.1} parent=0 // pred_region
    _
  $region125: #{translation_model_forward.1} parent=0 // pred_fallthru
    _
  // Predicated region
  $region126: #{translation_model_forward.1} parent=0 // pred_check
    _
  $region127: #{translation_model_forward.1} parent=0 // pred_check_branch
    %155 = sbr.rel (0) target = $region129
  $region128: #{translation_model_forward.1} parent=0 // pred_region
    _
  $region129: #{translation_model_forward.1} parent=0 // pred_fallthru
    _
  // Predicated region
  $region130: #{translation_model_forward.1} parent=0 // pred_check
    _
  $region131: #{translation_model_forward.1} parent=0 // pred_check_branch
    %157 = sbr.rel (0) target = $region133
  $region132: #{translation_model_forward.1} parent=0 // pred_region
    _
  $region133: #{translation_model_forward.1} parent=0 // pred_fallthru
    _
  // Predicated region
  $region134: #{translation_model_forward.1} parent=0 // pred_check
    _
  $region135: #{translation_model_forward.1} parent=0 // pred_check_branch
    %159 = sbr.rel (0) target = $region137
  $region136: #{translation_model_forward.1} parent=0 // pred_region
    _
  $region137: #{translation_model_forward.1} parent=0 // pred_fallthru
    _
  // Predicated region
  $region138: #{translation_model_forward.1} parent=0 // pred_check
    _
  $region139: #{translation_model_forward.1} parent=0 // pred_check_branch
    %161 = sbr.rel (0) target = $region141
  $region140: #{translation_model_forward.1} parent=0 // pred_region
    _
  $region141: #{translation_model_forward.1} parent=0 // pred_fallthru
    _
  // Predicated region
  $region142: #{translation_model_forward.1} parent=0 // pred_check
    _
  $region143: #{translation_model_forward.1} parent=0 // pred_check_branch
    %163 = sbr.rel (0) target = $region145
  $region144: #{translation_model_forward.1} parent=0 // pred_region
    _
  $region145: #{translation_model_forward.1} parent=0 // pred_fallthru
    _
  // Predicated region
  $region146: #{translation_model_forward.1} parent=0 // pred_check
    _
  $region147: #{translation_model_forward.1} parent=0 // pred_check_branch
    %165 = sbr.rel (0) target = $region149
  $region148: #{translation_model_forward.1} parent=0 // pred_region
    _
  $region149: #{translation_model_forward.1} parent=0 // pred_fallthru
    _
  // Predicated region
  $region150: #{translation_model_forward.1} parent=0 // pred_check
    _
  $region151: #{translation_model_forward.1} parent=0 // pred_check_branch
    %167 = sbr.rel (0) target = $region153
  $region152: #{translation_model_forward.1} parent=0 // pred_region
    _
  $region153: #{translation_model_forward.1} parent=0 // pred_fallthru
    _
  // Predicated region
  $region154: #{translation_model_forward.1} parent=0 // pred_check
    _
  $region155: #{translation_model_forward.1} parent=0 // pred_check_branch
    %169 = sbr.rel (0) target = $region157
  $region156: #{translation_model_forward.1} parent=0 // pred_region
    _
  $region157: #{translation_model_forward.1} parent=0 // pred_fallthru
    _
  // Predicated region
  $region158: #{translation_model_forward.1} parent=0 // pred_check
    _
  $region159: #{translation_model_forward.1} parent=0 // pred_check_branch
    %171 = sbr.rel (0) target = $region161
  $region160: #{translation_model_forward.1} parent=0 // pred_region
    _
  $region161: #{translation_model_forward.1} parent=0 // pred_fallthru
    _
  // Predicated region
  $region162: #{translation_model_forward.1} parent=0 // pred_check
    _
  $region163: #{translation_model_forward.1} parent=0 // pred_check_branch
    %173 = sbr.rel (0) target = $region165
  $region164: #{translation_model_forward.1} parent=0 // pred_region
    _
  $region165: #{translation_model_forward.1} parent=0 // pred_fallthru
    _
  // Predicated region
  $region166: #{translation_model_forward.1} parent=0 // pred_check
    _
  $region167: #{translation_model_forward.1} parent=0 // pred_check_branch
    %175 = sbr.rel (0) target = $region169
  $region168: #{translation_model_forward.1} parent=0 // pred_region
    _
  $region169: #{translation_model_forward.1} parent=0 // pred_fallthru
    _
  // Predicated region
  $region170: #{translation_model_forward.1} parent=0 // pred_check
    _
  $region171: #{translation_model_forward.1} parent=0 // pred_check_branch
    %177 = sbr.rel (0) target = $region173
  $region172: #{translation_model_forward.1} parent=0 // pred_region
    _
  $region173: #{translation_model_forward.1} parent=0 // pred_fallthru
    _
  %v179 = vld [vmem:[%s5] sm:$0xff]
  %v180 = vld [vmem:[%s5 + $0x8] sm:$0xff]
  %v181 = vld [vmem:[%s5 + $0x10] sm:$0xff]
  %v182 = vld [vmem:[%s5 + $0x18] sm:$0xff]
  %v183 = vld [vmem:[%s7] sm:$0xff]
  %v184 = vld [vmem:[%s7 + $0x8] sm:$0xff]
  %v185 = vld [vmem:[%s9] sm:$0xff]
  %v186 = vld [vmem:[%s9 + $0x8] sm:$0xff]
  %v187 = vld [vmem:[%s1] sm:$0xff]
  %v188 = vld [vmem:[%s1 + $0x8] sm:$0xff]
  %v189 = vld [vmem:[%s1 + $0x10] sm:$0xff]
  %v190 = vld [vmem:[%s1 + $0x18] sm:$0xff]
  %v191 = vld [vmem:[%s11] sm:$0xf]
  %v192 = vld [vmem:[%s11 + $0x4] sm:$0xf]
  %v193 = vld [vmem:[%s11 + $0x8] sm:$0xf]
  %v194 = vld [vmem:[%s11 + $0xc] sm:$0xf]
  %v195 = vpack.c.bf16 %v188, %v187
  %v196 = vpack.c.bf16 %v190, %v189
  %v197 = vld [vmem:[%s13] sm:$0x1]
  %v199 = vperm.slane %v197, 0
  %v205 = vunpack.c.l.b16 %v191
  %v206 = vunpack.c.l.b16 %v192
  %v207 = vunpack.c.l.b16 %v193
  %v208 = vunpack.c.l.b16 %v194
  %v209 = vpack.c.b16 %v206, %v205
  %v210 = vpack.c.b16 %v208, %v207
  %vm213 = vcmask 261120
  %v215 = vsel %vm213, %v195, 0
  %v218 = vsel %vm213, %v196, 0
  %220 = vmatpush.bf16.msra.mxu0 0
  %221 = vmatpush.bf16.msra.mxu0 0
  %222 = vmatpush.bf16.msra.mxu0 0
  %223 = vmatpush.bf16.msra.mxu0 0
  %224 = vmatpush.bf16.msra.mxu0 0
  %225 = vmatpush.bf16.msra.mxu0 0
  %226 = vmatpush.bf16.msra.mxu0 %v210
  %227 = vmatpush.bf16.msra.mxu0 %v209
  %228 = vmatmul.bf16.gmra.mxu0 %v215
  %v229 = vpop.f32.mrf.mxu0
  %v230 = vadd.f32 %v199, %v229
  %v231 = vpop.f32.mrf.mxu0
  %v232 = vadd.f32 %v199, %v231
  %233 = vmatmul.bf16.gmra.mxu0 %v218
  %v234 = vpop.f32.mrf.mxu0
  %v235 = vadd.f32 %v199, %v234
  %v236 = vpop.f32.mrf.mxu0
  %v237 = vadd.f32 %v199, %v236
  %238 = vdwg.mxu0
  %v239 = vld [vmem:[%s15] sm:$0xf]
  %v240 = vld [vmem:[%s15 + $0x4] sm:$0xf]
  %v241 = vld [vmem:[%s15 + $0x8] sm:$0xf]
  %v242 = vld [vmem:[%s15 + $0xc] sm:$0xf]
  %v243 = vld [vmem:[%s17] sm:$0x1]
  %v244 = vmul.f32 %v230, 0.35355338
  %v245 = vmul.f32 %v232, 0.35355338
  %v246 = vmul.f32 %v235, 0.35355338
  %v247 = vmul.f32 %v237, 0.35355338
  %v248 = vpack.c.bf16 %v244, %v244
  %v249 = vpack.c.bf16 %v245, %v245
  %v250 = vpack.c.bf16 %v246, %v246
  %v251 = vpack.c.bf16 %v247, %v247
  %v252 = vpack.c.bf16 %v230, %v230
  %v253 = vpack.c.bf16 %v232, %v232
  %v254 = vpack.c.bf16 %v235, %v235
  %v255 = vpack.c.bf16 %v237, %v237
  %v260 = vunpack.c.l.b16 %v248
  %v261 = vunpack.c.l.b16 %v249
  %v262 = vunpack.c.l.b16 %v250
  %v263 = vunpack.c.l.b16 %v251
  %v264 = vpack.c.b16 %v261, %v260
  %v265 = vpack.c.b16 %v263, %v262
  %v270 = vunpack.c.l.b16 %v252
  %v271 = vunpack.c.l.b16 %v253
  %v272 = vunpack.c.l.b16 %v254
  %v273 = vunpack.c.l.b16 %v255
  %v274 = vpack.c.b16 %v271, %v270
  %v275 = vpack.c.b16 %v273, %v272
  %276 = vrot.lane.b32.xlu0 %v274, 96
  %v277 = vpop.permute.xlu0 %276
  %278 = vrot.lane.b32.xlu0 %v275, 96
  %v279 = vpop.permute.xlu0 %278
  %vm280 = vcmask 64512
  %v282 = vsel %vm280, %v264, 0
  %v285 = vsel %vm280, %v265, 0
  %v288 = vsel %vm280, %v277, 0
  %v291 = vsel %vm280, %v279, 0
  %293 = vmatpush.bf16.xpose.msra.mxu0 0
  %294 = vmatpush.bf16.xpose.msra.mxu0 0
  %295 = vmatpush.bf16.xpose.msra.mxu0 0
  %296 = vmatpush.bf16.xpose.msra.mxu0 0
  %297 = vmatpush.bf16.xpose.msra.mxu0 0
  %298 = vmatpush.bf16.xpose.msra.mxu0 0
  %299 = vmatpush.bf16.xpose.msra.mxu0 %v291
  %300 = vmatpush.bf16.xpose.msra.mxu0 %v288
  %301 = vmatmul.bf16.gmra.mxu0 %v282
  %v302 = vpop.f32.mrf.mxu0
  %v303 = vadd.f32 %v179, %v302
  %v304 = vpop.f32.mrf.mxu0
  %v305 = vadd.f32 %v180, %v304
  %306 = vmatmul.bf16.gmra.mxu0 %v285
  %v307 = vpop.f32.mrf.mxu0
  %v308 = vadd.f32 %v181, %v307
  %v309 = vpop.f32.mrf.mxu0
  %v310 = vadd.f32 %v182, %v309
  %311 = vdwg.mxu0
  %v312 = vsel %vm213, %v303, -inf
  %313 = vmax.xlane.f32.xlu0 %v312
  %v314 = vpop.xlane.xlu0 %313
  %v315 = vsel %vm213, %v305, -inf
  %316 = vmax.xlane.f32.xlu0 %v315
  %v317 = vpop.xlane.xlu0 %316
  %v318 = vsel %vm213, %v308, -inf
  %319 = vmax.xlane.f32.xlu0 %v318
  %v320 = vpop.xlane.xlu0 %319
  %v321 = vsel %vm213, %v310, -inf
  %322 = vmax.xlane.f32.xlu0 %v321
  %v323 = vpop.xlane.xlu0 %322
  %v324 = vsub.f32 %v303, %v314
  %v325 = vsub.f32 %v305, %v317
  %v326 = vsub.f32 %v308, %v320
  %v327 = vsub.f32 %v310, %v323
  %v328 = vmul.f32 %v324, 1.442695
  %v329 = vpow.pop %v328
  %v330 = vmul.f32 %v325, 1.442695
  %v331 = vpow.pop %v330
  %v332 = vmul.f32 %v326, 1.442695
  %v333 = vpow.pop %v332
  %v334 = vmul.f32 %v327, 1.442695
  %v335 = vpow.pop %v334
  %v336 = vsel %vm213, %v329, 0.0
  %337 = vadd.xlane.f32.xlu0 %v336
  %v338 = vpop.xlane.xlu0 %337
  %v339 = vsel %vm213, %v331, 0.0
  %340 = vadd.xlane.f32.xlu0 %v339
  %v341 = vpop.xlane.xlu0 %340
  %v342 = vsel %vm213, %v333, 0.0
  %343 = vadd.xlane.f32.xlu0 %v342
  %v344 = vpop.xlane.xlu0 %343
  %v345 = vsel %vm213, %v335, 0.0
  %346 = vadd.xlane.f32.xlu0 %v345
  %v347 = vpop.xlane.xlu0 %346
  %v348 = vrcp.pop %v338
  %v349 = vrcp.pop %v341
  %v350 = vrcp.pop %v344
  %v351 = vrcp.pop %v347
  %v352 = vmul.f32 %v329, %v348
  %v353 = vmul.f32 %v331, %v349
  %v354 = vmul.f32 %v333, %v350
  %v355 = vmul.f32 %v335, %v351
  %v356 = vpack.c.bf16 %v353, %v352
  %v357 = vpack.c.bf16 %v355, %v354
  %358 = vrot.lane.b32.xlu0 %v274, 64
  %v359 = vpop.permute.xlu0 %358
  %360 = vrot.lane.b32.xlu0 %v275, 64
  %v361 = vpop.permute.xlu0 %360
  %v365 = vsel %vm213, %v356, 0
  %v368 = vsel %vm213, %v357, 0
  %370 = vmatpush.bf16.msra.mxu0 0
  %371 = vmatpush.bf16.msra.mxu0 0
  %372 = vmatpush.bf16.msra.mxu0 0
  %373 = vmatpush.bf16.msra.mxu0 0
  %374 = vmatpush.bf16.msra.mxu0 0
  %375 = vmatpush.bf16.msra.mxu0 0
  %376 = vmatpush.bf16.msra.mxu0 %v361
  %377 = vmatpush.bf16.msra.mxu0 %v359
  %378 = vmatmul.bf16.gmra.mxu0 %v365
  %v379 = vpop.f32.mrf.mxu0
  %v380 = vadd.f32 0.0, %v379
  %v381 = vpop.f32.mrf.mxu0
  %v382 = vadd.f32 0.0, %v381
  %383 = vmatmul.bf16.gmra.mxu0 %v368
  %v384 = vpop.f32.mrf.mxu0
  %v385 = vadd.f32 0.0, %v384
  %v386 = vpop.f32.mrf.mxu0
  %v387 = vadd.f32 0.0, %v386
  %388 = vdwg.mxu0
  %389 = vrot.lane.b32.xlu0 %v264, 120
  %v390 = vpop.permute.xlu0 %389
  %391 = vrot.lane.b32.xlu0 %v265, 120
  %v392 = vpop.permute.xlu0 %391
  %393 = vrot.lane.b32.xlu0 %v274, 88
  %v394 = vpop.permute.xlu0 %393
  %395 = vrot.lane.b32.xlu0 %v275, 88
  %v396 = vpop.permute.xlu0 %395
  %v398 = vsel %vm280, %v390, 0
  %v401 = vsel %vm280, %v392, 0
  %v404 = vsel %vm280, %v394, 0
  %v407 = vsel %vm280, %v396, 0
  %409 = vmatpush.bf16.xpose.msra.mxu0 0
  %410 = vmatpush.bf16.xpose.msra.mxu0 0
  %411 = vmatpush.bf16.xpose.msra.mxu0 0
  %412 = vmatpush.bf16.xpose.msra.mxu0 0
  %413 = vmatpush.bf16.xpose.msra.mxu0 0
  %414 = vmatpush.bf16.xpose.msra.mxu0 0
  %415 = vmatpush.bf16.xpose.msra.mxu0 %v407
  %416 = vmatpush.bf16.xpose.msra.mxu0 %v404
  %417 = vmatmul.bf16.gmra.mxu0 %v398
  %v418 = vpop.f32.mrf.mxu0
  %v419 = vadd.f32 %v179, %v418
  %v420 = vpop.f32.mrf.mxu0
  %v421 = vadd.f32 %v180, %v420
  %422 = vmatmul.bf16.gmra.mxu0 %v401
  %v423 = vpop.f32.mrf.mxu0
  %v424 = vadd.f32 %v181, %v423
  %v425 = vpop.f32.mrf.mxu0
  %v426 = vadd.f32 %v182, %v425
  %427 = vdwg.mxu0
  %v428 = vsel %vm213, %v419, -inf
  %429 = vmax.xlane.f32.xlu0 %v428
  %v430 = vpop.xlane.xlu0 %429
  %v431 = vsel %vm213, %v421, -inf
  %432 = vmax.xlane.f32.xlu0 %v431
  %v433 = vpop.xlane.xlu0 %432
  %v434 = vsel %vm213, %v424, -inf
  %435 = vmax.xlane.f32.xlu0 %v434
  %v436 = vpop.xlane.xlu0 %435
  %v437 = vsel %vm213, %v426, -inf
  %438 = vmax.xlane.f32.xlu0 %v437
  %v439 = vpop.xlane.xlu0 %438
  %v440 = vsub.f32 %v419, %v430
  %v441 = vsub.f32 %v421, %v433
  %v442 = vsub.f32 %v424, %v436
  %v443 = vsub.f32 %v426, %v439
  %v444 = vmul.f32 %v440, 1.442695
  %v445 = vpow.pop %v444
  %v446 = vmul.f32 %v441, 1.442695
  %v447 = vpow.pop %v446
  %v448 = vmul.f32 %v442, 1.442695
  %v449 = vpow.pop %v448
  %v450 = vmul.f32 %v443, 1.442695
  %v451 = vpow.pop %v450
  %v452 = vsel %vm213, %v445, 0.0
  %453 = vadd.xlane.f32.xlu0 %v452
  %v454 = vpop.xlane.xlu0 %453
  %v455 = vsel %vm213, %v447, 0.0
  %456 = vadd.xlane.f32.xlu0 %v455
  %v457 = vpop.xlane.xlu0 %456
  %v458 = vsel %vm213, %v449, 0.0
  %459 = vadd.xlane.f32.xlu0 %v458
  %v460 = vpop.xlane.xlu0 %459
  %v461 = vsel %vm213, %v451, 0.0
  %462 = vadd.xlane.f32.xlu0 %v461
  %v463 = vpop.xlane.xlu0 %462
  %v464 = vrcp.pop %v454
  %v465 = vrcp.pop %v457
  %v466 = vrcp.pop %v460
  %v467 = vrcp.pop %v463
  %v468 = vmul.f32 %v445, %v464
  %v469 = vmul.f32 %v447, %v465
  %v470 = vmul.f32 %v449, %v466
  %v471 = vmul.f32 %v451, %v467
  %v472 = vpack.c.bf16 %v469, %v468
  %v473 = vpack.c.bf16 %v471, %v470
  %474 = vrot.lane.b32.xlu0 %v274, 56
  %v475 = vpop.permute.xlu0 %474
  %476 = vrot.lane.b32.xlu0 %v275, 56
  %v477 = vpop.permute.xlu0 %476
  %v481 = vsel %vm213, %v472, 0
  %v484 = vsel %vm213, %v473, 0
  %486 = vmatpush.bf16.msra.mxu0 0
  %487 = vmatpush.bf16.msra.mxu0 0
  %488 = vmatpush.bf16.msra.mxu0 0
  %489 = vmatpush.bf16.msra.mxu0 0
  %490 = vmatpush.bf16.msra.mxu0 0
  %491 = vmatpush.bf16.msra.mxu0 0
  %492 = vmatpush.bf16.msra.mxu0 %v477
  %493 = vmatpush.bf16.msra.mxu0 %v475
  %494 = vmatmul.bf16.gmra.mxu0 %v481
  %v495 = vpop.f32.mrf.mxu0
  %v496 = vadd.f32 0.0, %v495
  %v497 = vpop.f32.mrf.mxu0
  %v498 = vadd.f32 0.0, %v497
  %499 = vmatmul.bf16.gmra.mxu0 %v484
  %v500 = vpop.f32.mrf.mxu0
  %v501 = vadd.f32 0.0, %v500
  %v502 = vpop.f32.mrf.mxu0
  %v503 = vadd.f32 0.0, %v502
  %504 = vdwg.mxu0
  %505 = vrot.lane.b32.xlu0 %v264, 112
  %v506 = vpop.permute.xlu0 %505
  %507 = vrot.lane.b32.xlu0 %v265, 112
  %v508 = vpop.permute.xlu0 %507
  %509 = vrot.lane.b32.xlu0 %v274, 80
  %v510 = vpop.permute.xlu0 %509
  %511 = vrot.lane.b32.xlu0 %v275, 80
  %v512 = vpop.permute.xlu0 %511
  %v514 = vsel %vm280, %v506, 0
  %v517 = vsel %vm280, %v508, 0
  %v520 = vsel %vm280, %v510, 0
  %v523 = vsel %vm280, %v512, 0
  %525 = vmatpush.bf16.xpose.msra.mxu0 0
  %526 = vmatpush.bf16.xpose.msra.mxu0 0
  %527 = vmatpush.bf16.xpose.msra.mxu0 0
  %528 = vmatpush.bf16.xpose.msra.mxu0 0
  %529 = vmatpush.bf16.xpose.msra.mxu0 0
  %530 = vmatpush.bf16.xpose.msra.mxu0 0
  %531 = vmatpush.bf16.xpose.msra.mxu0 %v523
  %532 = vmatpush.bf16.xpose.msra.mxu0 %v520
  %533 = vmatmul.bf16.gmra.mxu0 %v514
  %v534 = vpop.f32.mrf.mxu0
  %v535 = vadd.f32 %v179, %v534
  %v536 = vpop.f32.mrf.mxu0
  %v537 = vadd.f32 %v180, %v536
  %538 = vmatmul.bf16.gmra.mxu0 %v517
  %v539 = vpop.f32.mrf.mxu0
  %v540 = vadd.f32 %v181, %v539
  %v541 = vpop.f32.mrf.mxu0
  %v542 = vadd.f32 %v182, %v541
  %543 = vdwg.mxu0
  %v544 = vsel %vm213, %v535, -inf
  %545 = vmax.xlane.f32.xlu0 %v544
  %v546 = vpop.xlane.xlu0 %545
  %v547 = vsel %vm213, %v537, -inf
  %548 = vmax.xlane.f32.xlu0 %v547
  %v549 = vpop.xlane.xlu0 %548
  %v550 = vsel %vm213, %v540, -inf
  %551 = vmax.xlane.f32.xlu0 %v550
  %v552 = vpop.xlane.xlu0 %551
  %v553 = vsel %vm213, %v542, -inf
  %554 = vmax.xlane.f32.xlu0 %v553
  %v555 = vpop.xlane.xlu0 %554
  %v556 = vsub.f32 %v535, %v546
  %v557 = vsub.f32 %v537, %v549
  %v558 = vsub.f32 %v540, %v552
  %v559 = vsub.f32 %v542, %v555
  %v560 = vmul.f32 %v556, 1.442695
  %v561 = vpow.pop %v560
  %v562 = vmul.f32 %v557, 1.442695
  %v563 = vpow.pop %v562
  %v564 = vmul.f32 %v558, 1.442695
  %v565 = vpow.pop %v564
  %v566 = vmul.f32 %v559, 1.442695
  %v567 = vpow.pop %v566
  %v568 = vsel %vm213, %v561, 0.0
  %569 = vadd.xlane.f32.xlu0 %v568
  %v570 = vpop.xlane.xlu0 %569
  %v571 = vsel %vm213, %v563, 0.0
  %572 = vadd.xlane.f32.xlu0 %v571
  %v573 = vpop.xlane.xlu0 %572
  %v574 = vsel %vm213, %v565, 0.0
  %575 = vadd.xlane.f32.xlu0 %v574
  %v576 = vpop.xlane.xlu0 %575
  %v577 = vsel %vm213, %v567, 0.0
  %578 = vadd.xlane.f32.xlu0 %v577
  %v579 = vpop.xlane.xlu0 %578
  %v580 = vrcp.pop %v570
  %v581 = vrcp.pop %v573
  %v582 = vrcp.pop %v576
  %v583 = vrcp.pop %v579
  %v584 = vmul.f32 %v561, %v580
  %v585 = vmul.f32 %v563, %v581
  %v586 = vmul.f32 %v565, %v582
  %v587 = vmul.f32 %v567, %v583
  %v588 = vpack.c.bf16 %v585, %v584
  %v589 = vpack.c.bf16 %v587, %v586
  %590 = vrot.lane.b32.xlu0 %v274, 48
  %v591 = vpop.permute.xlu0 %590
  %592 = vrot.lane.b32.xlu0 %v275, 48
  %v593 = vpop.permute.xlu0 %592
  %v597 = vsel %vm213, %v588, 0
  %v600 = vsel %vm213, %v589, 0
  %602 = vmatpush.bf16.msra.mxu0 0
  %603 = vmatpush.bf16.msra.mxu0 0
  %604 = vmatpush.bf16.msra.mxu0 0
  %605 = vmatpush.bf16.msra.mxu0 0
  %606 = vmatpush.bf16.msra.mxu0 0
  %607 = vmatpush.bf16.msra.mxu0 0
  %608 = vmatpush.bf16.msra.mxu0 %v593
  %609 = vmatpush.bf16.msra.mxu0 %v591
  %610 = vmatmul.bf16.gmra.mxu0 %v597
  %v611 = vpop.f32.mrf.mxu0
  %v612 = vadd.f32 0.0, %v611
  %v613 = vpop.f32.mrf.mxu0
  %v614 = vadd.f32 0.0, %v613
  %615 = vmatmul.bf16.gmra.mxu0 %v600
  %v616 = vpop.f32.mrf.mxu0
  %v617 = vadd.f32 0.0, %v616
  %v618 = vpop.f32.mrf.mxu0
  %v619 = vadd.f32 0.0, %v618
  %620 = vdwg.mxu0
  %621 = vrot.lane.b32.xlu0 %v264, 104
  %v622 = vpop.permute.xlu0 %621
  %623 = vrot.lane.b32.xlu0 %v265, 104
  %v624 = vpop.permute.xlu0 %623
  %625 = vrot.lane.b32.xlu0 %v274, 72
  %v626 = vpop.permute.xlu0 %625
  %627 = vrot.lane.b32.xlu0 %v275, 72
  %v628 = vpop.permute.xlu0 %627
  %v630 = vsel %vm280, %v622, 0
  %v633 = vsel %vm280, %v624, 0
  %v636 = vsel %vm280, %v626, 0
  %v639 = vsel %vm280, %v628, 0
  %641 = vmatpush.bf16.xpose.msra.mxu0 0
  %642 = vmatpush.bf16.xpose.msra.mxu0 0
  %643 = vmatpush.bf16.xpose.msra.mxu0 0
  %644 = vmatpush.bf16.xpose.msra.mxu0 0
  %645 = vmatpush.bf16.xpose.msra.mxu0 0
  %646 = vmatpush.bf16.xpose.msra.mxu0 0
  %647 = vmatpush.bf16.xpose.msra.mxu0 %v639
  %648 = vmatpush.bf16.xpose.msra.mxu0 %v636
  %649 = vmatmul.bf16.gmra.mxu0 %v630
  %v650 = vpop.f32.mrf.mxu0
  %v651 = vadd.f32 %v179, %v650
  %v652 = vpop.f32.mrf.mxu0
  %v653 = vadd.f32 %v180, %v652
  %654 = vmatmul.bf16.gmra.mxu0 %v633
  %v655 = vpop.f32.mrf.mxu0
  %v656 = vadd.f32 %v181, %v655
  %v657 = vpop.f32.mrf.mxu0
  %v658 = vadd.f32 %v182, %v657
  %659 = vdwg.mxu0
  %v660 = vsel %vm213, %v651, -inf
  %661 = vmax.xlane.f32.xlu0 %v660
  %v662 = vpop.xlane.xlu0 %661
  %v663 = vsel %vm213, %v653, -inf
  %664 = vmax.xlane.f32.xlu0 %v663
  %v665 = vpop.xlane.xlu0 %664
  %v666 = vsel %vm213, %v656, -inf
  %667 = vmax.xlane.f32.xlu0 %v666
  %v668 = vpop.xlane.xlu0 %667
  %v669 = vsel %vm213, %v658, -inf
  %670 = vmax.xlane.f32.xlu0 %v669
  %v671 = vpop.xlane.xlu0 %670
  %v672 = vsub.f32 %v651, %v662
  %v673 = vsub.f32 %v653, %v665
  %v674 = vsub.f32 %v656, %v668
  %v675 = vsub.f32 %v658, %v671
  %v676 = vmul.f32 %v672, 1.442695
  %v677 = vpow.pop %v676
  %v678 = vmul.f32 %v673, 1.442695
  %v679 = vpow.pop %v678
  %v680 = vmul.f32 %v674, 1.442695
  %v681 = vpow.pop %v680
  %v682 = vmul.f32 %v675, 1.442695
  %v683 = vpow.pop %v682
  %v684 = vsel %vm213, %v677, 0.0
  %685 = vadd.xlane.f32.xlu0 %v684
  %v686 = vpop.xlane.xlu0 %685
  %v687 = vsel %vm213, %v679, 0.0
  %688 = vadd.xlane.f32.xlu0 %v687
  %v689 = vpop.xlane.xlu0 %688
  %v690 = vsel %vm213, %v681, 0.0
  %691 = vadd.xlane.f32.xlu0 %v690
  %v692 = vpop.xlane.xlu0 %691
  %v693 = vsel %vm213, %v683, 0.0
  %694 = vadd.xlane.f32.xlu0 %v693
  %v695 = vpop.xlane.xlu0 %694
  %v696 = vrcp.pop %v686
  %v697 = vrcp.pop %v689
  %v698 = vrcp.pop %v692
  %v699 = vrcp.pop %v695
  %v700 = vmul.f32 %v677, %v696
  %v701 = vmul.f32 %v679, %v697
  %v702 = vmul.f32 %v681, %v698
  %v703 = vmul.f32 %v683, %v699
  %v704 = vpack.c.bf16 %v701, %v700
  %v705 = vpack.c.bf16 %v703, %v702
  %706 = vrot.lane.b32.xlu0 %v274, 40
  %v707 = vpop.permute.xlu0 %706
  %708 = vrot.lane.b32.xlu0 %v275, 40
  %v709 = vpop.permute.xlu0 %708
  %v713 = vsel %vm213, %v704, 0
  %v716 = vsel %vm213, %v705, 0
  %718 = vmatpush.bf16.msra.mxu0 0
  %719 = vmatpush.bf16.msra.mxu0 0
  %720 = vmatpush.bf16.msra.mxu0 0
  %721 = vmatpush.bf16.msra.mxu0 0
  %722 = vmatpush.bf16.msra.mxu0 0
  %723 = vmatpush.bf16.msra.mxu0 0
  %724 = vmatpush.bf16.msra.mxu0 %v709
  %725 = vmatpush.bf16.msra.mxu0 %v707
  %726 = vmatmul.bf16.gmra.mxu0 %v713
  %v727 = vpop.f32.mrf.mxu0
  %v728 = vadd.f32 0.0, %v727
  %v729 = vpop.f32.mrf.mxu0
  %v730 = vadd.f32 0.0, %v729
  %731 = vmatmul.bf16.gmra.mxu0 %v716
  %v732 = vpop.f32.mrf.mxu0
  %v733 = vadd.f32 0.0, %v732
  %v734 = vpop.f32.mrf.mxu0
  %v735 = vadd.f32 0.0, %v734
  %736 = vdwg.mxu0
  %741 = vrot.lane.b32.xlu0 %v496, 8
  %v742 = vpop.permute.xlu0 %741
  %743 = vrot.lane.b32.xlu0 %v498, 8
  %v744 = vpop.permute.xlu0 %743
  %745 = vrot.lane.b32.xlu0 %v501, 8
  %v746 = vpop.permute.xlu0 %745
  %747 = vrot.lane.b32.xlu0 %v503, 8
  %v748 = vpop.permute.xlu0 %747
  %757 = vrot.lane.b32.xlu0 %v612, 16
  %v758 = vpop.permute.xlu0 %757
  %759 = vrot.lane.b32.xlu0 %v614, 16
  %v760 = vpop.permute.xlu0 %759
  %761 = vrot.lane.b32.xlu0 %v617, 16
  %v762 = vpop.permute.xlu0 %761
  %763 = vrot.lane.b32.xlu0 %v619, 16
  %v764 = vpop.permute.xlu0 %763
  %773 = vrot.lane.b32.xlu0 %v728, 24
  %v774 = vpop.permute.xlu0 %773
  %775 = vrot.lane.b32.xlu0 %v730, 24
  %v776 = vpop.permute.xlu0 %775
  %777 = vrot.lane.b32.xlu0 %v733, 24
  %v778 = vpop.permute.xlu0 %777
  %779 = vrot.lane.b32.xlu0 %v735, 24
  %v780 = vpop.permute.xlu0 %779
  %v785 = vsel %vm280, %v380, %v742
  %v786 = vsel %vm280, %v382, %v744
  %v787 = vsel %vm280, %v385, %v746
  %v788 = vsel %vm280, %v387, %v748
  %vm789 = vcmask 130048
  %v790 = vsel %vm789, %v785, %v758
  %v791 = vsel %vm789, %v786, %v760
  %v792 = vsel %vm789, %v787, %v762
  %v793 = vsel %vm789, %v788, %v764
  %vm794 = vcmask 195584
  %v795 = vsel %vm794, %v790, %v774
  %v796 = vsel %vm794, %v791, %v776
  %v797 = vsel %vm794, %v792, %v778
  %v798 = vsel %vm794, %v793, %v780
  %v799 = vpack.c.bf16 %v796, %v795
  %v800 = vpack.c.bf16 %v798, %v797
  %v802 = vperm.slane %v243, 0
  %v808 = vunpack.c.l.b16 %v239
  %v809 = vunpack.c.l.b16 %v240
  %v810 = vunpack.c.l.b16 %v241
  %v811 = vunpack.c.l.b16 %v242
  %v812 = vpack.c.b16 %v809, %v808
  %v813 = vpack.c.b16 %v811, %v810
  %v817 = vsel %vm213, %v799, 0
  %v820 = vsel %vm213, %v800, 0
  %822 = vmatpush.bf16.msra.mxu0 0
  %823 = vmatpush.bf16.msra.mxu0 0
  %824 = vmatpush.bf16.msra.mxu0 0
  %825 = vmatpush.bf16.msra.mxu0 0
  %826 = vmatpush.bf16.msra.mxu0 0
  %827 = vmatpush.bf16.msra.mxu0 0
  %828 = vmatpush.bf16.msra.mxu0 %v813
  %829 = vmatpush.bf16.msra.mxu0 %v812
  %830 = vmatmul.bf16.gmra.mxu0 %v817
  %v831 = vpop.f32.mrf.mxu0
  %v832 = vadd.f32 %v802, %v831
  %v833 = vpop.f32.mrf.mxu0
  %v834 = vadd.f32 %v802, %v833
  %835 = vmatmul.bf16.gmra.mxu0 %v820
  %v836 = vpop.f32.mrf.mxu0
  %v837 = vadd.f32 %v802, %v836
  %v838 = vpop.f32.mrf.mxu0
  %v839 = vadd.f32 %v802, %v838
  %840 = vdwg.mxu0
  %v841 = vadd.f32 %v187, %v832
  %v842 = vadd.f32 %v188, %v834
  %v843 = vadd.f32 %v189, %v837
  %v844 = vadd.f32 %v190, %v839
  %v845 = vld [vmem:[%s19] sm:$0x1]
  %v846 = vld [vmem:[%s21] sm:$0x1]
  %v847 = vsel %vm213, %v841, 0.0
  %848 = vadd.xlane.f32.xlu0 %v847
  %v849 = vpop.xlane.xlu0 %848
  %v850 = vsel %vm213, %v842, 0.0
  %851 = vadd.xlane.f32.xlu0 %v850
  %v852 = vpop.xlane.xlu0 %851
  %v853 = vsel %vm213, %v843, 0.0
  %854 = vadd.xlane.f32.xlu0 %v853
  %v855 = vpop.xlane.xlu0 %854
  %v856 = vsel %vm213, %v844, 0.0
  %857 = vadd.xlane.f32.xlu0 %v856
  %v858 = vpop.xlane.xlu0 %857
  %v859 = vrcp.pop 32.0
  %v860 = vmul.f32 32.0, %v859
  %v861 = vsub.f32 1.0, %v860
  %v862 = vmul.f32 %v859, %v861
  %v863 = vadd.f32 %v859, %v862
  %vm864 = vweird.f32 %v859
  %v865 = vsel %vm864, %v859, %v863
  %v866 = vmul.f32 %v849, %v865
  %v867 = vmul.f32 %v852, %v865
  %v868 = vmul.f32 %v855, %v865
  %v869 = vmul.f32 %v858, %v865
  %v870 = vsub.f32 %v841, %v866
  %v871 = vsub.f32 %v842, %v867
  %v872 = vsub.f32 %v843, %v868
  %v873 = vsub.f32 %v844, %v869
  %v874 = vmul.f32 %v870, %v870
  %v875 = vmul.f32 %v871, %v871
  %v876 = vmul.f32 %v872, %v872
  %v877 = vmul.f32 %v873, %v873
  %v878 = vsel %vm213, %v874, 0.0
  %879 = vadd.xlane.f32.xlu0 %v878
  %v880 = vpop.xlane.xlu0 %879
  %v881 = vsel %vm213, %v875, 0.0
  %882 = vadd.xlane.f32.xlu0 %v881
  %v883 = vpop.xlane.xlu0 %882
  %v884 = vsel %vm213, %v876, 0.0
  %885 = vadd.xlane.f32.xlu0 %v884
  %v886 = vpop.xlane.xlu0 %885
  %v887 = vsel %vm213, %v877, 0.0
  %888 = vadd.xlane.f32.xlu0 %v887
  %v889 = vpop.xlane.xlu0 %888
  %v890 = vmul.f32 %v880, %v865
  %v891 = vmul.f32 %v883, %v865
  %v892 = vmul.f32 %v886, %v865
  %v893 = vmul.f32 %v889, %v865
  %v894 = vadd.f32 %v890, 1e-05
  %v895 = vadd.f32 %v891, 1e-05
  %v896 = vadd.f32 %v892, 1e-05
  %v897 = vadd.f32 %v893, 1e-05
  %v898 = vrsqrt.pop %v894
  %v899 = vmul.f32 %v898, %v894
  %v900 = vmul.f32 %v899, %v898
  %v901 = vmul.f32 0.5, %v900
  %v902 = vsub.f32 1.5, %v901
  %v903 = vmul.f32 %v898, %v902
  %vm904 = vweird.f32 %v894
  %vm905 = vweird.f32 %v898
  %vm906 = vmor %vm904, %vm905
  %v907 = vsel %vm906, %v898, %v903
  %v908 = vrsqrt.pop %v895
  %v909 = vmul.f32 %v908, %v895
  %v910 = vmul.f32 %v909, %v908
  %v911 = vmul.f32 0.5, %v910
  %v912 = vsub.f32 1.5, %v911
  %v913 = vmul.f32 %v908, %v912
  %vm914 = vweird.f32 %v895
  %vm915 = vweird.f32 %v908
  %vm916 = vmor %vm914, %vm915
  %v917 = vsel %vm916, %v908, %v913
  %v918 = vrsqrt.pop %v896
  %v919 = vmul.f32 %v918, %v896
  %v920 = vmul.f32 %v919, %v918
  %v921 = vmul.f32 0.5, %v920
  %v922 = vsub.f32 1.5, %v921
  %v923 = vmul.f32 %v918, %v922
  %vm924 = vweird.f32 %v896
  %vm925 = vweird.f32 %v918
  %vm926 = vmor %vm924, %vm925
  %v927 = vsel %vm926, %v918, %v923
  %v928 = vrsqrt.pop %v897
  %v929 = vmul.f32 %v928, %v897
  %v930 = vmul.f32 %v929, %v928
  %v931 = vmul.f32 0.5, %v930
  %v932 = vsub.f32 1.5, %v931
  %v933 = vmul.f32 %v928, %v932
  %vm934 = vweird.f32 %v897
  %vm935 = vweird.f32 %v928
  %vm936 = vmor %vm934, %vm935
  %v937 = vsel %vm936, %v928, %v933
  %v938 = vmul.f32 %v870, %v907
  %v939 = vmul.f32 %v871, %v917
  %v940 = vmul.f32 %v872, %v927
  %v941 = vmul.f32 %v873, %v937
  %v943 = vperm.slane %v845, 0
  %v945 = vmul.f32 %v938, %v943
  %v946 = vmul.f32 %v939, %v943
  %v947 = vmul.f32 %v940, %v943
  %v948 = vmul.f32 %v941, %v943
  %v950 = vperm.slane %v846, 0
  %v952 = vadd.f32 %v945, %v950
  %v953 = vadd.f32 %v946, %v950
  %v954 = vadd.f32 %v947, %v950
  %v955 = vadd.f32 %v948, %v950
  %v956 = vld [vmem:[%s23] sm:$0xf]
  %v957 = vld [vmem:[%s23 + $0x4] sm:$0xf]
  %v958 = vld [vmem:[%s23 + $0x8] sm:$0xf]
  %v959 = vld [vmem:[%s23 + $0xc] sm:$0xf]
  %v960 = vld [vmem:[%s25] sm:$0x1]
  %v961 = vld [vmem:[%s27] sm:$0xf]
  %v962 = vld [vmem:[%s27 + $0x4] sm:$0xf]
  %v963 = vld [vmem:[%s27 + $0x8] sm:$0xf]
  %v964 = vld [vmem:[%s27 + $0xc] sm:$0xf]
  %v965 = vld [vmem:[%s27 + $0x10] sm:$0xf]
  %v966 = vld [vmem:[%s27 + $0x14] sm:$0xf]
  %v967 = vld [vmem:[%s27 + $0x18] sm:$0xf]
  %v968 = vld [vmem:[%s27 + $0x1c] sm:$0xf]
  %v969 = vld [vmem:[%s29] sm:$0x1]
  %v970 = vpack.c.bf16 %v953, %v952
  %v971 = vpack.c.bf16 %v955, %v954
  %v973 = vperm.slane %v960, 0
  %v979 = vunpack.c.l.b16 %v956
  %v980 = vunpack.c.l.b16 %v957
  %v981 = vunpack.c.l.b16 %v958
  %v982 = vunpack.c.l.b16 %v959
  %v983 = vpack.c.b16 %v980, %v979
  %v984 = vpack.c.b16 %v982, %v981
  %v988 = vsel %vm213, %v970, 0
  %v991 = vsel %vm213, %v971, 0
  %993 = vmatpush.bf16.msra.mxu0 0
  %994 = vmatpush.bf16.msra.mxu0 0
  %995 = vmatpush.bf16.msra.mxu0 0
  %996 = vmatpush.bf16.msra.mxu0 0
  %997 = vmatpush.bf16.msra.mxu0 0
  %998 = vmatpush.bf16.msra.mxu0 0
  %999 = vmatpush.bf16.msra.mxu0 %v984
  %1000 = vmatpush.bf16.msra.mxu0 %v983
  %1001 = vmatmul.bf16.gmra.mxu0 %v988
  %v1002 = vpop.f32.mrf.mxu0
  %v1003 = vadd.f32 %v973, %v1002
  %v1004 = vpop.f32.mrf.mxu0
  %v1005 = vadd.f32 %v973, %v1004
  %1006 = vmatmul.bf16.gmra.mxu0 %v991
  %v1007 = vpop.f32.mrf.mxu0
  %v1008 = vadd.f32 %v973, %v1007
  %v1009 = vpop.f32.mrf.mxu0
  %v1010 = vadd.f32 %v973, %v1009
  %1011 = vdwg.mxu0
  %v1012 = vmax.f32 %v1003, 0.0
  %v1013 = vmax.f32 %v1005, 0.0
  %v1014 = vmax.f32 %v1008, 0.0
  %v1015 = vmax.f32 %v1010, 0.0
  %v1016 = vpack.c.bf16 %v1013, %v1012
  %v1017 = vpack.c.bf16 %v1015, %v1014
  %v1019 = vperm.slane %v969, 0
  %v1029 = vunpack.c.l.b16 %v961
  %v1030 = vunpack.c.l.b16 %v962
  %v1031 = vunpack.c.l.b16 %v963
  %v1032 = vunpack.c.l.b16 %v964
  %v1033 = vunpack.c.l.b16 %v965
  %v1034 = vunpack.c.l.b16 %v966
  %v1035 = vunpack.c.l.b16 %v967
  %v1036 = vunpack.c.l.b16 %v968
  %v1037 = vpack.c.b16 %v1030, %v1029
  %v1038 = vpack.c.b16 %v1032, %v1031
  %v1039 = vpack.c.b16 %v1034, %v1033
  %v1040 = vpack.c.b16 %v1036, %v1035
  %vm1045 = vcmask 523264
  %v1047 = vsel %vm1045, %v1016, 0
  %v1050 = vsel %vm1045, %v1017, 0
  %1052 = vmatpush.bf16.msra.mxu0 0
  %1053 = vmatpush.bf16.msra.mxu0 0
  %1054 = vmatpush.bf16.msra.mxu0 0
  %1055 = vmatpush.bf16.msra.mxu0 0
  %1056 = vmatpush.bf16.msra.mxu0 %v1040
  %1057 = vmatpush.bf16.msra.mxu0 %v1039
  %1058 = vmatpush.bf16.msra.mxu0 %v1038
  %1059 = vmatpush.bf16.msra.mxu0 %v1037
  %1060 = vmatmul.bf16.gmra.mxu0 %v1047
  %v1061 = vpop.f32.mrf.mxu0
  %v1062 = vadd.f32 %v1019, %v1061
  %v1063 = vpop.f32.mrf.mxu0
  %v1064 = vadd.f32 %v1019, %v1063
  %1065 = vmatmul.bf16.gmra.mxu0 %v1050
  %v1066 = vpop.f32.mrf.mxu0
  %v1067 = vadd.f32 %v1019, %v1066
  %v1068 = vpop.f32.mrf.mxu0
  %v1069 = vadd.f32 %v1019, %v1068
  %1070 = vdwg.mxu0
  %v1071 = vadd.f32 %v952, %v1062
  %v1072 = vadd.f32 %v953, %v1064
  %v1073 = vadd.f32 %v954, %v1067
  %v1074 = vadd.f32 %v955, %v1069
  %v1075 = vld [vmem:[%s31] sm:$0x1]
  %v1076 = vld [vmem:[%s33] sm:$0x1]
  %v1077 = vsel %vm213, %v1071, 0.0
  %1078 = vadd.xlane.f32.xlu0 %v1077
  %v1079 = vpop.xlane.xlu0 %1078
  %v1080 = vsel %vm213, %v1072, 0.0
  %1081 = vadd.xlane.f32.xlu0 %v1080
  %v1082 = vpop.xlane.xlu0 %1081
  %v1083 = vsel %vm213, %v1073, 0.0
  %1084 = vadd.xlane.f32.xlu0 %v1083
  %v1085 = vpop.xlane.xlu0 %1084
  %v1086 = vsel %vm213, %v1074, 0.0
  %1087 = vadd.xlane.f32.xlu0 %v1086
  %v1088 = vpop.xlane.xlu0 %1087
  %v1089 = vmul.f32 %v1079, %v865
  %v1090 = vmul.f32 %v1082, %v865
  %v1091 = vmul.f32 %v1085, %v865
  %v1092 = vmul.f32 %v1088, %v865
  %v1093 = vsub.f32 %v1071, %v1089
  %v1094 = vsub.f32 %v1072, %v1090
  %v1095 = vsub.f32 %v1073, %v1091
  %v1096 = vsub.f32 %v1074, %v1092
  %v1097 = vmul.f32 %v1093, %v1093
  %v1098 = vmul.f32 %v1094, %v1094
  %v1099 = vmul.f32 %v1095, %v1095
  %v1100 = vmul.f32 %v1096, %v1096
  %v1101 = vsel %vm213, %v1097, 0.0
  %1102 = vadd.xlane.f32.xlu0 %v1101
  %v1103 = vpop.xlane.xlu0 %1102
  %v1104 = vsel %vm213, %v1098, 0.0
  %1105 = vadd.xlane.f32.xlu0 %v1104
  %v1106 = vpop.xlane.xlu0 %1105
  %v1107 = vsel %vm213, %v1099, 0.0
  %1108 = vadd.xlane.f32.xlu0 %v1107
  %v1109 = vpop.xlane.xlu0 %1108
  %v1110 = vsel %vm213, %v1100, 0.0
  %1111 = vadd.xlane.f32.xlu0 %v1110
  %v1112 = vpop.xlane.xlu0 %1111
  %v1113 = vmul.f32 %v1103, %v865
  %v1114 = vmul.f32 %v1106, %v865
  %v1115 = vmul.f32 %v1109, %v865
  %v1116 = vmul.f32 %v1112, %v865
  %v1117 = vadd.f32 %v1113, 1e-05
  %v1118 = vadd.f32 %v1114, 1e-05
  %v1119 = vadd.f32 %v1115, 1e-05
  %v1120 = vadd.f32 %v1116, 1e-05
  %v1121 = vrsqrt.pop %v1117
  %v1122 = vmul.f32 %v1121, %v1117
  %v1123 = vmul.f32 %v1122, %v1121
  %v1124 = vmul.f32 0.5, %v1123
  %v1125 = vsub.f32 1.5, %v1124
  %v1126 = vmul.f32 %v1121, %v1125
  %vm1127 = vweird.f32 %v1117
  %vm1128 = vweird.f32 %v1121
  %vm1129 = vmor %vm1127, %vm1128
  %v1130 = vsel %vm1129, %v1121, %v1126
  %v1131 = vrsqrt.pop %v1118
  %v1132 = vmul.f32 %v1131, %v1118
  %v1133 = vmul.f32 %v1132, %v1131
  %v1134 = vmul.f32 0.5, %v1133
  %v1135 = vsub.f32 1.5, %v1134
  %v1136 = vmul.f32 %v1131, %v1135
  %vm1137 = vweird.f32 %v1118
  %vm1138 = vweird.f32 %v1131
  %vm1139 = vmor %vm1137, %vm1138
  %v1140 = vsel %vm1139, %v1131, %v1136
  %v1141 = vrsqrt.pop %v1119
  %v1142 = vmul.f32 %v1141, %v1119
  %v1143 = vmul.f32 %v1142, %v1141
  %v1144 = vmul.f32 0.5, %v1143
  %v1145 = vsub.f32 1.5, %v1144
  %v1146 = vmul.f32 %v1141, %v1145
  %vm1147 = vweird.f32 %v1119
  %vm1148 = vweird.f32 %v1141
  %vm1149 = vmor %vm1147, %vm1148
  %v1150 = vsel %vm1149, %v1141, %v1146
  %v1151 = vrsqrt.pop %v1120
  %v1152 = vmul.f32 %v1151, %v1120
  %v1153 = vmul.f32 %v1152, %v1151
  %v1154 = vmul.f32 0.5, %v1153
  %v1155 = vsub.f32 1.5, %v1154
  %v1156 = vmul.f32 %v1151, %v1155
  %vm1157 = vweird.f32 %v1120
  %vm1158 = vweird.f32 %v1151
  %vm1159 = vmor %vm1157, %vm1158
  %v1160 = vsel %vm1159, %v1151, %v1156
  %v1161 = vmul.f32 %v1093, %v1130
  %v1162 = vmul.f32 %v1094, %v1140
  %v1163 = vmul.f32 %v1095, %v1150
  %v1164 = vmul.f32 %v1096, %v1160
  %v1166 = vperm.slane %v1075, 0
  %v1168 = vmul.f32 %v1161, %v1166
  %v1169 = vmul.f32 %v1162, %v1166
  %v1170 = vmul.f32 %v1163, %v1166
  %v1171 = vmul.f32 %v1164, %v1166
  %v1173 = vperm.slane %v1076, 0
  %v1175 = vadd.f32 %v1168, %v1173
  %v1176 = vadd.f32 %v1169, %v1173
  %v1177 = vadd.f32 %v1170, %v1173
  %v1178 = vadd.f32 %v1171, %v1173
  %s1179 = scalar_lea.vmem %s11, 16
  %v1180 = vld [vmem:[%s1179] sm:$0xf]
  %v1181 = vld [vmem:[%s1179 + $0x4] sm:$0xf]
  %v1182 = vld [vmem:[%s1179 + $0x8] sm:$0xf]
  %v1183 = vld [vmem:[%s1179 + $0xc] sm:$0xf]
  %v1184 = vpack.c.bf16 %v1176, %v1175
  %v1185 = vpack.c.bf16 %v1178, %v1177
  %s1186 = scalar_lea.vmem %s13, 1
  %v1187 = vld [vmem:[%s1186] sm:$0x1]
  %v1189 = vperm.slane %v1187, 0
  %v1195 = vunpack.c.l.b16 %v1180
  %v1196 = vunpack.c.l.b16 %v1181
  %v1197 = vunpack.c.l.b16 %v1182
  %v1198 = vunpack.c.l.b16 %v1183
  %v1199 = vpack.c.b16 %v1196, %v1195
  %v1200 = vpack.c.b16 %v1198, %v1197
  %v1204 = vsel %vm213, %v1184, 0
  %v1207 = vsel %vm213, %v1185, 0
  %1209 = vmatpush.bf16.msra.mxu0 0
  %1210 = vmatpush.bf16.msra.mxu0 0
  %1211 = vmatpush.bf16.msra.mxu0 0
  %1212 = vmatpush.bf16.msra.mxu0 0
  %1213 = vmatpush.bf16.msra.mxu0 0
  %1214 = vmatpush.bf16.msra.mxu0 0
  %1215 = vmatpush.bf16.msra.mxu0 %v1200
  %1216 = vmatpush.bf16.msra.mxu0 %v1199
  %1217 = vmatmul.bf16.gmra.mxu0 %v1204
  %v1218 = vpop.f32.mrf.mxu0
  %v1219 = vadd.f32 %v1189, %v1218
  %v1220 = vpop.f32.mrf.mxu0
  %v1221 = vadd.f32 %v1189, %v1220
  %1222 = vmatmul.bf16.gmra.mxu0 %v1207
  %v1223 = vpop.f32.mrf.mxu0
  %v1224 = vadd.f32 %v1189, %v1223
  %v1225 = vpop.f32.mrf.mxu0
  %v1226 = vadd.f32 %v1189, %v1225
  %1227 = vdwg.mxu0
  %s1228 = scalar_lea.vmem %s15, 16
  %v1229 = vld [vmem:[%s1228] sm:$0xf]
  %v1230 = vld [vmem:[%s1228 + $0x4] sm:$0xf]
  %v1231 = vld [vmem:[%s1228 + $0x8] sm:$0xf]
  %v1232 = vld [vmem:[%s1228 + $0xc] sm:$0xf]
  %s1233 = scalar_lea.vmem %s17, 1
  %v1234 = vld [vmem:[%s1233] sm:$0x1]
  %v1235 = vmul.f32 %v1219, 0.35355338
  %v1236 = vmul.f32 %v1221, 0.35355338
  %v1237 = vmul.f32 %v1224, 0.35355338
  %v1238 = vmul.f32 %v1226, 0.35355338
  %v1239 = vpack.c.bf16 %v1235, %v1235
  %v1240 = vpack.c.bf16 %v1236, %v1236
  %v1241 = vpack.c.bf16 %v1237, %v1237
  %v1242 = vpack.c.bf16 %v1238, %v1238
  %v1243 = vpack.c.bf16 %v1219, %v1219
  %v1244 = vpack.c.bf16 %v1221, %v1221
  %v1245 = vpack.c.bf16 %v1224, %v1224
  %v1246 = vpack.c.bf16 %v1226, %v1226
  %v1251 = vunpack.c.l.b16 %v1239
  %v1252 = vunpack.c.l.b16 %v1240
  %v1253 = vunpack.c.l.b16 %v1241
  %v1254 = vunpack.c.l.b16 %v1242
  %v1255 = vpack.c.b16 %v1252, %v1251
  %v1256 = vpack.c.b16 %v1254, %v1253
  %v1261 = vunpack.c.l.b16 %v1243
  %v1262 = vunpack.c.l.b16 %v1244
  %v1263 = vunpack.c.l.b16 %v1245
  %v1264 = vunpack.c.l.b16 %v1246
  %v1265 = vpack.c.b16 %v1262, %v1261
  %v1266 = vpack.c.b16 %v1264, %v1263
  %1267 = vrot.lane.b32.xlu0 %v1265, 96
  %v1268 = vpop.permute.xlu0 %1267
  %1269 = vrot.lane.b32.xlu0 %v1266, 96
  %v1270 = vpop.permute.xlu0 %1269
  %v1272 = vsel %vm280, %v1255, 0
  %v1275 = vsel %vm280, %v1256, 0
  %v1278 = vsel %vm280, %v1268, 0
  %v1281 = vsel %vm280, %v1270, 0
  %1283 = vmatpush.bf16.xpose.msra.mxu0 0
  %1284 = vmatpush.bf16.xpose.msra.mxu0 0
  %1285 = vmatpush.bf16.xpose.msra.mxu0 0
  %1286 = vmatpush.bf16.xpose.msra.mxu0 0
  %1287 = vmatpush.bf16.xpose.msra.mxu0 0
  %1288 = vmatpush.bf16.xpose.msra.mxu0 0
  %1289 = vmatpush.bf16.xpose.msra.mxu0 %v1281
  %1290 = vmatpush.bf16.xpose.msra.mxu0 %v1278
  %1291 = vmatmul.bf16.gmra.mxu0 %v1272
  %v1292 = vpop.f32.mrf.mxu0
  %v1293 = vadd.f32 %v179, %v1292
  %v1294 = vpop.f32.mrf.mxu0
  %v1295 = vadd.f32 %v180, %v1294
  %1296 = vmatmul.bf16.gmra.mxu0 %v1275
  %v1297 = vpop.f32.mrf.mxu0
  %v1298 = vadd.f32 %v181, %v1297
  %v1299 = vpop.f32.mrf.mxu0
  %v1300 = vadd.f32 %v182, %v1299
  %1301 = vdwg.mxu0
  %v1302 = vsel %vm213, %v1293, -inf
  %1303 = vmax.xlane.f32.xlu0 %v1302
  %v1304 = vpop.xlane.xlu0 %1303
  %v1305 = vsel %vm213, %v1295, -inf
  %1306 = vmax.xlane.f32.xlu0 %v1305
  %v1307 = vpop.xlane.xlu0 %1306
  %v1308 = vsel %vm213, %v1298, -inf
  %1309 = vmax.xlane.f32.xlu0 %v1308
  %v1310 = vpop.xlane.xlu0 %1309
  %v1311 = vsel %vm213, %v1300, -inf
  %1312 = vmax.xlane.f32.xlu0 %v1311
  %v1313 = vpop.xlane.xlu0 %1312
  %v1314 = vsub.f32 %v1293, %v1304
  %v1315 = vsub.f32 %v1295, %v1307
  %v1316 = vsub.f32 %v1298, %v1310
  %v1317 = vsub.f32 %v1300, %v1313
  %v1318 = vmul.f32 %v1314, 1.442695
  %v1319 = vpow.pop %v1318
  %v1320 = vmul.f32 %v1315, 1.442695
  %v1321 = vpow.pop %v1320
  %v1322 = vmul.f32 %v1316, 1.442695
  %v1323 = vpow.pop %v1322
  %v1324 = vmul.f32 %v1317, 1.442695
  %v1325 = vpow.pop %v1324
  %v1326 = vsel %vm213, %v1319, 0.0
  %1327 = vadd.xlane.f32.xlu0 %v1326
  %v1328 = vpop.xlane.xlu0 %1327
  %v1329 = vsel %vm213, %v1321, 0.0
  %1330 = vadd.xlane.f32.xlu0 %v1329
  %v1331 = vpop.xlane.xlu0 %1330
  %v1332 = vsel %vm213, %v1323, 0.0
  %1333 = vadd.xlane.f32.xlu0 %v1332
  %v1334 = vpop.xlane.xlu0 %1333
  %v1335 = vsel %vm213, %v1325, 0.0
  %1336 = vadd.xlane.f32.xlu0 %v1335
  %v1337 = vpop.xlane.xlu0 %1336
  %v1338 = vrcp.pop %v1328
  %v1339 = vrcp.pop %v1331
  %v1340 = vrcp.pop %v1334
  %v1341 = vrcp.pop %v1337
  %v1342 = vmul.f32 %v1319, %v1338
  %v1343 = vmul.f32 %v1321, %v1339
  %v1344 = vmul.f32 %v1323, %v1340
  %v1345 = vmul.f32 %v1325, %v1341
  %v1346 = vpack.c.bf16 %v1343, %v1342
  %v1347 = vpack.c.bf16 %v1345, %v1344
  %1348 = vrot.lane.b32.xlu0 %v1265, 64
  %v1349 = vpop.permute.xlu0 %1348
  %1350 = vrot.lane.b32.xlu0 %v1266, 64
  %v1351 = vpop.permute.xlu0 %1350
  %v1355 = vsel %vm213, %v1346, 0
  %v1358 = vsel %vm213, %v1347, 0
  %1360 = vmatpush.bf16.msra.mxu0 0
  %1361 = vmatpush.bf16.msra.mxu0 0
  %1362 = vmatpush.bf16.msra.mxu0 0
  %1363 = vmatpush.bf16.msra.mxu0 0
  %1364 = vmatpush.bf16.msra.mxu0 0
  %1365 = vmatpush.bf16.msra.mxu0 0
  %1366 = vmatpush.bf16.msra.mxu0 %v1351
  %1367 = vmatpush.bf16.msra.mxu0 %v1349
  %1368 = vmatmul.bf16.gmra.mxu0 %v1355
  %v1369 = vpop.f32.mrf.mxu0
  %v1370 = vadd.f32 0.0, %v1369
  %v1371 = vpop.f32.mrf.mxu0
  %v1372 = vadd.f32 0.0, %v1371
  %1373 = vmatmul.bf16.gmra.mxu0 %v1358
  %v1374 = vpop.f32.mrf.mxu0
  %v1375 = vadd.f32 0.0, %v1374
  %v1376 = vpop.f32.mrf.mxu0
  %v1377 = vadd.f32 0.0, %v1376
  %1378 = vdwg.mxu0
  %1379 = vrot.lane.b32.xlu0 %v1255, 120
  %v1380 = vpop.permute.xlu0 %1379
  %1381 = vrot.lane.b32.xlu0 %v1256, 120
  %v1382 = vpop.permute.xlu0 %1381
  %1383 = vrot.lane.b32.xlu0 %v1265, 88
  %v1384 = vpop.permute.xlu0 %1383
  %1385 = vrot.lane.b32.xlu0 %v1266, 88
  %v1386 = vpop.permute.xlu0 %1385
  %v1388 = vsel %vm280, %v1380, 0
  %v1391 = vsel %vm280, %v1382, 0
  %v1394 = vsel %vm280, %v1384, 0
  %v1397 = vsel %vm280, %v1386, 0
  %1399 = vmatpush.bf16.xpose.msra.mxu0 0
  %1400 = vmatpush.bf16.xpose.msra.mxu0 0
  %1401 = vmatpush.bf16.xpose.msra.mxu0 0
  %1402 = vmatpush.bf16.xpose.msra.mxu0 0
  %1403 = vmatpush.bf16.xpose.msra.mxu0 0
  %1404 = vmatpush.bf16.xpose.msra.mxu0 0
  %1405 = vmatpush.bf16.xpose.msra.mxu0 %v1397
  %1406 = vmatpush.bf16.xpose.msra.mxu0 %v1394
  %1407 = vmatmul.bf16.gmra.mxu0 %v1388
  %v1408 = vpop.f32.mrf.mxu0
  %v1409 = vadd.f32 %v179, %v1408
  %v1410 = vpop.f32.mrf.mxu0
  %v1411 = vadd.f32 %v180, %v1410
  %1412 = vmatmul.bf16.gmra.mxu0 %v1391
  %v1413 = vpop.f32.mrf.mxu0
  %v1414 = vadd.f32 %v181, %v1413
  %v1415 = vpop.f32.mrf.mxu0
  %v1416 = vadd.f32 %v182, %v1415
  %1417 = vdwg.mxu0
  %v1418 = vsel %vm213, %v1409, -inf
  %1419 = vmax.xlane.f32.xlu0 %v1418
  %v1420 = vpop.xlane.xlu0 %1419
  %v1421 = vsel %vm213, %v1411, -inf
  %1422 = vmax.xlane.f32.xlu0 %v1421
  %v1423 = vpop.xlane.xlu0 %1422
  %v1424 = vsel %vm213, %v1414, -inf
  %1425 = vmax.xlane.f32.xlu0 %v1424
  %v1426 = vpop.xlane.xlu0 %1425
  %v1427 = vsel %vm213, %v1416, -inf
  %1428 = vmax.xlane.f32.xlu0 %v1427
  %v1429 = vpop.xlane.xlu0 %1428
  %v1430 = vsub.f32 %v1409, %v1420
  %v1431 = vsub.f32 %v1411, %v1423
  %v1432 = vsub.f32 %v1414, %v1426
  %v1433 = vsub.f32 %v1416, %v1429
  %v1434 = vmul.f32 %v1430, 1.442695
  %v1435 = vpow.pop %v1434
  %v1436 = vmul.f32 %v1431, 1.442695
  %v1437 = vpow.pop %v1436
  %v1438 = vmul.f32 %v1432, 1.442695
  %v1439 = vpow.pop %v1438
  %v1440 = vmul.f32 %v1433, 1.442695
  %v1441 = vpow.pop %v1440
  %v1442 = vsel %vm213, %v1435, 0.0
  %1443 = vadd.xlane.f32.xlu0 %v1442
  %v1444 = vpop.xlane.xlu0 %1443
  %v1445 = vsel %vm213, %v1437, 0.0
  %1446 = vadd.xlane.f32.xlu0 %v1445
  %v1447 = vpop.xlane.xlu0 %1446
  %v1448 = vsel %vm213, %v1439, 0.0
  %1449 = vadd.xlane.f32.xlu0 %v1448
  %v1450 = vpop.xlane.xlu0 %1449
  %v1451 = vsel %vm213, %v1441, 0.0
  %1452 = vadd.xlane.f32.xlu0 %v1451
  %v1453 = vpop.xlane.xlu0 %1452
  %v1454 = vrcp.pop %v1444
  %v1455 = vrcp.pop %v1447
  %v1456 = vrcp.pop %v1450
  %v1457 = vrcp.pop %v1453
  %v1458 = vmul.f32 %v1435, %v1454
  %v1459 = vmul.f32 %v1437, %v1455
  %v1460 = vmul.f32 %v1439, %v1456
  %v1461 = vmul.f32 %v1441, %v1457
  %v1462 = vpack.c.bf16 %v1459, %v1458
  %v1463 = vpack.c.bf16 %v1461, %v1460
  %1464 = vrot.lane.b32.xlu0 %v1265, 56
  %v1465 = vpop.permute.xlu0 %1464
  %1466 = vrot.lane.b32.xlu0 %v1266, 56
  %v1467 = vpop.permute.xlu0 %1466
  %v1471 = vsel %vm213, %v1462, 0
  %v1474 = vsel %vm213, %v1463, 0
  %1476 = vmatpush.bf16.msra.mxu0 0
  %1477 = vmatpush.bf16.msra.mxu0 0
  %1478 = vmatpush.bf16.msra.mxu0 0
  %1479 = vmatpush.bf16.msra.mxu0 0
  %1480 = vmatpush.bf16.msra.mxu0 0
  %1481 = vmatpush.bf16.msra.mxu0 0
  %1482 = vmatpush.bf16.msra.mxu0 %v1467
  %1483 = vmatpush.bf16.msra.mxu0 %v1465
  %1484 = vmatmul.bf16.gmra.mxu0 %v1471
  %v1485 = vpop.f32.mrf.mxu0
  %v1486 = vadd.f32 0.0, %v1485
  %v1487 = vpop.f32.mrf.mxu0
  %v1488 = vadd.f32 0.0, %v1487
  %1489 = vmatmul.bf16.gmra.mxu0 %v1474
  %v1490 = vpop.f32.mrf.mxu0
  %v1491 = vadd.f32 0.0, %v1490
  %v1492 = vpop.f32.mrf.mxu0
  %v1493 = vadd.f32 0.0, %v1492
  %1494 = vdwg.mxu0
  %1495 = vrot.lane.b32.xlu0 %v1255, 112
  %v1496 = vpop.permute.xlu0 %1495
  %1497 = vrot.lane.b32.xlu0 %v1256, 112
  %v1498 = vpop.permute.xlu0 %1497
  %1499 = vrot.lane.b32.xlu0 %v1265, 80
  %v1500 = vpop.permute.xlu0 %1499
  %1501 = vrot.lane.b32.xlu0 %v1266, 80
  %v1502 = vpop.permute.xlu0 %1501
  %v1504 = vsel %vm280, %v1496, 0
  %v1507 = vsel %vm280, %v1498, 0
  %v1510 = vsel %vm280, %v1500, 0
  %v1513 = vsel %vm280, %v1502, 0
  %1515 = vmatpush.bf16.xpose.msra.mxu0 0
  %1516 = vmatpush.bf16.xpose.msra.mxu0 0
  %1517 = vmatpush.bf16.xpose.msra.mxu0 0
  %1518 = vmatpush.bf16.xpose.msra.mxu0 0
  %1519 = vmatpush.bf16.xpose.msra.mxu0 0
  %1520 = vmatpush.bf16.xpose.msra.mxu0 0
  %1521 = vmatpush.bf16.xpose.msra.mxu0 %v1513
  %1522 = vmatpush.bf16.xpose.msra.mxu0 %v1510
  %1523 = vmatmul.bf16.gmra.mxu0 %v1504
  %v1524 = vpop.f32.mrf.mxu0
  %v1525 = vadd.f32 %v179, %v1524
  %v1526 = vpop.f32.mrf.mxu0
  %v1527 = vadd.f32 %v180, %v1526
  %1528 = vmatmul.bf16.gmra.mxu0 %v1507
  %v1529 = vpop.f32.mrf.mxu0
  %v1530 = vadd.f32 %v181, %v1529
  %v1531 = vpop.f32.mrf.mxu0
  %v1532 = vadd.f32 %v182, %v1531
  %1533 = vdwg.mxu0
  %v1534 = vsel %vm213, %v1525, -inf
  %1535 = vmax.xlane.f32.xlu0 %v1534
  %v1536 = vpop.xlane.xlu0 %1535
  %v1537 = vsel %vm213, %v1527, -inf
  %1538 = vmax.xlane.f32.xlu0 %v1537
  %v1539 = vpop.xlane.xlu0 %1538
  %v1540 = vsel %vm213, %v1530, -inf
  %1541 = vmax.xlane.f32.xlu0 %v1540
  %v1542 = vpop.xlane.xlu0 %1541
  %v1543 = vsel %vm213, %v1532, -inf
  %1544 = vmax.xlane.f32.xlu0 %v1543
  %v1545 = vpop.xlane.xlu0 %1544
  %v1546 = vsub.f32 %v1525, %v1536
  %v1547 = vsub.f32 %v1527, %v1539
  %v1548 = vsub.f32 %v1530, %v1542
  %v1549 = vsub.f32 %v1532, %v1545
  %v1550 = vmul.f32 %v1546, 1.442695
  %v1551 = vpow.pop %v1550
  %v1552 = vmul.f32 %v1547, 1.442695
  %v1553 = vpow.pop %v1552
  %v1554 = vmul.f32 %v1548, 1.442695
  %v1555 = vpow.pop %v1554
  %v1556 = vmul.f32 %v1549, 1.442695
  %v1557 = vpow.pop %v1556
  %v1558 = vsel %vm213, %v1551, 0.0
  %1559 = vadd.xlane.f32.xlu0 %v1558
  %v1560 = vpop.xlane.xlu0 %1559
  %v1561 = vsel %vm213, %v1553, 0.0
  %1562 = vadd.xlane.f32.xlu0 %v1561
  %v1563 = vpop.xlane.xlu0 %1562
  %v1564 = vsel %vm213, %v1555, 0.0
  %1565 = vadd.xlane.f32.xlu0 %v1564
  %v1566 = vpop.xlane.xlu0 %1565
  %v1567 = vsel %vm213, %v1557, 0.0
  %1568 = vadd.xlane.f32.xlu0 %v1567
  %v1569 = vpop.xlane.xlu0 %1568
  %v1570 = vrcp.pop %v1560
  %v1571 = vrcp.pop %v1563
  %v1572 = vrcp.pop %v1566
  %v1573 = vrcp.pop %v1569
  %v1574 = vmul.f32 %v1551, %v1570
  %v1575 = vmul.f32 %v1553, %v1571
  %v1576 = vmul.f32 %v1555, %v1572
  %v1577 = vmul.f32 %v1557, %v1573
  %v1578 = vpack.c.bf16 %v1575, %v1574
  %v1579 = vpack.c.bf16 %v1577, %v1576
  %1580 = vrot.lane.b32.xlu0 %v1265, 48
  %v1581 = vpop.permute.xlu0 %1580
  %1582 = vrot.lane.b32.xlu0 %v1266, 48
  %v1583 = vpop.permute.xlu0 %1582
  %v1587 = vsel %vm213, %v1578, 0
  %v1590 = vsel %vm213, %v1579, 0
  %1592 = vmatpush.bf16.msra.mxu0 0
  %1593 = vmatpush.bf16.msra.mxu0 0
  %1594 = vmatpush.bf16.msra.mxu0 0
  %1595 = vmatpush.bf16.msra.mxu0 0
  %1596 = vmatpush.bf16.msra.mxu0 0
  %1597 = vmatpush.bf16.msra.mxu0 0
  %1598 = vmatpush.bf16.msra.mxu0 %v1583
  %1599 = vmatpush.bf16.msra.mxu0 %v1581
  %1600 = vmatmul.bf16.gmra.mxu0 %v1587
  %v1601 = vpop.f32.mrf.mxu0
  %v1602 = vadd.f32 0.0, %v1601
  %v1603 = vpop.f32.mrf.mxu0
  %v1604 = vadd.f32 0.0, %v1603
  %1605 = vmatmul.bf16.gmra.mxu0 %v1590
  %v1606 = vpop.f32.mrf.mxu0
  %v1607 = vadd.f32 0.0, %v1606
  %v1608 = vpop.f32.mrf.mxu0
  %v1609 = vadd.f32 0.0, %v1608
  %1610 = vdwg.mxu0
  %1611 = vrot.lane.b32.xlu0 %v1255, 104
  %v1612 = vpop.permute.xlu0 %1611
  %1613 = vrot.lane.b32.xlu0 %v1256, 104
  %v1614 = vpop.permute.xlu0 %1613
  %1615 = vrot.lane.b32.xlu0 %v1265, 72
  %v1616 = vpop.permute.xlu0 %1615
  %1617 = vrot.lane.b32.xlu0 %v1266, 72
  %v1618 = vpop.permute.xlu0 %1617
  %v1620 = vsel %vm280, %v1612, 0
  %v1623 = vsel %vm280, %v1614, 0
  %v1626 = vsel %vm280, %v1616, 0
  %v1629 = vsel %vm280, %v1618, 0
  %1631 = vmatpush.bf16.xpose.msra.mxu0 0
  %1632 = vmatpush.bf16.xpose.msra.mxu0 0
  %1633 = vmatpush.bf16.xpose.msra.mxu0 0
  %1634 = vmatpush.bf16.xpose.msra.mxu0 0
  %1635 = vmatpush.bf16.xpose.msra.mxu0 0
  %1636 = vmatpush.bf16.xpose.msra.mxu0 0
  %1637 = vmatpush.bf16.xpose.msra.mxu0 %v1629
  %1638 = vmatpush.bf16.xpose.msra.mxu0 %v1626
  %1639 = vmatmul.bf16.gmra.mxu0 %v1620
  %v1640 = vpop.f32.mrf.mxu0
  %v1641 = vadd.f32 %v179, %v1640
  %v1642 = vpop.f32.mrf.mxu0
  %v1643 = vadd.f32 %v180, %v1642
  %1644 = vmatmul.bf16.gmra.mxu0 %v1623
  %v1645 = vpop.f32.mrf.mxu0
  %v1646 = vadd.f32 %v181, %v1645
  %v1647 = vpop.f32.mrf.mxu0
  %v1648 = vadd.f32 %v182, %v1647
  %1649 = vdwg.mxu0
  %v1650 = vsel %vm213, %v1641, -inf
  %1651 = vmax.xlane.f32.xlu0 %v1650
  %v1652 = vpop.xlane.xlu0 %1651
  %v1653 = vsel %vm213, %v1643, -inf
  %1654 = vmax.xlane.f32.xlu0 %v1653
  %v1655 = vpop.xlane.xlu0 %1654
  %v1656 = vsel %vm213, %v1646, -inf
  %1657 = vmax.xlane.f32.xlu0 %v1656
  %v1658 = vpop.xlane.xlu0 %1657
  %v1659 = vsel %vm213, %v1648, -inf
  %1660 = vmax.xlane.f32.xlu0 %v1659
  %v1661 = vpop.xlane.xlu0 %1660
  %v1662 = vsub.f32 %v1641, %v1652
  %v1663 = vsub.f32 %v1643, %v1655
  %v1664 = vsub.f32 %v1646, %v1658
  %v1665 = vsub.f32 %v1648, %v1661
  %v1666 = vmul.f32 %v1662, 1.442695
  %v1667 = vpow.pop %v1666
  %v1668 = vmul.f32 %v1663, 1.442695
  %v1669 = vpow.pop %v1668
  %v1670 = vmul.f32 %v1664, 1.442695
  %v1671 = vpow.pop %v1670
  %v1672 = vmul.f32 %v1665, 1.442695
  %v1673 = vpow.pop %v1672
  %v1674 = vsel %vm213, %v1667, 0.0
  %1675 = vadd.xlane.f32.xlu0 %v1674
  %v1676 = vpop.xlane.xlu0 %1675
  %v1677 = vsel %vm213, %v1669, 0.0
  %1678 = vadd.xlane.f32.xlu0 %v1677
  %v1679 = vpop.xlane.xlu0 %1678
  %v1680 = vsel %vm213, %v1671, 0.0
  %1681 = vadd.xlane.f32.xlu0 %v1680
  %v1682 = vpop.xlane.xlu0 %1681
  %v1683 = vsel %vm213, %v1673, 0.0
  %1684 = vadd.xlane.f32.xlu0 %v1683
  %v1685 = vpop.xlane.xlu0 %1684
  %v1686 = vrcp.pop %v1676
  %v1687 = vrcp.pop %v1679
  %v1688 = vrcp.pop %v1682
  %v1689 = vrcp.pop %v1685
  %v1690 = vmul.f32 %v1667, %v1686
  %v1691 = vmul.f32 %v1669, %v1687
  %v1692 = vmul.f32 %v1671, %v1688
  %v1693 = vmul.f32 %v1673, %v1689
  %v1694 = vpack.c.bf16 %v1691, %v1690
  %v1695 = vpack.c.bf16 %v1693, %v1692
  %1696 = vrot.lane.b32.xlu0 %v1265, 40
  %v1697 = vpop.permute.xlu0 %1696
  %1698 = vrot.lane.b32.xlu0 %v1266, 40
  %v1699 = vpop.permute.xlu0 %1698
  %v1703 = vsel %vm213, %v1694, 0
  %v1706 = vsel %vm213, %v1695, 0
  %1708 = vmatpush.bf16.msra.mxu0 0
  %1709 = vmatpush.bf16.msra.mxu0 0
  %1710 = vmatpush.bf16.msra.mxu0 0
  %1711 = vmatpush.bf16.msra.mxu0 0
  %1712 = vmatpush.bf16.msra.mxu0 0
  %1713 = vmatpush.bf16.msra.mxu0 0
  %1714 = vmatpush.bf16.msra.mxu0 %v1699
  %1715 = vmatpush.bf16.msra.mxu0 %v1697
  %1716 = vmatmul.bf16.gmra.mxu0 %v1703
  %v1717 = vpop.f32.mrf.mxu0
  %v1718 = vadd.f32 0.0, %v1717
  %v1719 = vpop.f32.mrf.mxu0
  %v1720 = vadd.f32 0.0, %v1719
  %1721 = vmatmul.bf16.gmra.mxu0 %v1706
  %v1722 = vpop.f32.mrf.mxu0
  %v1723 = vadd.f32 0.0, %v1722
  %v1724 = vpop.f32.mrf.mxu0
  %v1725 = vadd.f32 0.0, %v1724
  %1726 = vdwg.mxu0
  %1731 = vrot.lane.b32.xlu0 %v1486, 8
  %v1732 = vpop.permute.xlu0 %1731
  %1733 = vrot.lane.b32.xlu0 %v1488, 8
  %v1734 = vpop.permute.xlu0 %1733
  %1735 = vrot.lane.b32.xlu0 %v1491, 8
  %v1736 = vpop.permute.xlu0 %1735
  %1737 = vrot.lane.b32.xlu0 %v1493, 8
  %v1738 = vpop.permute.xlu0 %1737
  %1747 = vrot.lane.b32.xlu0 %v1602, 16
  %v1748 = vpop.permute.xlu0 %1747
  %1749 = vrot.lane.b32.xlu0 %v1604, 16
  %v1750 = vpop.permute.xlu0 %1749
  %1751 = vrot.lane.b32.xlu0 %v1607, 16
  %v1752 = vpop.permute.xlu0 %1751
  %1753 = vrot.lane.b32.xlu0 %v1609, 16
  %v1754 = vpop.permute.xlu0 %1753
  %1763 = vrot.lane.b32.xlu0 %v1718, 24
  %v1764 = vpop.permute.xlu0 %1763
  %1765 = vrot.lane.b32.xlu0 %v1720, 24
  %v1766 = vpop.permute.xlu0 %1765
  %1767 = vrot.lane.b32.xlu0 %v1723, 24
  %v1768 = vpop.permute.xlu0 %1767
  %1769 = vrot.lane.b32.xlu0 %v1725, 24
  %v1770 = vpop.permute.xlu0 %1769
  %v1775 = vsel %vm280, %v1370, %v1732
  %v1776 = vsel %vm280, %v1372, %v1734
  %v1777 = vsel %vm280, %v1375, %v1736
  %v1778 = vsel %vm280, %v1377, %v1738
  %v1779 = vsel %vm789, %v1775, %v1748
  %v1780 = vsel %vm789, %v1776, %v1750
  %v1781 = vsel %vm789, %v1777, %v1752
  %v1782 = vsel %vm789, %v1778, %v1754
  %v1783 = vsel %vm794, %v1779, %v1764
  %v1784 = vsel %vm794, %v1780, %v1766
  %v1785 = vsel %vm794, %v1781, %v1768
  %v1786 = vsel %vm794, %v1782, %v1770
  %v1787 = vpack.c.bf16 %v1784, %v1783
  %v1788 = vpack.c.bf16 %v1786, %v1785
  %v1790 = vperm.slane %v1234, 0
  %v1796 = vunpack.c.l.b16 %v1229
  %v1797 = vunpack.c.l.b16 %v1230
  %v1798 = vunpack.c.l.b16 %v1231
  %v1799 = vunpack.c.l.b16 %v1232
  %v1800 = vpack.c.b16 %v1797, %v1796
  %v1801 = vpack.c.b16 %v1799, %v1798
  %v1805 = vsel %vm213, %v1787, 0
  %v1808 = vsel %vm213, %v1788, 0
  %1810 = vmatpush.bf16.msra.mxu0 0
  %1811 = vmatpush.bf16.msra.mxu0 0
  %1812 = vmatpush.bf16.msra.mxu0 0
  %1813 = vmatpush.bf16.msra.mxu0 0
  %1814 = vmatpush.bf16.msra.mxu0 0
  %1815 = vmatpush.bf16.msra.mxu0 0
  %1816 = vmatpush.bf16.msra.mxu0 %v1801
  %1817 = vmatpush.bf16.msra.mxu0 %v1800
  %1818 = vmatmul.bf16.gmra.mxu0 %v1805
  %v1819 = vpop.f32.mrf.mxu0
  %v1820 = vadd.f32 %v1790, %v1819
  %v1821 = vpop.f32.mrf.mxu0
  %v1822 = vadd.f32 %v1790, %v1821
  %1823 = vmatmul.bf16.gmra.mxu0 %v1808
  %v1824 = vpop.f32.mrf.mxu0
  %v1825 = vadd.f32 %v1790, %v1824
  %v1826 = vpop.f32.mrf.mxu0
  %v1827 = vadd.f32 %v1790, %v1826
  %1828 = vdwg.mxu0
  %v1829 = vadd.f32 %v1175, %v1820
  %v1830 = vadd.f32 %v1176, %v1822
  %v1831 = vadd.f32 %v1177, %v1825
  %v1832 = vadd.f32 %v1178, %v1827
  %s1833 = scalar_lea.vmem %s19, 1
  %v1834 = vld [vmem:[%s1833] sm:$0x1]
  %s1835 = scalar_lea.vmem %s21, 1
  %v1836 = vld [vmem:[%s1835] sm:$0x1]
  %v1837 = vsel %vm213, %v1829, 0.0
  %1838 = vadd.xlane.f32.xlu0 %v1837
  %v1839 = vpop.xlane.xlu0 %1838
  %v1840 = vsel %vm213, %v1830, 0.0
  %1841 = vadd.xlane.f32.xlu0 %v1840
  %v1842 = vpop.xlane.xlu0 %1841
  %v1843 = vsel %vm213, %v1831, 0.0
  %1844 = vadd.xlane.f32.xlu0 %v1843
  %v1845 = vpop.xlane.xlu0 %1844
  %v1846 = vsel %vm213, %v1832, 0.0
  %1847 = vadd.xlane.f32.xlu0 %v1846
  %v1848 = vpop.xlane.xlu0 %1847
  %v1849 = vmul.f32 %v1839, %v865
  %v1850 = vmul.f32 %v1842, %v865
  %v1851 = vmul.f32 %v1845, %v865
  %v1852 = vmul.f32 %v1848, %v865
  %v1853 = vsub.f32 %v1829, %v1849
  %v1854 = vsub.f32 %v1830, %v1850
  %v1855 = vsub.f32 %v1831, %v1851
  %v1856 = vsub.f32 %v1832, %v1852
  %v1857 = vmul.f32 %v1853, %v1853
  %v1858 = vmul.f32 %v1854, %v1854
  %v1859 = vmul.f32 %v1855, %v1855
  %v1860 = vmul.f32 %v1856, %v1856
  %v1861 = vsel %vm213, %v1857, 0.0
  %1862 = vadd.xlane.f32.xlu0 %v1861
  %v1863 = vpop.xlane.xlu0 %1862
  %v1864 = vsel %vm213, %v1858, 0.0
  %1865 = vadd.xlane.f32.xlu0 %v1864
  %v1866 = vpop.xlane.xlu0 %1865
  %v1867 = vsel %vm213, %v1859, 0.0
  %1868 = vadd.xlane.f32.xlu0 %v1867
  %v1869 = vpop.xlane.xlu0 %1868
  %v1870 = vsel %vm213, %v1860, 0.0
  %1871 = vadd.xlane.f32.xlu0 %v1870
  %v1872 = vpop.xlane.xlu0 %1871
  %v1873 = vmul.f32 %v1863, %v865
  %v1874 = vmul.f32 %v1866, %v865
  %v1875 = vmul.f32 %v1869, %v865
  %v1876 = vmul.f32 %v1872, %v865
  %v1877 = vadd.f32 %v1873, 1e-05
  %v1878 = vadd.f32 %v1874, 1e-05
  %v1879 = vadd.f32 %v1875, 1e-05
  %v1880 = vadd.f32 %v1876, 1e-05
  %v1881 = vrsqrt.pop %v1877
  %v1882 = vmul.f32 %v1881, %v1877
  %v1883 = vmul.f32 %v1882, %v1881
  %v1884 = vmul.f32 0.5, %v1883
  %v1885 = vsub.f32 1.5, %v1884
  %v1886 = vmul.f32 %v1881, %v1885
  %vm1887 = vweird.f32 %v1877
  %vm1888 = vweird.f32 %v1881
  %vm1889 = vmor %vm1887, %vm1888
  %v1890 = vsel %vm1889, %v1881, %v1886
  %v1891 = vrsqrt.pop %v1878
  %v1892 = vmul.f32 %v1891, %v1878
  %v1893 = vmul.f32 %v1892, %v1891
  %v1894 = vmul.f32 0.5, %v1893
  %v1895 = vsub.f32 1.5, %v1894
  %v1896 = vmul.f32 %v1891, %v1895
  %vm1897 = vweird.f32 %v1878
  %vm1898 = vweird.f32 %v1891
  %vm1899 = vmor %vm1897, %vm1898
  %v1900 = vsel %vm1899, %v1891, %v1896
  %v1901 = vrsqrt.pop %v1879
  %v1902 = vmul.f32 %v1901, %v1879
  %v1903 = vmul.f32 %v1902, %v1901
  %v1904 = vmul.f32 0.5, %v1903
  %v1905 = vsub.f32 1.5, %v1904
  %v1906 = vmul.f32 %v1901, %v1905
  %vm1907 = vweird.f32 %v1879
  %vm1908 = vweird.f32 %v1901
  %vm1909 = vmor %vm1907, %vm1908
  %v1910 = vsel %vm1909, %v1901, %v1906
  %v1911 = vrsqrt.pop %v1880
  %v1912 = vmul.f32 %v1911, %v1880
  %v1913 = vmul.f32 %v1912, %v1911
  %v1914 = vmul.f32 0.5, %v1913
  %v1915 = vsub.f32 1.5, %v1914
  %v1916 = vmul.f32 %v1911, %v1915
  %vm1917 = vweird.f32 %v1880
  %vm1918 = vweird.f32 %v1911
  %vm1919 = vmor %vm1917, %vm1918
  %v1920 = vsel %vm1919, %v1911, %v1916
  %v1921 = vmul.f32 %v1853, %v1890
  %v1922 = vmul.f32 %v1854, %v1900
  %v1923 = vmul.f32 %v1855, %v1910
  %v1924 = vmul.f32 %v1856, %v1920
  %v1926 = vperm.slane %v1834, 0
  %v1928 = vmul.f32 %v1921, %v1926
  %v1929 = vmul.f32 %v1922, %v1926
  %v1930 = vmul.f32 %v1923, %v1926
  %v1931 = vmul.f32 %v1924, %v1926
  %v1933 = vperm.slane %v1836, 0
  %v1935 = vadd.f32 %v1928, %v1933
  %v1936 = vadd.f32 %v1929, %v1933
  %v1937 = vadd.f32 %v1930, %v1933
  %v1938 = vadd.f32 %v1931, %v1933
  %s1939 = scalar_lea.vmem %s23, 16
  %v1940 = vld [vmem:[%s1939] sm:$0xf]
  %v1941 = vld [vmem:[%s1939 + $0x4] sm:$0xf]
  %v1942 = vld [vmem:[%s1939 + $0x8] sm:$0xf]
  %v1943 = vld [vmem:[%s1939 + $0xc] sm:$0xf]
  %s1944 = scalar_lea.vmem %s25, 1
  %v1945 = vld [vmem:[%s1944] sm:$0x1]
  %s1946 = scalar_lea.vmem %s27, 32
  %v1947 = vld [vmem:[%s1946] sm:$0xf]
  %v1948 = vld [vmem:[%s1946 + $0x4] sm:$0xf]
  %v1949 = vld [vmem:[%s1946 + $0x8] sm:$0xf]
  %v1950 = vld [vmem:[%s1946 + $0xc] sm:$0xf]
  %v1951 = vld [vmem:[%s1946 + $0x10] sm:$0xf]
  %v1952 = vld [vmem:[%s1946 + $0x14] sm:$0xf]
  %v1953 = vld [vmem:[%s1946 + $0x18] sm:$0xf]
  %v1954 = vld [vmem:[%s1946 + $0x1c] sm:$0xf]
  %s1955 = scalar_lea.vmem %s29, 1
  %v1956 = vld [vmem:[%s1955] sm:$0x1]
  %v1957 = vpack.c.bf16 %v1936, %v1935
  %v1958 = vpack.c.bf16 %v1938, %v1937
  %v1960 = vperm.slane %v1945, 0
  %v1966 = vunpack.c.l.b16 %v1940
  %v1967 = vunpack.c.l.b16 %v1941
  %v1968 = vunpack.c.l.b16 %v1942
  %v1969 = vunpack.c.l.b16 %v1943
  %v1970 = vpack.c.b16 %v1967, %v1966
  %v1971 = vpack.c.b16 %v1969, %v1968
  %v1975 = vsel %vm213, %v1957, 0
  %v1978 = vsel %vm213, %v1958, 0
  %1980 = vmatpush.bf16.msra.mxu0 0
  %1981 = vmatpush.bf16.msra.mxu0 0
  %1982 = vmatpush.bf16.msra.mxu0 0
  %1983 = vmatpush.bf16.msra.mxu0 0
  %1984 = vmatpush.bf16.msra.mxu0 0
  %1985 = vmatpush.bf16.msra.mxu0 0
  %1986 = vmatpush.bf16.msra.mxu0 %v1971
  %1987 = vmatpush.bf16.msra.mxu0 %v1970
  %1988 = vmatmul.bf16.gmra.mxu0 %v1975
  %v1989 = vpop.f32.mrf.mxu0
  %v1990 = vadd.f32 %v1960, %v1989
  %v1991 = vpop.f32.mrf.mxu0
  %v1992 = vadd.f32 %v1960, %v1991
  %1993 = vmatmul.bf16.gmra.mxu0 %v1978
  %v1994 = vpop.f32.mrf.mxu0
  %v1995 = vadd.f32 %v1960, %v1994
  %v1996 = vpop.f32.mrf.mxu0
  %v1997 = vadd.f32 %v1960, %v1996
  %1998 = vdwg.mxu0
  %v1999 = vmax.f32 %v1990, 0.0
  %v2000 = vmax.f32 %v1992, 0.0
  %v2001 = vmax.f32 %v1995, 0.0
  %v2002 = vmax.f32 %v1997, 0.0
  %v2003 = vpack.c.bf16 %v2000, %v1999
  %v2004 = vpack.c.bf16 %v2002, %v2001
  %v2006 = vperm.slane %v1956, 0
  %v2016 = vunpack.c.l.b16 %v1947
  %v2017 = vunpack.c.l.b16 %v1948
  %v2018 = vunpack.c.l.b16 %v1949
  %v2019 = vunpack.c.l.b16 %v1950
  %v2020 = vunpack.c.l.b16 %v1951
  %v2021 = vunpack.c.l.b16 %v1952
  %v2022 = vunpack.c.l.b16 %v1953
  %v2023 = vunpack.c.l.b16 %v1954
  %v2024 = vpack.c.b16 %v2017, %v2016
  %v2025 = vpack.c.b16 %v2019, %v2018
  %v2026 = vpack.c.b16 %v2021, %v2020
  %v2027 = vpack.c.b16 %v2023, %v2022
  %v2033 = vsel %vm1045, %v2003, 0
  %v2036 = vsel %vm1045, %v2004, 0
  %2038 = vmatpush.bf16.msra.mxu0 0
  %2039 = vmatpush.bf16.msra.mxu0 0
  %2040 = vmatpush.bf16.msra.mxu0 0
  %2041 = vmatpush.bf16.msra.mxu0 0
  %2042 = vmatpush.bf16.msra.mxu0 %v2027
  %2043 = vmatpush.bf16.msra.mxu0 %v2026
  %2044 = vmatpush.bf16.msra.mxu0 %v2025
  %2045 = vmatpush.bf16.msra.mxu0 %v2024
  %2046 = vmatmul.bf16.gmra.mxu0 %v2033
  %v2047 = vpop.f32.mrf.mxu0
  %v2048 = vadd.f32 %v2006, %v2047
  %v2049 = vpop.f32.mrf.mxu0
  %v2050 = vadd.f32 %v2006, %v2049
  %2051 = vmatmul.bf16.gmra.mxu0 %v2036
  %v2052 = vpop.f32.mrf.mxu0
  %v2053 = vadd.f32 %v2006, %v2052
  %v2054 = vpop.f32.mrf.mxu0
  %v2055 = vadd.f32 %v2006, %v2054
  %2056 = vdwg.mxu0
  %v2057 = vadd.f32 %v1935, %v2048
  %v2058 = vadd.f32 %v1936, %v2050
  %v2059 = vadd.f32 %v1937, %v2053
  %v2060 = vadd.f32 %v1938, %v2055
  %s2061 = scalar_lea.vmem %s31, 1
  %v2062 = vld [vmem:[%s2061] sm:$0x1]
  %s2063 = scalar_lea.vmem %s33, 1
  %v2064 = vld [vmem:[%s2063] sm:$0x1]
  %v2065 = vsel %vm213, %v2057, 0.0
  %2066 = vadd.xlane.f32.xlu0 %v2065
  %v2067 = vpop.xlane.xlu0 %2066
  %v2068 = vsel %vm213, %v2058, 0.0
  %2069 = vadd.xlane.f32.xlu0 %v2068
  %v2070 = vpop.xlane.xlu0 %2069
  %v2071 = vsel %vm213, %v2059, 0.0
  %2072 = vadd.xlane.f32.xlu0 %v2071
  %v2073 = vpop.xlane.xlu0 %2072
  %v2074 = vsel %vm213, %v2060, 0.0
  %2075 = vadd.xlane.f32.xlu0 %v2074
  %v2076 = vpop.xlane.xlu0 %2075
  %v2077 = vmul.f32 %v2067, %v865
  %v2078 = vmul.f32 %v2070, %v865
  %v2079 = vmul.f32 %v2073, %v865
  %v2080 = vmul.f32 %v2076, %v865
  %v2081 = vsub.f32 %v2057, %v2077
  %v2082 = vsub.f32 %v2058, %v2078
  %v2083 = vsub.f32 %v2059, %v2079
  %v2084 = vsub.f32 %v2060, %v2080
  %v2085 = vmul.f32 %v2081, %v2081
  %v2086 = vmul.f32 %v2082, %v2082
  %v2087 = vmul.f32 %v2083, %v2083
  %v2088 = vmul.f32 %v2084, %v2084
  %v2089 = vsel %vm213, %v2085, 0.0
  %2090 = vadd.xlane.f32.xlu0 %v2089
  %v2091 = vpop.xlane.xlu0 %2090
  %v2092 = vsel %vm213, %v2086, 0.0
  %2093 = vadd.xlane.f32.xlu0 %v2092
  %v2094 = vpop.xlane.xlu0 %2093
  %v2095 = vsel %vm213, %v2087, 0.0
  %2096 = vadd.xlane.f32.xlu0 %v2095
  %v2097 = vpop.xlane.xlu0 %2096
  %v2098 = vsel %vm213, %v2088, 0.0
  %2099 = vadd.xlane.f32.xlu0 %v2098
  %v2100 = vpop.xlane.xlu0 %2099
  %v2101 = vmul.f32 %v2091, %v865
  %v2102 = vmul.f32 %v2094, %v865
  %v2103 = vmul.f32 %v2097, %v865
  %v2104 = vmul.f32 %v2100, %v865
  %v2105 = vadd.f32 %v2101, 1e-05
  %v2106 = vadd.f32 %v2102, 1e-05
  %v2107 = vadd.f32 %v2103, 1e-05
  %v2108 = vadd.f32 %v2104, 1e-05
  %v2109 = vrsqrt.pop %v2105
  %v2110 = vmul.f32 %v2109, %v2105
  %v2111 = vmul.f32 %v2110, %v2109
  %v2112 = vmul.f32 0.5, %v2111
  %v2113 = vsub.f32 1.5, %v2112
  %v2114 = vmul.f32 %v2109, %v2113
  %vm2115 = vweird.f32 %v2105
  %vm2116 = vweird.f32 %v2109
  %vm2117 = vmor %vm2115, %vm2116
  %v2118 = vsel %vm2117, %v2109, %v2114
  %v2119 = vrsqrt.pop %v2106
  %v2120 = vmul.f32 %v2119, %v2106
  %v2121 = vmul.f32 %v2120, %v2119
  %v2122 = vmul.f32 0.5, %v2121
  %v2123 = vsub.f32 1.5, %v2122
  %v2124 = vmul.f32 %v2119, %v2123
  %vm2125 = vweird.f32 %v2106
  %vm2126 = vweird.f32 %v2119
  %vm2127 = vmor %vm2125, %vm2126
  %v2128 = vsel %vm2127, %v2119, %v2124
  %v2129 = vrsqrt.pop %v2107
  %v2130 = vmul.f32 %v2129, %v2107
  %v2131 = vmul.f32 %v2130, %v2129
  %v2132 = vmul.f32 0.5, %v2131
  %v2133 = vsub.f32 1.5, %v2132
  %v2134 = vmul.f32 %v2129, %v2133
  %vm2135 = vweird.f32 %v2107
  %vm2136 = vweird.f32 %v2129
  %vm2137 = vmor %vm2135, %vm2136
  %v2138 = vsel %vm2137, %v2129, %v2134
  %v2139 = vrsqrt.pop %v2108
  %v2140 = vmul.f32 %v2139, %v2108
  %v2141 = vmul.f32 %v2140, %v2139
  %v2142 = vmul.f32 0.5, %v2141
  %v2143 = vsub.f32 1.5, %v2142
  %v2144 = vmul.f32 %v2139, %v2143
  %vm2145 = vweird.f32 %v2108
  %vm2146 = vweird.f32 %v2139
  %vm2147 = vmor %vm2145, %vm2146
  %v2148 = vsel %vm2147, %v2139, %v2144
  %v2149 = vmul.f32 %v2081, %v2118
  %v2150 = vmul.f32 %v2082, %v2128
  %v2151 = vmul.f32 %v2083, %v2138
  %v2152 = vmul.f32 %v2084, %v2148
  %v2154 = vperm.slane %v2062, 0
  %v2156 = vmul.f32 %v2149, %v2154
  %v2157 = vmul.f32 %v2150, %v2154
  %v2158 = vmul.f32 %v2151, %v2154
  %v2159 = vmul.f32 %v2152, %v2154
  %v2161 = vperm.slane %v2064, 0
  %v2163 = vadd.f32 %v2156, %v2161
  %v2164 = vadd.f32 %v2157, %v2161
  %v2165 = vadd.f32 %v2158, %v2161
  %v2166 = vadd.f32 %v2159, %v2161
  %v2167 = vld [vmem:[%s35] sm:$0x1]
  %v2168 = vld [vmem:[%s37] sm:$0x1]
  %v2169 = vsel %vm213, %v2163, 0.0
  %2170 = vadd.xlane.f32.xlu0 %v2169
  %v2171 = vpop.xlane.xlu0 %2170
  %v2172 = vsel %vm213, %v2164, 0.0
  %2173 = vadd.xlane.f32.xlu0 %v2172
  %v2174 = vpop.xlane.xlu0 %2173
  %v2175 = vsel %vm213, %v2165, 0.0
  %2176 = vadd.xlane.f32.xlu0 %v2175
  %v2177 = vpop.xlane.xlu0 %2176
  %v2178 = vsel %vm213, %v2166, 0.0
  %2179 = vadd.xlane.f32.xlu0 %v2178
  %v2180 = vpop.xlane.xlu0 %2179
  %v2181 = vmul.f32 %v2171, %v865
  %v2182 = vmul.f32 %v2174, %v865
  %v2183 = vmul.f32 %v2177, %v865
  %v2184 = vmul.f32 %v2180, %v865
  %v2185 = vsub.f32 %v2163, %v2181
  %v2186 = vsub.f32 %v2164, %v2182
  %v2187 = vsub.f32 %v2165, %v2183
  %v2188 = vsub.f32 %v2166, %v2184
  %v2189 = vmul.f32 %v2185, %v2185
  %v2190 = vmul.f32 %v2186, %v2186
  %v2191 = vmul.f32 %v2187, %v2187
  %v2192 = vmul.f32 %v2188, %v2188
  %v2193 = vsel %vm213, %v2189, 0.0
  %2194 = vadd.xlane.f32.xlu0 %v2193
  %v2195 = vpop.xlane.xlu0 %2194
  %v2196 = vsel %vm213, %v2190, 0.0
  %2197 = vadd.xlane.f32.xlu0 %v2196
  %v2198 = vpop.xlane.xlu0 %2197
  %v2199 = vsel %vm213, %v2191, 0.0
  %2200 = vadd.xlane.f32.xlu0 %v2199
  %v2201 = vpop.xlane.xlu0 %2200
  %v2202 = vsel %vm213, %v2192, 0.0
  %2203 = vadd.xlane.f32.xlu0 %v2202
  %v2204 = vpop.xlane.xlu0 %2203
  %v2205 = vmul.f32 %v2195, %v865
  %v2206 = vmul.f32 %v2198, %v865
  %v2207 = vmul.f32 %v2201, %v865
  %v2208 = vmul.f32 %v2204, %v865
  %v2209 = vadd.f32 %v2205, 1e-05
  %v2210 = vadd.f32 %v2206, 1e-05
  %v2211 = vadd.f32 %v2207, 1e-05
  %v2212 = vadd.f32 %v2208, 1e-05
  %v2213 = vrsqrt.pop %v2209
  %v2214 = vmul.f32 %v2213, %v2209
  %v2215 = vmul.f32 %v2214, %v2213
  %v2216 = vmul.f32 0.5, %v2215
  %v2217 = vsub.f32 1.5, %v2216
  %v2218 = vmul.f32 %v2213, %v2217
  %vm2219 = vweird.f32 %v2209
  %vm2220 = vweird.f32 %v2213
  %vm2221 = vmor %vm2219, %vm2220
  %v2222 = vsel %vm2221, %v2213, %v2218
  %v2223 = vrsqrt.pop %v2210
  %v2224 = vmul.f32 %v2223, %v2210
  %v2225 = vmul.f32 %v2224, %v2223
  %v2226 = vmul.f32 0.5, %v2225
  %v2227 = vsub.f32 1.5, %v2226
  %v2228 = vmul.f32 %v2223, %v2227
  %vm2229 = vweird.f32 %v2210
  %vm2230 = vweird.f32 %v2223
  %vm2231 = vmor %vm2229, %vm2230
  %v2232 = vsel %vm2231, %v2223, %v2228
  %v2233 = vrsqrt.pop %v2211
  %v2234 = vmul.f32 %v2233, %v2211
  %v2235 = vmul.f32 %v2234, %v2233
  %v2236 = vmul.f32 0.5, %v2235
  %v2237 = vsub.f32 1.5, %v2236
  %v2238 = vmul.f32 %v2233, %v2237
  %vm2239 = vweird.f32 %v2211
  %vm2240 = vweird.f32 %v2233
  %vm2241 = vmor %vm2239, %vm2240
  %v2242 = vsel %vm2241, %v2233, %v2238
  %v2243 = vrsqrt.pop %v2212
  %v2244 = vmul.f32 %v2243, %v2212
  %v2245 = vmul.f32 %v2244, %v2243
  %v2246 = vmul.f32 0.5, %v2245
  %v2247 = vsub.f32 1.5, %v2246
  %v2248 = vmul.f32 %v2243, %v2247
  %vm2249 = vweird.f32 %v2212
  %vm2250 = vweird.f32 %v2243
  %vm2251 = vmor %vm2249, %vm2250
  %v2252 = vsel %vm2251, %v2243, %v2248
  %v2253 = vmul.f32 %v2185, %v2222
  %v2254 = vmul.f32 %v2186, %v2232
  %v2255 = vmul.f32 %v2187, %v2242
  %v2256 = vmul.f32 %v2188, %v2252
  %v2258 = vperm.slane %v2167, 0
  %v2260 = vmul.f32 %v2253, %v2258
  %v2261 = vmul.f32 %v2254, %v2258
  %v2262 = vmul.f32 %v2255, %v2258
  %v2263 = vmul.f32 %v2256, %v2258
  %v2265 = vperm.slane %v2168, 0
  %v2267 = vadd.f32 %v2260, %v2265
  %v2268 = vadd.f32 %v2261, %v2265
  %v2269 = vadd.f32 %v2262, %v2265
  %v2270 = vadd.f32 %v2263, %v2265
  %v2271 = vld [vmem:[%s3] sm:$0xff]
  %v2272 = vld [vmem:[%s3 + $0x8] sm:$0xff]
  %v2273 = vld [vmem:[%s39] sm:$0xf]
  %v2274 = vld [vmem:[%s39 + $0x4] sm:$0xf]
  %v2275 = vld [vmem:[%s39 + $0x8] sm:$0xf]
  %v2276 = vld [vmem:[%s39 + $0xc] sm:$0xf]
  %v2277 = vpack.c.bf16 %v2272, %v2271
  %v2278 = vld [vmem:[%s41] sm:$0x1]
  %v2280 = vperm.slane %v2278, 0
  %v2286 = vunpack.c.l.b16 %v2273
  %v2287 = vunpack.c.l.b16 %v2274
  %v2288 = vunpack.c.l.b16 %v2275
  %v2289 = vunpack.c.l.b16 %v2276
  %v2290 = vpack.c.b16 %v2287, %v2286
  %v2291 = vpack.c.b16 %v2289, %v2288
  %v2295 = vsel %vm213, %v2277, 0
  %2297 = vmatpush.bf16.msra.mxu0 0
  %2298 = vmatpush.bf16.msra.mxu0 0
  %2299 = vmatpush.bf16.msra.mxu0 0
  %2300 = vmatpush.bf16.msra.mxu0 0
  %2301 = vmatpush.bf16.msra.mxu0 0
  %2302 = vmatpush.bf16.msra.mxu0 0
  %2303 = vmatpush.bf16.msra.mxu0 %v2291
  %2304 = vmatpush.bf16.msra.mxu0 %v2290
  %2305 = vmatmul.bf16.gmra.mxu0 %v2295
  %v2306 = vpop.f32.mrf.mxu0
  %v2307 = vadd.f32 %v2280, %v2306
  %v2308 = vpop.f32.mrf.mxu0
  %v2309 = vadd.f32 %v2280, %v2308
  %2310 = vdwg.mxu0
  %v2311 = vld [vmem:[%s43] sm:$0xf]
  %v2312 = vld [vmem:[%s43 + $0x4] sm:$0xf]
  %v2313 = vld [vmem:[%s43 + $0x8] sm:$0xf]
  %v2314 = vld [vmem:[%s43 + $0xc] sm:$0xf]
  %v2315 = vld [vmem:[%s45] sm:$0x1]
  %v2316 = vmul.f32 %v2307, 0.35355338
  %v2317 = vmul.f32 %v2309, 0.35355338
  %v2318 = vpack.c.bf16 %v2316, %v2316
  %v2319 = vpack.c.bf16 %v2317, %v2317
  %v2320 = vpack.c.bf16 %v2307, %v2307
  %v2321 = vpack.c.bf16 %v2309, %v2309
  %v2324 = vunpack.c.l.b16 %v2318
  %v2325 = vunpack.c.l.b16 %v2319
  %v2326 = vpack.c.b16 %v2325, %v2324
  %v2329 = vunpack.c.l.b16 %v2320
  %v2330 = vunpack.c.l.b16 %v2321
  %v2331 = vpack.c.b16 %v2330, %v2329
  %2332 = vrot.lane.b32.xlu0 %v2331, 96
  %v2333 = vpop.permute.xlu0 %2332
  %v2335 = vsel %vm280, %v2326, 0
  %v2338 = vsel %vm280, %v2333, 0
  %2340 = vmatpush.bf16.xpose.msra.mxu0 0
  %2341 = vmatpush.bf16.xpose.msra.mxu0 0
  %2342 = vmatpush.bf16.xpose.msra.mxu0 0
  %2343 = vmatpush.bf16.xpose.msra.mxu0 0
  %2344 = vmatpush.bf16.xpose.msra.mxu0 0
  %2345 = vmatpush.bf16.xpose.msra.mxu0 0
  %2346 = vmatpush.bf16.xpose.msra.mxu0 0
  %2347 = vmatpush.bf16.xpose.msra.mxu0 %v2338
  %2348 = vmatmul.bf16.gmra.mxu0 %v2335
  %v2349 = vpop.f32.mrf.mxu0
  %v2350 = vadd.f32 %v183, %v2349
  %v2351 = vpop.f32.mrf.mxu0
  %v2352 = vadd.f32 %v184, %v2351
  %2353 = vdwg.mxu0
  %v2354 = vsel %vm789, %v2350, -inf
  %2355 = vmax.xlane.f32.xlu0 %v2354
  %v2356 = vpop.xlane.xlu0 %2355
  %v2357 = vsel %vm789, %v2352, -inf
  %2358 = vmax.xlane.f32.xlu0 %v2357
  %v2359 = vpop.xlane.xlu0 %2358
  %v2360 = vsub.f32 %v2350, %v2356
  %v2361 = vsub.f32 %v2352, %v2359
  %v2362 = vmul.f32 %v2360, 1.442695
  %v2363 = vpow.pop %v2362
  %v2364 = vmul.f32 %v2361, 1.442695
  %v2365 = vpow.pop %v2364
  %v2366 = vsel %vm789, %v2363, 0.0
  %2367 = vadd.xlane.f32.xlu0 %v2366
  %v2368 = vpop.xlane.xlu0 %2367
  %v2369 = vsel %vm789, %v2365, 0.0
  %2370 = vadd.xlane.f32.xlu0 %v2369
  %v2371 = vpop.xlane.xlu0 %2370
  %v2372 = vrcp.pop %v2368
  %v2373 = vrcp.pop %v2371
  %v2374 = vmul.f32 %v2363, %v2372
  %v2375 = vmul.f32 %v2365, %v2373
  %v2376 = vpack.c.bf16 %v2375, %v2374
  %2377 = vrot.lane.b32.xlu0 %v2331, 64
  %v2378 = vpop.permute.xlu0 %2377
  %v2381 = vsel %vm789, %v2376, 0
  %2383 = vmatpush.bf16.msra.mxu0 0
  %2384 = vmatpush.bf16.msra.mxu0 0
  %2385 = vmatpush.bf16.msra.mxu0 0
  %2386 = vmatpush.bf16.msra.mxu0 0
  %2387 = vmatpush.bf16.msra.mxu0 0
  %2388 = vmatpush.bf16.msra.mxu0 0
  %2389 = vmatpush.bf16.msra.mxu0 0
  %2390 = vmatpush.bf16.msra.mxu0 %v2378
  %2391 = vmatmul.bf16.gmra.mxu0 %v2381
  %v2392 = vpop.f32.mrf.mxu0
  %v2393 = vadd.f32 0.0, %v2392
  %v2394 = vpop.f32.mrf.mxu0
  %v2395 = vadd.f32 0.0, %v2394
  %2396 = vdwg.mxu0
  %2397 = vrot.lane.b32.xlu0 %v2326, 120
  %v2398 = vpop.permute.xlu0 %2397
  %2399 = vrot.lane.b32.xlu0 %v2331, 88
  %v2400 = vpop.permute.xlu0 %2399
  %v2402 = vsel %vm280, %v2398, 0
  %v2405 = vsel %vm280, %v2400, 0
  %2407 = vmatpush.bf16.xpose.msra.mxu0 0
  %2408 = vmatpush.bf16.xpose.msra.mxu0 0
  %2409 = vmatpush.bf16.xpose.msra.mxu0 0
  %2410 = vmatpush.bf16.xpose.msra.mxu0 0
  %2411 = vmatpush.bf16.xpose.msra.mxu0 0
  %2412 = vmatpush.bf16.xpose.msra.mxu0 0
  %2413 = vmatpush.bf16.xpose.msra.mxu0 0
  %2414 = vmatpush.bf16.xpose.msra.mxu0 %v2405
  %2415 = vmatmul.bf16.gmra.mxu0 %v2402
  %v2416 = vpop.f32.mrf.mxu0
  %v2417 = vadd.f32 %v183, %v2416
  %v2418 = vpop.f32.mrf.mxu0
  %v2419 = vadd.f32 %v184, %v2418
  %2420 = vdwg.mxu0
  %v2421 = vsel %vm789, %v2417, -inf
  %2422 = vmax.xlane.f32.xlu0 %v2421
  %v2423 = vpop.xlane.xlu0 %2422
  %v2424 = vsel %vm789, %v2419, -inf
  %2425 = vmax.xlane.f32.xlu0 %v2424
  %v2426 = vpop.xlane.xlu0 %2425
  %v2427 = vsub.f32 %v2417, %v2423
  %v2428 = vsub.f32 %v2419, %v2426
  %v2429 = vmul.f32 %v2427, 1.442695
  %v2430 = vpow.pop %v2429
  %v2431 = vmul.f32 %v2428, 1.442695
  %v2432 = vpow.pop %v2431
  %v2433 = vsel %vm789, %v2430, 0.0
  %2434 = vadd.xlane.f32.xlu0 %v2433
  %v2435 = vpop.xlane.xlu0 %2434
  %v2436 = vsel %vm789, %v2432, 0.0
  %2437 = vadd.xlane.f32.xlu0 %v2436
  %v2438 = vpop.xlane.xlu0 %2437
  %v2439 = vrcp.pop %v2435
  %v2440 = vrcp.pop %v2438
  %v2441 = vmul.f32 %v2430, %v2439
  %v2442 = vmul.f32 %v2432, %v2440
  %v2443 = vpack.c.bf16 %v2442, %v2441
  %2444 = vrot.lane.b32.xlu0 %v2331, 56
  %v2445 = vpop.permute.xlu0 %2444
  %v2448 = vsel %vm789, %v2443, 0
  %2450 = vmatpush.bf16.msra.mxu0 0
  %2451 = vmatpush.bf16.msra.mxu0 0
  %2452 = vmatpush.bf16.msra.mxu0 0
  %2453 = vmatpush.bf16.msra.mxu0 0
  %2454 = vmatpush.bf16.msra.mxu0 0
  %2455 = vmatpush.bf16.msra.mxu0 0
  %2456 = vmatpush.bf16.msra.mxu0 0
  %2457 = vmatpush.bf16.msra.mxu0 %v2445
  %2458 = vmatmul.bf16.gmra.mxu0 %v2448
  %v2459 = vpop.f32.mrf.mxu0
  %v2460 = vadd.f32 0.0, %v2459
  %v2461 = vpop.f32.mrf.mxu0
  %v2462 = vadd.f32 0.0, %v2461
  %2463 = vdwg.mxu0
  %2464 = vrot.lane.b32.xlu0 %v2326, 112
  %v2465 = vpop.permute.xlu0 %2464
  %2466 = vrot.lane.b32.xlu0 %v2331, 80
  %v2467 = vpop.permute.xlu0 %2466
  %v2469 = vsel %vm280, %v2465, 0
  %v2472 = vsel %vm280, %v2467, 0
  %2474 = vmatpush.bf16.xpose.msra.mxu0 0
  %2475 = vmatpush.bf16.xpose.msra.mxu0 0
  %2476 = vmatpush.bf16.xpose.msra.mxu0 0
  %2477 = vmatpush.bf16.xpose.msra.mxu0 0
  %2478 = vmatpush.bf16.xpose.msra.mxu0 0
  %2479 = vmatpush.bf16.xpose.msra.mxu0 0
  %2480 = vmatpush.bf16.xpose.msra.mxu0 0
  %2481 = vmatpush.bf16.xpose.msra.mxu0 %v2472
  %2482 = vmatmul.bf16.gmra.mxu0 %v2469
  %v2483 = vpop.f32.mrf.mxu0
  %v2484 = vadd.f32 %v183, %v2483
  %v2485 = vpop.f32.mrf.mxu0
  %v2486 = vadd.f32 %v184, %v2485
  %2487 = vdwg.mxu0
  %v2488 = vsel %vm789, %v2484, -inf
  %2489 = vmax.xlane.f32.xlu0 %v2488
  %v2490 = vpop.xlane.xlu0 %2489
  %v2491 = vsel %vm789, %v2486, -inf
  %2492 = vmax.xlane.f32.xlu0 %v2491
  %v2493 = vpop.xlane.xlu0 %2492
  %v2494 = vsub.f32 %v2484, %v2490
  %v2495 = vsub.f32 %v2486, %v2493
  %v2496 = vmul.f32 %v2494, 1.442695
  %v2497 = vpow.pop %v2496
  %v2498 = vmul.f32 %v2495, 1.442695
  %v2499 = vpow.pop %v2498
  %v2500 = vsel %vm789, %v2497, 0.0
  %2501 = vadd.xlane.f32.xlu0 %v2500
  %v2502 = vpop.xlane.xlu0 %2501
  %v2503 = vsel %vm789, %v2499, 0.0
  %2504 = vadd.xlane.f32.xlu0 %v2503
  %v2505 = vpop.xlane.xlu0 %2504
  %v2506 = vrcp.pop %v2502
  %v2507 = vrcp.pop %v2505
  %v2508 = vmul.f32 %v2497, %v2506
  %v2509 = vmul.f32 %v2499, %v2507
  %v2510 = vpack.c.bf16 %v2509, %v2508
  %2511 = vrot.lane.b32.xlu0 %v2331, 48
  %v2512 = vpop.permute.xlu0 %2511
  %v2515 = vsel %vm789, %v2510, 0
  %2517 = vmatpush.bf16.msra.mxu0 0
  %2518 = vmatpush.bf16.msra.mxu0 0
  %2519 = vmatpush.bf16.msra.mxu0 0
  %2520 = vmatpush.bf16.msra.mxu0 0
  %2521 = vmatpush.bf16.msra.mxu0 0
  %2522 = vmatpush.bf16.msra.mxu0 0
  %2523 = vmatpush.bf16.msra.mxu0 0
  %2524 = vmatpush.bf16.msra.mxu0 %v2512
  %2525 = vmatmul.bf16.gmra.mxu0 %v2515
  %v2526 = vpop.f32.mrf.mxu0
  %v2527 = vadd.f32 0.0, %v2526
  %v2528 = vpop.f32.mrf.mxu0
  %v2529 = vadd.f32 0.0, %v2528
  %2530 = vdwg.mxu0
  %2531 = vrot.lane.b32.xlu0 %v2326, 104
  %v2532 = vpop.permute.xlu0 %2531
  %2533 = vrot.lane.b32.xlu0 %v2331, 72
  %v2534 = vpop.permute.xlu0 %2533
  %v2536 = vsel %vm280, %v2532, 0
  %v2539 = vsel %vm280, %v2534, 0
  %2541 = vmatpush.bf16.xpose.msra.mxu0 0
  %2542 = vmatpush.bf16.xpose.msra.mxu0 0
  %2543 = vmatpush.bf16.xpose.msra.mxu0 0
  %2544 = vmatpush.bf16.xpose.msra.mxu0 0
  %2545 = vmatpush.bf16.xpose.msra.mxu0 0
  %2546 = vmatpush.bf16.xpose.msra.mxu0 0
  %2547 = vmatpush.bf16.xpose.msra.mxu0 0
  %2548 = vmatpush.bf16.xpose.msra.mxu0 %v2539
  %2549 = vmatmul.bf16.gmra.mxu0 %v2536
  %v2550 = vpop.f32.mrf.mxu0
  %v2551 = vadd.f32 %v183, %v2550
  %v2552 = vpop.f32.mrf.mxu0
  %v2553 = vadd.f32 %v184, %v2552
  %2554 = vdwg.mxu0
  %v2555 = vsel %vm789, %v2551, -inf
  %2556 = vmax.xlane.f32.xlu0 %v2555
  %v2557 = vpop.xlane.xlu0 %2556
  %v2558 = vsel %vm789, %v2553, -inf
  %2559 = vmax.xlane.f32.xlu0 %v2558
  %v2560 = vpop.xlane.xlu0 %2559
  %v2561 = vsub.f32 %v2551, %v2557
  %v2562 = vsub.f32 %v2553, %v2560
  %v2563 = vmul.f32 %v2561, 1.442695
  %v2564 = vpow.pop %v2563
  %v2565 = vmul.f32 %v2562, 1.442695
  %v2566 = vpow.pop %v2565
  %v2567 = vsel %vm789, %v2564, 0.0
  %2568 = vadd.xlane.f32.xlu0 %v2567
  %v2569 = vpop.xlane.xlu0 %2568
  %v2570 = vsel %vm789, %v2566, 0.0
  %2571 = vadd.xlane.f32.xlu0 %v2570
  %v2572 = vpop.xlane.xlu0 %2571
  %v2573 = vrcp.pop %v2569
  %v2574 = vrcp.pop %v2572
  %v2575 = vmul.f32 %v2564, %v2573
  %v2576 = vmul.f32 %v2566, %v2574
  %v2577 = vpack.c.bf16 %v2576, %v2575
  %2578 = vrot.lane.b32.xlu0 %v2331, 40
  %v2579 = vpop.permute.xlu0 %2578
  %v2582 = vsel %vm789, %v2577, 0
  %2584 = vmatpush.bf16.msra.mxu0 0
  %2585 = vmatpush.bf16.msra.mxu0 0
  %2586 = vmatpush.bf16.msra.mxu0 0
  %2587 = vmatpush.bf16.msra.mxu0 0
  %2588 = vmatpush.bf16.msra.mxu0 0
  %2589 = vmatpush.bf16.msra.mxu0 0
  %2590 = vmatpush.bf16.msra.mxu0 0
  %2591 = vmatpush.bf16.msra.mxu0 %v2579
  %2592 = vmatmul.bf16.gmra.mxu0 %v2582
  %v2593 = vpop.f32.mrf.mxu0
  %v2594 = vadd.f32 0.0, %v2593
  %v2595 = vpop.f32.mrf.mxu0
  %v2596 = vadd.f32 0.0, %v2595
  %2597 = vdwg.mxu0
  %2600 = vrot.lane.b32.xlu0 %v2460, 8
  %v2601 = vpop.permute.xlu0 %2600
  %2602 = vrot.lane.b32.xlu0 %v2462, 8
  %v2603 = vpop.permute.xlu0 %2602
  %2608 = vrot.lane.b32.xlu0 %v2527, 16
  %v2609 = vpop.permute.xlu0 %2608
  %2610 = vrot.lane.b32.xlu0 %v2529, 16
  %v2611 = vpop.permute.xlu0 %2610
  %2616 = vrot.lane.b32.xlu0 %v2594, 24
  %v2617 = vpop.permute.xlu0 %2616
  %2618 = vrot.lane.b32.xlu0 %v2596, 24
  %v2619 = vpop.permute.xlu0 %2618
  %v2622 = vsel %vm280, %v2393, %v2601
  %v2623 = vsel %vm280, %v2395, %v2603
  %v2624 = vsel %vm789, %v2622, %v2609
  %v2625 = vsel %vm789, %v2623, %v2611
  %v2626 = vsel %vm794, %v2624, %v2617
  %v2627 = vsel %vm794, %v2625, %v2619
  %v2628 = vpack.c.bf16 %v2627, %v2626
  %v2630 = vperm.slane %v2315, 0
  %v2636 = vunpack.c.l.b16 %v2311
  %v2637 = vunpack.c.l.b16 %v2312
  %v2638 = vunpack.c.l.b16 %v2313
  %v2639 = vunpack.c.l.b16 %v2314
  %v2640 = vpack.c.b16 %v2637, %v2636
  %v2641 = vpack.c.b16 %v2639, %v2638
  %v2645 = vsel %vm213, %v2628, 0
  %2647 = vmatpush.bf16.msra.mxu0 0
  %2648 = vmatpush.bf16.msra.mxu0 0
  %2649 = vmatpush.bf16.msra.mxu0 0
  %2650 = vmatpush.bf16.msra.mxu0 0
  %2651 = vmatpush.bf16.msra.mxu0 0
  %2652 = vmatpush.bf16.msra.mxu0 0
  %2653 = vmatpush.bf16.msra.mxu0 %v2641
  %2654 = vmatpush.bf16.msra.mxu0 %v2640
  %2655 = vmatmul.bf16.gmra.mxu0 %v2645
  %v2656 = vpop.f32.mrf.mxu0
  %v2657 = vadd.f32 %v2630, %v2656
  %v2658 = vpop.f32.mrf.mxu0
  %v2659 = vadd.f32 %v2630, %v2658
  %2660 = vdwg.mxu0
  %v2661 = vadd.f32 %v2271, %v2657
  %v2662 = vadd.f32 %v2272, %v2659
  %v2663 = vld [vmem:[%s47] sm:$0x1]
  %v2664 = vld [vmem:[%s49] sm:$0x1]
  %v2665 = vsel %vm213, %v2661, 0.0
  %2666 = vadd.xlane.f32.xlu0 %v2665
  %v2667 = vpop.xlane.xlu0 %2666
  %v2668 = vsel %vm213, %v2662, 0.0
  %2669 = vadd.xlane.f32.xlu0 %v2668
  %v2670 = vpop.xlane.xlu0 %2669
  %v2671 = vmul.f32 %v2667, %v865
  %v2672 = vmul.f32 %v2670, %v865
  %v2673 = vsub.f32 %v2661, %v2671
  %v2674 = vsub.f32 %v2662, %v2672
  %v2675 = vmul.f32 %v2673, %v2673
  %v2676 = vmul.f32 %v2674, %v2674
  %v2677 = vsel %vm213, %v2675, 0.0
  %2678 = vadd.xlane.f32.xlu0 %v2677
  %v2679 = vpop.xlane.xlu0 %2678
  %v2680 = vsel %vm213, %v2676, 0.0
  %2681 = vadd.xlane.f32.xlu0 %v2680
  %v2682 = vpop.xlane.xlu0 %2681
  %v2683 = vmul.f32 %v2679, %v865
  %v2684 = vmul.f32 %v2682, %v865
  %v2685 = vadd.f32 %v2683, 1e-05
  %v2686 = vadd.f32 %v2684, 1e-05
  %v2687 = vrsqrt.pop %v2685
  %v2688 = vmul.f32 %v2687, %v2685
  %v2689 = vmul.f32 %v2688, %v2687
  %v2690 = vmul.f32 0.5, %v2689
  %v2691 = vsub.f32 1.5, %v2690
  %v2692 = vmul.f32 %v2687, %v2691
  %vm2693 = vweird.f32 %v2685
  %vm2694 = vweird.f32 %v2687
  %vm2695 = vmor %vm2693, %vm2694
  %v2696 = vsel %vm2695, %v2687, %v2692
  %v2697 = vrsqrt.pop %v2686
  %v2698 = vmul.f32 %v2697, %v2686
  %v2699 = vmul.f32 %v2698, %v2697
  %v2700 = vmul.f32 0.5, %v2699
  %v2701 = vsub.f32 1.5, %v2700
  %v2702 = vmul.f32 %v2697, %v2701
  %vm2703 = vweird.f32 %v2686
  %vm2704 = vweird.f32 %v2697
  %vm2705 = vmor %vm2703, %vm2704
  %v2706 = vsel %vm2705, %v2697, %v2702
  %v2707 = vmul.f32 %v2673, %v2696
  %v2708 = vmul.f32 %v2674, %v2706
  %v2710 = vperm.slane %v2663, 0
  %v2712 = vmul.f32 %v2707, %v2710
  %v2713 = vmul.f32 %v2708, %v2710
  %v2715 = vperm.slane %v2664, 0
  %v2717 = vadd.f32 %v2712, %v2715
  %v2718 = vadd.f32 %v2713, %v2715
  %v2719 = vld [vmem:[%s51] sm:$0xf]
  %v2720 = vld [vmem:[%s51 + $0x4] sm:$0xf]
  %v2721 = vld [vmem:[%s51 + $0x8] sm:$0xf]
  %v2722 = vld [vmem:[%s51 + $0xc] sm:$0xf]
  %v2723 = vpack.c.bf16 %v2718, %v2717
  %v2724 = vld [vmem:[%s53] sm:$0x1]
  %v2726 = vperm.slane %v2724, 0
  %v2732 = vunpack.c.l.b16 %v2719
  %v2733 = vunpack.c.l.b16 %v2720
  %v2734 = vunpack.c.l.b16 %v2721
  %v2735 = vunpack.c.l.b16 %v2722
  %v2736 = vpack.c.b16 %v2733, %v2732
  %v2737 = vpack.c.b16 %v2735, %v2734
  %v2741 = vsel %vm213, %v2723, 0
  %2743 = vmatpush.bf16.msra.mxu0 0
  %2744 = vmatpush.bf16.msra.mxu0 0
  %2745 = vmatpush.bf16.msra.mxu0 0
  %2746 = vmatpush.bf16.msra.mxu0 0
  %2747 = vmatpush.bf16.msra.mxu0 0
  %2748 = vmatpush.bf16.msra.mxu0 0
  %2749 = vmatpush.bf16.msra.mxu0 %v2737
  %2750 = vmatpush.bf16.msra.mxu0 %v2736
  %2751 = vmatmul.bf16.gmra.mxu0 %v2741
  %v2752 = vpop.f32.mrf.mxu0
  %v2753 = vadd.f32 %v2726, %v2752
  %v2754 = vpop.f32.mrf.mxu0
  %v2755 = vadd.f32 %v2726, %v2754
  %2756 = vdwg.mxu0
  %v2757 = vld [vmem:[%s55] sm:$0xf]
  %v2758 = vld [vmem:[%s55 + $0x4] sm:$0xf]
  %v2759 = vld [vmem:[%s55 + $0x8] sm:$0xf]
  %v2760 = vld [vmem:[%s55 + $0xc] sm:$0xf]
  %v2761 = vpack.c.bf16 %v2268, %v2267
  %v2762 = vpack.c.bf16 %v2270, %v2269
  %v2763 = vld [vmem:[%s57] sm:$0x1]
  %v2765 = vperm.slane %v2763, 0
  %v2771 = vunpack.c.l.b16 %v2757
  %v2772 = vunpack.c.l.b16 %v2758
  %v2773 = vunpack.c.l.b16 %v2759
  %v2774 = vunpack.c.l.b16 %v2760
  %v2775 = vpack.c.b16 %v2772, %v2771
  %v2776 = vpack.c.b16 %v2774, %v2773
  %v2780 = vsel %vm213, %v2761, 0
  %v2783 = vsel %vm213, %v2762, 0
  %2785 = vmatpush.bf16.msra.mxu0 0
  %2786 = vmatpush.bf16.msra.mxu0 0
  %2787 = vmatpush.bf16.msra.mxu0 0
  %2788 = vmatpush.bf16.msra.mxu0 0
  %2789 = vmatpush.bf16.msra.mxu0 0
  %2790 = vmatpush.bf16.msra.mxu0 0
  %2791 = vmatpush.bf16.msra.mxu0 %v2776
  %2792 = vmatpush.bf16.msra.mxu0 %v2775
  %2793 = vmatmul.bf16.gmra.mxu0 %v2780
  %v2794 = vpop.f32.mrf.mxu0
  %v2795 = vadd.f32 %v2765, %v2794
  %v2796 = vpop.f32.mrf.mxu0
  %v2797 = vadd.f32 %v2765, %v2796
  %2798 = vmatmul.bf16.gmra.mxu0 %v2783
  %v2799 = vpop.f32.mrf.mxu0
  %v2800 = vadd.f32 %v2765, %v2799
  %v2801 = vpop.f32.mrf.mxu0
  %v2802 = vadd.f32 %v2765, %v2801
  %2803 = vdwg.mxu0
  %v2804 = vld [vmem:[%s59] sm:$0xf]
  %v2805 = vld [vmem:[%s59 + $0x4] sm:$0xf]
  %v2806 = vld [vmem:[%s59 + $0x8] sm:$0xf]
  %v2807 = vld [vmem:[%s59 + $0xc] sm:$0xf]
  %v2808 = vld [vmem:[%s61] sm:$0x1]
  %v2809 = vmul.f32 %v2753, 0.35355338
  %v2810 = vmul.f32 %v2755, 0.35355338
  %v2811 = vpack.c.bf16 %v2809, %v2809
  %v2812 = vpack.c.bf16 %v2810, %v2810
  %v2813 = vpack.c.bf16 %v2795, %v2795
  %v2814 = vpack.c.bf16 %v2797, %v2797
  %v2815 = vpack.c.bf16 %v2800, %v2800
  %v2816 = vpack.c.bf16 %v2802, %v2802
  %v2819 = vunpack.c.l.b16 %v2811
  %v2820 = vunpack.c.l.b16 %v2812
  %v2821 = vpack.c.b16 %v2820, %v2819
  %v2826 = vunpack.c.l.b16 %v2813
  %v2827 = vunpack.c.l.b16 %v2814
  %v2828 = vunpack.c.l.b16 %v2815
  %v2829 = vunpack.c.l.b16 %v2816
  %v2830 = vpack.c.b16 %v2827, %v2826
  %v2831 = vpack.c.b16 %v2829, %v2828
  %v2833 = vsel %vm280, %v2821, 0
  %v2836 = vsel %vm280, %v2830, 0
  %v2839 = vsel %vm280, %v2831, 0
  %2841 = vmatpush.bf16.xpose.msra.mxu0 0
  %2842 = vmatpush.bf16.xpose.msra.mxu0 0
  %2843 = vmatpush.bf16.xpose.msra.mxu0 0
  %2844 = vmatpush.bf16.xpose.msra.mxu0 0
  %2845 = vmatpush.bf16.xpose.msra.mxu0 0
  %2846 = vmatpush.bf16.xpose.msra.mxu0 0
  %2847 = vmatpush.bf16.xpose.msra.mxu0 %v2839
  %2848 = vmatpush.bf16.xpose.msra.mxu0 %v2836
  %2849 = vmatmul.bf16.gmra.mxu0 %v2833
  %v2850 = vpop.f32.mrf.mxu0
  %v2851 = vadd.f32 %v185, %v2850
  %v2852 = vpop.f32.mrf.mxu0
  %v2853 = vadd.f32 %v186, %v2852
  %2854 = vdwg.mxu0
  %v2855 = vsel %vm213, %v2851, -inf
  %2856 = vmax.xlane.f32.xlu0 %v2855
  %v2857 = vpop.xlane.xlu0 %2856
  %v2858 = vsel %vm213, %v2853, -inf
  %2859 = vmax.xlane.f32.xlu0 %v2858
  %v2860 = vpop.xlane.xlu0 %2859
  %v2861 = vsub.f32 %v2851, %v2857
  %v2862 = vsub.f32 %v2853, %v2860
  %v2863 = vmul.f32 %v2861, 1.442695
  %v2864 = vpow.pop %v2863
  %v2865 = vmul.f32 %v2862, 1.442695
  %v2866 = vpow.pop %v2865
  %v2867 = vsel %vm213, %v2864, 0.0
  %2868 = vadd.xlane.f32.xlu0 %v2867
  %v2869 = vpop.xlane.xlu0 %2868
  %v2870 = vsel %vm213, %v2866, 0.0
  %2871 = vadd.xlane.f32.xlu0 %v2870
  %v2872 = vpop.xlane.xlu0 %2871
  %v2873 = vrcp.pop %v2869
  %v2874 = vrcp.pop %v2872
  %v2875 = vmul.f32 %v2864, %v2873
  %v2876 = vmul.f32 %v2866, %v2874
  %v2877 = vpack.c.bf16 %v2876, %v2875
  %2878 = vrot.lane.b32.xlu0 %v2830, 96
  %v2879 = vpop.permute.xlu0 %2878
  %2880 = vrot.lane.b32.xlu0 %v2831, 96
  %v2881 = vpop.permute.xlu0 %2880
  %v2885 = vsel %vm213, %v2877, 0
  %2887 = vmatpush.bf16.msra.mxu0 0
  %2888 = vmatpush.bf16.msra.mxu0 0
  %2889 = vmatpush.bf16.msra.mxu0 0
  %2890 = vmatpush.bf16.msra.mxu0 0
  %2891 = vmatpush.bf16.msra.mxu0 0
  %2892 = vmatpush.bf16.msra.mxu0 0
  %2893 = vmatpush.bf16.msra.mxu0 %v2881
  %2894 = vmatpush.bf16.msra.mxu0 %v2879
  %2895 = vmatmul.bf16.gmra.mxu0 %v2885
  %v2896 = vpop.f32.mrf.mxu0
  %v2897 = vadd.f32 0.0, %v2896
  %v2898 = vpop.f32.mrf.mxu0
  %v2899 = vadd.f32 0.0, %v2898
  %2900 = vdwg.mxu0
  %2901 = vrot.lane.b32.xlu0 %v2821, 120
  %v2902 = vpop.permute.xlu0 %2901
  %2903 = vrot.lane.b32.xlu0 %v2830, 120
  %v2904 = vpop.permute.xlu0 %2903
  %2905 = vrot.lane.b32.xlu0 %v2831, 120
  %v2906 = vpop.permute.xlu0 %2905
  %v2908 = vsel %vm280, %v2902, 0
  %v2911 = vsel %vm280, %v2904, 0
  %v2914 = vsel %vm280, %v2906, 0
  %2916 = vmatpush.bf16.xpose.msra.mxu0 0
  %2917 = vmatpush.bf16.xpose.msra.mxu0 0
  %2918 = vmatpush.bf16.xpose.msra.mxu0 0
  %2919 = vmatpush.bf16.xpose.msra.mxu0 0
  %2920 = vmatpush.bf16.xpose.msra.mxu0 0
  %2921 = vmatpush.bf16.xpose.msra.mxu0 0
  %2922 = vmatpush.bf16.xpose.msra.mxu0 %v2914
  %2923 = vmatpush.bf16.xpose.msra.mxu0 %v2911
  %2924 = vmatmul.bf16.gmra.mxu0 %v2908
  %v2925 = vpop.f32.mrf.mxu0
  %v2926 = vadd.f32 %v185, %v2925
  %v2927 = vpop.f32.mrf.mxu0
  %v2928 = vadd.f32 %v186, %v2927
  %2929 = vdwg.mxu0
  %v2930 = vsel %vm213, %v2926, -inf
  %2931 = vmax.xlane.f32.xlu0 %v2930
  %v2932 = vpop.xlane.xlu0 %2931
  %v2933 = vsel %vm213, %v2928, -inf
  %2934 = vmax.xlane.f32.xlu0 %v2933
  %v2935 = vpop.xlane.xlu0 %2934
  %v2936 = vsub.f32 %v2926, %v2932
  %v2937 = vsub.f32 %v2928, %v2935
  %v2938 = vmul.f32 %v2936, 1.442695
  %v2939 = vpow.pop %v2938
  %v2940 = vmul.f32 %v2937, 1.442695
  %v2941 = vpow.pop %v2940
  %v2942 = vsel %vm213, %v2939, 0.0
  %2943 = vadd.xlane.f32.xlu0 %v2942
  %v2944 = vpop.xlane.xlu0 %2943
  %v2945 = vsel %vm213, %v2941, 0.0
  %2946 = vadd.xlane.f32.xlu0 %v2945
  %v2947 = vpop.xlane.xlu0 %2946
  %v2948 = vrcp.pop %v2944
  %v2949 = vrcp.pop %v2947
  %v2950 = vmul.f32 %v2939, %v2948
  %v2951 = vmul.f32 %v2941, %v2949
  %v2952 = vpack.c.bf16 %v2951, %v2950
  %2953 = vrot.lane.b32.xlu0 %v2830, 88
  %v2954 = vpop.permute.xlu0 %2953
  %2955 = vrot.lane.b32.xlu0 %v2831, 88
  %v2956 = vpop.permute.xlu0 %2955
  %v2960 = vsel %vm213, %v2952, 0
  %2962 = vmatpush.bf16.msra.mxu0 0
  %2963 = vmatpush.bf16.msra.mxu0 0
  %2964 = vmatpush.bf16.msra.mxu0 0
  %2965 = vmatpush.bf16.msra.mxu0 0
  %2966 = vmatpush.bf16.msra.mxu0 0
  %2967 = vmatpush.bf16.msra.mxu0 0
  %2968 = vmatpush.bf16.msra.mxu0 %v2956
  %2969 = vmatpush.bf16.msra.mxu0 %v2954
  %2970 = vmatmul.bf16.gmra.mxu0 %v2960
  %v2971 = vpop.f32.mrf.mxu0
  %v2972 = vadd.f32 0.0, %v2971
  %v2973 = vpop.f32.mrf.mxu0
  %v2974 = vadd.f32 0.0, %v2973
  %2975 = vdwg.mxu0
  %2976 = vrot.lane.b32.xlu0 %v2821, 112
  %v2977 = vpop.permute.xlu0 %2976
  %2978 = vrot.lane.b32.xlu0 %v2830, 112
  %v2979 = vpop.permute.xlu0 %2978
  %2980 = vrot.lane.b32.xlu0 %v2831, 112
  %v2981 = vpop.permute.xlu0 %2980
  %v2983 = vsel %vm280, %v2977, 0
  %v2986 = vsel %vm280, %v2979, 0
  %v2989 = vsel %vm280, %v2981, 0
  %2991 = vmatpush.bf16.xpose.msra.mxu0 0
  %2992 = vmatpush.bf16.xpose.msra.mxu0 0
  %2993 = vmatpush.bf16.xpose.msra.mxu0 0
  %2994 = vmatpush.bf16.xpose.msra.mxu0 0
  %2995 = vmatpush.bf16.xpose.msra.mxu0 0
  %2996 = vmatpush.bf16.xpose.msra.mxu0 0
  %2997 = vmatpush.bf16.xpose.msra.mxu0 %v2989
  %2998 = vmatpush.bf16.xpose.msra.mxu0 %v2986
  %2999 = vmatmul.bf16.gmra.mxu0 %v2983
  %v3000 = vpop.f32.mrf.mxu0
  %v3001 = vadd.f32 %v185, %v3000
  %v3002 = vpop.f32.mrf.mxu0
  %v3003 = vadd.f32 %v186, %v3002
  %3004 = vdwg.mxu0
  %v3005 = vsel %vm213, %v3001, -inf
  %3006 = vmax.xlane.f32.xlu0 %v3005
  %v3007 = vpop.xlane.xlu0 %3006
  %v3008 = vsel %vm213, %v3003, -inf
  %3009 = vmax.xlane.f32.xlu0 %v3008
  %v3010 = vpop.xlane.xlu0 %3009
  %v3011 = vsub.f32 %v3001, %v3007
  %v3012 = vsub.f32 %v3003, %v3010
  %v3013 = vmul.f32 %v3011, 1.442695
  %v3014 = vpow.pop %v3013
  %v3015 = vmul.f32 %v3012, 1.442695
  %v3016 = vpow.pop %v3015
  %v3017 = vsel %vm213, %v3014, 0.0
  %3018 = vadd.xlane.f32.xlu0 %v3017
  %v3019 = vpop.xlane.xlu0 %3018
  %v3020 = vsel %vm213, %v3016, 0.0
  %3021 = vadd.xlane.f32.xlu0 %v3020
  %v3022 = vpop.xlane.xlu0 %3021
  %v3023 = vrcp.pop %v3019
  %v3024 = vrcp.pop %v3022
  %v3025 = vmul.f32 %v3014, %v3023
  %v3026 = vmul.f32 %v3016, %v3024
  %v3027 = vpack.c.bf16 %v3026, %v3025
  %3028 = vrot.lane.b32.xlu0 %v2830, 80
  %v3029 = vpop.permute.xlu0 %3028
  %3030 = vrot.lane.b32.xlu0 %v2831, 80
  %v3031 = vpop.permute.xlu0 %3030
  %v3035 = vsel %vm213, %v3027, 0
  %3037 = vmatpush.bf16.msra.mxu0 0
  %3038 = vmatpush.bf16.msra.mxu0 0
  %3039 = vmatpush.bf16.msra.mxu0 0
  %3040 = vmatpush.bf16.msra.mxu0 0
  %3041 = vmatpush.bf16.msra.mxu0 0
  %3042 = vmatpush.bf16.msra.mxu0 0
  %3043 = vmatpush.bf16.msra.mxu0 %v3031
  %3044 = vmatpush.bf16.msra.mxu0 %v3029
  %3045 = vmatmul.bf16.gmra.mxu0 %v3035
  %v3046 = vpop.f32.mrf.mxu0
  %v3047 = vadd.f32 0.0, %v3046
  %v3048 = vpop.f32.mrf.mxu0
  %v3049 = vadd.f32 0.0, %v3048
  %3050 = vdwg.mxu0
  %3051 = vrot.lane.b32.xlu0 %v2821, 104
  %v3052 = vpop.permute.xlu0 %3051
  %3053 = vrot.lane.b32.xlu0 %v2830, 104
  %v3054 = vpop.permute.xlu0 %3053
  %3055 = vrot.lane.b32.xlu0 %v2831, 104
  %v3056 = vpop.permute.xlu0 %3055
  %v3058 = vsel %vm280, %v3052, 0
  %v3061 = vsel %vm280, %v3054, 0
  %v3064 = vsel %vm280, %v3056, 0
  %3066 = vmatpush.bf16.xpose.msra.mxu0 0
  %3067 = vmatpush.bf16.xpose.msra.mxu0 0
  %3068 = vmatpush.bf16.xpose.msra.mxu0 0
  %3069 = vmatpush.bf16.xpose.msra.mxu0 0
  %3070 = vmatpush.bf16.xpose.msra.mxu0 0
  %3071 = vmatpush.bf16.xpose.msra.mxu0 0
  %3072 = vmatpush.bf16.xpose.msra.mxu0 %v3064
  %3073 = vmatpush.bf16.xpose.msra.mxu0 %v3061
  %3074 = vmatmul.bf16.gmra.mxu0 %v3058
  %v3075 = vpop.f32.mrf.mxu0
  %v3076 = vadd.f32 %v185, %v3075
  %v3077 = vpop.f32.mrf.mxu0
  %v3078 = vadd.f32 %v186, %v3077
  %3079 = vdwg.mxu0
  %v3080 = vsel %vm213, %v3076, -inf
  %3081 = vmax.xlane.f32.xlu0 %v3080
  %v3082 = vpop.xlane.xlu0 %3081
  %v3083 = vsel %vm213, %v3078, -inf
  %3084 = vmax.xlane.f32.xlu0 %v3083
  %v3085 = vpop.xlane.xlu0 %3084
  %v3086 = vsub.f32 %v3076, %v3082
  %v3087 = vsub.f32 %v3078, %v3085
  %v3088 = vmul.f32 %v3086, 1.442695
  %v3089 = vpow.pop %v3088
  %v3090 = vmul.f32 %v3087, 1.442695
  %v3091 = vpow.pop %v3090
  %v3092 = vsel %vm213, %v3089, 0.0
  %3093 = vadd.xlane.f32.xlu0 %v3092
  %v3094 = vpop.xlane.xlu0 %3093
  %v3095 = vsel %vm213, %v3091, 0.0
  %3096 = vadd.xlane.f32.xlu0 %v3095
  %v3097 = vpop.xlane.xlu0 %3096
  %v3098 = vrcp.pop %v3094
  %v3099 = vrcp.pop %v3097
  %v3100 = vmul.f32 %v3089, %v3098
  %v3101 = vmul.f32 %v3091, %v3099
  %v3102 = vpack.c.bf16 %v3101, %v3100
  %3103 = vrot.lane.b32.xlu0 %v2830, 72
  %v3104 = vpop.permute.xlu0 %3103
  %3105 = vrot.lane.b32.xlu0 %v2831, 72
  %v3106 = vpop.permute.xlu0 %3105
  %v3110 = vsel %vm213, %v3102, 0
  %3112 = vmatpush.bf16.msra.mxu0 0
  %3113 = vmatpush.bf16.msra.mxu0 0
  %3114 = vmatpush.bf16.msra.mxu0 0
  %3115 = vmatpush.bf16.msra.mxu0 0
  %3116 = vmatpush.bf16.msra.mxu0 0
  %3117 = vmatpush.bf16.msra.mxu0 0
  %3118 = vmatpush.bf16.msra.mxu0 %v3106
  %3119 = vmatpush.bf16.msra.mxu0 %v3104
  %3120 = vmatmul.bf16.gmra.mxu0 %v3110
  %v3121 = vpop.f32.mrf.mxu0
  %v3122 = vadd.f32 0.0, %v3121
  %v3123 = vpop.f32.mrf.mxu0
  %v3124 = vadd.f32 0.0, %v3123
  %3125 = vdwg.mxu0
  %3128 = vrot.lane.b32.xlu0 %v2972, 8
  %v3129 = vpop.permute.xlu0 %3128
  %3130 = vrot.lane.b32.xlu0 %v2974, 8
  %v3131 = vpop.permute.xlu0 %3130
  %3136 = vrot.lane.b32.xlu0 %v3047, 16
  %v3137 = vpop.permute.xlu0 %3136
  %3138 = vrot.lane.b32.xlu0 %v3049, 16
  %v3139 = vpop.permute.xlu0 %3138
  %3144 = vrot.lane.b32.xlu0 %v3122, 24
  %v3145 = vpop.permute.xlu0 %3144
  %3146 = vrot.lane.b32.xlu0 %v3124, 24
  %v3147 = vpop.permute.xlu0 %3146
  %v3150 = vsel %vm280, %v2897, %v3129
  %v3151 = vsel %vm280, %v2899, %v3131
  %v3152 = vsel %vm789, %v3150, %v3137
  %v3153 = vsel %vm789, %v3151, %v3139
  %v3154 = vsel %vm794, %v3152, %v3145
  %v3155 = vsel %vm794, %v3153, %v3147
  %v3156 = vpack.c.bf16 %v3155, %v3154
  %v3158 = vperm.slane %v2808, 0
  %v3164 = vunpack.c.l.b16 %v2804
  %v3165 = vunpack.c.l.b16 %v2805
  %v3166 = vunpack.c.l.b16 %v2806
  %v3167 = vunpack.c.l.b16 %v2807
  %v3168 = vpack.c.b16 %v3165, %v3164
  %v3169 = vpack.c.b16 %v3167, %v3166
  %v3173 = vsel %vm213, %v3156, 0
  %3175 = vmatpush.bf16.msra.mxu0 0
  %3176 = vmatpush.bf16.msra.mxu0 0
  %3177 = vmatpush.bf16.msra.mxu0 0
  %3178 = vmatpush.bf16.msra.mxu0 0
  %3179 = vmatpush.bf16.msra.mxu0 0
  %3180 = vmatpush.bf16.msra.mxu0 0
  %3181 = vmatpush.bf16.msra.mxu0 %v3169
  %3182 = vmatpush.bf16.msra.mxu0 %v3168
  %3183 = vmatmul.bf16.gmra.mxu0 %v3173
  %v3184 = vpop.f32.mrf.mxu0
  %v3185 = vadd.f32 %v3158, %v3184
  %v3186 = vpop.f32.mrf.mxu0
  %v3187 = vadd.f32 %v3158, %v3186
  %3188 = vdwg.mxu0
  %v3189 = vadd.f32 %v2717, %v3185
  %v3190 = vadd.f32 %v2718, %v3187
  %v3191 = vld [vmem:[%s63] sm:$0x1]
  %v3192 = vld [vmem:[%s65] sm:$0x1]
  %v3193 = vsel %vm213, %v3189, 0.0
  %3194 = vadd.xlane.f32.xlu0 %v3193
  %v3195 = vpop.xlane.xlu0 %3194
  %v3196 = vsel %vm213, %v3190, 0.0
  %3197 = vadd.xlane.f32.xlu0 %v3196
  %v3198 = vpop.xlane.xlu0 %3197
  %v3199 = vmul.f32 %v3195, %v865
  %v3200 = vmul.f32 %v3198, %v865
  %v3201 = vsub.f32 %v3189, %v3199
  %v3202 = vsub.f32 %v3190, %v3200
  %v3203 = vmul.f32 %v3201, %v3201
  %v3204 = vmul.f32 %v3202, %v3202
  %v3205 = vsel %vm213, %v3203, 0.0
  %3206 = vadd.xlane.f32.xlu0 %v3205
  %v3207 = vpop.xlane.xlu0 %3206
  %v3208 = vsel %vm213, %v3204, 0.0
  %3209 = vadd.xlane.f32.xlu0 %v3208
  %v3210 = vpop.xlane.xlu0 %3209
  %v3211 = vmul.f32 %v3207, %v865
  %v3212 = vmul.f32 %v3210, %v865
  %v3213 = vadd.f32 %v3211, 1e-05
  %v3214 = vadd.f32 %v3212, 1e-05
  %v3215 = vrsqrt.pop %v3213
  %v3216 = vmul.f32 %v3215, %v3213
  %v3217 = vmul.f32 %v3216, %v3215
  %v3218 = vmul.f32 0.5, %v3217
  %v3219 = vsub.f32 1.5, %v3218
  %v3220 = vmul.f32 %v3215, %v3219
  %vm3221 = vweird.f32 %v3213
  %vm3222 = vweird.f32 %v3215
  %vm3223 = vmor %vm3221, %vm3222
  %v3224 = vsel %vm3223, %v3215, %v3220
  %v3225 = vrsqrt.pop %v3214
  %v3226 = vmul.f32 %v3225, %v3214
  %v3227 = vmul.f32 %v3226, %v3225
  %v3228 = vmul.f32 0.5, %v3227
  %v3229 = vsub.f32 1.5, %v3228
  %v3230 = vmul.f32 %v3225, %v3229
  %vm3231 = vweird.f32 %v3214
  %vm3232 = vweird.f32 %v3225
  %vm3233 = vmor %vm3231, %vm3232
  %v3234 = vsel %vm3233, %v3225, %v3230
  %v3235 = vmul.f32 %v3201, %v3224
  %v3236 = vmul.f32 %v3202, %v3234
  %v3238 = vperm.slane %v3191, 0
  %v3240 = vmul.f32 %v3235, %v3238
  %v3241 = vmul.f32 %v3236, %v3238
  %v3243 = vperm.slane %v3192, 0
  %v3245 = vadd.f32 %v3240, %v3243
  %v3246 = vadd.f32 %v3241, %v3243
  %v3247 = vld [vmem:[%s67] sm:$0xf]
  %v3248 = vld [vmem:[%s67 + $0x4] sm:$0xf]
  %v3249 = vld [vmem:[%s67 + $0x8] sm:$0xf]
  %v3250 = vld [vmem:[%s67 + $0xc] sm:$0xf]
  %v3251 = vld [vmem:[%s69] sm:$0x1]
  %v3252 = vld [vmem:[%s71] sm:$0xf]
  %v3253 = vld [vmem:[%s71 + $0x4] sm:$0xf]
  %v3254 = vld [vmem:[%s71 + $0x8] sm:$0xf]
  %v3255 = vld [vmem:[%s71 + $0xc] sm:$0xf]
  %v3256 = vld [vmem:[%s71 + $0x10] sm:$0xf]
  %v3257 = vld [vmem:[%s71 + $0x14] sm:$0xf]
  %v3258 = vld [vmem:[%s71 + $0x18] sm:$0xf]
  %v3259 = vld [vmem:[%s71 + $0x1c] sm:$0xf]
  %v3260 = vld [vmem:[%s73] sm:$0x1]
  %v3261 = vpack.c.bf16 %v3246, %v3245
  %v3263 = vperm.slane %v3251, 0
  %v3269 = vunpack.c.l.b16 %v3247
  %v3270 = vunpack.c.l.b16 %v3248
  %v3271 = vunpack.c.l.b16 %v3249
  %v3272 = vunpack.c.l.b16 %v3250
  %v3273 = vpack.c.b16 %v3270, %v3269
  %v3274 = vpack.c.b16 %v3272, %v3271
  %v3278 = vsel %vm213, %v3261, 0
  %3280 = vmatpush.bf16.msra.mxu0 0
  %3281 = vmatpush.bf16.msra.mxu0 0
  %3282 = vmatpush.bf16.msra.mxu0 0
  %3283 = vmatpush.bf16.msra.mxu0 0
  %3284 = vmatpush.bf16.msra.mxu0 0
  %3285 = vmatpush.bf16.msra.mxu0 0
  %3286 = vmatpush.bf16.msra.mxu0 %v3274
  %3287 = vmatpush.bf16.msra.mxu0 %v3273
  %3288 = vmatmul.bf16.gmra.mxu0 %v3278
  %v3289 = vpop.f32.mrf.mxu0
  %v3290 = vadd.f32 %v3263, %v3289
  %v3291 = vpop.f32.mrf.mxu0
  %v3292 = vadd.f32 %v3263, %v3291
  %3293 = vdwg.mxu0
  %v3294 = vmax.f32 %v3290, 0.0
  %v3295 = vmax.f32 %v3292, 0.0
  %v3296 = vpack.c.bf16 %v3295, %v3294
  %v3298 = vperm.slane %v3260, 0
  %v3308 = vunpack.c.l.b16 %v3252
  %v3309 = vunpack.c.l.b16 %v3253
  %v3310 = vunpack.c.l.b16 %v3254
  %v3311 = vunpack.c.l.b16 %v3255
  %v3312 = vunpack.c.l.b16 %v3256
  %v3313 = vunpack.c.l.b16 %v3257
  %v3314 = vunpack.c.l.b16 %v3258
  %v3315 = vunpack.c.l.b16 %v3259
  %v3316 = vpack.c.b16 %v3309, %v3308
  %v3317 = vpack.c.b16 %v3311, %v3310
  %v3318 = vpack.c.b16 %v3313, %v3312
  %v3319 = vpack.c.b16 %v3315, %v3314
  %v3325 = vsel %vm1045, %v3296, 0
  %3327 = vmatpush.bf16.msra.mxu0 0
  %3328 = vmatpush.bf16.msra.mxu0 0
  %3329 = vmatpush.bf16.msra.mxu0 0
  %3330 = vmatpush.bf16.msra.mxu0 0
  %3331 = vmatpush.bf16.msra.mxu0 %v3319
  %3332 = vmatpush.bf16.msra.mxu0 %v3318
  %3333 = vmatpush.bf16.msra.mxu0 %v3317
  %3334 = vmatpush.bf16.msra.mxu0 %v3316
  %3335 = vmatmul.bf16.gmra.mxu0 %v3325
  %v3336 = vpop.f32.mrf.mxu0
  %v3337 = vadd.f32 %v3298, %v3336
  %v3338 = vpop.f32.mrf.mxu0
  %v3339 = vadd.f32 %v3298, %v3338
  %3340 = vdwg.mxu0
  %v3341 = vadd.f32 %v3245, %v3337
  %v3342 = vadd.f32 %v3246, %v3339
  %v3343 = vld [vmem:[%s75] sm:$0x1]
  %v3344 = vld [vmem:[%s77] sm:$0x1]
  %v3345 = vsel %vm213, %v3341, 0.0
  %3346 = vadd.xlane.f32.xlu0 %v3345
  %v3347 = vpop.xlane.xlu0 %3346
  %v3348 = vsel %vm213, %v3342, 0.0
  %3349 = vadd.xlane.f32.xlu0 %v3348
  %v3350 = vpop.xlane.xlu0 %3349
  %v3351 = vmul.f32 %v3347, %v865
  %v3352 = vmul.f32 %v3350, %v865
  %v3353 = vsub.f32 %v3341, %v3351
  %v3354 = vsub.f32 %v3342, %v3352
  %v3355 = vmul.f32 %v3353, %v3353
  %v3356 = vmul.f32 %v3354, %v3354
  %v3357 = vsel %vm213, %v3355, 0.0
  %3358 = vadd.xlane.f32.xlu0 %v3357
  %v3359 = vpop.xlane.xlu0 %3358
  %v3360 = vsel %vm213, %v3356, 0.0
  %3361 = vadd.xlane.f32.xlu0 %v3360
  %v3362 = vpop.xlane.xlu0 %3361
  %v3363 = vmul.f32 %v3359, %v865
  %v3364 = vmul.f32 %v3362, %v865
  %v3365 = vadd.f32 %v3363, 1e-05
  %v3366 = vadd.f32 %v3364, 1e-05
  %v3367 = vrsqrt.pop %v3365
  %v3368 = vmul.f32 %v3367, %v3365
  %v3369 = vmul.f32 %v3368, %v3367
  %v3370 = vmul.f32 0.5, %v3369
  %v3371 = vsub.f32 1.5, %v3370
  %v3372 = vmul.f32 %v3367, %v3371
  %vm3373 = vweird.f32 %v3365
  %vm3374 = vweird.f32 %v3367
  %vm3375 = vmor %vm3373, %vm3374
  %v3376 = vsel %vm3375, %v3367, %v3372
  %v3377 = vrsqrt.pop %v3366
  %v3378 = vmul.f32 %v3377, %v3366
  %v3379 = vmul.f32 %v3378, %v3377
  %v3380 = vmul.f32 0.5, %v3379
  %v3381 = vsub.f32 1.5, %v3380
  %v3382 = vmul.f32 %v3377, %v3381
  %vm3383 = vweird.f32 %v3366
  %vm3384 = vweird.f32 %v3377
  %vm3385 = vmor %vm3383, %vm3384
  %v3386 = vsel %vm3385, %v3377, %v3382
  %v3387 = vmul.f32 %v3353, %v3376
  %v3388 = vmul.f32 %v3354, %v3386
  %v3390 = vperm.slane %v3343, 0
  %v3392 = vmul.f32 %v3387, %v3390
  %v3393 = vmul.f32 %v3388, %v3390
  %v3395 = vperm.slane %v3344, 0
  %v3397 = vadd.f32 %v3392, %v3395
  %v3398 = vadd.f32 %v3393, %v3395
  %s3399 = scalar_lea.vmem %s39, 16
  %v3400 = vld [vmem:[%s3399] sm:$0xf]
  %v3401 = vld [vmem:[%s3399 + $0x4] sm:$0xf]
  %v3402 = vld [vmem:[%s3399 + $0x8] sm:$0xf]
  %v3403 = vld [vmem:[%s3399 + $0xc] sm:$0xf]
  %v3404 = vpack.c.bf16 %v3398, %v3397
  %s3405 = scalar_lea.vmem %s41, 1
  %v3406 = vld [vmem:[%s3405] sm:$0x1]
  %v3408 = vperm.slane %v3406, 0
  %v3414 = vunpack.c.l.b16 %v3400
  %v3415 = vunpack.c.l.b16 %v3401
  %v3416 = vunpack.c.l.b16 %v3402
  %v3417 = vunpack.c.l.b16 %v3403
  %v3418 = vpack.c.b16 %v3415, %v3414
  %v3419 = vpack.c.b16 %v3417, %v3416
  %v3423 = vsel %vm213, %v3404, 0
  %3425 = vmatpush.bf16.msra.mxu0 0
  %3426 = vmatpush.bf16.msra.mxu0 0
  %3427 = vmatpush.bf16.msra.mxu0 0
  %3428 = vmatpush.bf16.msra.mxu0 0
  %3429 = vmatpush.bf16.msra.mxu0 0
  %3430 = vmatpush.bf16.msra.mxu0 0
  %3431 = vmatpush.bf16.msra.mxu0 %v3419
  %3432 = vmatpush.bf16.msra.mxu0 %v3418
  %3433 = vmatmul.bf16.gmra.mxu0 %v3423
  %v3434 = vpop.f32.mrf.mxu0
  %v3435 = vadd.f32 %v3408, %v3434
  %v3436 = vpop.f32.mrf.mxu0
  %v3437 = vadd.f32 %v3408, %v3436
  %3438 = vdwg.mxu0
  %s3439 = scalar_lea.vmem %s43, 16
  %v3440 = vld [vmem:[%s3439] sm:$0xf]
  %v3441 = vld [vmem:[%s3439 + $0x4] sm:$0xf]
  %v3442 = vld [vmem:[%s3439 + $0x8] sm:$0xf]
  %v3443 = vld [vmem:[%s3439 + $0xc] sm:$0xf]
  %s3444 = scalar_lea.vmem %s45, 1
  %v3445 = vld [vmem:[%s3444] sm:$0x1]
  %v3446 = vmul.f32 %v3435, 0.35355338
  %v3447 = vmul.f32 %v3437, 0.35355338
  %v3448 = vpack.c.bf16 %v3446, %v3446
  %v3449 = vpack.c.bf16 %v3447, %v3447
  %v3450 = vpack.c.bf16 %v3435, %v3435
  %v3451 = vpack.c.bf16 %v3437, %v3437
  %v3454 = vunpack.c.l.b16 %v3448
  %v3455 = vunpack.c.l.b16 %v3449
  %v3456 = vpack.c.b16 %v3455, %v3454
  %v3459 = vunpack.c.l.b16 %v3450
  %v3460 = vunpack.c.l.b16 %v3451
  %v3461 = vpack.c.b16 %v3460, %v3459
  %3462 = vrot.lane.b32.xlu0 %v3461, 96
  %v3463 = vpop.permute.xlu0 %3462
  %v3465 = vsel %vm280, %v3456, 0
  %v3468 = vsel %vm280, %v3463, 0
  %3470 = vmatpush.bf16.xpose.msra.mxu0 0
  %3471 = vmatpush.bf16.xpose.msra.mxu0 0
  %3472 = vmatpush.bf16.xpose.msra.mxu0 0
  %3473 = vmatpush.bf16.xpose.msra.mxu0 0
  %3474 = vmatpush.bf16.xpose.msra.mxu0 0
  %3475 = vmatpush.bf16.xpose.msra.mxu0 0
  %3476 = vmatpush.bf16.xpose.msra.mxu0 0
  %3477 = vmatpush.bf16.xpose.msra.mxu0 %v3468
  %3478 = vmatmul.bf16.gmra.mxu0 %v3465
  %v3479 = vpop.f32.mrf.mxu0
  %v3480 = vadd.f32 %v183, %v3479
  %v3481 = vpop.f32.mrf.mxu0
  %v3482 = vadd.f32 %v184, %v3481
  %3483 = vdwg.mxu0
  %v3484 = vsel %vm789, %v3480, -inf
  %3485 = vmax.xlane.f32.xlu0 %v3484
  %v3486 = vpop.xlane.xlu0 %3485
  %v3487 = vsel %vm789, %v3482, -inf
  %3488 = vmax.xlane.f32.xlu0 %v3487
  %v3489 = vpop.xlane.xlu0 %3488
  %v3490 = vsub.f32 %v3480, %v3486
  %v3491 = vsub.f32 %v3482, %v3489
  %v3492 = vmul.f32 %v3490, 1.442695
  %v3493 = vpow.pop %v3492
  %v3494 = vmul.f32 %v3491, 1.442695
  %v3495 = vpow.pop %v3494
  %v3496 = vsel %vm789, %v3493, 0.0
  %3497 = vadd.xlane.f32.xlu0 %v3496
  %v3498 = vpop.xlane.xlu0 %3497
  %v3499 = vsel %vm789, %v3495, 0.0
  %3500 = vadd.xlane.f32.xlu0 %v3499
  %v3501 = vpop.xlane.xlu0 %3500
  %v3502 = vrcp.pop %v3498
  %v3503 = vrcp.pop %v3501
  %v3504 = vmul.f32 %v3493, %v3502
  %v3505 = vmul.f32 %v3495, %v3503
  %v3506 = vpack.c.bf16 %v3505, %v3504
  %3507 = vrot.lane.b32.xlu0 %v3461, 64
  %v3508 = vpop.permute.xlu0 %3507
  %v3511 = vsel %vm789, %v3506, 0
  %3513 = vmatpush.bf16.msra.mxu0 0
  %3514 = vmatpush.bf16.msra.mxu0 0
  %3515 = vmatpush.bf16.msra.mxu0 0
  %3516 = vmatpush.bf16.msra.mxu0 0
  %3517 = vmatpush.bf16.msra.mxu0 0
  %3518 = vmatpush.bf16.msra.mxu0 0
  %3519 = vmatpush.bf16.msra.mxu0 0
  %3520 = vmatpush.bf16.msra.mxu0 %v3508
  %3521 = vmatmul.bf16.gmra.mxu0 %v3511
  %v3522 = vpop.f32.mrf.mxu0
  %v3523 = vadd.f32 0.0, %v3522
  %v3524 = vpop.f32.mrf.mxu0
  %v3525 = vadd.f32 0.0, %v3524
  %3526 = vdwg.mxu0
  %3527 = vrot.lane.b32.xlu0 %v3456, 120
  %v3528 = vpop.permute.xlu0 %3527
  %3529 = vrot.lane.b32.xlu0 %v3461, 88
  %v3530 = vpop.permute.xlu0 %3529
  %v3532 = vsel %vm280, %v3528, 0
  %v3535 = vsel %vm280, %v3530, 0
  %3537 = vmatpush.bf16.xpose.msra.mxu0 0
  %3538 = vmatpush.bf16.xpose.msra.mxu0 0
  %3539 = vmatpush.bf16.xpose.msra.mxu0 0
  %3540 = vmatpush.bf16.xpose.msra.mxu0 0
  %3541 = vmatpush.bf16.xpose.msra.mxu0 0
  %3542 = vmatpush.bf16.xpose.msra.mxu0 0
  %3543 = vmatpush.bf16.xpose.msra.mxu0 0
  %3544 = vmatpush.bf16.xpose.msra.mxu0 %v3535
  %3545 = vmatmul.bf16.gmra.mxu0 %v3532
  %v3546 = vpop.f32.mrf.mxu0
  %v3547 = vadd.f32 %v183, %v3546
  %v3548 = vpop.f32.mrf.mxu0
  %v3549 = vadd.f32 %v184, %v3548
  %3550 = vdwg.mxu0
  %v3551 = vsel %vm789, %v3547, -inf
  %3552 = vmax.xlane.f32.xlu0 %v3551
  %v3553 = vpop.xlane.xlu0 %3552
  %v3554 = vsel %vm789, %v3549, -inf
  %3555 = vmax.xlane.f32.xlu0 %v3554
  %v3556 = vpop.xlane.xlu0 %3555
  %v3557 = vsub.f32 %v3547, %v3553
  %v3558 = vsub.f32 %v3549, %v3556
  %v3559 = vmul.f32 %v3557, 1.442695
  %v3560 = vpow.pop %v3559
  %v3561 = vmul.f32 %v3558, 1.442695
  %v3562 = vpow.pop %v3561
  %v3563 = vsel %vm789, %v3560, 0.0
  %3564 = vadd.xlane.f32.xlu0 %v3563
  %v3565 = vpop.xlane.xlu0 %3564
  %v3566 = vsel %vm789, %v3562, 0.0
  %3567 = vadd.xlane.f32.xlu0 %v3566
  %v3568 = vpop.xlane.xlu0 %3567
  %v3569 = vrcp.pop %v3565
  %v3570 = vrcp.pop %v3568
  %v3571 = vmul.f32 %v3560, %v3569
  %v3572 = vmul.f32 %v3562, %v3570
  %v3573 = vpack.c.bf16 %v3572, %v3571
  %3574 = vrot.lane.b32.xlu0 %v3461, 56
  %v3575 = vpop.permute.xlu0 %3574
  %v3578 = vsel %vm789, %v3573, 0
  %3580 = vmatpush.bf16.msra.mxu0 0
  %3581 = vmatpush.bf16.msra.mxu0 0
  %3582 = vmatpush.bf16.msra.mxu0 0
  %3583 = vmatpush.bf16.msra.mxu0 0
  %3584 = vmatpush.bf16.msra.mxu0 0
  %3585 = vmatpush.bf16.msra.mxu0 0
  %3586 = vmatpush.bf16.msra.mxu0 0
  %3587 = vmatpush.bf16.msra.mxu0 %v3575
  %3588 = vmatmul.bf16.gmra.mxu0 %v3578
  %v3589 = vpop.f32.mrf.mxu0
  %v3590 = vadd.f32 0.0, %v3589
  %v3591 = vpop.f32.mrf.mxu0
  %v3592 = vadd.f32 0.0, %v3591
  %3593 = vdwg.mxu0
  %3594 = vrot.lane.b32.xlu0 %v3456, 112
  %v3595 = vpop.permute.xlu0 %3594
  %3596 = vrot.lane.b32.xlu0 %v3461, 80
  %v3597 = vpop.permute.xlu0 %3596
  %v3599 = vsel %vm280, %v3595, 0
  %v3602 = vsel %vm280, %v3597, 0
  %3604 = vmatpush.bf16.xpose.msra.mxu0 0
  %3605 = vmatpush.bf16.xpose.msra.mxu0 0
  %3606 = vmatpush.bf16.xpose.msra.mxu0 0
  %3607 = vmatpush.bf16.xpose.msra.mxu0 0
  %3608 = vmatpush.bf16.xpose.msra.mxu0 0
  %3609 = vmatpush.bf16.xpose.msra.mxu0 0
  %3610 = vmatpush.bf16.xpose.msra.mxu0 0
  %3611 = vmatpush.bf16.xpose.msra.mxu0 %v3602
  %3612 = vmatmul.bf16.gmra.mxu0 %v3599
  %v3613 = vpop.f32.mrf.mxu0
  %v3614 = vadd.f32 %v183, %v3613
  %v3615 = vpop.f32.mrf.mxu0
  %v3616 = vadd.f32 %v184, %v3615
  %3617 = vdwg.mxu0
  %v3618 = vsel %vm789, %v3614, -inf
  %3619 = vmax.xlane.f32.xlu0 %v3618
  %v3620 = vpop.xlane.xlu0 %3619
  %v3621 = vsel %vm789, %v3616, -inf
  %3622 = vmax.xlane.f32.xlu0 %v3621
  %v3623 = vpop.xlane.xlu0 %3622
  %v3624 = vsub.f32 %v3614, %v3620
  %v3625 = vsub.f32 %v3616, %v3623
  %v3626 = vmul.f32 %v3624, 1.442695
  %v3627 = vpow.pop %v3626
  %v3628 = vmul.f32 %v3625, 1.442695
  %v3629 = vpow.pop %v3628
  %v3630 = vsel %vm789, %v3627, 0.0
  %3631 = vadd.xlane.f32.xlu0 %v3630
  %v3632 = vpop.xlane.xlu0 %3631
  %v3633 = vsel %vm789, %v3629, 0.0
  %3634 = vadd.xlane.f32.xlu0 %v3633
  %v3635 = vpop.xlane.xlu0 %3634
  %v3636 = vrcp.pop %v3632
  %v3637 = vrcp.pop %v3635
  %v3638 = vmul.f32 %v3627, %v3636
  %v3639 = vmul.f32 %v3629, %v3637
  %v3640 = vpack.c.bf16 %v3639, %v3638
  %3641 = vrot.lane.b32.xlu0 %v3461, 48
  %v3642 = vpop.permute.xlu0 %3641
  %v3645 = vsel %vm789, %v3640, 0
  %3647 = vmatpush.bf16.msra.mxu0 0
  %3648 = vmatpush.bf16.msra.mxu0 0
  %3649 = vmatpush.bf16.msra.mxu0 0
  %3650 = vmatpush.bf16.msra.mxu0 0
  %3651 = vmatpush.bf16.msra.mxu0 0
  %3652 = vmatpush.bf16.msra.mxu0 0
  %3653 = vmatpush.bf16.msra.mxu0 0
  %3654 = vmatpush.bf16.msra.mxu0 %v3642
  %3655 = vmatmul.bf16.gmra.mxu0 %v3645
  %v3656 = vpop.f32.mrf.mxu0
  %v3657 = vadd.f32 0.0, %v3656
  %v3658 = vpop.f32.mrf.mxu0
  %v3659 = vadd.f32 0.0, %v3658
  %3660 = vdwg.mxu0
  %3661 = vrot.lane.b32.xlu0 %v3456, 104
  %v3662 = vpop.permute.xlu0 %3661
  %3663 = vrot.lane.b32.xlu0 %v3461, 72
  %v3664 = vpop.permute.xlu0 %3663
  %v3666 = vsel %vm280, %v3662, 0
  %v3669 = vsel %vm280, %v3664, 0
  %3671 = vmatpush.bf16.xpose.msra.mxu0 0
  %3672 = vmatpush.bf16.xpose.msra.mxu0 0
  %3673 = vmatpush.bf16.xpose.msra.mxu0 0
  %3674 = vmatpush.bf16.xpose.msra.mxu0 0
  %3675 = vmatpush.bf16.xpose.msra.mxu0 0
  %3676 = vmatpush.bf16.xpose.msra.mxu0 0
  %3677 = vmatpush.bf16.xpose.msra.mxu0 0
  %3678 = vmatpush.bf16.xpose.msra.mxu0 %v3669
  %3679 = vmatmul.bf16.gmra.mxu0 %v3666
  %v3680 = vpop.f32.mrf.mxu0
  %v3681 = vadd.f32 %v183, %v3680
  %v3682 = vpop.f32.mrf.mxu0
  %v3683 = vadd.f32 %v184, %v3682
  %3684 = vdwg.mxu0
  %v3685 = vsel %vm789, %v3681, -inf
  %3686 = vmax.xlane.f32.xlu0 %v3685
  %v3687 = vpop.xlane.xlu0 %3686
  %v3688 = vsel %vm789, %v3683, -inf
  %3689 = vmax.xlane.f32.xlu0 %v3688
  %v3690 = vpop.xlane.xlu0 %3689
  %v3691 = vsub.f32 %v3681, %v3687
  %v3692 = vsub.f32 %v3683, %v3690
  %v3693 = vmul.f32 %v3691, 1.442695
  %v3694 = vpow.pop %v3693
  %v3695 = vmul.f32 %v3692, 1.442695
  %v3696 = vpow.pop %v3695
  %v3697 = vsel %vm789, %v3694, 0.0
  %3698 = vadd.xlane.f32.xlu0 %v3697
  %v3699 = vpop.xlane.xlu0 %3698
  %v3700 = vsel %vm789, %v3696, 0.0
  %3701 = vadd.xlane.f32.xlu0 %v3700
  %v3702 = vpop.xlane.xlu0 %3701
  %v3703 = vrcp.pop %v3699
  %v3704 = vrcp.pop %v3702
  %v3705 = vmul.f32 %v3694, %v3703
  %v3706 = vmul.f32 %v3696, %v3704
  %v3707 = vpack.c.bf16 %v3706, %v3705
  %3708 = vrot.lane.b32.xlu0 %v3461, 40
  %v3709 = vpop.permute.xlu0 %3708
  %v3712 = vsel %vm789, %v3707, 0
  %3714 = vmatpush.bf16.msra.mxu0 0
  %3715 = vmatpush.bf16.msra.mxu0 0
  %3716 = vmatpush.bf16.msra.mxu0 0
  %3717 = vmatpush.bf16.msra.mxu0 0
  %3718 = vmatpush.bf16.msra.mxu0 0
  %3719 = vmatpush.bf16.msra.mxu0 0
  %3720 = vmatpush.bf16.msra.mxu0 0
  %3721 = vmatpush.bf16.msra.mxu0 %v3709
  %3722 = vmatmul.bf16.gmra.mxu0 %v3712
  %v3723 = vpop.f32.mrf.mxu0
  %v3724 = vadd.f32 0.0, %v3723
  %v3725 = vpop.f32.mrf.mxu0
  %v3726 = vadd.f32 0.0, %v3725
  %3727 = vdwg.mxu0
  %3730 = vrot.lane.b32.xlu0 %v3590, 8
  %v3731 = vpop.permute.xlu0 %3730
  %3732 = vrot.lane.b32.xlu0 %v3592, 8
  %v3733 = vpop.permute.xlu0 %3732
  %3738 = vrot.lane.b32.xlu0 %v3657, 16
  %v3739 = vpop.permute.xlu0 %3738
  %3740 = vrot.lane.b32.xlu0 %v3659, 16
  %v3741 = vpop.permute.xlu0 %3740
  %3746 = vrot.lane.b32.xlu0 %v3724, 24
  %v3747 = vpop.permute.xlu0 %3746
  %3748 = vrot.lane.b32.xlu0 %v3726, 24
  %v3749 = vpop.permute.xlu0 %3748
  %v3752 = vsel %vm280, %v3523, %v3731
  %v3753 = vsel %vm280, %v3525, %v3733
  %v3754 = vsel %vm789, %v3752, %v3739
  %v3755 = vsel %vm789, %v3753, %v3741
  %v3756 = vsel %vm794, %v3754, %v3747
  %v3757 = vsel %vm794, %v3755, %v3749
  %v3758 = vpack.c.bf16 %v3757, %v3756
  %v3760 = vperm.slane %v3445, 0
  %v3766 = vunpack.c.l.b16 %v3440
  %v3767 = vunpack.c.l.b16 %v3441
  %v3768 = vunpack.c.l.b16 %v3442
  %v3769 = vunpack.c.l.b16 %v3443
  %v3770 = vpack.c.b16 %v3767, %v3766
  %v3771 = vpack.c.b16 %v3769, %v3768
  %v3775 = vsel %vm213, %v3758, 0
  %3777 = vmatpush.bf16.msra.mxu0 0
  %3778 = vmatpush.bf16.msra.mxu0 0
  %3779 = vmatpush.bf16.msra.mxu0 0
  %3780 = vmatpush.bf16.msra.mxu0 0
  %3781 = vmatpush.bf16.msra.mxu0 0
  %3782 = vmatpush.bf16.msra.mxu0 0
  %3783 = vmatpush.bf16.msra.mxu0 %v3771
  %3784 = vmatpush.bf16.msra.mxu0 %v3770
  %3785 = vmatmul.bf16.gmra.mxu0 %v3775
  %v3786 = vpop.f32.mrf.mxu0
  %v3787 = vadd.f32 %v3760, %v3786
  %v3788 = vpop.f32.mrf.mxu0
  %v3789 = vadd.f32 %v3760, %v3788
  %3790 = vdwg.mxu0
  %v3791 = vadd.f32 %v3397, %v3787
  %v3792 = vadd.f32 %v3398, %v3789
  %s3793 = scalar_lea.vmem %s47, 1
  %v3794 = vld [vmem:[%s3793] sm:$0x1]
  %s3795 = scalar_lea.vmem %s49, 1
  %v3796 = vld [vmem:[%s3795] sm:$0x1]
  %v3797 = vsel %vm213, %v3791, 0.0
  %3798 = vadd.xlane.f32.xlu0 %v3797
  %v3799 = vpop.xlane.xlu0 %3798
  %v3800 = vsel %vm213, %v3792, 0.0
  %3801 = vadd.xlane.f32.xlu0 %v3800
  %v3802 = vpop.xlane.xlu0 %3801
  %v3803 = vmul.f32 %v3799, %v865
  %v3804 = vmul.f32 %v3802, %v865
  %v3805 = vsub.f32 %v3791, %v3803
  %v3806 = vsub.f32 %v3792, %v3804
  %v3807 = vmul.f32 %v3805, %v3805
  %v3808 = vmul.f32 %v3806, %v3806
  %v3809 = vsel %vm213, %v3807, 0.0
  %3810 = vadd.xlane.f32.xlu0 %v3809
  %v3811 = vpop.xlane.xlu0 %3810
  %v3812 = vsel %vm213, %v3808, 0.0
  %3813 = vadd.xlane.f32.xlu0 %v3812
  %v3814 = vpop.xlane.xlu0 %3813
  %v3815 = vmul.f32 %v3811, %v865
  %v3816 = vmul.f32 %v3814, %v865
  %v3817 = vadd.f32 %v3815, 1e-05
  %v3818 = vadd.f32 %v3816, 1e-05
  %v3819 = vrsqrt.pop %v3817
  %v3820 = vmul.f32 %v3819, %v3817
  %v3821 = vmul.f32 %v3820, %v3819
  %v3822 = vmul.f32 0.5, %v3821
  %v3823 = vsub.f32 1.5, %v3822
  %v3824 = vmul.f32 %v3819, %v3823
  %vm3825 = vweird.f32 %v3817
  %vm3826 = vweird.f32 %v3819
  %vm3827 = vmor %vm3825, %vm3826
  %v3828 = vsel %vm3827, %v3819, %v3824
  %v3829 = vrsqrt.pop %v3818
  %v3830 = vmul.f32 %v3829, %v3818
  %v3831 = vmul.f32 %v3830, %v3829
  %v3832 = vmul.f32 0.5, %v3831
  %v3833 = vsub.f32 1.5, %v3832
  %v3834 = vmul.f32 %v3829, %v3833
  %vm3835 = vweird.f32 %v3818
  %vm3836 = vweird.f32 %v3829
  %vm3837 = vmor %vm3835, %vm3836
  %v3838 = vsel %vm3837, %v3829, %v3834
  %v3839 = vmul.f32 %v3805, %v3828
  %v3840 = vmul.f32 %v3806, %v3838
  %v3842 = vperm.slane %v3794, 0
  %v3844 = vmul.f32 %v3839, %v3842
  %v3845 = vmul.f32 %v3840, %v3842
  %v3847 = vperm.slane %v3796, 0
  %v3849 = vadd.f32 %v3844, %v3847
  %v3850 = vadd.f32 %v3845, %v3847
  %s3851 = scalar_lea.vmem %s51, 16
  %v3852 = vld [vmem:[%s3851] sm:$0xf]
  %v3853 = vld [vmem:[%s3851 + $0x4] sm:$0xf]
  %v3854 = vld [vmem:[%s3851 + $0x8] sm:$0xf]
  %v3855 = vld [vmem:[%s3851 + $0xc] sm:$0xf]
  %v3856 = vpack.c.bf16 %v3850, %v3849
  %s3857 = scalar_lea.vmem %s53, 1
  %v3858 = vld [vmem:[%s3857] sm:$0x1]
  %v3860 = vperm.slane %v3858, 0
  %v3866 = vunpack.c.l.b16 %v3852
  %v3867 = vunpack.c.l.b16 %v3853
  %v3868 = vunpack.c.l.b16 %v3854
  %v3869 = vunpack.c.l.b16 %v3855
  %v3870 = vpack.c.b16 %v3867, %v3866
  %v3871 = vpack.c.b16 %v3869, %v3868
  %v3875 = vsel %vm213, %v3856, 0
  %3877 = vmatpush.bf16.msra.mxu0 0
  %3878 = vmatpush.bf16.msra.mxu0 0
  %3879 = vmatpush.bf16.msra.mxu0 0
  %3880 = vmatpush.bf16.msra.mxu0 0
  %3881 = vmatpush.bf16.msra.mxu0 0
  %3882 = vmatpush.bf16.msra.mxu0 0
  %3883 = vmatpush.bf16.msra.mxu0 %v3871
  %3884 = vmatpush.bf16.msra.mxu0 %v3870
  %3885 = vmatmul.bf16.gmra.mxu0 %v3875
  %v3886 = vpop.f32.mrf.mxu0
  %v3887 = vadd.f32 %v3860, %v3886
  %v3888 = vpop.f32.mrf.mxu0
  %v3889 = vadd.f32 %v3860, %v3888
  %3890 = vdwg.mxu0
  %s3891 = scalar_lea.vmem %s55, 16
  %v3892 = vld [vmem:[%s3891] sm:$0xf]
  %v3893 = vld [vmem:[%s3891 + $0x4] sm:$0xf]
  %v3894 = vld [vmem:[%s3891 + $0x8] sm:$0xf]
  %v3895 = vld [vmem:[%s3891 + $0xc] sm:$0xf]
  %s3896 = scalar_lea.vmem %s57, 1
  %v3897 = vld [vmem:[%s3896] sm:$0x1]
  %v3899 = vperm.slane %v3897, 0
  %v3905 = vunpack.c.l.b16 %v3892
  %v3906 = vunpack.c.l.b16 %v3893
  %v3907 = vunpack.c.l.b16 %v3894
  %v3908 = vunpack.c.l.b16 %v3895
  %v3909 = vpack.c.b16 %v3906, %v3905
  %v3910 = vpack.c.b16 %v3908, %v3907
  %3913 = vmatpush.bf16.msra.mxu0 0
  %3914 = vmatpush.bf16.msra.mxu0 0
  %3915 = vmatpush.bf16.msra.mxu0 0
  %3916 = vmatpush.bf16.msra.mxu0 0
  %3917 = vmatpush.bf16.msra.mxu0 0
  %3918 = vmatpush.bf16.msra.mxu0 0
  %3919 = vmatpush.bf16.msra.mxu0 %v3910
  %3920 = vmatpush.bf16.msra.mxu0 %v3909
  %3921 = vmatmul.bf16.gmra.mxu0 %v2780
  %v3922 = vpop.f32.mrf.mxu0
  %v3923 = vadd.f32 %v3899, %v3922
  %v3924 = vpop.f32.mrf.mxu0
  %v3925 = vadd.f32 %v3899, %v3924
  %3926 = vmatmul.bf16.gmra.mxu0 %v2783
  %v3927 = vpop.f32.mrf.mxu0
  %v3928 = vadd.f32 %v3899, %v3927
  %v3929 = vpop.f32.mrf.mxu0
  %v3930 = vadd.f32 %v3899, %v3929
  %3931 = vdwg.mxu0
  %s3932 = scalar_lea.vmem %s59, 16
  %v3933 = vld [vmem:[%s3932] sm:$0xf]
  %v3934 = vld [vmem:[%s3932 + $0x4] sm:$0xf]
  %v3935 = vld [vmem:[%s3932 + $0x8] sm:$0xf]
  %v3936 = vld [vmem:[%s3932 + $0xc] sm:$0xf]
  %s3937 = scalar_lea.vmem %s61, 1
  %v3938 = vld [vmem:[%s3937] sm:$0x1]
  %v3939 = vmul.f32 %v3887, 0.35355338
  %v3940 = vmul.f32 %v3889, 0.35355338
  %v3941 = vpack.c.bf16 %v3939, %v3939
  %v3942 = vpack.c.bf16 %v3940, %v3940
  %v3943 = vpack.c.bf16 %v3923, %v3923
  %v3944 = vpack.c.bf16 %v3925, %v3925
  %v3945 = vpack.c.bf16 %v3928, %v3928
  %v3946 = vpack.c.bf16 %v3930, %v3930
  %v3949 = vunpack.c.l.b16 %v3941
  %v3950 = vunpack.c.l.b16 %v3942
  %v3951 = vpack.c.b16 %v3950, %v3949
  %v3956 = vunpack.c.l.b16 %v3943
  %v3957 = vunpack.c.l.b16 %v3944
  %v3958 = vunpack.c.l.b16 %v3945
  %v3959 = vunpack.c.l.b16 %v3946
  %v3960 = vpack.c.b16 %v3957, %v3956
  %v3961 = vpack.c.b16 %v3959, %v3958
  %v3963 = vsel %vm280, %v3951, 0
  %v3966 = vsel %vm280, %v3960, 0
  %v3969 = vsel %vm280, %v3961, 0
  %3971 = vmatpush.bf16.xpose.msra.mxu0 0
  %3972 = vmatpush.bf16.xpose.msra.mxu0 0
  %3973 = vmatpush.bf16.xpose.msra.mxu0 0
  %3974 = vmatpush.bf16.xpose.msra.mxu0 0
  %3975 = vmatpush.bf16.xpose.msra.mxu0 0
  %3976 = vmatpush.bf16.xpose.msra.mxu0 0
  %3977 = vmatpush.bf16.xpose.msra.mxu0 %v3969
  %3978 = vmatpush.bf16.xpose.msra.mxu0 %v3966
  %3979 = vmatmul.bf16.gmra.mxu0 %v3963
  %v3980 = vpop.f32.mrf.mxu0
  %v3981 = vadd.f32 %v185, %v3980
  %v3982 = vpop.f32.mrf.mxu0
  %v3983 = vadd.f32 %v186, %v3982
  %3984 = vdwg.mxu0
  %v3985 = vsel %vm213, %v3981, -inf
  %3986 = vmax.xlane.f32.xlu0 %v3985
  %v3987 = vpop.xlane.xlu0 %3986
  %v3988 = vsel %vm213, %v3983, -inf
  %3989 = vmax.xlane.f32.xlu0 %v3988
  %v3990 = vpop.xlane.xlu0 %3989
  %v3991 = vsub.f32 %v3981, %v3987
  %v3992 = vsub.f32 %v3983, %v3990
  %v3993 = vmul.f32 %v3991, 1.442695
  %v3994 = vpow.pop %v3993
  %v3995 = vmul.f32 %v3992, 1.442695
  %v3996 = vpow.pop %v3995
  %v3997 = vsel %vm213, %v3994, 0.0
  %3998 = vadd.xlane.f32.xlu0 %v3997
  %v3999 = vpop.xlane.xlu0 %3998
  %v4000 = vsel %vm213, %v3996, 0.0
  %4001 = vadd.xlane.f32.xlu0 %v4000
  %v4002 = vpop.xlane.xlu0 %4001
  %v4003 = vrcp.pop %v3999
  %v4004 = vrcp.pop %v4002
  %v4005 = vmul.f32 %v3994, %v4003
  %v4006 = vmul.f32 %v3996, %v4004
  %v4007 = vpack.c.bf16 %v4006, %v4005
  %4008 = vrot.lane.b32.xlu0 %v3960, 96
  %v4009 = vpop.permute.xlu0 %4008
  %4010 = vrot.lane.b32.xlu0 %v3961, 96
  %v4011 = vpop.permute.xlu0 %4010
  %v4015 = vsel %vm213, %v4007, 0
  %4017 = vmatpush.bf16.msra.mxu0 0
  %4018 = vmatpush.bf16.msra.mxu0 0
  %4019 = vmatpush.bf16.msra.mxu0 0
  %4020 = vmatpush.bf16.msra.mxu0 0
  %4021 = vmatpush.bf16.msra.mxu0 0
  %4022 = vmatpush.bf16.msra.mxu0 0
  %4023 = vmatpush.bf16.msra.mxu0 %v4011
  %4024 = vmatpush.bf16.msra.mxu0 %v4009
  %4025 = vmatmul.bf16.gmra.mxu0 %v4015
  %v4026 = vpop.f32.mrf.mxu0
  %v4027 = vadd.f32 0.0, %v4026
  %v4028 = vpop.f32.mrf.mxu0
  %v4029 = vadd.f32 0.0, %v4028
  %4030 = vdwg.mxu0
  %4031 = vrot.lane.b32.xlu0 %v3951, 120
  %v4032 = vpop.permute.xlu0 %4031
  %4033 = vrot.lane.b32.xlu0 %v3960, 120
  %v4034 = vpop.permute.xlu0 %4033
  %4035 = vrot.lane.b32.xlu0 %v3961, 120
  %v4036 = vpop.permute.xlu0 %4035
  %v4038 = vsel %vm280, %v4032, 0
  %v4041 = vsel %vm280, %v4034, 0
  %v4044 = vsel %vm280, %v4036, 0
  %4046 = vmatpush.bf16.xpose.msra.mxu0 0
  %4047 = vmatpush.bf16.xpose.msra.mxu0 0
  %4048 = vmatpush.bf16.xpose.msra.mxu0 0
  %4049 = vmatpush.bf16.xpose.msra.mxu0 0
  %4050 = vmatpush.bf16.xpose.msra.mxu0 0
  %4051 = vmatpush.bf16.xpose.msra.mxu0 0
  %4052 = vmatpush.bf16.xpose.msra.mxu0 %v4044
  %4053 = vmatpush.bf16.xpose.msra.mxu0 %v4041
  %4054 = vmatmul.bf16.gmra.mxu0 %v4038
  %v4055 = vpop.f32.mrf.mxu0
  %v4056 = vadd.f32 %v185, %v4055
  %v4057 = vpop.f32.mrf.mxu0
  %v4058 = vadd.f32 %v186, %v4057
  %4059 = vdwg.mxu0
  %v4060 = vsel %vm213, %v4056, -inf
  %4061 = vmax.xlane.f32.xlu0 %v4060
  %v4062 = vpop.xlane.xlu0 %4061
  %v4063 = vsel %vm213, %v4058, -inf
  %4064 = vmax.xlane.f32.xlu0 %v4063
  %v4065 = vpop.xlane.xlu0 %4064
  %v4066 = vsub.f32 %v4056, %v4062
  %v4067 = vsub.f32 %v4058, %v4065
  %v4068 = vmul.f32 %v4066, 1.442695
  %v4069 = vpow.pop %v4068
  %v4070 = vmul.f32 %v4067, 1.442695
  %v4071 = vpow.pop %v4070
  %v4072 = vsel %vm213, %v4069, 0.0
  %4073 = vadd.xlane.f32.xlu0 %v4072
  %v4074 = vpop.xlane.xlu0 %4073
  %v4075 = vsel %vm213, %v4071, 0.0
  %4076 = vadd.xlane.f32.xlu0 %v4075
  %v4077 = vpop.xlane.xlu0 %4076
  %v4078 = vrcp.pop %v4074
  %v4079 = vrcp.pop %v4077
  %v4080 = vmul.f32 %v4069, %v4078
  %v4081 = vmul.f32 %v4071, %v4079
  %v4082 = vpack.c.bf16 %v4081, %v4080
  %4083 = vrot.lane.b32.xlu0 %v3960, 88
  %v4084 = vpop.permute.xlu0 %4083
  %4085 = vrot.lane.b32.xlu0 %v3961, 88
  %v4086 = vpop.permute.xlu0 %4085
  %v4090 = vsel %vm213, %v4082, 0
  %4092 = vmatpush.bf16.msra.mxu0 0
  %4093 = vmatpush.bf16.msra.mxu0 0
  %4094 = vmatpush.bf16.msra.mxu0 0
  %4095 = vmatpush.bf16.msra.mxu0 0
  %4096 = vmatpush.bf16.msra.mxu0 0
  %4097 = vmatpush.bf16.msra.mxu0 0
  %4098 = vmatpush.bf16.msra.mxu0 %v4086
  %4099 = vmatpush.bf16.msra.mxu0 %v4084
  %4100 = vmatmul.bf16.gmra.mxu0 %v4090
  %v4101 = vpop.f32.mrf.mxu0
  %v4102 = vadd.f32 0.0, %v4101
  %v4103 = vpop.f32.mrf.mxu0
  %v4104 = vadd.f32 0.0, %v4103
  %4105 = vdwg.mxu0
  %4106 = vrot.lane.b32.xlu0 %v3951, 112
  %v4107 = vpop.permute.xlu0 %4106
  %4108 = vrot.lane.b32.xlu0 %v3960, 112
  %v4109 = vpop.permute.xlu0 %4108
  %4110 = vrot.lane.b32.xlu0 %v3961, 112
  %v4111 = vpop.permute.xlu0 %4110
  %v4113 = vsel %vm280, %v4107, 0
  %v4116 = vsel %vm280, %v4109, 0
  %v4119 = vsel %vm280, %v4111, 0
  %4121 = vmatpush.bf16.xpose.msra.mxu0 0
  %4122 = vmatpush.bf16.xpose.msra.mxu0 0
  %4123 = vmatpush.bf16.xpose.msra.mxu0 0
  %4124 = vmatpush.bf16.xpose.msra.mxu0 0
  %4125 = vmatpush.bf16.xpose.msra.mxu0 0
  %4126 = vmatpush.bf16.xpose.msra.mxu0 0
  %4127 = vmatpush.bf16.xpose.msra.mxu0 %v4119
  %4128 = vmatpush.bf16.xpose.msra.mxu0 %v4116
  %4129 = vmatmul.bf16.gmra.mxu0 %v4113
  %v4130 = vpop.f32.mrf.mxu0
  %v4131 = vadd.f32 %v185, %v4130
  %v4132 = vpop.f32.mrf.mxu0
  %v4133 = vadd.f32 %v186, %v4132
  %4134 = vdwg.mxu0
  %v4135 = vsel %vm213, %v4131, -inf
  %4136 = vmax.xlane.f32.xlu0 %v4135
  %v4137 = vpop.xlane.xlu0 %4136
  %v4138 = vsel %vm213, %v4133, -inf
  %4139 = vmax.xlane.f32.xlu0 %v4138
  %v4140 = vpop.xlane.xlu0 %4139
  %v4141 = vsub.f32 %v4131, %v4137
  %v4142 = vsub.f32 %v4133, %v4140
  %v4143 = vmul.f32 %v4141, 1.442695
  %v4144 = vpow.pop %v4143
  %v4145 = vmul.f32 %v4142, 1.442695
  %v4146 = vpow.pop %v4145
  %v4147 = vsel %vm213, %v4144, 0.0
  %4148 = vadd.xlane.f32.xlu0 %v4147
  %v4149 = vpop.xlane.xlu0 %4148
  %v4150 = vsel %vm213, %v4146, 0.0
  %4151 = vadd.xlane.f32.xlu0 %v4150
  %v4152 = vpop.xlane.xlu0 %4151
  %v4153 = vrcp.pop %v4149
  %v4154 = vrcp.pop %v4152
  %v4155 = vmul.f32 %v4144, %v4153
  %v4156 = vmul.f32 %v4146, %v4154
  %v4157 = vpack.c.bf16 %v4156, %v4155
  %4158 = vrot.lane.b32.xlu0 %v3960, 80
  %v4159 = vpop.permute.xlu0 %4158
  %4160 = vrot.lane.b32.xlu0 %v3961, 80
  %v4161 = vpop.permute.xlu0 %4160
  %v4165 = vsel %vm213, %v4157, 0
  %4167 = vmatpush.bf16.msra.mxu0 0
  %4168 = vmatpush.bf16.msra.mxu0 0
  %4169 = vmatpush.bf16.msra.mxu0 0
  %4170 = vmatpush.bf16.msra.mxu0 0
  %4171 = vmatpush.bf16.msra.mxu0 0
  %4172 = vmatpush.bf16.msra.mxu0 0
  %4173 = vmatpush.bf16.msra.mxu0 %v4161
  %4174 = vmatpush.bf16.msra.mxu0 %v4159
  %4175 = vmatmul.bf16.gmra.mxu0 %v4165
  %v4176 = vpop.f32.mrf.mxu0
  %v4177 = vadd.f32 0.0, %v4176
  %v4178 = vpop.f32.mrf.mxu0
  %v4179 = vadd.f32 0.0, %v4178
  %4180 = vdwg.mxu0
  %4181 = vrot.lane.b32.xlu0 %v3951, 104
  %v4182 = vpop.permute.xlu0 %4181
  %4183 = vrot.lane.b32.xlu0 %v3960, 104
  %v4184 = vpop.permute.xlu0 %4183
  %4185 = vrot.lane.b32.xlu0 %v3961, 104
  %v4186 = vpop.permute.xlu0 %4185
  %v4188 = vsel %vm280, %v4182, 0
  %v4191 = vsel %vm280, %v4184, 0
  %v4194 = vsel %vm280, %v4186, 0
  %4196 = vmatpush.bf16.xpose.msra.mxu0 0
  %4197 = vmatpush.bf16.xpose.msra.mxu0 0
  %4198 = vmatpush.bf16.xpose.msra.mxu0 0
  %4199 = vmatpush.bf16.xpose.msra.mxu0 0
  %4200 = vmatpush.bf16.xpose.msra.mxu0 0
  %4201 = vmatpush.bf16.xpose.msra.mxu0 0
  %4202 = vmatpush.bf16.xpose.msra.mxu0 %v4194
  %4203 = vmatpush.bf16.xpose.msra.mxu0 %v4191
  %4204 = vmatmul.bf16.gmra.mxu0 %v4188
  %v4205 = vpop.f32.mrf.mxu0
  %v4206 = vadd.f32 %v185, %v4205
  %v4207 = vpop.f32.mrf.mxu0
  %v4208 = vadd.f32 %v186, %v4207
  %4209 = vdwg.mxu0
  %v4210 = vsel %vm213, %v4206, -inf
  %4211 = vmax.xlane.f32.xlu0 %v4210
  %v4212 = vpop.xlane.xlu0 %4211
  %v4213 = vsel %vm213, %v4208, -inf
  %4214 = vmax.xlane.f32.xlu0 %v4213
  %v4215 = vpop.xlane.xlu0 %4214
  %v4216 = vsub.f32 %v4206, %v4212
  %v4217 = vsub.f32 %v4208, %v4215
  %v4218 = vmul.f32 %v4216, 1.442695
  %v4219 = vpow.pop %v4218
  %v4220 = vmul.f32 %v4217, 1.442695
  %v4221 = vpow.pop %v4220
  %v4222 = vsel %vm213, %v4219, 0.0
  %4223 = vadd.xlane.f32.xlu0 %v4222
  %v4224 = vpop.xlane.xlu0 %4223
  %v4225 = vsel %vm213, %v4221, 0.0
  %4226 = vadd.xlane.f32.xlu0 %v4225
  %v4227 = vpop.xlane.xlu0 %4226
  %v4228 = vrcp.pop %v4224
  %v4229 = vrcp.pop %v4227
  %v4230 = vmul.f32 %v4219, %v4228
  %v4231 = vmul.f32 %v4221, %v4229
  %v4232 = vpack.c.bf16 %v4231, %v4230
  %4233 = vrot.lane.b32.xlu0 %v3960, 72
  %v4234 = vpop.permute.xlu0 %4233
  %4235 = vrot.lane.b32.xlu0 %v3961, 72
  %v4236 = vpop.permute.xlu0 %4235
  %v4240 = vsel %vm213, %v4232, 0
  %4242 = vmatpush.bf16.msra.mxu0 0
  %4243 = vmatpush.bf16.msra.mxu0 0
  %4244 = vmatpush.bf16.msra.mxu0 0
  %4245 = vmatpush.bf16.msra.mxu0 0
  %4246 = vmatpush.bf16.msra.mxu0 0
  %4247 = vmatpush.bf16.msra.mxu0 0
  %4248 = vmatpush.bf16.msra.mxu0 %v4236
  %4249 = vmatpush.bf16.msra.mxu0 %v4234
  %4250 = vmatmul.bf16.gmra.mxu0 %v4240
  %v4251 = vpop.f32.mrf.mxu0
  %v4252 = vadd.f32 0.0, %v4251
  %v4253 = vpop.f32.mrf.mxu0
  %v4254 = vadd.f32 0.0, %v4253
  %4255 = vdwg.mxu0
  %4258 = vrot.lane.b32.xlu0 %v4102, 8
  %v4259 = vpop.permute.xlu0 %4258
  %4260 = vrot.lane.b32.xlu0 %v4104, 8
  %v4261 = vpop.permute.xlu0 %4260
  %4266 = vrot.lane.b32.xlu0 %v4177, 16
  %v4267 = vpop.permute.xlu0 %4266
  %4268 = vrot.lane.b32.xlu0 %v4179, 16
  %v4269 = vpop.permute.xlu0 %4268
  %4274 = vrot.lane.b32.xlu0 %v4252, 24
  %v4275 = vpop.permute.xlu0 %4274
  %4276 = vrot.lane.b32.xlu0 %v4254, 24
  %v4277 = vpop.permute.xlu0 %4276
  %v4280 = vsel %vm280, %v4027, %v4259
  %v4281 = vsel %vm280, %v4029, %v4261
  %v4282 = vsel %vm789, %v4280, %v4267
  %v4283 = vsel %vm789, %v4281, %v4269
  %v4284 = vsel %vm794, %v4282, %v4275
  %v4285 = vsel %vm794, %v4283, %v4277
  %v4286 = vpack.c.bf16 %v4285, %v4284
  %v4288 = vperm.slane %v3938, 0
  %v4294 = vunpack.c.l.b16 %v3933
  %v4295 = vunpack.c.l.b16 %v3934
  %v4296 = vunpack.c.l.b16 %v3935
  %v4297 = vunpack.c.l.b16 %v3936
  %v4298 = vpack.c.b16 %v4295, %v4294
  %v4299 = vpack.c.b16 %v4297, %v4296
  %v4303 = vsel %vm213, %v4286, 0
  %4305 = vmatpush.bf16.msra.mxu0 0
  %4306 = vmatpush.bf16.msra.mxu0 0
  %4307 = vmatpush.bf16.msra.mxu0 0
  %4308 = vmatpush.bf16.msra.mxu0 0
  %4309 = vmatpush.bf16.msra.mxu0 0
  %4310 = vmatpush.bf16.msra.mxu0 0
  %4311 = vmatpush.bf16.msra.mxu0 %v4299
  %4312 = vmatpush.bf16.msra.mxu0 %v4298
  %4313 = vmatmul.bf16.gmra.mxu0 %v4303
  %v4314 = vpop.f32.mrf.mxu0
  %v4315 = vadd.f32 %v4288, %v4314
  %v4316 = vpop.f32.mrf.mxu0
  %v4317 = vadd.f32 %v4288, %v4316
  %4318 = vdwg.mxu0
  %v4319 = vadd.f32 %v3849, %v4315
  %v4320 = vadd.f32 %v3850, %v4317
  %s4321 = scalar_lea.vmem %s63, 1
  %v4322 = vld [vmem:[%s4321] sm:$0x1]
  %s4323 = scalar_lea.vmem %s65, 1
  %v4324 = vld [vmem:[%s4323] sm:$0x1]
  %v4325 = vsel %vm213, %v4319, 0.0
  %4326 = vadd.xlane.f32.xlu0 %v4325
  %v4327 = vpop.xlane.xlu0 %4326
  %v4328 = vsel %vm213, %v4320, 0.0
  %4329 = vadd.xlane.f32.xlu0 %v4328
  %v4330 = vpop.xlane.xlu0 %4329
  %v4331 = vmul.f32 %v4327, %v865
  %v4332 = vmul.f32 %v4330, %v865
  %v4333 = vsub.f32 %v4319, %v4331
  %v4334 = vsub.f32 %v4320, %v4332
  %v4335 = vmul.f32 %v4333, %v4333
  %v4336 = vmul.f32 %v4334, %v4334
  %v4337 = vsel %vm213, %v4335, 0.0
  %4338 = vadd.xlane.f32.xlu0 %v4337
  %v4339 = vpop.xlane.xlu0 %4338
  %v4340 = vsel %vm213, %v4336, 0.0
  %4341 = vadd.xlane.f32.xlu0 %v4340
  %v4342 = vpop.xlane.xlu0 %4341
  %v4343 = vmul.f32 %v4339, %v865
  %v4344 = vmul.f32 %v4342, %v865
  %v4345 = vadd.f32 %v4343, 1e-05
  %v4346 = vadd.f32 %v4344, 1e-05
  %v4347 = vrsqrt.pop %v4345
  %v4348 = vmul.f32 %v4347, %v4345
  %v4349 = vmul.f32 %v4348, %v4347
  %v4350 = vmul.f32 0.5, %v4349
  %v4351 = vsub.f32 1.5, %v4350
  %v4352 = vmul.f32 %v4347, %v4351
  %vm4353 = vweird.f32 %v4345
  %vm4354 = vweird.f32 %v4347
  %vm4355 = vmor %vm4353, %vm4354
  %v4356 = vsel %vm4355, %v4347, %v4352
  %v4357 = vrsqrt.pop %v4346
  %v4358 = vmul.f32 %v4357, %v4346
  %v4359 = vmul.f32 %v4358, %v4357
  %v4360 = vmul.f32 0.5, %v4359
  %v4361 = vsub.f32 1.5, %v4360
  %v4362 = vmul.f32 %v4357, %v4361
  %vm4363 = vweird.f32 %v4346
  %vm4364 = vweird.f32 %v4357
  %vm4365 = vmor %vm4363, %vm4364
  %v4366 = vsel %vm4365, %v4357, %v4362
  %v4367 = vmul.f32 %v4333, %v4356
  %v4368 = vmul.f32 %v4334, %v4366
  %v4370 = vperm.slane %v4322, 0
  %v4372 = vmul.f32 %v4367, %v4370
  %v4373 = vmul.f32 %v4368, %v4370
  %v4375 = vperm.slane %v4324, 0
  %v4377 = vadd.f32 %v4372, %v4375
  %v4378 = vadd.f32 %v4373, %v4375
  %s4379 = scalar_lea.vmem %s67, 16
  %v4380 = vld [vmem:[%s4379] sm:$0xf]
  %v4381 = vld [vmem:[%s4379 + $0x4] sm:$0xf]
  %v4382 = vld [vmem:[%s4379 + $0x8] sm:$0xf]
  %v4383 = vld [vmem:[%s4379 + $0xc] sm:$0xf]
  %s4384 = scalar_lea.vmem %s69, 1
  %v4385 = vld [vmem:[%s4384] sm:$0x1]
  %s4386 = scalar_lea.vmem %s71, 32
  %v4387 = vld [vmem:[%s4386] sm:$0xf]
  %v4388 = vld [vmem:[%s4386 + $0x4] sm:$0xf]
  %v4389 = vld [vmem:[%s4386 + $0x8] sm:$0xf]
  %v4390 = vld [vmem:[%s4386 + $0xc] sm:$0xf]
  %v4391 = vld [vmem:[%s4386 + $0x10] sm:$0xf]
  %v4392 = vld [vmem:[%s4386 + $0x14] sm:$0xf]
  %v4393 = vld [vmem:[%s4386 + $0x18] sm:$0xf]
  %v4394 = vld [vmem:[%s4386 + $0x1c] sm:$0xf]
  %s4395 = scalar_lea.vmem %s73, 1
  %v4396 = vld [vmem:[%s4395] sm:$0x1]
  %v4397 = vpack.c.bf16 %v4378, %v4377
  %v4399 = vperm.slane %v4385, 0
  %v4405 = vunpack.c.l.b16 %v4380
  %v4406 = vunpack.c.l.b16 %v4381
  %v4407 = vunpack.c.l.b16 %v4382
  %v4408 = vunpack.c.l.b16 %v4383
  %v4409 = vpack.c.b16 %v4406, %v4405
  %v4410 = vpack.c.b16 %v4408, %v4407
  %v4414 = vsel %vm213, %v4397, 0
  %4416 = vmatpush.bf16.msra.mxu0 0
  %4417 = vmatpush.bf16.msra.mxu0 0
  %4418 = vmatpush.bf16.msra.mxu0 0
  %4419 = vmatpush.bf16.msra.mxu0 0
  %4420 = vmatpush.bf16.msra.mxu0 0
  %4421 = vmatpush.bf16.msra.mxu0 0
  %4422 = vmatpush.bf16.msra.mxu0 %v4410
  %4423 = vmatpush.bf16.msra.mxu0 %v4409
  %4424 = vmatmul.bf16.gmra.mxu0 %v4414
  %v4425 = vpop.f32.mrf.mxu0
  %v4426 = vadd.f32 %v4399, %v4425
  %v4427 = vpop.f32.mrf.mxu0
  %v4428 = vadd.f32 %v4399, %v4427
  %4429 = vdwg.mxu0
  %v4430 = vmax.f32 %v4426, 0.0
  %v4431 = vmax.f32 %v4428, 0.0
  %v4432 = vpack.c.bf16 %v4431, %v4430
  %v4434 = vperm.slane %v4396, 0
  %v4444 = vunpack.c.l.b16 %v4387
  %v4445 = vunpack.c.l.b16 %v4388
  %v4446 = vunpack.c.l.b16 %v4389
  %v4447 = vunpack.c.l.b16 %v4390
  %v4448 = vunpack.c.l.b16 %v4391
  %v4449 = vunpack.c.l.b16 %v4392
  %v4450 = vunpack.c.l.b16 %v4393
  %v4451 = vunpack.c.l.b16 %v4394
  %v4452 = vpack.c.b16 %v4445, %v4444
  %v4453 = vpack.c.b16 %v4447, %v4446
  %v4454 = vpack.c.b16 %v4449, %v4448
  %v4455 = vpack.c.b16 %v4451, %v4450
  %v4461 = vsel %vm1045, %v4432, 0
  %4463 = vmatpush.bf16.msra.mxu0 0
  %4464 = vmatpush.bf16.msra.mxu0 0
  %4465 = vmatpush.bf16.msra.mxu0 0
  %4466 = vmatpush.bf16.msra.mxu0 0
  %4467 = vmatpush.bf16.msra.mxu0 %v4455
  %4468 = vmatpush.bf16.msra.mxu0 %v4454
  %4469 = vmatpush.bf16.msra.mxu0 %v4453
  %4470 = vmatpush.bf16.msra.mxu0 %v4452
  %4471 = vmatmul.bf16.gmra.mxu0 %v4461
  %v4472 = vpop.f32.mrf.mxu0
  %v4473 = vadd.f32 %v4434, %v4472
  %v4474 = vpop.f32.mrf.mxu0
  %v4475 = vadd.f32 %v4434, %v4474
  %4476 = vdwg.mxu0
  %v4477 = vadd.f32 %v4377, %v4473
  %v4478 = vadd.f32 %v4378, %v4475
  %s4479 = scalar_lea.vmem %s75, 1
  %v4480 = vld [vmem:[%s4479] sm:$0x1]
  %s4481 = scalar_lea.vmem %s77, 1
  %v4482 = vld [vmem:[%s4481] sm:$0x1]
  %v4483 = vsel %vm213, %v4477, 0.0
  %4484 = vadd.xlane.f32.xlu0 %v4483
  %v4485 = vpop.xlane.xlu0 %4484
  %v4486 = vsel %vm213, %v4478, 0.0
  %4487 = vadd.xlane.f32.xlu0 %v4486
  %v4488 = vpop.xlane.xlu0 %4487
  %v4489 = vmul.f32 %v4485, %v865
  %v4490 = vmul.f32 %v4488, %v865
  %v4491 = vsub.f32 %v4477, %v4489
  %v4492 = vsub.f32 %v4478, %v4490
  %v4493 = vmul.f32 %v4491, %v4491
  %v4494 = vmul.f32 %v4492, %v4492
  %v4495 = vsel %vm213, %v4493, 0.0
  %4496 = vadd.xlane.f32.xlu0 %v4495
  %v4497 = vpop.xlane.xlu0 %4496
  %v4498 = vsel %vm213, %v4494, 0.0
  %4499 = vadd.xlane.f32.xlu0 %v4498
  %v4500 = vpop.xlane.xlu0 %4499
  %v4501 = vmul.f32 %v4497, %v865
  %v4502 = vmul.f32 %v4500, %v865
  %v4503 = vadd.f32 %v4501, 1e-05
  %v4504 = vadd.f32 %v4502, 1e-05
  %v4505 = vrsqrt.pop %v4503
  %v4506 = vmul.f32 %v4505, %v4503
  %v4507 = vmul.f32 %v4506, %v4505
  %v4508 = vmul.f32 0.5, %v4507
  %v4509 = vsub.f32 1.5, %v4508
  %v4510 = vmul.f32 %v4505, %v4509
  %vm4511 = vweird.f32 %v4503
  %vm4512 = vweird.f32 %v4505
  %vm4513 = vmor %vm4511, %vm4512
  %v4514 = vsel %vm4513, %v4505, %v4510
  %v4515 = vrsqrt.pop %v4504
  %v4516 = vmul.f32 %v4515, %v4504
  %v4517 = vmul.f32 %v4516, %v4515
  %v4518 = vmul.f32 0.5, %v4517
  %v4519 = vsub.f32 1.5, %v4518
  %v4520 = vmul.f32 %v4515, %v4519
  %vm4521 = vweird.f32 %v4504
  %vm4522 = vweird.f32 %v4515
  %vm4523 = vmor %vm4521, %vm4522
  %v4524 = vsel %vm4523, %v4515, %v4520
  %v4525 = vmul.f32 %v4491, %v4514
  %v4526 = vmul.f32 %v4492, %v4524
  %v4528 = vperm.slane %v4480, 0
  %v4530 = vmul.f32 %v4525, %v4528
  %v4531 = vmul.f32 %v4526, %v4528
  %v4533 = vperm.slane %v4482, 0
  %v4535 = vadd.f32 %v4530, %v4533
  %v4536 = vadd.f32 %v4531, %v4533
  %v4537 = vld [vmem:[%s79] sm:$0x1]
  %v4538 = vld [vmem:[%s81] sm:$0x1]
  %v4539 = vsel %vm213, %v4535, 0.0
  %4540 = vadd.xlane.f32.xlu0 %v4539
  %v4541 = vpop.xlane.xlu0 %4540
  %v4542 = vsel %vm213, %v4536, 0.0
  %4543 = vadd.xlane.f32.xlu0 %v4542
  %v4544 = vpop.xlane.xlu0 %4543
  %v4545 = vmul.f32 %v4541, %v865
  %v4546 = vmul.f32 %v4544, %v865
  %v4547 = vsub.f32 %v4535, %v4545
  %v4548 = vsub.f32 %v4536, %v4546
  %v4549 = vmul.f32 %v4547, %v4547
  %v4550 = vmul.f32 %v4548, %v4548
  %v4551 = vsel %vm213, %v4549, 0.0
  %4552 = vadd.xlane.f32.xlu0 %v4551
  %v4553 = vpop.xlane.xlu0 %4552
  %v4554 = vsel %vm213, %v4550, 0.0
  %4555 = vadd.xlane.f32.xlu0 %v4554
  %v4556 = vpop.xlane.xlu0 %4555
  %v4557 = vmul.f32 %v4553, %v865
  %v4558 = vmul.f32 %v4556, %v865
  %v4559 = vadd.f32 %v4557, 1e-05
  %v4560 = vadd.f32 %v4558, 1e-05
  %v4561 = vrsqrt.pop %v4559
  %v4562 = vmul.f32 %v4561, %v4559
  %v4563 = vmul.f32 %v4562, %v4561
  %v4564 = vmul.f32 0.5, %v4563
  %v4565 = vsub.f32 1.5, %v4564
  %v4566 = vmul.f32 %v4561, %v4565
  %vm4567 = vweird.f32 %v4559
  %vm4568 = vweird.f32 %v4561
  %vm4569 = vmor %vm4567, %vm4568
  %v4570 = vsel %vm4569, %v4561, %v4566
  %v4571 = vrsqrt.pop %v4560
  %v4572 = vmul.f32 %v4571, %v4560
  %v4573 = vmul.f32 %v4572, %v4571
  %v4574 = vmul.f32 0.5, %v4573
  %v4575 = vsub.f32 1.5, %v4574
  %v4576 = vmul.f32 %v4571, %v4575
  %vm4577 = vweird.f32 %v4560
  %vm4578 = vweird.f32 %v4571
  %vm4579 = vmor %vm4577, %vm4578
  %v4580 = vsel %vm4579, %v4571, %v4576
  %v4581 = vmul.f32 %v4547, %v4570
  %v4582 = vmul.f32 %v4548, %v4580
  %v4584 = vperm.slane %v4537, 0
  %v4586 = vmul.f32 %v4581, %v4584
  %v4587 = vmul.f32 %v4582, %v4584
  %v4589 = vperm.slane %v4538, 0
  %v4591 = vadd.f32 %v4586, %v4589
  %v4592 = vadd.f32 %v4587, %v4589
  %v4593 = vld [vmem:[%s83] sm:$0xf]
  %v4594 = vld [vmem:[%s83 + $0x4] sm:$0xf]
  %v4595 = vld [vmem:[%s83 + $0x8] sm:$0xf]
  %v4596 = vld [vmem:[%s83 + $0xc] sm:$0xf]
  %v4597 = vpack.c.bf16 %v4592, %v4591
  %v4598 = vld [vmem:[%s85] sm:$0x1]
  %v4600 = vperm.slane %v4598, 0
  %v4606 = vunpack.c.l.b16 %v4593
  %v4607 = vunpack.c.l.b16 %v4594
  %v4608 = vunpack.c.l.b16 %v4595
  %v4609 = vunpack.c.l.b16 %v4596
  %v4610 = vpack.c.b16 %v4607, %v4606
  %v4611 = vpack.c.b16 %v4609, %v4608
  %v4615 = vsel %vm213, %v4597, 0
  %4617 = vmatpush.bf16.msra.mxu0 0
  %4618 = vmatpush.bf16.msra.mxu0 0
  %4619 = vmatpush.bf16.msra.mxu0 0
  %4620 = vmatpush.bf16.msra.mxu0 0
  %4621 = vmatpush.bf16.msra.mxu0 0
  %4622 = vmatpush.bf16.msra.mxu0 0
  %4623 = vmatpush.bf16.msra.mxu0 %v4611
  %4624 = vmatpush.bf16.msra.mxu0 %v4610
  %4625 = vmatmul.bf16.gmra.mxu0 %v4615
  %v4626 = vpop.f32.mrf.mxu0
  %v4627 = vadd.f32 %v4600, %v4626
  %v4628 = vpop.f32.mrf.mxu0
  %v4629 = vadd.f32 %v4600, %v4628
  %4630 = vdwg.mxu0
  %4631 = vst [vmem:[%s87] sm:$0xff] %v4627
  %4632 = vst [vmem:[%s87 + $0x8] sm:$0xff] %v4629
  // Predicated region
  $region174: #{translation_model_forward.1} parent=0 // pred_check
    _
  $region175: #{translation_model_forward.1} parent=0 // pred_check_branch
    %4634 = sbr.rel (0) target = $region177
  $region176: #{translation_model_forward.1} parent=0 // pred_region
    _
  $region177: #{translation_model_forward.1} parent=0 // pred_fallthru
    _
  // Predicated region
  $region178: #{translation_model_forward.1} parent=0 // pred_check
    _
  $region179: #{translation_model_forward.1} parent=0 // pred_check_branch
    %4636 = sbr.rel (0) target = $region181
  $region180: #{translation_model_forward.1} parent=0 // pred_region
    _
  $region181: #{translation_model_forward.1} parent=0 // pred_fallthru
    _

</llo_original>
